<compile_context>
chip_gen: v6e
topology: v6e:2x2x1
jax: 0.10.0
libtpu: 0.0.40
codegen_flags: <defaults>
</compile_context>

<pallas_src>
import jax
import jax.numpy as jnp
from jax.experimental import pallas as pl
from jax.experimental.pallas import tpu as pltpu

K = 5       # conv kernel size (fixed by the module)
PAD = 2     # conv padding (fixed by the module)
MID_L = 8   # left pad of the conv2 intermediate -> sublane-aligned interior store


def _round_up(x, m):
    return (x + m - 1) // m * m


def _pick_batch_block(n, h, w):
    """Largest divisor of n keeping M = b*h*w modest, preferring >=2 grid steps."""
    cap = max(1, 256 // (h * w))
    best = 1
    for d in range(1, n + 1):
        if n % d == 0 and d <= cap and (n < 2 or n // d >= 2):
            best = d
    return best


def resblock_kernel(xpad_ref, w1_ref, b1_ref, w2_ref, b2_ref, xres_ref,
                    out_ref, col_ref, mid_ref):
    # xpad_ref : (B, Hp, Win, C) zero-padded input, Win multiple of 8
    # w*_ref   : (K, K*C, C)     per-kh weights; contraction stacks the 5 kw taps
    # b*_ref   : (1, C)
    # xres_ref : (B, H, W, C)    residual input
    # out_ref  : (B, H, W, C)
    # col_ref  : VMEM (B, Hp, W, K*C)  im2col-along-kw scratch (reused by both convs)
    # mid_ref  : VMEM (B, Hp, Wm, C)   zero-bordered relu(conv1) output
    B, H, W, C = xres_ref.shape
    M = B * H * W
    KC = K * C
    Wm = mid_ref.shape[2]

    def build_col(src_ref, w_off):
        # 5 hoisted kw shifts per conv (instead of 25), packed along lanes.
        for kw in range(K):
            col_ref[:, :, :, kw * C:(kw + 1) * C] = \
                src_ref[:, :, w_off + kw:w_off + kw + W, :]

    def conv(w_ref):
        acc = jnp.zeros((M, C), jnp.float32)
        for kh in range(K):  # kh slice of col is a leading-dim slice (addressing only)
            lhs = col_ref[:, kh:kh + H].reshape(M, KC)
            acc = acc + jnp.dot(lhs, w_ref[kh],
                                preferred_element_type=jnp.float32)
        return acc

    # ---- conv1 + bias + relu ----
    build_col(xpad_ref, 0)
    act = jnp.maximum(conv(w1_ref) + b1_ref[...], 0.0)

    # ---- zero-bordered intermediate for conv2 (only borders zeroed each step,
    #      so the kernel stays correct under parallel/megacore grid splitting) ----
    zrow = jnp.zeros((B, PAD, Wm, C), jnp.float32)
    mid_ref[:, 0:PAD] = zrow
    mid_ref[:, PAD + H:PAD + H + PAD] = zrow
    zcol = jnp.zeros((B, H, PAD, C), jnp.float32)
    mid_ref[:, PAD:PAD + H, MID_L - PAD:MID_L] = zcol
    mid_ref[:, PAD:PAD + H, MID_L + W:MID_L + W + PAD] = zcol
    # interior store starts at sublane offset MID_L=8 -> aligned, unmasked
    mid_ref[:, PAD:PAD + H, MID_L:MID_L + W] = act.reshape(B, H, W, C)

    # ---- conv2 + bias + residual add ----
    build_col(mid_ref, MID_L - PAD)
    out = (conv(w2_ref) + b2_ref[...]).reshape(B, H, W, C) + xres_ref[...]
    out_ref[...] = out.astype(out_ref.dtype)


def resblock_pallas(x_nchw, w1_hwio, b1, w2_hwio, b2):
    """x_nchw: (N, 64, H, W) float32.  Weights in HWIO (5,5,Cin,Cout)."""
    N, C, H, W = x_nchw.shape
    Hp = H + 2 * PAD
    Win = _round_up(W + 2 * PAD, 8)        # sublane-aligned padded input width
    Wm = _round_up(MID_L + W + PAD, 8)     # conv2 intermediate width
    B = _pick_batch_block(N, H, W)
    grid = (N // B,)

    x_nhwc = jnp.transpose(x_nchw, (0, 2, 3, 1)).astype(jnp.float32)
    xpad = jnp.pad(x_nhwc, ((0, 0), (PAD, PAD), (PAD, Win - W - PAD), (0, 0)))
    # Stack the 5 kw taps along the contraction dim: (K, K*C, C), [kh, kw*C+ci, co].
    w1 = w1_hwio.reshape(K, K * C, C).astype(jnp.float32)
    w2 = w2_hwio.reshape(K, K * C, C).astype(jnp.float32)
    b1r = b1.reshape(1, C).astype(jnp.float32)
    b2r = b2.reshape(1, C).astype(jnp.float32)

    # TODO(synk): for large H/W switch to row-strip tiling with a 2-row halo and
    # set vmem_limit_bytes explicitly (v7x has only 64 MiB physical VMEM).
    out_nhwc = pl.pallas_call(
        resblock_kernel,
        out_shape=jax.ShapeDtypeStruct((N, H, W, C), jnp.float32),
        grid_spec=pltpu.PrefetchScalarGridSpec(
            num_scalar_prefetch=0,
            grid=grid,
            in_specs=[
                pl.BlockSpec((B, Hp, Win, C), lambda n: (n, 0, 0, 0)),
                pl.BlockSpec((K, K * C, C), lambda n: (0, 0, 0)),
                pl.BlockSpec((1, C), lambda n: (0, 0)),
                pl.BlockSpec((K, K * C, C), lambda n: (0, 0, 0)),
                pl.BlockSpec((1, C), lambda n: (0, 0)),
                pl.BlockSpec((B, H, W, C), lambda n: (n, 0, 0, 0)),
            ],
            out_specs=pl.BlockSpec((B, H, W, C), lambda n: (n, 0, 0, 0)),
            scratch_shapes=[
                pltpu.VMEM((B, Hp, W, K * C), jnp.float32),   # im2col scratch
                pltpu.VMEM((B, Hp, Wm, C), jnp.float32),      # padded relu(conv1)
            ],
        ),
        compiler_params=pltpu.CompilerParams(
            dimension_semantics=("parallel",)),
    )(xpad, w1, b1r, w2, b2r, x_nhwc)

    return jnp.transpose(out_nhwc, (0, 3, 1, 2))


def resblock_ref(x_nchw, w1_hwio, b1, w2_hwio, b2):
    """Pure-JAX reference matching the PyTorch forward."""
    dn = ('NCHW', 'HWIO', 'NCHW')

    def conv(x, w, b):
        y = jax.lax.conv_general_dilated(
            x, w, window_strides=(1, 1),
            padding=((PAD, PAD), (PAD, PAD)), dimension_numbers=dn)
        return y + b.reshape(1, -1, 1, 1)

    out = conv(x_nchw, w1_hwio, b1)
    out = jnp.maximum(out, 0.0)
    out = conv(out, w2_hwio, b2)
    return out + x_nchw


if __name__ == "__main__":
    N, C, H, W = 4, 64, 8, 8          # channels fixed to 64 by the module
    key = jax.random.PRNGKey(0)
    k1, k2, k3, k4, k5 = jax.random.split(key, 5)

    x = jax.random.normal(k1, (N, C, H, W), jnp.float32)

    # Deterministic Conv2d-style init (uniform(-1/sqrt(fan_in), 1/sqrt(fan_in))).
    fan_in = C * K * K
    scale = 1.0 / (fan_in ** 0.5)
    w1 = jax.random.uniform(k2, (K, K, C, C), jnp.float32, -scale, scale)
    b1 = jax.random.uniform(k3, (C,), jnp.float32, -scale, scale)
    w2 = jax.random.uniform(k4, (K, K, C, C), jnp.float32, -scale, scale)
    b2 = jax.random.uniform(k5, (C,), jnp.float32, -scale, scale)

    out = jax.block_until_ready(jax.jit(resblock_pallas)(x, w1, b1, w2, b2))
    ref = jax.block_until_ready(resblock_ref(x, w1, b1, w2, b2))

    assert out.shape == (N, C, H, W)
    max_err = float(jnp.max(jnp.abs(out - ref)))
    assert max_err < 1e-3, f"mismatch vs reference, max abs err = {max_err}"

    print("KERNEL_OK")
</pallas_src>

<mosaic_0001>
module attributes {stable_mosaic.version = 11 : i64} {
  func.func @resblock_kernel(%arg0: i32, %arg1: memref<2x12x16x64xf32, #tpu.memory_space<vmem>>, %arg2: memref<5x320x64xf32, #tpu.memory_space<vmem>>, %arg3: memref<1x64xf32, #tpu.memory_space<vmem>>, %arg4: memref<5x320x64xf32, #tpu.memory_space<vmem>>, %arg5: memref<1x64xf32, #tpu.memory_space<vmem>>, %arg6: memref<2x8x8x64xf32, #tpu.memory_space<vmem>>, %arg7: memref<2x8x8x64xf32, #tpu.memory_space<vmem>>, %arg8: memref<2x12x8x320xf32, #tpu.memory_space<vmem>>, %arg9: memref<2x12x24x64xf32, #tpu.memory_space<vmem>>) attributes {dimension_semantics = [#tpu.dimension_semantics<parallel>], iteration_bounds = array<i64: 2>, scalar_prefetch = 0 : i64, scratch_operands = 2 : i64, tpu.core_type = #tpu.core_type<tc>, window_params = [{transform_indices = @transform_0, window_bounds = array<i64: 2, 12, 16, 64>}, {pipeline_mode = #tpu.pipeline_mode<synchronous>, transform_indices = @transform_1, window_bounds = array<i64: 5, 320, 64>}, {pipeline_mode = #tpu.pipeline_mode<synchronous>, transform_indices = @transform_2, window_bounds = array<i64: 1, 64>}, {pipeline_mode = #tpu.pipeline_mode<synchronous>, transform_indices = @transform_3, window_bounds = array<i64: 5, 320, 64>}, {pipeline_mode = #tpu.pipeline_mode<synchronous>, transform_indices = @transform_4, window_bounds = array<i64: 1, 64>}, {transform_indices = @transform_5, window_bounds = array<i64: 2, 8, 8, 64>}, {transform_indices = @transform_6, window_bounds = array<i64: 2, 8, 8, 64>}]} {
    %c0 = arith.constant 0 : index
    %c0_0 = arith.constant 0 : index
    %c0_1 = arith.constant 0 : index
    %c0_2 = arith.constant 0 : index
    %0 = vector.load %arg1[%c0, %c0_0, %c0_1, %c0_2] : memref<2x12x16x64xf32, #tpu.memory_space<vmem>>, vector<2x12x8x64xf32>
    %c0_3 = arith.constant 0 : index
    %c0_4 = arith.constant 0 : index
    %c0_5 = arith.constant 0 : index
    %c0_6 = arith.constant 0 : index
    %1 = vector.load %arg8[%c0_3, %c0_4, %c0_5, %c0_6] : memref<2x12x8x320xf32, #tpu.memory_space<vmem>>, vector<2x12x8x64xf32>
    tpu.vector_store %arg8[%c0_3, %c0_4, %c0_5, %c0_6], %0 {strides = array<i32>} : memref<2x12x8x320xf32, #tpu.memory_space<vmem>>, vector<2x12x8x64xf32>,
    %c0_7 = arith.constant 0 : index
    %c0_8 = arith.constant 0 : index
    %c1 = arith.constant 1 : index
    %c0_9 = arith.constant 0 : index
    %2 = vector.load %arg1[%c0_7, %c0_8, %c1, %c0_9] : memref<2x12x16x64xf32, #tpu.memory_space<vmem>>, vector<2x12x8x64xf32>
    %c0_10 = arith.constant 0 : index
    %c0_11 = arith.constant 0 : index
    %c0_12 = arith.constant 0 : index
    %c64 = arith.constant 64 : index
    %3 = vector.load %arg8[%c0_10, %c0_11, %c0_12, %c64] : memref<2x12x8x320xf32, #tpu.memory_space<vmem>>, vector<2x12x8x64xf32>
    tpu.vector_store %arg8[%c0_10, %c0_11, %c0_12, %c64], %2 {strides = array<i32>} : memref<2x12x8x320xf32, #tpu.memory_space<vmem>>, vector<2x12x8x64xf32>,
    %c0_13 = arith.constant 0 : index
    %c0_14 = arith.constant 0 : index
    %c2 = arith.constant 2 : index
    %c0_15 = arith.constant 0 : index
    %4 = vector.load %arg1[%c0_13, %c0_14, %c2, %c0_15] : memref<2x12x16x64xf32, #tpu.memory_space<vmem>>, vector<2x12x8x64xf32>
    %c0_16 = arith.constant 0 : index
    %c0_17 = arith.constant 0 : index
    %c0_18 = arith.constant 0 : index
    %c128 = arith.constant 128 : index
    %5 = vector.load %arg8[%c0_16, %c0_17, %c0_18, %c128] : memref<2x12x8x320xf32, #tpu.memory_space<vmem>>, vector<2x12x8x64xf32>
    tpu.vector_store %arg8[%c0_16, %c0_17, %c0_18, %c128], %4 {strides = array<i32>} : memref<2x12x8x320xf32, #tpu.memory_space<vmem>>, vector<2x12x8x64xf32>,
    %c0_19 = arith.constant 0 : index
    %c0_20 = arith.constant 0 : index
    %c3 = arith.constant 3 : index
    %c0_21 = arith.constant 0 : index
    %6 = vector.load %arg1[%c0_19, %c0_20, %c3, %c0_21] : memref<2x12x16x64xf32, #tpu.memory_space<vmem>>, vector<2x12x8x64xf32>
    %c0_22 = arith.constant 0 : index
    %c0_23 = arith.constant 0 : index
    %c0_24 = arith.constant 0 : index
    %c192 = arith.constant 192 : index
    %7 = vector.load %arg8[%c0_22, %c0_23, %c0_24, %c192] : memref<2x12x8x320xf32, #tpu.memory_space<vmem>>, vector<2x12x8x64xf32>
    tpu.vector_store %arg8[%c0_22, %c0_23, %c0_24, %c192], %6 {strides = array<i32>} : memref<2x12x8x320xf32, #tpu.memory_space<vmem>>, vector<2x12x8x64xf32>,
    %c0_25 = arith.constant 0 : index
    %c0_26 = arith.constant 0 : index
    %c4 = arith.constant 4 : index
    %c0_27 = arith.constant 0 : index
    %8 = vector.load %arg1[%c0_25, %c0_26, %c4, %c0_27] : memref<2x12x16x64xf32, #tpu.memory_space<vmem>>, vector<2x12x8x64xf32>
    %c0_28 = arith.constant 0 : index
    %c0_29 = arith.constant 0 : index
    %c0_30 = arith.constant 0 : index
    %c256 = arith.constant 256 : index
    %9 = vector.load %arg8[%c0_28, %c0_29, %c0_30, %c256] : memref<2x12x8x320xf32, #tpu.memory_space<vmem>>, vector<2x12x8x64xf32>
    tpu.vector_store %arg8[%c0_28, %c0_29, %c0_30, %c256], %8 {strides = array<i32>} : memref<2x12x8x320xf32, #tpu.memory_space<vmem>>, vector<2x12x8x64xf32>,
    %cst = arith.constant 0.000000e+00 : f32
    %10 = vector.broadcast %cst : f32 to vector<128x64xf32>
    %c0_31 = arith.constant 0 : index
    %c0_32 = arith.constant 0 : index
    %c0_33 = arith.constant 0 : index
    %c0_34 = arith.constant 0 : index
    %11 = vector.load %arg8[%c0_31, %c0_32, %c0_33, %c0_34] : memref<2x12x8x320xf32, #tpu.memory_space<vmem>>, vector<2x8x8x320xf32>
    %12 = vector.shape_cast %11 : vector<2x8x8x320xf32> to vector<128x320xf32>
    %c0_35 = arith.constant 0 : index
    %c0_36 = arith.constant 0 : index
    %c0_37 = arith.constant 0 : index
    %13 = vector.load %arg2[%c0_35, %c0_36, %c0_37] : memref<5x320x64xf32, #tpu.memory_space<vmem>>, vector<1x320x64xf32>
    %14 = vector.shape_cast %13 : vector<1x320x64xf32> to vector<320x64xf32>
    %cst_38 = arith.constant dense<0.000000e+00> : vector<128x64xf32>
    %15 = tpu.matmul %12, %14, %cst_38 {dimension_numbers = #tpu.dot_dimension_numbers<[1], [0], [0], [1], [0, 0, 1, 1], [], []>} : vector<128x320xf32>, vector<320x64xf32>, vector<128x64xf32> -> vector<128x64xf32>
    %16 = arith.addf %10, %15 : vector<128x64xf32>
    %c0_39 = arith.constant 0 : index
    %c1_40 = arith.constant 1 : index
    %c0_41 = arith.constant 0 : index
    %c0_42 = arith.constant 0 : index
    %17 = vector.load %arg8[%c0_39, %c1_40, %c0_41, %c0_42] : memref<2x12x8x320xf32, #tpu.memory_space<vmem>>, vector<2x8x8x320xf32>
    %18 = vector.shape_cast %17 : vector<2x8x8x320xf32> to vector<128x320xf32>
    %c1_43 = arith.constant 1 : index
    %c0_44 = arith.constant 0 : index
    %c0_45 = arith.constant 0 : index
    %19 = vector.load %arg2[%c1_43, %c0_44, %c0_45] : memref<5x320x64xf32, #tpu.memory_space<vmem>>, vector<1x320x64xf32>
    %20 = vector.shape_cast %19 : vector<1x320x64xf32> to vector<320x64xf32>
    %cst_46 = arith.constant dense<0.000000e+00> : vector<128x64xf32>
    %21 = tpu.matmul %18, %20, %cst_46 {dimension_numbers = #tpu.dot_dimension_numbers<[1], [0], [0], [1], [0, 0, 1, 1], [], []>} : vector<128x320xf32>, vector<320x64xf32>, vector<128x64xf32> -> vector<128x64xf32>
    %22 = arith.addf %16, %21 : vector<128x64xf32>
    %c0_47 = arith.constant 0 : index
    %c2_48 = arith.constant 2 : index
    %c0_49 = arith.constant 0 : index
    %c0_50 = arith.constant 0 : index
    %23 = vector.load %arg8[%c0_47, %c2_48, %c0_49, %c0_50] : memref<2x12x8x320xf32, #tpu.memory_space<vmem>>, vector<2x8x8x320xf32>
    %24 = vector.shape_cast %23 : vector<2x8x8x320xf32> to vector<128x320xf32>
    %c2_51 = arith.constant 2 : index
    %c0_52 = arith.constant 0 : index
    %c0_53 = arith.constant 0 : index
    %25 = vector.load %arg2[%c2_51, %c0_52, %c0_53] : memref<5x320x64xf32, #tpu.memory_space<vmem>>, vector<1x320x64xf32>
    %26 = vector.shape_cast %25 : vector<1x320x64xf32> to vector<320x64xf32>
    %cst_54 = arith.constant dense<0.000000e+00> : vector<128x64xf32>
    %27 = tpu.matmul %24, %26, %cst_54 {dimension_numbers = #tpu.dot_dimension_numbers<[1], [0], [0], [1], [0, 0, 1, 1], [], []>} : vector<128x320xf32>, vector<320x64xf32>, vector<128x64xf32> -> vector<128x64xf32>
    %28 = arith.addf %22, %27 : vector<128x64xf32>
    %c0_55 = arith.constant 0 : index
    %c3_56 = arith.constant 3 : index
    %c0_57 = arith.constant 0 : index
    %c0_58 = arith.constant 0 : index
    %29 = vector.load %arg8[%c0_55, %c3_56, %c0_57, %c0_58] : memref<2x12x8x320xf32, #tpu.memory_space<vmem>>, vector<2x8x8x320xf32>
    %30 = vector.shape_cast %29 : vector<2x8x8x320xf32> to vector<128x320xf32>
    %c3_59 = arith.constant 3 : index
    %c0_60 = arith.constant 0 : index
    %c0_61 = arith.constant 0 : index
    %31 = vector.load %arg2[%c3_59, %c0_60, %c0_61] : memref<5x320x64xf32, #tpu.memory_space<vmem>>, vector<1x320x64xf32>
    %32 = vector.shape_cast %31 : vector<1x320x64xf32> to vector<320x64xf32>
    %cst_62 = arith.constant dense<0.000000e+00> : vector<128x64xf32>
    %33 = tpu.matmul %30, %32, %cst_62 {dimension_numbers = #tpu.dot_dimension_numbers<[1], [0], [0], [1], [0, 0, 1, 1], [], []>} : vector<128x320xf32>, vector<320x64xf32>, vector<128x64xf32> -> vector<128x64xf32>
    %34 = arith.addf %28, %33 : vector<128x64xf32>
    %c0_63 = arith.constant 0 : index
    %c4_64 = arith.constant 4 : index
    %c0_65 = arith.constant 0 : index
    %c0_66 = arith.constant 0 : index
    %35 = vector.load %arg8[%c0_63, %c4_64, %c0_65, %c0_66] : memref<2x12x8x320xf32, #tpu.memory_space<vmem>>, vector<2x8x8x320xf32>
    %36 = vector.shape_cast %35 : vector<2x8x8x320xf32> to vector<128x320xf32>
    %c4_67 = arith.constant 4 : index
    %c0_68 = arith.constant 0 : index
    %c0_69 = arith.constant 0 : index
    %37 = vector.load %arg2[%c4_67, %c0_68, %c0_69] : memref<5x320x64xf32, #tpu.memory_space<vmem>>, vector<1x320x64xf32>
    %38 = vector.shape_cast %37 : vector<1x320x64xf32> to vector<320x64xf32>
    %cst_70 = arith.constant dense<0.000000e+00> : vector<128x64xf32>
    %39 = tpu.matmul %36, %38, %cst_70 {dimension_numbers = #tpu.dot_dimension_numbers<[1], [0], [0], [1], [0, 0, 1, 1], [], []>} : vector<128x320xf32>, vector<320x64xf32>, vector<128x64xf32> -> vector<128x64xf32>
    %40 = arith.addf %34, %39 : vector<128x64xf32>
    %c0_71 = arith.constant 0 : index
    %c0_72 = arith.constant 0 : index
    %41 = vector.load %arg3[%c0_71, %c0_72] : memref<1x64xf32, #tpu.memory_space<vmem>>, vector<1x64xf32>
    %42 = vector.broadcast %41 : vector<1x64xf32> to vector<128x64xf32>
    %43 = arith.addf %40, %42 : vector<128x64xf32>
    %cst_73 = arith.constant 0.000000e+00 : f32
    %44 = vector.broadcast %cst_73 : f32 to vector<128x64xf32>
    %45 = arith.maximumf %43, %44 : vector<128x64xf32>
    %cst_74 = arith.constant 0.000000e+00 : f32
    %46 = vector.broadcast %cst_74 : f32 to vector<2x2x24x64xf32>
    %c0_75 = arith.constant 0 : index
    %c0_76 = arith.constant 0 : index
    %c0_77 = arith.constant 0 : index
    %c0_78 = arith.constant 0 : index
    %47 = vector.load %arg9[%c0_75, %c0_76, %c0_77, %c0_78] : memref<2x12x24x64xf32, #tpu.memory_space<vmem>>, vector<2x2x24x64xf32>
    tpu.vector_store %arg9[%c0_75, %c0_76, %c0_77, %c0_78], %46 {strides = array<i32>} : memref<2x12x24x64xf32, #tpu.memory_space<vmem>>, vector<2x2x24x64xf32>,
    %c0_79 = arith.constant 0 : index
    %c10 = arith.constant 10 : index
    %c0_80 = arith.constant 0 : index
    %c0_81 = arith.constant 0 : index
    %48 = vector.load %arg9[%c0_79, %c10, %c0_80, %c0_81] : memref<2x12x24x64xf32, #tpu.memory_space<vmem>>, vector<2x2x24x64xf32>
    tpu.vector_store %arg9[%c0_79, %c10, %c0_80, %c0_81], %46 {strides = array<i32>} : memref<2x12x24x64xf32, #tpu.memory_space<vmem>>, vector<2x2x24x64xf32>,
    %cst_82 = arith.constant 0.000000e+00 : f32
    %49 = vector.broadcast %cst_82 : f32 to vector<2x8x2x64xf32>
    %c0_83 = arith.constant 0 : index
    %c2_84 = arith.constant 2 : index
    %c6 = arith.constant 6 : index
    %c0_85 = arith.constant 0 : index
    %50 = vector.load %arg9[%c0_83, %c2_84, %c6, %c0_85] : memref<2x12x24x64xf32, #tpu.memory_space<vmem>>, vector<2x8x2x64xf32>
    tpu.vector_store %arg9[%c0_83, %c2_84, %c6, %c0_85], %49 {strides = array<i32>} : memref<2x12x24x64xf32, #tpu.memory_space<vmem>>, vector<2x8x2x64xf32>,
    %c0_86 = arith.constant 0 : index
    %c2_87 = arith.constant 2 : index
    %c16 = arith.constant 16 : index
    %c0_88 = arith.constant 0 : index
    %51 = vector.load %arg9[%c0_86, %c2_87, %c16, %c0_88] : memref<2x12x24x64xf32, #tpu.memory_space<vmem>>, vector<2x8x2x64xf32>
    tpu.vector_store %arg9[%c0_86, %c2_87, %c16, %c0_88], %49 {strides = array<i32>} : memref<2x12x24x64xf32, #tpu.memory_space<vmem>>, vector<2x8x2x64xf32>,
    %52 = vector.shape_cast %45 : vector<128x64xf32> to vector<2x8x8x64xf32>
    %c0_89 = arith.constant 0 : index
    %c2_90 = arith.constant 2 : index
    %c8 = arith.constant 8 : index
    %c0_91 = arith.constant 0 : index
    %53 = vector.load %arg9[%c0_89, %c2_90, %c8, %c0_91] : memref<2x12x24x64xf32, #tpu.memory_space<vmem>>, vector<2x8x8x64xf32>
    tpu.vector_store %arg9[%c0_89, %c2_90, %c8, %c0_91], %52 {strides = array<i32>} : memref<2x12x24x64xf32, #tpu.memory_space<vmem>>, vector<2x8x8x64xf32>,
    %c0_92 = arith.constant 0 : index
    %c0_93 = arith.constant 0 : index
    %c6_94 = arith.constant 6 : index
    %c0_95 = arith.constant 0 : index
    %54 = vector.load %arg9[%c0_92, %c0_93, %c6_94, %c0_95] : memref<2x12x24x64xf32, #tpu.memory_space<vmem>>, vector<2x12x8x64xf32>
    %c0_96 = arith.constant 0 : index
    %c0_97 = arith.constant 0 : index
    %c0_98 = arith.constant 0 : index
    %c0_99 = arith.constant 0 : index
    %55 = vector.load %arg8[%c0_96, %c0_97, %c0_98, %c0_99] : memref<2x12x8x320xf32, #tpu.memory_space<vmem>>, vector<2x12x8x64xf32>
    tpu.vector_store %arg8[%c0_96, %c0_97, %c0_98, %c0_99], %54 {strides = array<i32>} : memref<2x12x8x320xf32, #tpu.memory_space<vmem>>, vector<2x12x8x64xf32>,
    %c0_100 = arith.constant 0 : index
    %c0_101 = arith.constant 0 : index
    %c7 = arith.constant 7 : index
    %c0_102 = arith.constant 0 : index
    %56 = vector.load %arg9[%c0_100, %c0_101, %c7, %c0_102] : memref<2x12x24x64xf32, #tpu.memory_space<vmem>>, vector<2x12x8x64xf32>
    %c0_103 = arith.constant 0 : index
    %c0_104 = arith.constant 0 : index
    %c0_105 = arith.constant 0 : index
    %c64_106 = arith.constant 64 : index
    %57 = vector.load %arg8[%c0_103, %c0_104, %c0_105, %c64_106] : memref<2x12x8x320xf32, #tpu.memory_space<vmem>>, vector<2x12x8x64xf32>
    tpu.vector_store %arg8[%c0_103, %c0_104, %c0_105, %c64_106], %56 {strides = array<i32>} : memref<2x12x8x320xf32, #tpu.memory_space<vmem>>, vector<2x12x8x64xf32>,
    %c0_107 = arith.constant 0 : index
    %c0_108 = arith.constant 0 : index
    %c8_109 = arith.constant 8 : index
    %c0_110 = arith.constant 0 : index
    %58 = vector.load %arg9[%c0_107, %c0_108, %c8_109, %c0_110] : memref<2x12x24x64xf32, #tpu.memory_space<vmem>>, vector<2x12x8x64xf32>
    %c0_111 = arith.constant 0 : index
    %c0_112 = arith.constant 0 : index
    %c0_113 = arith.constant 0 : index
    %c128_114 = arith.constant 128 : index
    %59 = vector.load %arg8[%c0_111, %c0_112, %c0_113, %c128_114] : memref<2x12x8x320xf32, #tpu.memory_space<vmem>>, vector<2x12x8x64xf32>
    tpu.vector_store %arg8[%c0_111, %c0_112, %c0_113, %c128_114], %58 {strides = array<i32>} : memref<2x12x8x320xf32, #tpu.memory_space<vmem>>, vector<2x12x8x64xf32>,
    %c0_115 = arith.constant 0 : index
    %c0_116 = arith.constant 0 : index
    %c9 = arith.constant 9 : index
    %c0_117 = arith.constant 0 : index
    %60 = vector.load %arg9[%c0_115, %c0_116, %c9, %c0_117] : memref<2x12x24x64xf32, #tpu.memory_space<vmem>>, vector<2x12x8x64xf32>
    %c0_118 = arith.constant 0 : index
    %c0_119 = arith.constant 0 : index
    %c0_120 = arith.constant 0 : index
    %c192_121 = arith.constant 192 : index
    %61 = vector.load %arg8[%c0_118, %c0_119, %c0_120, %c192_121] : memref<2x12x8x320xf32, #tpu.memory_space<vmem>>, vector<2x12x8x64xf32>
    tpu.vector_store %arg8[%c0_118, %c0_119, %c0_120, %c192_121], %60 {strides = array<i32>} : memref<2x12x8x320xf32, #tpu.memory_space<vmem>>, vector<2x12x8x64xf32>,
    %c0_122 = arith.constant 0 : index
    %c0_123 = arith.constant 0 : index
    %c10_124 = arith.constant 10 : index
    %c0_125 = arith.constant 0 : index
    %62 = vector.load %arg9[%c0_122, %c0_123, %c10_124, %c0_125] : memref<2x12x24x64xf32, #tpu.memory_space<vmem>>, vector<2x12x8x64xf32>
    %c0_126 = arith.constant 0 : index
    %c0_127 = arith.constant 0 : index
    %c0_128 = arith.constant 0 : index
    %c256_129 = arith.constant 256 : index
    %63 = vector.load %arg8[%c0_126, %c0_127, %c0_128, %c256_129] : memref<2x12x8x320xf32, #tpu.memory_space<vmem>>, vector<2x12x8x64xf32>
    tpu.vector_store %arg8[%c0_126, %c0_127, %c0_128, %c256_129], %62 {strides = array<i32>} : memref<2x12x8x320xf32, #tpu.memory_space<vmem>>, vector<2x12x8x64xf32>,
    %cst_130 = arith.constant 0.000000e+00 : f32
    %64 = vector.broadcast %cst_130 : f32 to vector<128x64xf32>
    %c0_131 = arith.constant 0 : index
    %c0_132 = arith.constant 0 : index
    %c0_133 = arith.constant 0 : index
    %c0_134 = arith.constant 0 : index
    %65 = vector.load %arg8[%c0_131, %c0_132, %c0_133, %c0_134] : memref<2x12x8x320xf32, #tpu.memory_space<vmem>>, vector<2x8x8x320xf32>
    %66 = vector.shape_cast %65 : vector<2x8x8x320xf32> to vector<128x320xf32>
    %c0_135 = arith.constant 0 : index
    %c0_136 = arith.constant 0 : index
    %c0_137 = arith.constant 0 : index
    %67 = vector.load %arg4[%c0_135, %c0_136, %c0_137] : memref<5x320x64xf32, #tpu.memory_space<vmem>>, vector<1x320x64xf32>
    %68 = vector.shape_cast %67 : vector<1x320x64xf32> to vector<320x64xf32>
    %cst_138 = arith.constant dense<0.000000e+00> : vector<128x64xf32>
    %69 = tpu.matmul %66, %68, %cst_138 {dimension_numbers = #tpu.dot_dimension_numbers<[1], [0], [0], [1], [0, 0, 1, 1], [], []>} : vector<128x320xf32>, vector<320x64xf32>, vector<128x64xf32> -> vector<128x64xf32>
    %70 = arith.addf %64, %69 : vector<128x64xf32>
    %c0_139 = arith.constant 0 : index
    %c1_140 = arith.constant 1 : index
    %c0_141 = arith.constant 0 : index
    %c0_142 = arith.constant 0 : index
    %71 = vector.load %arg8[%c0_139, %c1_140, %c0_141, %c0_142] : memref<2x12x8x320xf32, #tpu.memory_space<vmem>>, vector<2x8x8x320xf32>
    %72 = vector.shape_cast %71 : vector<2x8x8x320xf32> to vector<128x320xf32>
    %c1_143 = arith.constant 1 : index
    %c0_144 = arith.constant 0 : index
    %c0_145 = arith.constant 0 : index
    %73 = vector.load %arg4[%c1_143, %c0_144, %c0_145] : memref<5x320x64xf32, #tpu.memory_space<vmem>>, vector<1x320x64xf32>
    %74 = vector.shape_cast %73 : vector<1x320x64xf32> to vector<320x64xf32>
    %cst_146 = arith.constant dense<0.000000e+00> : vector<128x64xf32>
    %75 = tpu.matmul %72, %74, %cst_146 {dimension_numbers = #tpu.dot_dimension_numbers<[1], [0], [0], [1], [0, 0, 1, 1], [], []>} : vector<128x320xf32>, vector<320x64xf32>, vector<128x64xf32> -> vector<128x64xf32>
    %76 = arith.addf %70, %75 : vector<128x64xf32>
    %c0_147 = arith.constant 0 : index
    %c2_148 = arith.constant 2 : index
    %c0_149 = arith.constant 0 : index
    %c0_150 = arith.constant 0 : index
    %77 = vector.load %arg8[%c0_147, %c2_148, %c0_149, %c0_150] : memref<2x12x8x320xf32, #tpu.memory_space<vmem>>, vector<2x8x8x320xf32>
    %78 = vector.shape_cast %77 : vector<2x8x8x320xf32> to vector<128x320xf32>
    %c2_151 = arith.constant 2 : index
    %c0_152 = arith.constant 0 : index
    %c0_153 = arith.constant 0 : index
    %79 = vector.load %arg4[%c2_151, %c0_152, %c0_153] : memref<5x320x64xf32, #tpu.memory_space<vmem>>, vector<1x320x64xf32>
    %80 = vector.shape_cast %79 : vector<1x320x64xf32> to vector<320x64xf32>
    %cst_154 = arith.constant dense<0.000000e+00> : vector<128x64xf32>
    %81 = tpu.matmul %78, %80, %cst_154 {dimension_numbers = #tpu.dot_dimension_numbers<[1], [0], [0], [1], [0, 0, 1, 1], [], []>} : vector<128x320xf32>, vector<320x64xf32>, vector<128x64xf32> -> vector<128x64xf32>
    %82 = arith.addf %76, %81 : vector<128x64xf32>
    %c0_155 = arith.constant 0 : index
    %c3_156 = arith.constant 3 : index
    %c0_157 = arith.constant 0 : index
    %c0_158 = arith.constant 0 : index
    %83 = vector.load %arg8[%c0_155, %c3_156, %c0_157, %c0_158] : memref<2x12x8x320xf32, #tpu.memory_space<vmem>>, vector<2x8x8x320xf32>
    %84 = vector.shape_cast %83 : vector<2x8x8x320xf32> to vector<128x320xf32>
    %c3_159 = arith.constant 3 : index
    %c0_160 = arith.constant 0 : index
    %c0_161 = arith.constant 0 : index
    %85 = vector.load %arg4[%c3_159, %c0_160, %c0_161] : memref<5x320x64xf32, #tpu.memory_space<vmem>>, vector<1x320x64xf32>
    %86 = vector.shape_cast %85 : vector<1x320x64xf32> to vector<320x64xf32>
    %cst_162 = arith.constant dense<0.000000e+00> : vector<128x64xf32>
    %87 = tpu.matmul %84, %86, %cst_162 {dimension_numbers = #tpu.dot_dimension_numbers<[1], [0], [0], [1], [0, 0, 1, 1], [], []>} : vector<128x320xf32>, vector<320x64xf32>, vector<128x64xf32> -> vector<128x64xf32>
    %88 = arith.addf %82, %87 : vector<128x64xf32>
    %c0_163 = arith.constant 0 : index
    %c4_164 = arith.constant 4 : index
    %c0_165 = arith.constant 0 : index
    %c0_166 = arith.constant 0 : index
    %89 = vector.load %arg8[%c0_163, %c4_164, %c0_165, %c0_166] : memref<2x12x8x320xf32, #tpu.memory_space<vmem>>, vector<2x8x8x320xf32>
    %90 = vector.shape_cast %89 : vector<2x8x8x320xf32> to vector<128x320xf32>
    %c4_167 = arith.constant 4 : index
    %c0_168 = arith.constant 0 : index
    %c0_169 = arith.constant 0 : index
    %91 = vector.load %arg4[%c4_167, %c0_168, %c0_169] : memref<5x320x64xf32, #tpu.memory_space<vmem>>, vector<1x320x64xf32>
    %92 = vector.shape_cast %91 : vector<1x320x64xf32> to vector<320x64xf32>
    %cst_170 = arith.constant dense<0.000000e+00> : vector<128x64xf32>
    %93 = tpu.matmul %90, %92, %cst_170 {dimension_numbers = #tpu.dot_dimension_numbers<[1], [0], [0], [1], [0, 0, 1, 1], [], []>} : vector<128x320xf32>, vector<320x64xf32>, vector<128x64xf32> -> vector<128x64xf32>
    %94 = arith.addf %88, %93 : vector<128x64xf32>
    %c0_171 = arith.constant 0 : index
    %c0_172 = arith.constant 0 : index
    %95 = vector.load %arg5[%c0_171, %c0_172] : memref<1x64xf32, #tpu.memory_space<vmem>>, vector<1x64xf32>
    %96 = vector.broadcast %95 : vector<1x64xf32> to vector<128x64xf32>
    %97 = arith.addf %94, %96 : vector<128x64xf32>
    %98 = vector.shape_cast %97 : vector<128x64xf32> to vector<2x8x8x64xf32>
    %c0_173 = arith.constant 0 : index
    %c0_174 = arith.constant 0 : index
    %c0_175 = arith.constant 0 : index
    %c0_176 = arith.constant 0 : index
    %99 = vector.load %arg6[%c0_173, %c0_174, %c0_175, %c0_176] : memref<2x8x8x64xf32, #tpu.memory_space<vmem>>, vector<2x8x8x64xf32>
    %100 = arith.addf %98, %99 : vector<2x8x8x64xf32>
    %c0_177 = arith.constant 0 : index
    %c0_178 = arith.constant 0 : index
    %c0_179 = arith.constant 0 : index
    %c0_180 = arith.constant 0 : index
    %101 = vector.load %arg7[%c0_177, %c0_178, %c0_179, %c0_180] : memref<2x8x8x64xf32, #tpu.memory_space<vmem>>, vector<2x8x8x64xf32>
    tpu.vector_store %arg7[%c0_177, %c0_178, %c0_179, %c0_180], %100 {strides = array<i32>} : memref<2x8x8x64xf32, #tpu.memory_space<vmem>>, vector<2x8x8x64xf32>,
    return
  }
  func.func @transform_0(%arg0: i32) -> (i32, i32, i32, i32) {
    %c0_i32 = arith.constant 0 : i32
    %c0_i32_0 = arith.constant 0 : i32
    %c0_i32_1 = arith.constant 0 : i32
    %c0_i32_2 = arith.constant 0 : i32
    return %arg0, %c0_i32, %c0_i32_0, %c0_i32_1 : i32, i32, i32, i32
  }
  func.func @transform_1(%arg0: i32) -> (i32, i32, i32) {
    %c0_i32 = arith.constant 0 : i32
    %c0_i32_0 = arith.constant 0 : i32
    %c0_i32_1 = arith.constant 0 : i32
    %c0_i32_2 = arith.constant 0 : i32
    return %c0_i32, %c0_i32_0, %c0_i32_1 : i32, i32, i32
  }
  func.func @transform_2(%arg0: i32) -> (i32, i32) {
    %c0_i32 = arith.constant 0 : i32
    %c0_i32_0 = arith.constant 0 : i32
    %c0_i32_1 = arith.constant 0 : i32
    return %c0_i32, %c0_i32_0 : i32, i32
  }
  func.func @transform_3(%arg0: i32) -> (i32, i32, i32) {
    %c0_i32 = arith.constant 0 : i32
    %c0_i32_0 = arith.constant 0 : i32
    %c0_i32_1 = arith.constant 0 : i32
    %c0_i32_2 = arith.constant 0 : i32
    return %c0_i32, %c0_i32_0, %c0_i32_1 : i32, i32, i32
  }
  func.func @transform_4(%arg0: i32) -> (i32, i32) {
    %c0_i32 = arith.constant 0 : i32
    %c0_i32_0 = arith.constant 0 : i32
    %c0_i32_1 = arith.constant 0 : i32
    return %c0_i32, %c0_i32_0 : i32, i32
  }
  func.func @transform_5(%arg0: i32) -> (i32, i32, i32, i32) {
    %c0_i32 = arith.constant 0 : i32
    %c0_i32_0 = arith.constant 0 : i32
    %c0_i32_1 = arith.constant 0 : i32
    %c0_i32_2 = arith.constant 0 : i32
    return %arg0, %c0_i32, %c0_i32_0, %c0_i32_1 : i32, i32, i32, i32
  }
  func.func @transform_6(%arg0: i32) -> (i32, i32, i32, i32) {
    %c0_i32 = arith.constant 0 : i32
    %c0_i32_0 = arith.constant 0 : i32
    %c0_i32_1 = arith.constant 0 : i32
    %c0_i32_2 = arith.constant 0 : i32
    return %arg0, %c0_i32, %c0_i32_0, %c0_i32_1 : i32, i32, i32, i32
  }
}

</mosaic_0001>

<llo_original>
// kernel: resblock_pallas.1
$region0: #{resblock_pallas.1}
  #allocation0 [shape = 'u32[]', space=smem, size = 0x4, offset = 0x4, fixed_abs, tag = 'smem constant byte address 0x4 - core index']
  #allocation1 [shape = 'u32[144,128]{1,0:T(1,128)}', space=vmem, size = 0x12000, scoped, tag = 'internal scratch']
  #allocation2 [shape = 'f32[2,12,8,320]{3,2,1,0:T(8,128)}', space=vmem, size = 0x48000, scoped, tag = 'scratch operand']
  #allocation3 [shape = 'f32[2,12,24,64]{3,2,1,0:T(8,128)}', space=vmem, size = 0x48000, scoped, tag = 'scratch operand']
  %s0 = inlined_call_operand.vmem [shape: f32[4,12,16,64], index: 0, kind: input, shape index: {}]
  %s1 = inlined_call_operand.hbm [shape: f32[5,320,64], index: 1, kind: input, shape index: {}]
  %s2 = inlined_call_operand.vmem [shape: f32[1,64], index: 2, kind: input, shape index: {}]
  %s3 = inlined_call_operand.hbm [shape: f32[5,320,64], index: 3, kind: input, shape index: {}]
  %s4 = inlined_call_operand.vmem [shape: f32[1,64], index: 4, kind: input, shape index: {}]
  %s5 = inlined_call_operand.vmem [shape: f32[4,8,8,64], index: 5, kind: input, shape index: {}]
  %s6 = inlined_call_operand.hbm [shape: f32[4,8,8,64], index: 6, kind: output, shape index: {}]
  %s7 = sld [smem:[#allocation0]]
  $region65: #{resblock_pallas.1} parent=0
    _
  %s9 = ssub.s32 1, %s7
  %s10 = scalar_select 0, %s9, %s7
  $region1: #{resblock_pallas.1} parent=0
    #allocation4 [shape = 'u8[819200]{0}', space=vmem, size = 0xc8000, scoped, tag = 'input window, operand 1, single buffered']
    #allocation5 [shape = 's32[2]{0}', space=sflag, size = 0x8, scoped, tag = 'scoped memory for resblock_pallas.1']
    #allocation6 [shape = 's32[2]{0}', space=sflag, size = 0x8, scoped, tag = 'scoped memory for resblock_pallas.1']
    #allocation7 [shape = 'u8[819200]{0}', space=vmem, size = 0xc8000, scoped, tag = 'input window, operand 3, single buffered']
    #allocation8 [shape = 's32[1]{0}', space=sflag, size = 0x4, scoped, tag = 'scoped memory for resblock_pallas.1']
    #allocation9 [shape = 'u8[131072]{0}', space=vmem, size = 0x20000, scoped, tag = 'output window, operand 0']
    %11 = vsyncpa [#allocation5], 0
    %12 = vsyncpa [#allocation8], 0
    %13 = vsyncpa [#allocation6], 0
    %s14 = scalar_lea.sflag [#allocation6], 1
    %15 = vsyncpa %s14, 0
    loop: start=0, step=1, limit=4
    $region2: #{resblock_pallas.1} parent=1 // loop_pre_header
      _
    $region3: #{resblock_pallas.1} parent=1 // loop_header
      %s17 = sphi 0, %s21
      %p18 = scmp.ge.s32.totalorder %s17, 4
      %s27 = sphi 0, %s29
      %s30 = sphi 0, %s27
      %s31 = sphi 0, %s30
      %s47 = sphi 0, %s31
      %s51 = sphi 0, %s51
      %s53 = sphi 0, %s51
      %s54 = sphi 0, %s53
      %s68 = sphi 0, %s54
      %s72 = sphi 0, %s72
      %s74 = sphi 0, %s72
      %s75 = sphi 0, %s74
      %s89 = sphi 0, %s75
      %s93 = sphi 0, %s93
      %s95 = sphi 0, %s93
      %s96 = sphi 0, %s95
      %s110 = sphi 0, %s96
      %s114 = sphi 0, %s114
      %s116 = sphi 0, %s114
      %s117 = sphi 0, %s116
      %s131 = sphi 0, %s117
      %s137 = sphi 0, %s139
      %s140 = sphi 0, %s137
      %s141 = sphi 0, %s140
      %s157 = sphi 0, %s141
      %s163 = sphi 0, %s165
      %s166 = sphi 0, %s163
      %s167 = sphi 0, %s166
      %s183 = sphi 0, %s167
    $region4: #{resblock_pallas.1} parent=1 // loop_header_branch
      %20 = sbr.rel (%p18) target = $region8
    $region5: #{resblock_pallas.1} parent=1 // loop_body
      %s22 = ssub.s32 %s17, 1
      %s23 = ssub.s32 %s17, 2
      %s24 = sadd.s32 %s17, 1
      %s25 = ssub.s32 %s17, %s24
      %p26 = scmp.eq.s32.totalorder %s25, 0
      %s28 = sadd.s32 %s27, 1
      %s29 = scalar_select %p26, %s27, %s28
      %p32 = pneg %p26
      %p33 = scmp.eq.s32.totalorder %s17, 1
      %p34 = por %p32, %p33
      %p35 = scmp.ne.s32.totalorder %s27, %s30
      %p36 = scmp.eq.s32.totalorder %s17, 0
      %p37 = por %p35, %p36
      %p38 = scmp.ne.s32.totalorder %s27, %s30
      %p39 = scmp.eq.s32.totalorder %s22, 1
      %p40 = por %p38, %p39
      %p41 = scmp.ne.s32.totalorder %s30, %s31
      %p42 = scmp.eq.s32.totalorder %s22, 0
      %p43 = por %p41, %p42
      %p44 = scmp.ne.s32.totalorder %s30, %s31
      %p45 = scmp.eq.s32.totalorder %s23, 1
      %p46 = por %p44, %p45
      %p48 = scmp.ne.s32.totalorder %s31, %s47
      %p49 = scmp.eq.s32.totalorder %s23, 0
      %p50 = por %p48, %p49
      %s52 = sadd.s32 %s51, 1
      %p55 = scmp.eq.s32.totalorder %s17, 1
      %p56 = scmp.ne.s32.totalorder %s51, %s53
      %p57 = scmp.eq.s32.totalorder %s17, 0
      %p58 = por %p56, %p57
      %p59 = scmp.ne.s32.totalorder %s51, %s53
      %p60 = scmp.eq.s32.totalorder %s22, 1
      %p61 = por %p59, %p60
      %p62 = scmp.ne.s32.totalorder %s53, %s54
      %p63 = scmp.eq.s32.totalorder %s22, 0
      %p64 = por %p62, %p63
      %p65 = scmp.ne.s32.totalorder %s53, %s54
      %p66 = scmp.eq.s32.totalorder %s23, 1
      %p67 = por %p65, %p66
      %p69 = scmp.ne.s32.totalorder %s54, %s68
      %p70 = scmp.eq.s32.totalorder %s23, 0
      %p71 = por %p69, %p70
      %s73 = sadd.s32 %s72, 1
      %p76 = scmp.eq.s32.totalorder %s17, 1
      %p77 = scmp.ne.s32.totalorder %s72, %s74
      %p78 = scmp.eq.s32.totalorder %s17, 0
      %p79 = por %p77, %p78
      %p80 = scmp.ne.s32.totalorder %s72, %s74
      %p81 = scmp.eq.s32.totalorder %s22, 1
      %p82 = por %p80, %p81
      %p83 = scmp.ne.s32.totalorder %s74, %s75
      %p84 = scmp.eq.s32.totalorder %s22, 0
      %p85 = por %p83, %p84
      %p86 = scmp.ne.s32.totalorder %s74, %s75
      %p87 = scmp.eq.s32.totalorder %s23, 1
      %p88 = por %p86, %p87
      %p90 = scmp.ne.s32.totalorder %s75, %s89
      %p91 = scmp.eq.s32.totalorder %s23, 0
      %p92 = por %p90, %p91
      %s94 = sadd.s32 %s93, 1
      %p97 = scmp.eq.s32.totalorder %s17, 1
      %p98 = scmp.ne.s32.totalorder %s93, %s95
      %p99 = scmp.eq.s32.totalorder %s17, 0
      %p100 = por %p98, %p99
      %p101 = scmp.ne.s32.totalorder %s93, %s95
      %p102 = scmp.eq.s32.totalorder %s22, 1
      %p103 = por %p101, %p102
      %p104 = scmp.ne.s32.totalorder %s95, %s96
      %p105 = scmp.eq.s32.totalorder %s22, 0
      %p106 = por %p104, %p105
      %p107 = scmp.ne.s32.totalorder %s95, %s96
      %p108 = scmp.eq.s32.totalorder %s23, 1
      %p109 = por %p107, %p108
      %p111 = scmp.ne.s32.totalorder %s96, %s110
      %p112 = scmp.eq.s32.totalorder %s23, 0
      %p113 = por %p111, %p112
      %s115 = sadd.s32 %s114, 1
      %p118 = scmp.eq.s32.totalorder %s17, 1
      %p119 = scmp.ne.s32.totalorder %s114, %s116
      %p120 = scmp.eq.s32.totalorder %s17, 0
      %p121 = por %p119, %p120
      %p122 = scmp.ne.s32.totalorder %s114, %s116
      %p123 = scmp.eq.s32.totalorder %s22, 1
      %p124 = por %p122, %p123
      %p125 = scmp.ne.s32.totalorder %s116, %s117
      %p126 = scmp.eq.s32.totalorder %s22, 0
      %p127 = por %p125, %p126
      %p128 = scmp.ne.s32.totalorder %s116, %s117
      %p129 = scmp.eq.s32.totalorder %s23, 1
      %p130 = por %p128, %p129
      %p132 = scmp.ne.s32.totalorder %s117, %s131
      %p133 = scmp.eq.s32.totalorder %s23, 0
      %p134 = por %p132, %p133
      %s135 = ssub.s32 %s17, %s24
      %p136 = scmp.eq.s32.totalorder %s135, 0
      %s138 = sadd.s32 %s137, 1
      %s139 = scalar_select %p136, %s137, %s138
      %p142 = pneg %p136
      %p143 = scmp.eq.s32.totalorder %s17, 1
      %p144 = por %p142, %p143
      %p145 = scmp.ne.s32.totalorder %s137, %s140
      %p146 = scmp.eq.s32.totalorder %s17, 0
      %p147 = por %p145, %p146
      %p148 = scmp.ne.s32.totalorder %s137, %s140
      %p149 = scmp.eq.s32.totalorder %s22, 1
      %p150 = por %p148, %p149
      %p151 = scmp.ne.s32.totalorder %s140, %s141
      %p152 = scmp.eq.s32.totalorder %s22, 0
      %p153 = por %p151, %p152
      %p154 = scmp.ne.s32.totalorder %s140, %s141
      %p155 = scmp.eq.s32.totalorder %s23, 1
      %p156 = por %p154, %p155
      %p158 = scmp.ne.s32.totalorder %s141, %s157
      %p159 = scmp.eq.s32.totalorder %s23, 0
      %p160 = por %p158, %p159
      %s161 = ssub.s32 %s17, %s24
      %p162 = scmp.eq.s32.totalorder %s161, 0
      %s164 = sadd.s32 %s163, 1
      %s165 = scalar_select %p162, %s163, %s164
      %p168 = pneg %p162
      %p169 = scmp.eq.s32.totalorder %s17, 1
      %p170 = por %p168, %p169
      %p171 = scmp.ne.s32.totalorder %s163, %s166
      %p172 = scmp.eq.s32.totalorder %s17, 0
      %p173 = por %p171, %p172
      %p174 = scmp.ne.s32.totalorder %s163, %s166
      %p175 = scmp.eq.s32.totalorder %s22, 1
      %p176 = por %p174, %p175
      %p177 = scmp.ne.s32.totalorder %s166, %s167
      %p178 = scmp.eq.s32.totalorder %s22, 0
      %p179 = por %p177, %p178
      %p180 = scmp.ne.s32.totalorder %s166, %s167
      %p181 = scmp.eq.s32.totalorder %s23, 1
      %p182 = por %p180, %p181
      %p184 = scmp.ne.s32.totalorder %s167, %s183
      %p185 = scmp.eq.s32.totalorder %s23, 0
      %p186 = por %p184, %p185
      %p187 = scmp.le.s32.totalorder 1, %s17
      %p188 = scmp.lt.s32.totalorder %s17, 3
      %p189 = pnand %p187, %p188
      %p190 = pneg %p189
      // Predicated region
      $region9: #{resblock_pallas.1} parent=5 // pred_check
        _
      $region10: #{resblock_pallas.1} parent=5 // pred_check_branch
        %192 = sbr.rel (%p189) target = $region12
      $region11: #{resblock_pallas.1} parent=5 // pred_region
        %s193 = ssub.s32 %s17, 1
        // Predicated region
        $region13: #{resblock_pallas.1} parent=11 // pred_check
          %p194 = pneg %p64
        $region14: #{resblock_pallas.1} parent=11 // pred_check_branch
          %196 = sbr.rel (%p194) target = $region16
        $region15: #{resblock_pallas.1} parent=11 // pred_region
          %s198 = ssub.s32 25600, 25600
          %199 = vsyncadd [#allocation5], %s198
          %s200 = sshll.u32 [#allocation4], 4
          %s201 = int_to_ptr.vmem [resolvable:$true] %s200
          %206 = dma.hbm_to_vmem [thread:$0]  %s1, 25600, %s201, [#allocation5], 128, 128, 8
        $region16: #{resblock_pallas.1} parent=11 // pred_fallthru
          _
        // Predicated region
        $region17: #{resblock_pallas.1} parent=11 // pred_check
          %p207 = pneg %p85
        $region18: #{resblock_pallas.1} parent=11 // pred_check_branch
          %209 = sbr.rel (%p207) target = $region20
        $region19: #{resblock_pallas.1} parent=11 // pred_region
          _
        $region20: #{resblock_pallas.1} parent=11 // pred_fallthru
          _
        // Predicated region
        $region21: #{resblock_pallas.1} parent=11 // pred_check
          %p210 = pneg %p106
        $region22: #{resblock_pallas.1} parent=11 // pred_check_branch
          %212 = sbr.rel (%p210) target = $region24
        $region23: #{resblock_pallas.1} parent=11 // pred_region
          %s214 = ssub.s32 25600, 25600
          %215 = vsyncadd [#allocation8], %s214
          %s216 = sshll.u32 [#allocation7], 4
          %s217 = int_to_ptr.vmem [resolvable:$true] %s216
          %222 = dma.hbm_to_vmem [thread:$0]  %s3, 25600, %s217, [#allocation8], 128, 128, 8
        $region24: #{resblock_pallas.1} parent=11 // pred_fallthru
          _
        // Predicated region
        $region25: #{resblock_pallas.1} parent=11 // pred_check
          %p223 = pneg %p127
        $region26: #{resblock_pallas.1} parent=11 // pred_check_branch
          %225 = sbr.rel (%p223) target = $region28
        $region27: #{resblock_pallas.1} parent=11 // pred_region
          _
        $region28: #{resblock_pallas.1} parent=11 // pred_fallthru
          _
      $region12: #{resblock_pallas.1} parent=5 // pred_fallthru
        _
      %p226 = scmp.lt.s32.totalorder %s17, 2
      // Predicated region
      $region29: #{resblock_pallas.1} parent=5 // pred_check
        %p227 = pneg %p226
      $region30: #{resblock_pallas.1} parent=5 // pred_check_branch
        %229 = sbr.rel (%p227) target = $region32
      $region31: #{resblock_pallas.1} parent=5 // pred_region
        // Predicated region
        $region33: #{resblock_pallas.1} parent=31 // pred_check
          %p230 = pneg %p37
        $region34: #{resblock_pallas.1} parent=31 // pred_check_branch
          %232 = sbr.rel (%p230) target = $region36
        $region35: #{resblock_pallas.1} parent=31 // pred_region
          %s233 = smul.u32 2, %s17
          %p234 = scmp.lt.s32.totalorder %s233, 3
          %s235 = scalar_select %p234, %s233, 3
          %s236 = smul.addr %s235, 24
          %s237 = smul.addr %s236, 8
          %s238 = scalar_lea.vmem %s0, %s237
          %s239 = smul.u32 2, %s17
        $region36: #{resblock_pallas.1} parent=31 // pred_fallthru
          _
        // Predicated region
        $region37: #{resblock_pallas.1} parent=31 // pred_check
          %p240 = pneg %p147
        $region38: #{resblock_pallas.1} parent=31 // pred_check_branch
          %242 = sbr.rel (%p240) target = $region40
        $region39: #{resblock_pallas.1} parent=31 // pred_region
          %s243 = smul.u32 2, %s17
          %p244 = scmp.lt.s32.totalorder %s243, 3
          %s245 = scalar_select %p244, %s243, 3
          %s246 = smul.addr %s245, 8
          %s247 = smul.addr %s246, 8
          %s248 = scalar_lea.vmem %s5, %s247
          %s249 = smul.u32 2, %s17
        $region40: #{resblock_pallas.1} parent=31 // pred_fallthru
          _
      $region32: #{resblock_pallas.1} parent=5 // pred_fallthru
        _
      %p250 = scmp.le.s32.totalorder 1, %s17
      %p251 = scmp.lt.s32.totalorder %s17, 3
      %p252 = pnand %p250, %p251
      %p253 = pneg %p252
      // Predicated region
      $region41: #{resblock_pallas.1} parent=5 // pred_check
        _
      $region42: #{resblock_pallas.1} parent=5 // pred_check_branch
        %255 = sbr.rel (%p252) target = $region44
      $region43: #{resblock_pallas.1} parent=5 // pred_region
        %s256 = ssub.s32 %s17, 1
        // Predicated region
        $region45: #{resblock_pallas.1} parent=43 // pred_check
          %p257 = pneg %p64
        $region46: #{resblock_pallas.1} parent=43 // pred_check_branch
          %259 = sbr.rel (%p257) target = $region48
        $region47: #{resblock_pallas.1} parent=43 // pred_region
          %260 = dma.done [#allocation5], 25600
        $region48: #{resblock_pallas.1} parent=43 // pred_fallthru
          _
        // Predicated region
        $region49: #{resblock_pallas.1} parent=43 // pred_check
          %p261 = pneg %p106
        $region50: #{resblock_pallas.1} parent=43 // pred_check_branch
          %263 = sbr.rel (%p261) target = $region52
        $region51: #{resblock_pallas.1} parent=43 // pred_region
          %264 = dma.done [#allocation8], 25600
        $region52: #{resblock_pallas.1} parent=43 // pred_fallthru
          _
        %s265 = smul.u32 2, %s22
        %p266 = scmp.lt.s32.totalorder %s265, 3
        %s267 = scalar_select %p266, %s265, 3
        %s268 = smul.addr %s267, 24
        %s269 = smul.addr %s268, 8
        %s270 = scalar_lea.vmem %s0, %s269
        %p271 = pneg %p43
        %p272 = pneg %p40
        %p273 = pneg %p64
        %p274 = pneg %p61
        %p275 = pneg %p85
        %p276 = pneg %p82
        %p277 = pneg %p106
        %p278 = pneg %p103
        %p279 = pneg %p127
        %p280 = pneg %p124
        %s281 = smul.u32 2, %s22
        %p282 = scmp.lt.s32.totalorder %s281, 3
        %s283 = scalar_select %p282, %s281, 3
        %s284 = smul.addr %s283, 8
        %s285 = smul.addr %s284, 8
        %s286 = scalar_lea.vmem %s5, %s285
        %p287 = pneg %p153
        %p288 = pneg %p150
        %p289 = pneg %p179
        %p290 = pneg %p176
        %s291 = sand.u32 %s166, 1
        %s292 = scalar_lea.sflag [#allocation6], %s291
        %s293 = sand.u32 %s166, 1
        %s294 = smul.addr %s293, 128
        %s295 = scalar_lea.vmem [#allocation9], %s294
        %s296 = smul.u32 2, %s22
        %p297 = scmp.lt.s32.totalorder %s296, 3
        %s298 = scalar_select %p297, %s296, 3
        %s299 = smul.addr %s298, 24
        %s300 = smul.addr %s299, 8
        %s301 = scalar_lea.vmem %s0, %s300
        %s302 = smul.u32 2, %s22
        %s303 = smul.u32 2, %s22
        %p304 = scmp.lt.s32.totalorder %s303, 3
        %s305 = scalar_select %p304, %s303, 3
        %s306 = smul.addr %s305, 8
        %s307 = smul.addr %s306, 8
        %s308 = scalar_lea.vmem %s5, %s307
        %s309 = smul.u32 2, %s22
        %s310 = smul.u32 2, %s22
        %v311 = vld [vmem:[%s301] sm:$0xff]
        %v312 = vld [vmem:[%s301 + $0x10] sm:$0xff]
        %v313 = vld [vmem:[%s301 + $0x20] sm:$0xff]
        %v314 = vld [vmem:[%s301 + $0x30] sm:$0xff]
        %v315 = vld [vmem:[%s301 + $0x40] sm:$0xff]
        %v316 = vld [vmem:[%s301 + $0x50] sm:$0xff]
        %v317 = vld [vmem:[%s301 + $0x60] sm:$0xff]
        %v318 = vld [vmem:[%s301 + $0x70] sm:$0xff]
        %v319 = vld [vmem:[%s301 + $0x80] sm:$0xff]
        %v320 = vld [vmem:[%s301 + $0x90] sm:$0xff]
        %v321 = vld [vmem:[%s301 + $0xa0] sm:$0xff]
        %v322 = vld [vmem:[%s301 + $0xb0] sm:$0xff]
        %v323 = vld [vmem:[%s301 + $0xc0] sm:$0xff]
        %v324 = vld [vmem:[%s301 + $0xd0] sm:$0xff]
        %v325 = vld [vmem:[%s301 + $0xe0] sm:$0xff]
        %v326 = vld [vmem:[%s301 + $0xf0] sm:$0xff]
        %v327 = vld [vmem:[%s301 + $0x100] sm:$0xff]
        %v328 = vld [vmem:[%s301 + $0x110] sm:$0xff]
        %v329 = vld [vmem:[%s301 + $0x120] sm:$0xff]
        %v330 = vld [vmem:[%s301 + $0x130] sm:$0xff]
        %v331 = vld [vmem:[%s301 + $0x140] sm:$0xff]
        %v332 = vld [vmem:[%s301 + $0x150] sm:$0xff]
        %v333 = vld [vmem:[%s301 + $0x160] sm:$0xff]
        %v334 = vld [vmem:[%s301 + $0x170] sm:$0xff]
        %vm335 = vcmask 523264
        %336 = vst.msk [vmem:[#allocation2] sm:$0xff] %vm335, %v311
        %337 = vst.msk [vmem:[#allocation2 + $0x18] sm:$0xff] %vm335, %v312
        %338 = vst.msk [vmem:[#allocation2 + $0x30] sm:$0xff] %vm335, %v313
        %339 = vst.msk [vmem:[#allocation2 + $0x48] sm:$0xff] %vm335, %v314
        %340 = vst.msk [vmem:[#allocation2 + $0x60] sm:$0xff] %vm335, %v315
        %341 = vst.msk [vmem:[#allocation2 + $0x78] sm:$0xff] %vm335, %v316
        %342 = vst.msk [vmem:[#allocation2 + $0x90] sm:$0xff] %vm335, %v317
        %343 = vst.msk [vmem:[#allocation2 + $0xa8] sm:$0xff] %vm335, %v318
        %344 = vst.msk [vmem:[#allocation2 + $0xc0] sm:$0xff] %vm335, %v319
        %345 = vst.msk [vmem:[#allocation2 + $0xd8] sm:$0xff] %vm335, %v320
        %346 = vst.msk [vmem:[#allocation2 + $0xf0] sm:$0xff] %vm335, %v321
        %347 = vst.msk [vmem:[#allocation2 + $0x108] sm:$0xff] %vm335, %v322
        %348 = vst.msk [vmem:[#allocation2 + $0x120] sm:$0xff] %vm335, %v323
        %349 = vst.msk [vmem:[#allocation2 + $0x138] sm:$0xff] %vm335, %v324
        %350 = vst.msk [vmem:[#allocation2 + $0x150] sm:$0xff] %vm335, %v325
        %351 = vst.msk [vmem:[#allocation2 + $0x168] sm:$0xff] %vm335, %v326
        %352 = vst.msk [vmem:[#allocation2 + $0x180] sm:$0xff] %vm335, %v327
        %353 = vst.msk [vmem:[#allocation2 + $0x198] sm:$0xff] %vm335, %v328
        %354 = vst.msk [vmem:[#allocation2 + $0x1b0] sm:$0xff] %vm335, %v329
        %355 = vst.msk [vmem:[#allocation2 + $0x1c8] sm:$0xff] %vm335, %v330
        %356 = vst.msk [vmem:[#allocation2 + $0x1e0] sm:$0xff] %vm335, %v331
        %357 = vst.msk [vmem:[#allocation2 + $0x1f8] sm:$0xff] %vm335, %v332
        %358 = vst.msk [vmem:[#allocation2 + $0x210] sm:$0xff] %vm335, %v333
        %359 = vst.msk [vmem:[#allocation2 + $0x228] sm:$0xff] %vm335, %v334
        %v360 = vld [vmem:[%s301 + $0x1] sm:$0xff]
        %v361 = vld [vmem:[%s301 + $0x11] sm:$0xff]
        %v362 = vld [vmem:[%s301 + $0x21] sm:$0xff]
        %v363 = vld [vmem:[%s301 + $0x31] sm:$0xff]
        %v364 = vld [vmem:[%s301 + $0x41] sm:$0xff]
        %v365 = vld [vmem:[%s301 + $0x51] sm:$0xff]
        %v366 = vld [vmem:[%s301 + $0x61] sm:$0xff]
        %v367 = vld [vmem:[%s301 + $0x71] sm:$0xff]
        %v368 = vld [vmem:[%s301 + $0x81] sm:$0xff]
        %v369 = vld [vmem:[%s301 + $0x91] sm:$0xff]
        %v370 = vld [vmem:[%s301 + $0xa1] sm:$0xff]
        %v371 = vld [vmem:[%s301 + $0xb1] sm:$0xff]
        %v372 = vld [vmem:[%s301 + $0xc1] sm:$0xff]
        %v373 = vld [vmem:[%s301 + $0xd1] sm:$0xff]
        %v374 = vld [vmem:[%s301 + $0xe1] sm:$0xff]
        %v375 = vld [vmem:[%s301 + $0xf1] sm:$0xff]
        %v376 = vld [vmem:[%s301 + $0x101] sm:$0xff]
        %v377 = vld [vmem:[%s301 + $0x111] sm:$0xff]
        %v378 = vld [vmem:[%s301 + $0x121] sm:$0xff]
        %v379 = vld [vmem:[%s301 + $0x131] sm:$0xff]
        %v380 = vld [vmem:[%s301 + $0x141] sm:$0xff]
        %v381 = vld [vmem:[%s301 + $0x151] sm:$0xff]
        %v382 = vld [vmem:[%s301 + $0x161] sm:$0xff]
        %v383 = vld [vmem:[%s301 + $0x171] sm:$0xff]
        %408 = vrot.lane.b32.xlu0 %v360, 64
        %v409 = vpop.permute.xlu0 %408
        %410 = vrot.lane.b32.xlu0 %v361, 64
        %v411 = vpop.permute.xlu0 %410
        %412 = vrot.lane.b32.xlu0 %v362, 64
        %v413 = vpop.permute.xlu0 %412
        %414 = vrot.lane.b32.xlu0 %v363, 64
        %v415 = vpop.permute.xlu0 %414
        %416 = vrot.lane.b32.xlu0 %v364, 64
        %v417 = vpop.permute.xlu0 %416
        %418 = vrot.lane.b32.xlu0 %v365, 64
        %v419 = vpop.permute.xlu0 %418
        %420 = vrot.lane.b32.xlu0 %v366, 64
        %v421 = vpop.permute.xlu0 %420
        %422 = vrot.lane.b32.xlu0 %v367, 64
        %v423 = vpop.permute.xlu0 %422
        %424 = vrot.lane.b32.xlu0 %v368, 64
        %v425 = vpop.permute.xlu0 %424
        %426 = vrot.lane.b32.xlu0 %v369, 64
        %v427 = vpop.permute.xlu0 %426
        %428 = vrot.lane.b32.xlu0 %v370, 64
        %v429 = vpop.permute.xlu0 %428
        %430 = vrot.lane.b32.xlu0 %v371, 64
        %v431 = vpop.permute.xlu0 %430
        %432 = vrot.lane.b32.xlu0 %v372, 64
        %v433 = vpop.permute.xlu0 %432
        %434 = vrot.lane.b32.xlu0 %v373, 64
        %v435 = vpop.permute.xlu0 %434
        %436 = vrot.lane.b32.xlu0 %v374, 64
        %v437 = vpop.permute.xlu0 %436
        %438 = vrot.lane.b32.xlu0 %v375, 64
        %v439 = vpop.permute.xlu0 %438
        %440 = vrot.lane.b32.xlu0 %v376, 64
        %v441 = vpop.permute.xlu0 %440
        %442 = vrot.lane.b32.xlu0 %v377, 64
        %v443 = vpop.permute.xlu0 %442
        %444 = vrot.lane.b32.xlu0 %v378, 64
        %v445 = vpop.permute.xlu0 %444
        %446 = vrot.lane.b32.xlu0 %v379, 64
        %v447 = vpop.permute.xlu0 %446
        %448 = vrot.lane.b32.xlu0 %v380, 64
        %v449 = vpop.permute.xlu0 %448
        %450 = vrot.lane.b32.xlu0 %v381, 64
        %v451 = vpop.permute.xlu0 %450
        %452 = vrot.lane.b32.xlu0 %v382, 64
        %v453 = vpop.permute.xlu0 %452
        %454 = vrot.lane.b32.xlu0 %v383, 64
        %v455 = vpop.permute.xlu0 %454
        %vm480 = vcmask 1048064
        %481 = vst.msk [vmem:[#allocation2] sm:$0xff] %vm480, %v409
        %482 = vst.msk [vmem:[#allocation2 + $0x18] sm:$0xff] %vm480, %v411
        %483 = vst.msk [vmem:[#allocation2 + $0x30] sm:$0xff] %vm480, %v413
        %484 = vst.msk [vmem:[#allocation2 + $0x48] sm:$0xff] %vm480, %v415
        %485 = vst.msk [vmem:[#allocation2 + $0x60] sm:$0xff] %vm480, %v417
        %486 = vst.msk [vmem:[#allocation2 + $0x78] sm:$0xff] %vm480, %v419
        %487 = vst.msk [vmem:[#allocation2 + $0x90] sm:$0xff] %vm480, %v421
        %488 = vst.msk [vmem:[#allocation2 + $0xa8] sm:$0xff] %vm480, %v423
        %489 = vst.msk [vmem:[#allocation2 + $0xc0] sm:$0xff] %vm480, %v425
        %490 = vst.msk [vmem:[#allocation2 + $0xd8] sm:$0xff] %vm480, %v427
        %491 = vst.msk [vmem:[#allocation2 + $0xf0] sm:$0xff] %vm480, %v429
        %492 = vst.msk [vmem:[#allocation2 + $0x108] sm:$0xff] %vm480, %v431
        %493 = vst.msk [vmem:[#allocation2 + $0x120] sm:$0xff] %vm480, %v433
        %494 = vst.msk [vmem:[#allocation2 + $0x138] sm:$0xff] %vm480, %v435
        %495 = vst.msk [vmem:[#allocation2 + $0x150] sm:$0xff] %vm480, %v437
        %496 = vst.msk [vmem:[#allocation2 + $0x168] sm:$0xff] %vm480, %v439
        %497 = vst.msk [vmem:[#allocation2 + $0x180] sm:$0xff] %vm480, %v441
        %498 = vst.msk [vmem:[#allocation2 + $0x198] sm:$0xff] %vm480, %v443
        %499 = vst.msk [vmem:[#allocation2 + $0x1b0] sm:$0xff] %vm480, %v445
        %500 = vst.msk [vmem:[#allocation2 + $0x1c8] sm:$0xff] %vm480, %v447
        %501 = vst.msk [vmem:[#allocation2 + $0x1e0] sm:$0xff] %vm480, %v449
        %502 = vst.msk [vmem:[#allocation2 + $0x1f8] sm:$0xff] %vm480, %v451
        %503 = vst.msk [vmem:[#allocation2 + $0x210] sm:$0xff] %vm480, %v453
        %504 = vst.msk [vmem:[#allocation2 + $0x228] sm:$0xff] %vm480, %v455
        %v505 = vld [vmem:[%s301 + $0x2] sm:$0xff]
        %v506 = vld [vmem:[%s301 + $0x12] sm:$0xff]
        %v507 = vld [vmem:[%s301 + $0x22] sm:$0xff]
        %v508 = vld [vmem:[%s301 + $0x32] sm:$0xff]
        %v509 = vld [vmem:[%s301 + $0x42] sm:$0xff]
        %v510 = vld [vmem:[%s301 + $0x52] sm:$0xff]
        %v511 = vld [vmem:[%s301 + $0x62] sm:$0xff]
        %v512 = vld [vmem:[%s301 + $0x72] sm:$0xff]
        %v513 = vld [vmem:[%s301 + $0x82] sm:$0xff]
        %v514 = vld [vmem:[%s301 + $0x92] sm:$0xff]
        %v515 = vld [vmem:[%s301 + $0xa2] sm:$0xff]
        %v516 = vld [vmem:[%s301 + $0xb2] sm:$0xff]
        %v517 = vld [vmem:[%s301 + $0xc2] sm:$0xff]
        %v518 = vld [vmem:[%s301 + $0xd2] sm:$0xff]
        %v519 = vld [vmem:[%s301 + $0xe2] sm:$0xff]
        %v520 = vld [vmem:[%s301 + $0xf2] sm:$0xff]
        %v521 = vld [vmem:[%s301 + $0x102] sm:$0xff]
        %v522 = vld [vmem:[%s301 + $0x112] sm:$0xff]
        %v523 = vld [vmem:[%s301 + $0x122] sm:$0xff]
        %v524 = vld [vmem:[%s301 + $0x132] sm:$0xff]
        %v525 = vld [vmem:[%s301 + $0x142] sm:$0xff]
        %v526 = vld [vmem:[%s301 + $0x152] sm:$0xff]
        %v527 = vld [vmem:[%s301 + $0x162] sm:$0xff]
        %v528 = vld [vmem:[%s301 + $0x172] sm:$0xff]
        %529 = vst.msk [vmem:[#allocation2 + $0x8] sm:$0xff] %vm335, %v505
        %530 = vst.msk [vmem:[#allocation2 + $0x20] sm:$0xff] %vm335, %v506
        %531 = vst.msk [vmem:[#allocation2 + $0x38] sm:$0xff] %vm335, %v507
        %532 = vst.msk [vmem:[#allocation2 + $0x50] sm:$0xff] %vm335, %v508
        %533 = vst.msk [vmem:[#allocation2 + $0x68] sm:$0xff] %vm335, %v509
        %534 = vst.msk [vmem:[#allocation2 + $0x80] sm:$0xff] %vm335, %v510
        %535 = vst.msk [vmem:[#allocation2 + $0x98] sm:$0xff] %vm335, %v511
        %536 = vst.msk [vmem:[#allocation2 + $0xb0] sm:$0xff] %vm335, %v512
        %537 = vst.msk [vmem:[#allocation2 + $0xc8] sm:$0xff] %vm335, %v513
        %538 = vst.msk [vmem:[#allocation2 + $0xe0] sm:$0xff] %vm335, %v514
        %539 = vst.msk [vmem:[#allocation2 + $0xf8] sm:$0xff] %vm335, %v515
        %540 = vst.msk [vmem:[#allocation2 + $0x110] sm:$0xff] %vm335, %v516
        %541 = vst.msk [vmem:[#allocation2 + $0x128] sm:$0xff] %vm335, %v517
        %542 = vst.msk [vmem:[#allocation2 + $0x140] sm:$0xff] %vm335, %v518
        %543 = vst.msk [vmem:[#allocation2 + $0x158] sm:$0xff] %vm335, %v519
        %544 = vst.msk [vmem:[#allocation2 + $0x170] sm:$0xff] %vm335, %v520
        %545 = vst.msk [vmem:[#allocation2 + $0x188] sm:$0xff] %vm335, %v521
        %546 = vst.msk [vmem:[#allocation2 + $0x1a0] sm:$0xff] %vm335, %v522
        %547 = vst.msk [vmem:[#allocation2 + $0x1b8] sm:$0xff] %vm335, %v523
        %548 = vst.msk [vmem:[#allocation2 + $0x1d0] sm:$0xff] %vm335, %v524
        %549 = vst.msk [vmem:[#allocation2 + $0x1e8] sm:$0xff] %vm335, %v525
        %550 = vst.msk [vmem:[#allocation2 + $0x200] sm:$0xff] %vm335, %v526
        %551 = vst.msk [vmem:[#allocation2 + $0x218] sm:$0xff] %vm335, %v527
        %552 = vst.msk [vmem:[#allocation2 + $0x230] sm:$0xff] %vm335, %v528
        %v553 = vld [vmem:[%s301 + $0x3] sm:$0xff]
        %v554 = vld [vmem:[%s301 + $0x13] sm:$0xff]
        %v555 = vld [vmem:[%s301 + $0x23] sm:$0xff]
        %v556 = vld [vmem:[%s301 + $0x33] sm:$0xff]
        %v557 = vld [vmem:[%s301 + $0x43] sm:$0xff]
        %v558 = vld [vmem:[%s301 + $0x53] sm:$0xff]
        %v559 = vld [vmem:[%s301 + $0x63] sm:$0xff]
        %v560 = vld [vmem:[%s301 + $0x73] sm:$0xff]
        %v561 = vld [vmem:[%s301 + $0x83] sm:$0xff]
        %v562 = vld [vmem:[%s301 + $0x93] sm:$0xff]
        %v563 = vld [vmem:[%s301 + $0xa3] sm:$0xff]
        %v564 = vld [vmem:[%s301 + $0xb3] sm:$0xff]
        %v565 = vld [vmem:[%s301 + $0xc3] sm:$0xff]
        %v566 = vld [vmem:[%s301 + $0xd3] sm:$0xff]
        %v567 = vld [vmem:[%s301 + $0xe3] sm:$0xff]
        %v568 = vld [vmem:[%s301 + $0xf3] sm:$0xff]
        %v569 = vld [vmem:[%s301 + $0x103] sm:$0xff]
        %v570 = vld [vmem:[%s301 + $0x113] sm:$0xff]
        %v571 = vld [vmem:[%s301 + $0x123] sm:$0xff]
        %v572 = vld [vmem:[%s301 + $0x133] sm:$0xff]
        %v573 = vld [vmem:[%s301 + $0x143] sm:$0xff]
        %v574 = vld [vmem:[%s301 + $0x153] sm:$0xff]
        %v575 = vld [vmem:[%s301 + $0x163] sm:$0xff]
        %v576 = vld [vmem:[%s301 + $0x173] sm:$0xff]
        %601 = vrot.lane.b32.xlu0 %v553, 64
        %v602 = vpop.permute.xlu0 %601
        %603 = vrot.lane.b32.xlu0 %v554, 64
        %v604 = vpop.permute.xlu0 %603
        %605 = vrot.lane.b32.xlu0 %v555, 64
        %v606 = vpop.permute.xlu0 %605
        %607 = vrot.lane.b32.xlu0 %v556, 64
        %v608 = vpop.permute.xlu0 %607
        %609 = vrot.lane.b32.xlu0 %v557, 64
        %v610 = vpop.permute.xlu0 %609
        %611 = vrot.lane.b32.xlu0 %v558, 64
        %v612 = vpop.permute.xlu0 %611
        %613 = vrot.lane.b32.xlu0 %v559, 64
        %v614 = vpop.permute.xlu0 %613
        %615 = vrot.lane.b32.xlu0 %v560, 64
        %v616 = vpop.permute.xlu0 %615
        %617 = vrot.lane.b32.xlu0 %v561, 64
        %v618 = vpop.permute.xlu0 %617
        %619 = vrot.lane.b32.xlu0 %v562, 64
        %v620 = vpop.permute.xlu0 %619
        %621 = vrot.lane.b32.xlu0 %v563, 64
        %v622 = vpop.permute.xlu0 %621
        %623 = vrot.lane.b32.xlu0 %v564, 64
        %v624 = vpop.permute.xlu0 %623
        %625 = vrot.lane.b32.xlu0 %v565, 64
        %v626 = vpop.permute.xlu0 %625
        %627 = vrot.lane.b32.xlu0 %v566, 64
        %v628 = vpop.permute.xlu0 %627
        %629 = vrot.lane.b32.xlu0 %v567, 64
        %v630 = vpop.permute.xlu0 %629
        %631 = vrot.lane.b32.xlu0 %v568, 64
        %v632 = vpop.permute.xlu0 %631
        %633 = vrot.lane.b32.xlu0 %v569, 64
        %v634 = vpop.permute.xlu0 %633
        %635 = vrot.lane.b32.xlu0 %v570, 64
        %v636 = vpop.permute.xlu0 %635
        %637 = vrot.lane.b32.xlu0 %v571, 64
        %v638 = vpop.permute.xlu0 %637
        %639 = vrot.lane.b32.xlu0 %v572, 64
        %v640 = vpop.permute.xlu0 %639
        %641 = vrot.lane.b32.xlu0 %v573, 64
        %v642 = vpop.permute.xlu0 %641
        %643 = vrot.lane.b32.xlu0 %v574, 64
        %v644 = vpop.permute.xlu0 %643
        %645 = vrot.lane.b32.xlu0 %v575, 64
        %v646 = vpop.permute.xlu0 %645
        %647 = vrot.lane.b32.xlu0 %v576, 64
        %v648 = vpop.permute.xlu0 %647
        %673 = vst.msk [vmem:[#allocation2 + $0x8] sm:$0xff] %vm480, %v602
        %674 = vst.msk [vmem:[#allocation2 + $0x20] sm:$0xff] %vm480, %v604
        %675 = vst.msk [vmem:[#allocation2 + $0x38] sm:$0xff] %vm480, %v606
        %676 = vst.msk [vmem:[#allocation2 + $0x50] sm:$0xff] %vm480, %v608
        %677 = vst.msk [vmem:[#allocation2 + $0x68] sm:$0xff] %vm480, %v610
        %678 = vst.msk [vmem:[#allocation2 + $0x80] sm:$0xff] %vm480, %v612
        %679 = vst.msk [vmem:[#allocation2 + $0x98] sm:$0xff] %vm480, %v614
        %680 = vst.msk [vmem:[#allocation2 + $0xb0] sm:$0xff] %vm480, %v616
        %681 = vst.msk [vmem:[#allocation2 + $0xc8] sm:$0xff] %vm480, %v618
        %682 = vst.msk [vmem:[#allocation2 + $0xe0] sm:$0xff] %vm480, %v620
        %683 = vst.msk [vmem:[#allocation2 + $0xf8] sm:$0xff] %vm480, %v622
        %684 = vst.msk [vmem:[#allocation2 + $0x110] sm:$0xff] %vm480, %v624
        %685 = vst.msk [vmem:[#allocation2 + $0x128] sm:$0xff] %vm480, %v626
        %686 = vst.msk [vmem:[#allocation2 + $0x140] sm:$0xff] %vm480, %v628
        %687 = vst.msk [vmem:[#allocation2 + $0x158] sm:$0xff] %vm480, %v630
        %688 = vst.msk [vmem:[#allocation2 + $0x170] sm:$0xff] %vm480, %v632
        %689 = vst.msk [vmem:[#allocation2 + $0x188] sm:$0xff] %vm480, %v634
        %690 = vst.msk [vmem:[#allocation2 + $0x1a0] sm:$0xff] %vm480, %v636
        %691 = vst.msk [vmem:[#allocation2 + $0x1b8] sm:$0xff] %vm480, %v638
        %692 = vst.msk [vmem:[#allocation2 + $0x1d0] sm:$0xff] %vm480, %v640
        %693 = vst.msk [vmem:[#allocation2 + $0x1e8] sm:$0xff] %vm480, %v642
        %694 = vst.msk [vmem:[#allocation2 + $0x200] sm:$0xff] %vm480, %v644
        %695 = vst.msk [vmem:[#allocation2 + $0x218] sm:$0xff] %vm480, %v646
        %696 = vst.msk [vmem:[#allocation2 + $0x230] sm:$0xff] %vm480, %v648
        %v697 = vld [vmem:[%s301 + $0x4] sm:$0xff]
        %v698 = vld [vmem:[%s301 + $0x14] sm:$0xff]
        %v699 = vld [vmem:[%s301 + $0x24] sm:$0xff]
        %v700 = vld [vmem:[%s301 + $0x34] sm:$0xff]
        %v701 = vld [vmem:[%s301 + $0x44] sm:$0xff]
        %v702 = vld [vmem:[%s301 + $0x54] sm:$0xff]
        %v703 = vld [vmem:[%s301 + $0x64] sm:$0xff]
        %v704 = vld [vmem:[%s301 + $0x74] sm:$0xff]
        %v705 = vld [vmem:[%s301 + $0x84] sm:$0xff]
        %v706 = vld [vmem:[%s301 + $0x94] sm:$0xff]
        %v707 = vld [vmem:[%s301 + $0xa4] sm:$0xff]
        %v708 = vld [vmem:[%s301 + $0xb4] sm:$0xff]
        %v709 = vld [vmem:[%s301 + $0xc4] sm:$0xff]
        %v710 = vld [vmem:[%s301 + $0xd4] sm:$0xff]
        %v711 = vld [vmem:[%s301 + $0xe4] sm:$0xff]
        %v712 = vld [vmem:[%s301 + $0xf4] sm:$0xff]
        %v713 = vld [vmem:[%s301 + $0x104] sm:$0xff]
        %v714 = vld [vmem:[%s301 + $0x114] sm:$0xff]
        %v715 = vld [vmem:[%s301 + $0x124] sm:$0xff]
        %v716 = vld [vmem:[%s301 + $0x134] sm:$0xff]
        %v717 = vld [vmem:[%s301 + $0x144] sm:$0xff]
        %v718 = vld [vmem:[%s301 + $0x154] sm:$0xff]
        %v719 = vld [vmem:[%s301 + $0x164] sm:$0xff]
        %v720 = vld [vmem:[%s301 + $0x174] sm:$0xff]
        %721 = vst.msk [vmem:[#allocation2 + $0x10] sm:$0xff] %vm335, %v697
        %722 = vst.msk [vmem:[#allocation2 + $0x28] sm:$0xff] %vm335, %v698
        %723 = vst.msk [vmem:[#allocation2 + $0x40] sm:$0xff] %vm335, %v699
        %724 = vst.msk [vmem:[#allocation2 + $0x58] sm:$0xff] %vm335, %v700
        %725 = vst.msk [vmem:[#allocation2 + $0x70] sm:$0xff] %vm335, %v701
        %726 = vst.msk [vmem:[#allocation2 + $0x88] sm:$0xff] %vm335, %v702
        %727 = vst.msk [vmem:[#allocation2 + $0xa0] sm:$0xff] %vm335, %v703
        %728 = vst.msk [vmem:[#allocation2 + $0xb8] sm:$0xff] %vm335, %v704
        %729 = vst.msk [vmem:[#allocation2 + $0xd0] sm:$0xff] %vm335, %v705
        %730 = vst.msk [vmem:[#allocation2 + $0xe8] sm:$0xff] %vm335, %v706
        %731 = vst.msk [vmem:[#allocation2 + $0x100] sm:$0xff] %vm335, %v707
        %732 = vst.msk [vmem:[#allocation2 + $0x118] sm:$0xff] %vm335, %v708
        %733 = vst.msk [vmem:[#allocation2 + $0x130] sm:$0xff] %vm335, %v709
        %734 = vst.msk [vmem:[#allocation2 + $0x148] sm:$0xff] %vm335, %v710
        %735 = vst.msk [vmem:[#allocation2 + $0x160] sm:$0xff] %vm335, %v711
        %736 = vst.msk [vmem:[#allocation2 + $0x178] sm:$0xff] %vm335, %v712
        %737 = vst.msk [vmem:[#allocation2 + $0x190] sm:$0xff] %vm335, %v713
        %738 = vst.msk [vmem:[#allocation2 + $0x1a8] sm:$0xff] %vm335, %v714
        %739 = vst.msk [vmem:[#allocation2 + $0x1c0] sm:$0xff] %vm335, %v715
        %740 = vst.msk [vmem:[#allocation2 + $0x1d8] sm:$0xff] %vm335, %v716
        %741 = vst.msk [vmem:[#allocation2 + $0x1f0] sm:$0xff] %vm335, %v717
        %742 = vst.msk [vmem:[#allocation2 + $0x208] sm:$0xff] %vm335, %v718
        %743 = vst.msk [vmem:[#allocation2 + $0x220] sm:$0xff] %vm335, %v719
        %744 = vst.msk [vmem:[#allocation2 + $0x238] sm:$0xff] %vm335, %v720
        %v745 = vld [vmem:[#allocation2] sm:$0xff]
        %v746 = vld [vmem:[#allocation2 + $0x8] sm:$0xff]
        %v747 = vld [vmem:[#allocation2 + $0x10] sm:$0xff]
        %v748 = vld [vmem:[#allocation2 + $0x18] sm:$0xff]
        %v749 = vld [vmem:[#allocation2 + $0x20] sm:$0xff]
        %v750 = vld [vmem:[#allocation2 + $0x28] sm:$0xff]
        %v751 = vld [vmem:[#allocation2 + $0x30] sm:$0xff]
        %v752 = vld [vmem:[#allocation2 + $0x38] sm:$0xff]
        %v753 = vld [vmem:[#allocation2 + $0x40] sm:$0xff]
        %v754 = vld [vmem:[#allocation2 + $0x48] sm:$0xff]
        %v755 = vld [vmem:[#allocation2 + $0x50] sm:$0xff]
        %v756 = vld [vmem:[#allocation2 + $0x58] sm:$0xff]
        %v757 = vld [vmem:[#allocation2 + $0x60] sm:$0xff]
        %v758 = vld [vmem:[#allocation2 + $0x68] sm:$0xff]
        %v759 = vld [vmem:[#allocation2 + $0x70] sm:$0xff]
        %v760 = vld [vmem:[#allocation2 + $0x78] sm:$0xff]
        %v761 = vld [vmem:[#allocation2 + $0x80] sm:$0xff]
        %v762 = vld [vmem:[#allocation2 + $0x88] sm:$0xff]
        %v763 = vld [vmem:[#allocation2 + $0x90] sm:$0xff]
        %v764 = vld [vmem:[#allocation2 + $0x98] sm:$0xff]
        %v765 = vld [vmem:[#allocation2 + $0xa0] sm:$0xff]
        %v766 = vld [vmem:[#allocation2 + $0xa8] sm:$0xff]
        %v767 = vld [vmem:[#allocation2 + $0xb0] sm:$0xff]
        %v768 = vld [vmem:[#allocation2 + $0xb8] sm:$0xff]
        %v769 = vld [vmem:[#allocation2 + $0x120] sm:$0xff]
        %v770 = vld [vmem:[#allocation2 + $0x128] sm:$0xff]
        %v771 = vld [vmem:[#allocation2 + $0x130] sm:$0xff]
        %v772 = vld [vmem:[#allocation2 + $0x138] sm:$0xff]
        %v773 = vld [vmem:[#allocation2 + $0x140] sm:$0xff]
        %v774 = vld [vmem:[#allocation2 + $0x148] sm:$0xff]
        %v775 = vld [vmem:[#allocation2 + $0x150] sm:$0xff]
        %v776 = vld [vmem:[#allocation2 + $0x158] sm:$0xff]
        %v777 = vld [vmem:[#allocation2 + $0x160] sm:$0xff]
        %v778 = vld [vmem:[#allocation2 + $0x168] sm:$0xff]
        %v779 = vld [vmem:[#allocation2 + $0x170] sm:$0xff]
        %v780 = vld [vmem:[#allocation2 + $0x178] sm:$0xff]
        %v781 = vld [vmem:[#allocation2 + $0x180] sm:$0xff]
        %v782 = vld [vmem:[#allocation2 + $0x188] sm:$0xff]
        %v783 = vld [vmem:[#allocation2 + $0x190] sm:$0xff]
        %v784 = vld [vmem:[#allocation2 + $0x198] sm:$0xff]
        %v785 = vld [vmem:[#allocation2 + $0x1a0] sm:$0xff]
        %v786 = vld [vmem:[#allocation2 + $0x1a8] sm:$0xff]
        %v787 = vld [vmem:[#allocation2 + $0x1b0] sm:$0xff]
        %v788 = vld [vmem:[#allocation2 + $0x1b8] sm:$0xff]
        %v789 = vld [vmem:[#allocation2 + $0x1c0] sm:$0xff]
        %v790 = vld [vmem:[#allocation2 + $0x1c8] sm:$0xff]
        %v791 = vld [vmem:[#allocation2 + $0x1d0] sm:$0xff]
        %v792 = vld [vmem:[#allocation2 + $0x1d8] sm:$0xff]
        %v793 = vld [vmem:[#allocation4] sm:$0xff]
        %v794 = vld [vmem:[#allocation4 + $0x8] sm:$0xff]
        %v795 = vld [vmem:[#allocation4 + $0x10] sm:$0xff]
        %v796 = vld [vmem:[#allocation4 + $0x18] sm:$0xff]
        %v797 = vld [vmem:[#allocation4 + $0x20] sm:$0xff]
        %v798 = vld [vmem:[#allocation4 + $0x28] sm:$0xff]
        %v799 = vld [vmem:[#allocation4 + $0x30] sm:$0xff]
        %v800 = vld [vmem:[#allocation4 + $0x38] sm:$0xff]
        %v801 = vld [vmem:[#allocation4 + $0x40] sm:$0xff]
        %v802 = vld [vmem:[#allocation4 + $0x48] sm:$0xff]
        %v803 = vld [vmem:[#allocation4 + $0x50] sm:$0xff]
        %v804 = vld [vmem:[#allocation4 + $0x58] sm:$0xff]
        %v805 = vld [vmem:[#allocation4 + $0x60] sm:$0xff]
        %v806 = vld [vmem:[#allocation4 + $0x68] sm:$0xff]
        %v807 = vld [vmem:[#allocation4 + $0x70] sm:$0xff]
        %v808 = vld [vmem:[#allocation4 + $0x78] sm:$0xff]
        %v809 = vld [vmem:[#allocation4 + $0x80] sm:$0xff]
        %v810 = vld [vmem:[#allocation4 + $0x88] sm:$0xff]
        %v811 = vld [vmem:[#allocation4 + $0x90] sm:$0xff]
        %v812 = vld [vmem:[#allocation4 + $0x98] sm:$0xff]
        %v813 = vld [vmem:[#allocation4 + $0xa0] sm:$0xff]
        %v814 = vld [vmem:[#allocation4 + $0xa8] sm:$0xff]
        %v815 = vld [vmem:[#allocation4 + $0xb0] sm:$0xff]
        %v816 = vld [vmem:[#allocation4 + $0xb8] sm:$0xff]
        %v817 = vld [vmem:[#allocation4 + $0xc0] sm:$0xff]
        %v818 = vld [vmem:[#allocation4 + $0xc8] sm:$0xff]
        %v819 = vld [vmem:[#allocation4 + $0xd0] sm:$0xff]
        %v820 = vld [vmem:[#allocation4 + $0xd8] sm:$0xff]
        %v821 = vld [vmem:[#allocation4 + $0xe0] sm:$0xff]
        %v822 = vld [vmem:[#allocation4 + $0xe8] sm:$0xff]
        %v823 = vld [vmem:[#allocation4 + $0xf0] sm:$0xff]
        %v824 = vld [vmem:[#allocation4 + $0xf8] sm:$0xff]
        %v825 = vld [vmem:[#allocation4 + $0x100] sm:$0xff]
        %v826 = vld [vmem:[#allocation4 + $0x108] sm:$0xff]
        %v827 = vld [vmem:[#allocation4 + $0x110] sm:$0xff]
        %v828 = vld [vmem:[#allocation4 + $0x118] sm:$0xff]
        %v829 = vld [vmem:[#allocation4 + $0x120] sm:$0xff]
        %v830 = vld [vmem:[#allocation4 + $0x128] sm:$0xff]
        %v831 = vld [vmem:[#allocation4 + $0x130] sm:$0xff]
        %v832 = vld [vmem:[#allocation4 + $0x138] sm:$0xff]
        %s833 = scalar_lea.vmem [#allocation2], 24
        %v834 = vld [vmem:[%s833] sm:$0xff]
        %v835 = vld [vmem:[%s833 + $0x8] sm:$0xff]
        %v836 = vld [vmem:[%s833 + $0x10] sm:$0xff]
        %v837 = vld [vmem:[%s833 + $0x18] sm:$0xff]
        %v838 = vld [vmem:[%s833 + $0x20] sm:$0xff]
        %v839 = vld [vmem:[%s833 + $0x28] sm:$0xff]
        %v840 = vld [vmem:[%s833 + $0x30] sm:$0xff]
        %v841 = vld [vmem:[%s833 + $0x38] sm:$0xff]
        %v842 = vld [vmem:[%s833 + $0x40] sm:$0xff]
        %v843 = vld [vmem:[%s833 + $0x48] sm:$0xff]
        %v844 = vld [vmem:[%s833 + $0x50] sm:$0xff]
        %v845 = vld [vmem:[%s833 + $0x58] sm:$0xff]
        %v846 = vld [vmem:[%s833 + $0x60] sm:$0xff]
        %v847 = vld [vmem:[%s833 + $0x68] sm:$0xff]
        %v848 = vld [vmem:[%s833 + $0x70] sm:$0xff]
        %v849 = vld [vmem:[%s833 + $0x78] sm:$0xff]
        %v850 = vld [vmem:[%s833 + $0x80] sm:$0xff]
        %v851 = vld [vmem:[%s833 + $0x88] sm:$0xff]
        %v852 = vld [vmem:[%s833 + $0x90] sm:$0xff]
        %v853 = vld [vmem:[%s833 + $0x98] sm:$0xff]
        %v854 = vld [vmem:[%s833 + $0xa0] sm:$0xff]
        %v855 = vld [vmem:[%s833 + $0xa8] sm:$0xff]
        %v856 = vld [vmem:[%s833 + $0xb0] sm:$0xff]
        %v857 = vld [vmem:[%s833 + $0xb8] sm:$0xff]
        %v858 = vld [vmem:[%s833 + $0x120] sm:$0xff]
        %v859 = vld [vmem:[%s833 + $0x128] sm:$0xff]
        %v860 = vld [vmem:[%s833 + $0x130] sm:$0xff]
        %v861 = vld [vmem:[%s833 + $0x138] sm:$0xff]
        %v862 = vld [vmem:[%s833 + $0x140] sm:$0xff]
        %v863 = vld [vmem:[%s833 + $0x148] sm:$0xff]
        %v864 = vld [vmem:[%s833 + $0x150] sm:$0xff]
        %v865 = vld [vmem:[%s833 + $0x158] sm:$0xff]
        %v866 = vld [vmem:[%s833 + $0x160] sm:$0xff]
        %v867 = vld [vmem:[%s833 + $0x168] sm:$0xff]
        %v868 = vld [vmem:[%s833 + $0x170] sm:$0xff]
        %v869 = vld [vmem:[%s833 + $0x178] sm:$0xff]
        %v870 = vld [vmem:[%s833 + $0x180] sm:$0xff]
        %v871 = vld [vmem:[%s833 + $0x188] sm:$0xff]
        %v872 = vld [vmem:[%s833 + $0x190] sm:$0xff]
        %v873 = vld [vmem:[%s833 + $0x198] sm:$0xff]
        %v874 = vld [vmem:[%s833 + $0x1a0] sm:$0xff]
        %v875 = vld [vmem:[%s833 + $0x1a8] sm:$0xff]
        %v876 = vld [vmem:[%s833 + $0x1b0] sm:$0xff]
        %v877 = vld [vmem:[%s833 + $0x1b8] sm:$0xff]
        %v878 = vld [vmem:[%s833 + $0x1c0] sm:$0xff]
        %v879 = vld [vmem:[%s833 + $0x1c8] sm:$0xff]
        %v880 = vld [vmem:[%s833 + $0x1d0] sm:$0xff]
        %v881 = vld [vmem:[%s833 + $0x1d8] sm:$0xff]
        %s882 = scalar_lea.vmem [#allocation4], 320
        %v883 = vld [vmem:[%s882] sm:$0xff]
        %v884 = vld [vmem:[%s882 + $0x8] sm:$0xff]
        %v885 = vld [vmem:[%s882 + $0x10] sm:$0xff]
        %v886 = vld [vmem:[%s882 + $0x18] sm:$0xff]
        %v887 = vld [vmem:[%s882 + $0x20] sm:$0xff]
        %v888 = vld [vmem:[%s882 + $0x28] sm:$0xff]
        %v889 = vld [vmem:[%s882 + $0x30] sm:$0xff]
        %v890 = vld [vmem:[%s882 + $0x38] sm:$0xff]
        %v891 = vld [vmem:[%s882 + $0x40] sm:$0xff]
        %v892 = vld [vmem:[%s882 + $0x48] sm:$0xff]
        %v893 = vld [vmem:[%s882 + $0x50] sm:$0xff]
        %v894 = vld [vmem:[%s882 + $0x58] sm:$0xff]
        %v895 = vld [vmem:[%s882 + $0x60] sm:$0xff]
        %v896 = vld [vmem:[%s882 + $0x68] sm:$0xff]
        %v897 = vld [vmem:[%s882 + $0x70] sm:$0xff]
        %v898 = vld [vmem:[%s882 + $0x78] sm:$0xff]
        %v899 = vld [vmem:[%s882 + $0x80] sm:$0xff]
        %v900 = vld [vmem:[%s882 + $0x88] sm:$0xff]
        %v901 = vld [vmem:[%s882 + $0x90] sm:$0xff]
        %v902 = vld [vmem:[%s882 + $0x98] sm:$0xff]
        %v903 = vld [vmem:[%s882 + $0xa0] sm:$0xff]
        %v904 = vld [vmem:[%s882 + $0xa8] sm:$0xff]
        %v905 = vld [vmem:[%s882 + $0xb0] sm:$0xff]
        %v906 = vld [vmem:[%s882 + $0xb8] sm:$0xff]
        %v907 = vld [vmem:[%s882 + $0xc0] sm:$0xff]
        %v908 = vld [vmem:[%s882 + $0xc8] sm:$0xff]
        %v909 = vld [vmem:[%s882 + $0xd0] sm:$0xff]
        %v910 = vld [vmem:[%s882 + $0xd8] sm:$0xff]
        %v911 = vld [vmem:[%s882 + $0xe0] sm:$0xff]
        %v912 = vld [vmem:[%s882 + $0xe8] sm:$0xff]
        %v913 = vld [vmem:[%s882 + $0xf0] sm:$0xff]
        %v914 = vld [vmem:[%s882 + $0xf8] sm:$0xff]
        %v915 = vld [vmem:[%s882 + $0x100] sm:$0xff]
        %v916 = vld [vmem:[%s882 + $0x108] sm:$0xff]
        %v917 = vld [vmem:[%s882 + $0x110] sm:$0xff]
        %v918 = vld [vmem:[%s882 + $0x118] sm:$0xff]
        %v919 = vld [vmem:[%s882 + $0x120] sm:$0xff]
        %v920 = vld [vmem:[%s882 + $0x128] sm:$0xff]
        %v921 = vld [vmem:[%s882 + $0x130] sm:$0xff]
        %v922 = vld [vmem:[%s882 + $0x138] sm:$0xff]
        %v924 = vsel %vm335, %v836, 0
        %v927 = vsel %vm335, %v839, 0
        %v930 = vsel %vm335, %v842, 0
        %v933 = vsel %vm335, %v845, 0
        %v936 = vsel %vm335, %v848, 0
        %v939 = vsel %vm335, %v851, 0
        %v942 = vsel %vm335, %v854, 0
        %v945 = vsel %vm335, %v857, 0
        %v948 = vsel %vm335, %v860, 0
        %v951 = vsel %vm335, %v863, 0
        %v954 = vsel %vm335, %v866, 0
        %v957 = vsel %vm335, %v869, 0
        %v960 = vsel %vm335, %v872, 0
        %v963 = vsel %vm335, %v875, 0
        %v966 = vsel %vm335, %v878, 0
        %v969 = vsel %vm335, %v881, 0
        %971 = vmatprep.subr.mxu0 0.0
        %972 = vmatpush1.msra.mxu0 %v898
        %973 = vmatprep.subr.mxu0 0.0
        %974 = vmatpush1.msra.mxu0 %v897
        %975 = vmatprep.subr.mxu0 0.0
        %976 = vmatpush1.msra.mxu0 %v896
        %977 = vmatprep.subr.mxu0 0.0
        %978 = vmatpush1.msra.mxu0 %v895
        %979 = vmatprep.subr.mxu0 0.0
        %980 = vmatpush1.msra.mxu0 %v894
        %981 = vmatprep.subr.mxu0 0.0
        %982 = vmatpush1.msra.mxu0 %v893
        %983 = vmatprep.subr.mxu0 0.0
        %984 = vmatpush1.msra.mxu0 %v892
        %985 = vmatprep.subr.mxu0 0.0
        %986 = vmatpush1.msra.mxu0 %v891
        %987 = vmatprep.subr.mxu0 0.0
        %988 = vmatpush1.msra.mxu0 %v890
        %989 = vmatprep.subr.mxu0 0.0
        %990 = vmatpush1.msra.mxu0 %v889
        %991 = vmatprep.subr.mxu0 0.0
        %992 = vmatpush1.msra.mxu0 %v888
        %993 = vmatprep.subr.mxu0 0.0
        %994 = vmatpush1.msra.mxu0 %v887
        %995 = vmatprep.subr.mxu0 0.0
        %996 = vmatpush1.msra.mxu0 %v886
        %997 = vmatprep.subr.mxu0 0.0
        %998 = vmatpush1.msra.mxu0 %v885
        %999 = vmatprep.subr.mxu0 0.0
        %1000 = vmatpush1.msra.mxu0 %v884
        %1001 = vmatprep.subr.mxu0 0.0
        %1002 = vmatpush1.msra.mxu0 %v883
        %1003 = vmatprep.subr.mxu0 0.0
        %1004 = vmatpush2.msra.mxu0 %v914
        %1005 = vmatprep.subr.mxu0 0.0
        %1006 = vmatpush2.msra.mxu0 %v913
        %1007 = vmatprep.subr.mxu0 0.0
        %1008 = vmatpush2.msra.mxu0 %v912
        %1009 = vmatprep.subr.mxu0 0.0
        %1010 = vmatpush2.msra.mxu0 %v911
        %1011 = vmatprep.subr.mxu0 0.0
        %1012 = vmatpush2.msra.mxu0 %v910
        %1013 = vmatprep.subr.mxu0 0.0
        %1014 = vmatpush2.msra.mxu0 %v909
        %1015 = vmatprep.subr.mxu0 0.0
        %1016 = vmatpush2.msra.mxu0 %v908
        %1017 = vmatprep.subr.mxu0 0.0
        %1018 = vmatpush2.msra.mxu0 %v907
        %1019 = vmatprep.subr.mxu0 0.0
        %1020 = vmatpush2.msra.mxu0 %v906
        %1021 = vmatprep.subr.mxu0 0.0
        %1022 = vmatpush2.msra.mxu0 %v905
        %1023 = vmatprep.subr.mxu0 0.0
        %1024 = vmatpush2.msra.mxu0 %v904
        %1025 = vmatprep.subr.mxu0 0.0
        %1026 = vmatpush2.msra.mxu0 %v903
        %1027 = vmatprep.subr.mxu0 0.0
        %1028 = vmatpush2.msra.mxu0 %v902
        %1029 = vmatprep.subr.mxu0 0.0
        %1030 = vmatpush2.msra.mxu0 %v901
        %1031 = vmatprep.subr.mxu0 0.0
        %1032 = vmatpush2.msra.mxu0 %v900
        %1033 = vmatprep.subr.mxu0 0.0
        %1034 = vmatpush2.msra.mxu0 %v899
        %1035 = vmatprep.mubr.f32.mxu0 %v835
        %1036 = vmatmul.mubr.f32.gmra.mxu0 %v834
        %v1037 = vpop.f32.mrf.mxu0
        %v1038 = vadd.f32 0.0, %v1037
        %v1039 = vpop.f32.mrf.mxu0
        %1040 = vmatprep.mubr.f32.mxu0 %v838
        %1041 = vmatmul.mubr.f32.gmra.mxu0 %v837
        %v1042 = vpop.f32.mrf.mxu0
        %v1043 = vadd.f32 0.0, %v1042
        %v1044 = vpop.f32.mrf.mxu0
        %1045 = vmatprep.mubr.f32.mxu0 %v841
        %1046 = vmatmul.mubr.f32.gmra.mxu0 %v840
        %v1047 = vpop.f32.mrf.mxu0
        %v1048 = vadd.f32 0.0, %v1047
        %v1049 = vpop.f32.mrf.mxu0
        %1050 = vmatprep.mubr.f32.mxu0 %v844
        %1051 = vmatmul.mubr.f32.gmra.mxu0 %v843
        %v1052 = vpop.f32.mrf.mxu0
        %v1053 = vadd.f32 0.0, %v1052
        %v1054 = vpop.f32.mrf.mxu0
        %1055 = vmatprep.mubr.f32.mxu0 %v847
        %1056 = vmatmul.mubr.f32.gmra.mxu0 %v846
        %v1057 = vpop.f32.mrf.mxu0
        %v1058 = vadd.f32 0.0, %v1057
        %v1059 = vpop.f32.mrf.mxu0
        %1060 = vmatprep.mubr.f32.mxu0 %v850
        %1061 = vmatmul.mubr.f32.gmra.mxu0 %v849
        %v1062 = vpop.f32.mrf.mxu0
        %v1063 = vadd.f32 0.0, %v1062
        %v1064 = vpop.f32.mrf.mxu0
        %1065 = vmatprep.mubr.f32.mxu0 %v853
        %1066 = vmatmul.mubr.f32.gmra.mxu0 %v852
        %v1067 = vpop.f32.mrf.mxu0
        %v1068 = vadd.f32 0.0, %v1067
        %v1069 = vpop.f32.mrf.mxu0
        %1070 = vmatprep.mubr.f32.mxu0 %v856
        %1071 = vmatmul.mubr.f32.gmra.mxu0 %v855
        %v1072 = vpop.f32.mrf.mxu0
        %v1073 = vadd.f32 0.0, %v1072
        %v1074 = vpop.f32.mrf.mxu0
        %1075 = vmatprep.mubr.f32.mxu0 %v859
        %1076 = vmatmul.mubr.f32.gmra.mxu0 %v858
        %v1077 = vpop.f32.mrf.mxu0
        %v1078 = vadd.f32 0.0, %v1077
        %v1079 = vpop.f32.mrf.mxu0
        %1080 = vmatprep.mubr.f32.mxu0 %v862
        %1081 = vmatmul.mubr.f32.gmra.mxu0 %v861
        %v1082 = vpop.f32.mrf.mxu0
        %v1083 = vadd.f32 0.0, %v1082
        %v1084 = vpop.f32.mrf.mxu0
        %1085 = vmatprep.mubr.f32.mxu0 %v865
        %1086 = vmatmul.mubr.f32.gmra.mxu0 %v864
        %v1087 = vpop.f32.mrf.mxu0
        %v1088 = vadd.f32 0.0, %v1087
        %v1089 = vpop.f32.mrf.mxu0
        %1090 = vmatprep.mubr.f32.mxu0 %v868
        %1091 = vmatmul.mubr.f32.gmra.mxu0 %v867
        %v1092 = vpop.f32.mrf.mxu0
        %v1093 = vadd.f32 0.0, %v1092
        %v1094 = vpop.f32.mrf.mxu0
        %1095 = vmatprep.mubr.f32.mxu0 %v871
        %1096 = vmatmul.mubr.f32.gmra.mxu0 %v870
        %v1097 = vpop.f32.mrf.mxu0
        %v1098 = vadd.f32 0.0, %v1097
        %v1099 = vpop.f32.mrf.mxu0
        %1100 = vmatprep.mubr.f32.mxu0 %v874
        %1101 = vmatmul.mubr.f32.gmra.mxu0 %v873
        %v1102 = vpop.f32.mrf.mxu0
        %v1103 = vadd.f32 0.0, %v1102
        %v1104 = vpop.f32.mrf.mxu0
        %1105 = vmatprep.mubr.f32.mxu0 %v877
        %1106 = vmatmul.mubr.f32.gmra.mxu0 %v876
        %v1107 = vpop.f32.mrf.mxu0
        %v1108 = vadd.f32 0.0, %v1107
        %v1109 = vpop.f32.mrf.mxu0
        %1110 = vmatprep.mubr.f32.mxu0 %v880
        %1111 = vmatmul.mubr.f32.gmra.mxu0 %v879
        %v1112 = vpop.f32.mrf.mxu0
        %v1113 = vadd.f32 0.0, %v1112
        %v1114 = vpop.f32.mrf.mxu0
        %1115 = vdwg.mxu0
        %1116 = vmatprep.subr.mxu0 0.0
        %1117 = vmatpush1.msra.mxu0 0.0
        %1118 = vmatprep.subr.mxu0 0.0
        %1119 = vmatpush1.msra.mxu0 0.0
        %1120 = vmatprep.subr.mxu0 0.0
        %1121 = vmatpush1.msra.mxu0 0.0
        %1122 = vmatprep.subr.mxu0 0.0
        %1123 = vmatpush1.msra.mxu0 0.0
        %1124 = vmatprep.subr.mxu0 0.0
        %1125 = vmatpush1.msra.mxu0 0.0
        %1126 = vmatprep.subr.mxu0 0.0
        %1127 = vmatpush1.msra.mxu0 0.0
        %1128 = vmatprep.subr.mxu0 0.0
        %1129 = vmatpush1.msra.mxu0 0.0
        %1130 = vmatprep.subr.mxu0 0.0
        %1131 = vmatpush1.msra.mxu0 0.0
        %1132 = vmatprep.subr.mxu0 0.0
        %1133 = vmatpush1.msra.mxu0 %v922
        %1134 = vmatprep.subr.mxu0 0.0
        %1135 = vmatpush1.msra.mxu0 %v921
        %1136 = vmatprep.subr.mxu0 0.0
        %1137 = vmatpush1.msra.mxu0 %v920
        %1138 = vmatprep.subr.mxu0 0.0
        %1139 = vmatpush1.msra.mxu0 %v919
        %1140 = vmatprep.subr.mxu0 0.0
        %1141 = vmatpush1.msra.mxu0 %v918
        %1142 = vmatprep.subr.mxu0 0.0
        %1143 = vmatpush1.msra.mxu0 %v917
        %1144 = vmatprep.subr.mxu0 0.0
        %1145 = vmatpush1.msra.mxu0 %v916
        %1146 = vmatprep.subr.mxu0 0.0
        %1147 = vmatpush1.msra.mxu0 %v915
        %1148 = vmatprep.subr.mxu0 0.0
        %1149 = vmatpush2.msra.mxu0 0.0
        %1150 = vmatprep.subr.mxu0 0.0
        %1151 = vmatpush2.msra.mxu0 0.0
        %1152 = vmatprep.subr.mxu0 0.0
        %1153 = vmatpush2.msra.mxu0 0.0
        %1154 = vmatprep.subr.mxu0 0.0
        %1155 = vmatpush2.msra.mxu0 0.0
        %1156 = vmatprep.subr.mxu0 0.0
        %1157 = vmatpush2.msra.mxu0 0.0
        %1158 = vmatprep.subr.mxu0 0.0
        %1159 = vmatpush2.msra.mxu0 0.0
        %1160 = vmatprep.subr.mxu0 0.0
        %1161 = vmatpush2.msra.mxu0 0.0
        %1162 = vmatprep.subr.mxu0 0.0
        %1163 = vmatpush2.msra.mxu0 0.0
        %1164 = vmatprep.subr.mxu0 0.0
        %1165 = vmatpush2.msra.mxu0 0.0
        %1166 = vmatprep.subr.mxu0 0.0
        %1167 = vmatpush2.msra.mxu0 0.0
        %1168 = vmatprep.subr.mxu0 0.0
        %1169 = vmatpush2.msra.mxu0 0.0
        %1170 = vmatprep.subr.mxu0 0.0
        %1171 = vmatpush2.msra.mxu0 0.0
        %1172 = vmatprep.subr.mxu0 0.0
        %1173 = vmatpush2.msra.mxu0 0.0
        %1174 = vmatprep.subr.mxu0 0.0
        %1175 = vmatpush2.msra.mxu0 0.0
        %1176 = vmatprep.subr.mxu0 0.0
        %1177 = vmatpush2.msra.mxu0 0.0
        %1178 = vmatprep.subr.mxu0 0.0
        %1179 = vmatpush2.msra.mxu0 0.0
        %1180 = vmatprep.mubr.f32.mxu0 0.0
        %1181 = vmatmul.mubr.f32.gmra.mxu0 %v924
        %v1182 = vpop.f32.mrf.mxu0
        %v1183 = vadd.f32 %v1038, %v1182
        %v1184 = vpop.f32.mrf.mxu0
        %1185 = vmatprep.mubr.f32.mxu0 0.0
        %1186 = vmatmul.mubr.f32.gmra.mxu0 %v927
        %v1187 = vpop.f32.mrf.mxu0
        %v1188 = vadd.f32 %v1043, %v1187
        %v1189 = vpop.f32.mrf.mxu0
        %1190 = vmatprep.mubr.f32.mxu0 0.0
        %1191 = vmatmul.mubr.f32.gmra.mxu0 %v930
        %v1192 = vpop.f32.mrf.mxu0
        %v1193 = vadd.f32 %v1048, %v1192
        %v1194 = vpop.f32.mrf.mxu0
        %1195 = vmatprep.mubr.f32.mxu0 0.0
        %1196 = vmatmul.mubr.f32.gmra.mxu0 %v933
        %v1197 = vpop.f32.mrf.mxu0
        %v1198 = vadd.f32 %v1053, %v1197
        %v1199 = vpop.f32.mrf.mxu0
        %1200 = vmatprep.mubr.f32.mxu0 0.0
        %1201 = vmatmul.mubr.f32.gmra.mxu0 %v936
        %v1202 = vpop.f32.mrf.mxu0
        %v1203 = vadd.f32 %v1058, %v1202
        %v1204 = vpop.f32.mrf.mxu0
        %1205 = vmatprep.mubr.f32.mxu0 0.0
        %1206 = vmatmul.mubr.f32.gmra.mxu0 %v939
        %v1207 = vpop.f32.mrf.mxu0
        %v1208 = vadd.f32 %v1063, %v1207
        %v1209 = vpop.f32.mrf.mxu0
        %1210 = vmatprep.mubr.f32.mxu0 0.0
        %1211 = vmatmul.mubr.f32.gmra.mxu0 %v942
        %v1212 = vpop.f32.mrf.mxu0
        %v1213 = vadd.f32 %v1068, %v1212
        %v1214 = vpop.f32.mrf.mxu0
        %1215 = vmatprep.mubr.f32.mxu0 0.0
        %1216 = vmatmul.mubr.f32.gmra.mxu0 %v945
        %v1217 = vpop.f32.mrf.mxu0
        %v1218 = vadd.f32 %v1073, %v1217
        %v1219 = vpop.f32.mrf.mxu0
        %1220 = vmatprep.mubr.f32.mxu0 0.0
        %1221 = vmatmul.mubr.f32.gmra.mxu0 %v948
        %v1222 = vpop.f32.mrf.mxu0
        %v1223 = vadd.f32 %v1078, %v1222
        %v1224 = vpop.f32.mrf.mxu0
        %1225 = vmatprep.mubr.f32.mxu0 0.0
        %1226 = vmatmul.mubr.f32.gmra.mxu0 %v951
        %v1227 = vpop.f32.mrf.mxu0
        %v1228 = vadd.f32 %v1083, %v1227
        %v1229 = vpop.f32.mrf.mxu0
        %1230 = vmatprep.mubr.f32.mxu0 0.0
        %1231 = vmatmul.mubr.f32.gmra.mxu0 %v954
        %v1232 = vpop.f32.mrf.mxu0
        %v1233 = vadd.f32 %v1088, %v1232
        %v1234 = vpop.f32.mrf.mxu0
        %1235 = vmatprep.mubr.f32.mxu0 0.0
        %1236 = vmatmul.mubr.f32.gmra.mxu0 %v957
        %v1237 = vpop.f32.mrf.mxu0
        %v1238 = vadd.f32 %v1093, %v1237
        %v1239 = vpop.f32.mrf.mxu0
        %1240 = vmatprep.mubr.f32.mxu0 0.0
        %1241 = vmatmul.mubr.f32.gmra.mxu0 %v960
        %v1242 = vpop.f32.mrf.mxu0
        %v1243 = vadd.f32 %v1098, %v1242
        %v1244 = vpop.f32.mrf.mxu0
        %1245 = vmatprep.mubr.f32.mxu0 0.0
        %1246 = vmatmul.mubr.f32.gmra.mxu0 %v963
        %v1247 = vpop.f32.mrf.mxu0
        %v1248 = vadd.f32 %v1103, %v1247
        %v1249 = vpop.f32.mrf.mxu0
        %1250 = vmatprep.mubr.f32.mxu0 0.0
        %1251 = vmatmul.mubr.f32.gmra.mxu0 %v966
        %v1252 = vpop.f32.mrf.mxu0
        %v1253 = vadd.f32 %v1108, %v1252
        %v1254 = vpop.f32.mrf.mxu0
        %1255 = vmatprep.mubr.f32.mxu0 0.0
        %1256 = vmatmul.mubr.f32.gmra.mxu0 %v969
        %v1257 = vpop.f32.mrf.mxu0
        %v1258 = vadd.f32 %v1113, %v1257
        %v1259 = vpop.f32.mrf.mxu0
        %1260 = vdwg.mxu0
        %v1262 = vsel %vm335, %v747, 0
        %v1265 = vsel %vm335, %v750, 0
        %v1268 = vsel %vm335, %v753, 0
        %v1271 = vsel %vm335, %v756, 0
        %v1274 = vsel %vm335, %v759, 0
        %v1277 = vsel %vm335, %v762, 0
        %v1280 = vsel %vm335, %v765, 0
        %v1283 = vsel %vm335, %v768, 0
        %v1286 = vsel %vm335, %v771, 0
        %v1289 = vsel %vm335, %v774, 0
        %v1292 = vsel %vm335, %v777, 0
        %v1295 = vsel %vm335, %v780, 0
        %v1298 = vsel %vm335, %v783, 0
        %v1301 = vsel %vm335, %v786, 0
        %v1304 = vsel %vm335, %v789, 0
        %v1307 = vsel %vm335, %v792, 0
        %1309 = vmatprep.subr.mxu0 0.0
        %1310 = vmatpush1.msra.mxu0 %v808
        %1311 = vmatprep.subr.mxu0 0.0
        %1312 = vmatpush1.msra.mxu0 %v807
        %1313 = vmatprep.subr.mxu0 0.0
        %1314 = vmatpush1.msra.mxu0 %v806
        %1315 = vmatprep.subr.mxu0 0.0
        %1316 = vmatpush1.msra.mxu0 %v805
        %1317 = vmatprep.subr.mxu0 0.0
        %1318 = vmatpush1.msra.mxu0 %v804
        %1319 = vmatprep.subr.mxu0 0.0
        %1320 = vmatpush1.msra.mxu0 %v803
        %1321 = vmatprep.subr.mxu0 0.0
        %1322 = vmatpush1.msra.mxu0 %v802
        %1323 = vmatprep.subr.mxu0 0.0
        %1324 = vmatpush1.msra.mxu0 %v801
        %1325 = vmatprep.subr.mxu0 0.0
        %1326 = vmatpush1.msra.mxu0 %v800
        %1327 = vmatprep.subr.mxu0 0.0
        %1328 = vmatpush1.msra.mxu0 %v799
        %1329 = vmatprep.subr.mxu0 0.0
        %1330 = vmatpush1.msra.mxu0 %v798
        %1331 = vmatprep.subr.mxu0 0.0
        %1332 = vmatpush1.msra.mxu0 %v797
        %1333 = vmatprep.subr.mxu0 0.0
        %1334 = vmatpush1.msra.mxu0 %v796
        %1335 = vmatprep.subr.mxu0 0.0
        %1336 = vmatpush1.msra.mxu0 %v795
        %1337 = vmatprep.subr.mxu0 0.0
        %1338 = vmatpush1.msra.mxu0 %v794
        %1339 = vmatprep.subr.mxu0 0.0
        %1340 = vmatpush1.msra.mxu0 %v793
        %1341 = vmatprep.subr.mxu0 0.0
        %1342 = vmatpush2.msra.mxu0 %v824
        %1343 = vmatprep.subr.mxu0 0.0
        %1344 = vmatpush2.msra.mxu0 %v823
        %1345 = vmatprep.subr.mxu0 0.0
        %1346 = vmatpush2.msra.mxu0 %v822
        %1347 = vmatprep.subr.mxu0 0.0
        %1348 = vmatpush2.msra.mxu0 %v821
        %1349 = vmatprep.subr.mxu0 0.0
        %1350 = vmatpush2.msra.mxu0 %v820
        %1351 = vmatprep.subr.mxu0 0.0
        %1352 = vmatpush2.msra.mxu0 %v819
        %1353 = vmatprep.subr.mxu0 0.0
        %1354 = vmatpush2.msra.mxu0 %v818
        %1355 = vmatprep.subr.mxu0 0.0
        %1356 = vmatpush2.msra.mxu0 %v817
        %1357 = vmatprep.subr.mxu0 0.0
        %1358 = vmatpush2.msra.mxu0 %v816
        %1359 = vmatprep.subr.mxu0 0.0
        %1360 = vmatpush2.msra.mxu0 %v815
        %1361 = vmatprep.subr.mxu0 0.0
        %1362 = vmatpush2.msra.mxu0 %v814
        %1363 = vmatprep.subr.mxu0 0.0
        %1364 = vmatpush2.msra.mxu0 %v813
        %1365 = vmatprep.subr.mxu0 0.0
        %1366 = vmatpush2.msra.mxu0 %v812
        %1367 = vmatprep.subr.mxu0 0.0
        %1368 = vmatpush2.msra.mxu0 %v811
        %1369 = vmatprep.subr.mxu0 0.0
        %1370 = vmatpush2.msra.mxu0 %v810
        %1371 = vmatprep.subr.mxu0 0.0
        %1372 = vmatpush2.msra.mxu0 %v809
        %1373 = vmatprep.mubr.f32.mxu0 %v746
        %1374 = vmatmul.mubr.f32.gmra.mxu0 %v745
        %v1375 = vpop.f32.mrf.mxu0
        %v1376 = vadd.f32 %v1183, %v1375
        %v1377 = vpop.f32.mrf.mxu0
        %1378 = vmatprep.mubr.f32.mxu0 %v749
        %1379 = vmatmul.mubr.f32.gmra.mxu0 %v748
        %v1380 = vpop.f32.mrf.mxu0
        %v1381 = vadd.f32 %v1188, %v1380
        %v1382 = vpop.f32.mrf.mxu0
        %1383 = vmatprep.mubr.f32.mxu0 %v752
        %1384 = vmatmul.mubr.f32.gmra.mxu0 %v751
        %v1385 = vpop.f32.mrf.mxu0
        %v1386 = vadd.f32 %v1193, %v1385
        %v1387 = vpop.f32.mrf.mxu0
        %1388 = vmatprep.mubr.f32.mxu0 %v755
        %1389 = vmatmul.mubr.f32.gmra.mxu0 %v754
        %v1390 = vpop.f32.mrf.mxu0
        %v1391 = vadd.f32 %v1198, %v1390
        %v1392 = vpop.f32.mrf.mxu0
        %1393 = vmatprep.mubr.f32.mxu0 %v758
        %1394 = vmatmul.mubr.f32.gmra.mxu0 %v757
        %v1395 = vpop.f32.mrf.mxu0
        %v1396 = vadd.f32 %v1203, %v1395
        %v1397 = vpop.f32.mrf.mxu0
        %1398 = vmatprep.mubr.f32.mxu0 %v761
        %1399 = vmatmul.mubr.f32.gmra.mxu0 %v760
        %v1400 = vpop.f32.mrf.mxu0
        %v1401 = vadd.f32 %v1208, %v1400
        %v1402 = vpop.f32.mrf.mxu0
        %1403 = vmatprep.mubr.f32.mxu0 %v764
        %1404 = vmatmul.mubr.f32.gmra.mxu0 %v763
        %v1405 = vpop.f32.mrf.mxu0
        %v1406 = vadd.f32 %v1213, %v1405
        %v1407 = vpop.f32.mrf.mxu0
        %1408 = vmatprep.mubr.f32.mxu0 %v767
        %1409 = vmatmul.mubr.f32.gmra.mxu0 %v766
        %v1410 = vpop.f32.mrf.mxu0
        %v1411 = vadd.f32 %v1218, %v1410
        %v1412 = vpop.f32.mrf.mxu0
        %1413 = vmatprep.mubr.f32.mxu0 %v770
        %1414 = vmatmul.mubr.f32.gmra.mxu0 %v769
        %v1415 = vpop.f32.mrf.mxu0
        %v1416 = vadd.f32 %v1223, %v1415
        %v1417 = vpop.f32.mrf.mxu0
        %1418 = vmatprep.mubr.f32.mxu0 %v773
        %1419 = vmatmul.mubr.f32.gmra.mxu0 %v772
        %v1420 = vpop.f32.mrf.mxu0
        %v1421 = vadd.f32 %v1228, %v1420
        %v1422 = vpop.f32.mrf.mxu0
        %1423 = vmatprep.mubr.f32.mxu0 %v776
        %1424 = vmatmul.mubr.f32.gmra.mxu0 %v775
        %v1425 = vpop.f32.mrf.mxu0
        %v1426 = vadd.f32 %v1233, %v1425
        %v1427 = vpop.f32.mrf.mxu0
        %1428 = vmatprep.mubr.f32.mxu0 %v779
        %1429 = vmatmul.mubr.f32.gmra.mxu0 %v778
        %v1430 = vpop.f32.mrf.mxu0
        %v1431 = vadd.f32 %v1238, %v1430
        %v1432 = vpop.f32.mrf.mxu0
        %1433 = vmatprep.mubr.f32.mxu0 %v782
        %1434 = vmatmul.mubr.f32.gmra.mxu0 %v781
        %v1435 = vpop.f32.mrf.mxu0
        %v1436 = vadd.f32 %v1243, %v1435
        %v1437 = vpop.f32.mrf.mxu0
        %1438 = vmatprep.mubr.f32.mxu0 %v785
        %1439 = vmatmul.mubr.f32.gmra.mxu0 %v784
        %v1440 = vpop.f32.mrf.mxu0
        %v1441 = vadd.f32 %v1248, %v1440
        %v1442 = vpop.f32.mrf.mxu0
        %1443 = vmatprep.mubr.f32.mxu0 %v788
        %1444 = vmatmul.mubr.f32.gmra.mxu0 %v787
        %v1445 = vpop.f32.mrf.mxu0
        %v1446 = vadd.f32 %v1253, %v1445
        %v1447 = vpop.f32.mrf.mxu0
        %1448 = vmatprep.mubr.f32.mxu0 %v791
        %1449 = vmatmul.mubr.f32.gmra.mxu0 %v790
        %v1450 = vpop.f32.mrf.mxu0
        %v1451 = vadd.f32 %v1258, %v1450
        %v1452 = vpop.f32.mrf.mxu0
        %1453 = vdwg.mxu0
        %1454 = vmatprep.subr.mxu0 0.0
        %1455 = vmatpush1.msra.mxu0 0.0
        %1456 = vmatprep.subr.mxu0 0.0
        %1457 = vmatpush1.msra.mxu0 0.0
        %1458 = vmatprep.subr.mxu0 0.0
        %1459 = vmatpush1.msra.mxu0 0.0
        %1460 = vmatprep.subr.mxu0 0.0
        %1461 = vmatpush1.msra.mxu0 0.0
        %1462 = vmatprep.subr.mxu0 0.0
        %1463 = vmatpush1.msra.mxu0 0.0
        %1464 = vmatprep.subr.mxu0 0.0
        %1465 = vmatpush1.msra.mxu0 0.0
        %1466 = vmatprep.subr.mxu0 0.0
        %1467 = vmatpush1.msra.mxu0 0.0
        %1468 = vmatprep.subr.mxu0 0.0
        %1469 = vmatpush1.msra.mxu0 0.0
        %1470 = vmatprep.subr.mxu0 0.0
        %1471 = vmatpush1.msra.mxu0 %v832
        %1472 = vmatprep.subr.mxu0 0.0
        %1473 = vmatpush1.msra.mxu0 %v831
        %1474 = vmatprep.subr.mxu0 0.0
        %1475 = vmatpush1.msra.mxu0 %v830
        %1476 = vmatprep.subr.mxu0 0.0
        %1477 = vmatpush1.msra.mxu0 %v829
        %1478 = vmatprep.subr.mxu0 0.0
        %1479 = vmatpush1.msra.mxu0 %v828
        %1480 = vmatprep.subr.mxu0 0.0
        %1481 = vmatpush1.msra.mxu0 %v827
        %1482 = vmatprep.subr.mxu0 0.0
        %1483 = vmatpush1.msra.mxu0 %v826
        %1484 = vmatprep.subr.mxu0 0.0
        %1485 = vmatpush1.msra.mxu0 %v825
        %1486 = vmatprep.subr.mxu0 0.0
        %1487 = vmatpush2.msra.mxu0 0.0
        %1488 = vmatprep.subr.mxu0 0.0
        %1489 = vmatpush2.msra.mxu0 0.0
        %1490 = vmatprep.subr.mxu0 0.0
        %1491 = vmatpush2.msra.mxu0 0.0
        %1492 = vmatprep.subr.mxu0 0.0
        %1493 = vmatpush2.msra.mxu0 0.0
        %1494 = vmatprep.subr.mxu0 0.0
        %1495 = vmatpush2.msra.mxu0 0.0
        %1496 = vmatprep.subr.mxu0 0.0
        %1497 = vmatpush2.msra.mxu0 0.0
        %1498 = vmatprep.subr.mxu0 0.0
        %1499 = vmatpush2.msra.mxu0 0.0
        %1500 = vmatprep.subr.mxu0 0.0
        %1501 = vmatpush2.msra.mxu0 0.0
        %1502 = vmatprep.subr.mxu0 0.0
        %1503 = vmatpush2.msra.mxu0 0.0
        %1504 = vmatprep.subr.mxu0 0.0
        %1505 = vmatpush2.msra.mxu0 0.0
        %1506 = vmatprep.subr.mxu0 0.0
        %1507 = vmatpush2.msra.mxu0 0.0
        %1508 = vmatprep.subr.mxu0 0.0
        %1509 = vmatpush2.msra.mxu0 0.0
        %1510 = vmatprep.subr.mxu0 0.0
        %1511 = vmatpush2.msra.mxu0 0.0
        %1512 = vmatprep.subr.mxu0 0.0
        %1513 = vmatpush2.msra.mxu0 0.0
        %1514 = vmatprep.subr.mxu0 0.0
        %1515 = vmatpush2.msra.mxu0 0.0
        %1516 = vmatprep.subr.mxu0 0.0
        %1517 = vmatpush2.msra.mxu0 0.0
        %1518 = vmatprep.mubr.f32.mxu0 0.0
        %1519 = vmatmul.mubr.f32.gmra.mxu0 %v1262
        %v1520 = vpop.f32.mrf.mxu0
        %v1521 = vadd.f32 %v1376, %v1520
        %v1522 = vpop.f32.mrf.mxu0
        %1523 = vmatprep.mubr.f32.mxu0 0.0
        %1524 = vmatmul.mubr.f32.gmra.mxu0 %v1265
        %v1525 = vpop.f32.mrf.mxu0
        %v1526 = vadd.f32 %v1381, %v1525
        %v1527 = vpop.f32.mrf.mxu0
        %1528 = vmatprep.mubr.f32.mxu0 0.0
        %1529 = vmatmul.mubr.f32.gmra.mxu0 %v1268
        %v1530 = vpop.f32.mrf.mxu0
        %v1531 = vadd.f32 %v1386, %v1530
        %v1532 = vpop.f32.mrf.mxu0
        %1533 = vmatprep.mubr.f32.mxu0 0.0
        %1534 = vmatmul.mubr.f32.gmra.mxu0 %v1271
        %v1535 = vpop.f32.mrf.mxu0
        %v1536 = vadd.f32 %v1391, %v1535
        %v1537 = vpop.f32.mrf.mxu0
        %1538 = vmatprep.mubr.f32.mxu0 0.0
        %1539 = vmatmul.mubr.f32.gmra.mxu0 %v1274
        %v1540 = vpop.f32.mrf.mxu0
        %v1541 = vadd.f32 %v1396, %v1540
        %v1542 = vpop.f32.mrf.mxu0
        %1543 = vmatprep.mubr.f32.mxu0 0.0
        %1544 = vmatmul.mubr.f32.gmra.mxu0 %v1277
        %v1545 = vpop.f32.mrf.mxu0
        %v1546 = vadd.f32 %v1401, %v1545
        %v1547 = vpop.f32.mrf.mxu0
        %1548 = vmatprep.mubr.f32.mxu0 0.0
        %1549 = vmatmul.mubr.f32.gmra.mxu0 %v1280
        %v1550 = vpop.f32.mrf.mxu0
        %v1551 = vadd.f32 %v1406, %v1550
        %v1552 = vpop.f32.mrf.mxu0
        %1553 = vmatprep.mubr.f32.mxu0 0.0
        %1554 = vmatmul.mubr.f32.gmra.mxu0 %v1283
        %v1555 = vpop.f32.mrf.mxu0
        %v1556 = vadd.f32 %v1411, %v1555
        %v1557 = vpop.f32.mrf.mxu0
        %1558 = vmatprep.mubr.f32.mxu0 0.0
        %1559 = vmatmul.mubr.f32.gmra.mxu0 %v1286
        %v1560 = vpop.f32.mrf.mxu0
        %v1561 = vadd.f32 %v1416, %v1560
        %v1562 = vpop.f32.mrf.mxu0
        %1563 = vmatprep.mubr.f32.mxu0 0.0
        %1564 = vmatmul.mubr.f32.gmra.mxu0 %v1289
        %v1565 = vpop.f32.mrf.mxu0
        %v1566 = vadd.f32 %v1421, %v1565
        %v1567 = vpop.f32.mrf.mxu0
        %1568 = vmatprep.mubr.f32.mxu0 0.0
        %1569 = vmatmul.mubr.f32.gmra.mxu0 %v1292
        %v1570 = vpop.f32.mrf.mxu0
        %v1571 = vadd.f32 %v1426, %v1570
        %v1572 = vpop.f32.mrf.mxu0
        %1573 = vmatprep.mubr.f32.mxu0 0.0
        %1574 = vmatmul.mubr.f32.gmra.mxu0 %v1295
        %v1575 = vpop.f32.mrf.mxu0
        %v1576 = vadd.f32 %v1431, %v1575
        %v1577 = vpop.f32.mrf.mxu0
        %1578 = vmatprep.mubr.f32.mxu0 0.0
        %1579 = vmatmul.mubr.f32.gmra.mxu0 %v1298
        %v1580 = vpop.f32.mrf.mxu0
        %v1581 = vadd.f32 %v1436, %v1580
        %v1582 = vpop.f32.mrf.mxu0
        %1583 = vmatprep.mubr.f32.mxu0 0.0
        %1584 = vmatmul.mubr.f32.gmra.mxu0 %v1301
        %v1585 = vpop.f32.mrf.mxu0
        %v1586 = vadd.f32 %v1441, %v1585
        %v1587 = vpop.f32.mrf.mxu0
        %1588 = vmatprep.mubr.f32.mxu0 0.0
        %1589 = vmatmul.mubr.f32.gmra.mxu0 %v1304
        %v1590 = vpop.f32.mrf.mxu0
        %v1591 = vadd.f32 %v1446, %v1590
        %v1592 = vpop.f32.mrf.mxu0
        %1593 = vmatprep.mubr.f32.mxu0 0.0
        %1594 = vmatmul.mubr.f32.gmra.mxu0 %v1307
        %v1595 = vpop.f32.mrf.mxu0
        %v1596 = vadd.f32 %v1451, %v1595
        %v1597 = vpop.f32.mrf.mxu0
        %1598 = vdwg.mxu0
        %s1599 = scalar_lea.vmem [#allocation2], 48
        %v1600 = vld [vmem:[%s1599] sm:$0xff]
        %v1601 = vld [vmem:[%s1599 + $0x8] sm:$0xff]
        %v1602 = vld [vmem:[%s1599 + $0x10] sm:$0xff]
        %v1603 = vld [vmem:[%s1599 + $0x18] sm:$0xff]
        %v1604 = vld [vmem:[%s1599 + $0x20] sm:$0xff]
        %v1605 = vld [vmem:[%s1599 + $0x28] sm:$0xff]
        %v1606 = vld [vmem:[%s1599 + $0x30] sm:$0xff]
        %v1607 = vld [vmem:[%s1599 + $0x38] sm:$0xff]
        %v1608 = vld [vmem:[%s1599 + $0x40] sm:$0xff]
        %v1609 = vld [vmem:[%s1599 + $0x48] sm:$0xff]
        %v1610 = vld [vmem:[%s1599 + $0x50] sm:$0xff]
        %v1611 = vld [vmem:[%s1599 + $0x58] sm:$0xff]
        %v1612 = vld [vmem:[%s1599 + $0x60] sm:$0xff]
        %v1613 = vld [vmem:[%s1599 + $0x68] sm:$0xff]
        %v1614 = vld [vmem:[%s1599 + $0x70] sm:$0xff]
        %v1615 = vld [vmem:[%s1599 + $0x78] sm:$0xff]
        %v1616 = vld [vmem:[%s1599 + $0x80] sm:$0xff]
        %v1617 = vld [vmem:[%s1599 + $0x88] sm:$0xff]
        %v1618 = vld [vmem:[%s1599 + $0x90] sm:$0xff]
        %v1619 = vld [vmem:[%s1599 + $0x98] sm:$0xff]
        %v1620 = vld [vmem:[%s1599 + $0xa0] sm:$0xff]
        %v1621 = vld [vmem:[%s1599 + $0xa8] sm:$0xff]
        %v1622 = vld [vmem:[%s1599 + $0xb0] sm:$0xff]
        %v1623 = vld [vmem:[%s1599 + $0xb8] sm:$0xff]
        %v1624 = vld [vmem:[%s1599 + $0x120] sm:$0xff]
        %v1625 = vld [vmem:[%s1599 + $0x128] sm:$0xff]
        %v1626 = vld [vmem:[%s1599 + $0x130] sm:$0xff]
        %v1627 = vld [vmem:[%s1599 + $0x138] sm:$0xff]
        %v1628 = vld [vmem:[%s1599 + $0x140] sm:$0xff]
        %v1629 = vld [vmem:[%s1599 + $0x148] sm:$0xff]
        %v1630 = vld [vmem:[%s1599 + $0x150] sm:$0xff]
        %v1631 = vld [vmem:[%s1599 + $0x158] sm:$0xff]
        %v1632 = vld [vmem:[%s1599 + $0x160] sm:$0xff]
        %v1633 = vld [vmem:[%s1599 + $0x168] sm:$0xff]
        %v1634 = vld [vmem:[%s1599 + $0x170] sm:$0xff]
        %v1635 = vld [vmem:[%s1599 + $0x178] sm:$0xff]
        %v1636 = vld [vmem:[%s1599 + $0x180] sm:$0xff]
        %v1637 = vld [vmem:[%s1599 + $0x188] sm:$0xff]
        %v1638 = vld [vmem:[%s1599 + $0x190] sm:$0xff]
        %v1639 = vld [vmem:[%s1599 + $0x198] sm:$0xff]
        %v1640 = vld [vmem:[%s1599 + $0x1a0] sm:$0xff]
        %v1641 = vld [vmem:[%s1599 + $0x1a8] sm:$0xff]
        %v1642 = vld [vmem:[%s1599 + $0x1b0] sm:$0xff]
        %v1643 = vld [vmem:[%s1599 + $0x1b8] sm:$0xff]
        %v1644 = vld [vmem:[%s1599 + $0x1c0] sm:$0xff]
        %v1645 = vld [vmem:[%s1599 + $0x1c8] sm:$0xff]
        %v1646 = vld [vmem:[%s1599 + $0x1d0] sm:$0xff]
        %v1647 = vld [vmem:[%s1599 + $0x1d8] sm:$0xff]
        %s1648 = scalar_lea.vmem [#allocation4], 640
        %v1649 = vld [vmem:[%s1648] sm:$0xff]
        %v1650 = vld [vmem:[%s1648 + $0x8] sm:$0xff]
        %v1651 = vld [vmem:[%s1648 + $0x10] sm:$0xff]
        %v1652 = vld [vmem:[%s1648 + $0x18] sm:$0xff]
        %v1653 = vld [vmem:[%s1648 + $0x20] sm:$0xff]
        %v1654 = vld [vmem:[%s1648 + $0x28] sm:$0xff]
        %v1655 = vld [vmem:[%s1648 + $0x30] sm:$0xff]
        %v1656 = vld [vmem:[%s1648 + $0x38] sm:$0xff]
        %v1657 = vld [vmem:[%s1648 + $0x40] sm:$0xff]
        %v1658 = vld [vmem:[%s1648 + $0x48] sm:$0xff]
        %v1659 = vld [vmem:[%s1648 + $0x50] sm:$0xff]
        %v1660 = vld [vmem:[%s1648 + $0x58] sm:$0xff]
        %v1661 = vld [vmem:[%s1648 + $0x60] sm:$0xff]
        %v1662 = vld [vmem:[%s1648 + $0x68] sm:$0xff]
        %v1663 = vld [vmem:[%s1648 + $0x70] sm:$0xff]
        %v1664 = vld [vmem:[%s1648 + $0x78] sm:$0xff]
        %v1665 = vld [vmem:[%s1648 + $0x80] sm:$0xff]
        %v1666 = vld [vmem:[%s1648 + $0x88] sm:$0xff]
        %v1667 = vld [vmem:[%s1648 + $0x90] sm:$0xff]
        %v1668 = vld [vmem:[%s1648 + $0x98] sm:$0xff]
        %v1669 = vld [vmem:[%s1648 + $0xa0] sm:$0xff]
        %v1670 = vld [vmem:[%s1648 + $0xa8] sm:$0xff]
        %v1671 = vld [vmem:[%s1648 + $0xb0] sm:$0xff]
        %v1672 = vld [vmem:[%s1648 + $0xb8] sm:$0xff]
        %v1673 = vld [vmem:[%s1648 + $0xc0] sm:$0xff]
        %v1674 = vld [vmem:[%s1648 + $0xc8] sm:$0xff]
        %v1675 = vld [vmem:[%s1648 + $0xd0] sm:$0xff]
        %v1676 = vld [vmem:[%s1648 + $0xd8] sm:$0xff]
        %v1677 = vld [vmem:[%s1648 + $0xe0] sm:$0xff]
        %v1678 = vld [vmem:[%s1648 + $0xe8] sm:$0xff]
        %v1679 = vld [vmem:[%s1648 + $0xf0] sm:$0xff]
        %v1680 = vld [vmem:[%s1648 + $0xf8] sm:$0xff]
        %v1681 = vld [vmem:[%s1648 + $0x100] sm:$0xff]
        %v1682 = vld [vmem:[%s1648 + $0x108] sm:$0xff]
        %v1683 = vld [vmem:[%s1648 + $0x110] sm:$0xff]
        %v1684 = vld [vmem:[%s1648 + $0x118] sm:$0xff]
        %v1685 = vld [vmem:[%s1648 + $0x120] sm:$0xff]
        %v1686 = vld [vmem:[%s1648 + $0x128] sm:$0xff]
        %v1687 = vld [vmem:[%s1648 + $0x130] sm:$0xff]
        %v1688 = vld [vmem:[%s1648 + $0x138] sm:$0xff]
        %v1690 = vsel %vm335, %v1602, 0
        %v1693 = vsel %vm335, %v1605, 0
        %v1696 = vsel %vm335, %v1608, 0
        %v1699 = vsel %vm335, %v1611, 0
        %v1702 = vsel %vm335, %v1614, 0
        %v1705 = vsel %vm335, %v1617, 0
        %v1708 = vsel %vm335, %v1620, 0
        %v1711 = vsel %vm335, %v1623, 0
        %v1714 = vsel %vm335, %v1626, 0
        %v1717 = vsel %vm335, %v1629, 0
        %v1720 = vsel %vm335, %v1632, 0
        %v1723 = vsel %vm335, %v1635, 0
        %v1726 = vsel %vm335, %v1638, 0
        %v1729 = vsel %vm335, %v1641, 0
        %v1732 = vsel %vm335, %v1644, 0
        %v1735 = vsel %vm335, %v1647, 0
        %1737 = vmatprep.subr.mxu0 0.0
        %1738 = vmatpush1.msra.mxu0 %v1664
        %1739 = vmatprep.subr.mxu0 0.0
        %1740 = vmatpush1.msra.mxu0 %v1663
        %1741 = vmatprep.subr.mxu0 0.0
        %1742 = vmatpush1.msra.mxu0 %v1662
        %1743 = vmatprep.subr.mxu0 0.0
        %1744 = vmatpush1.msra.mxu0 %v1661
        %1745 = vmatprep.subr.mxu0 0.0
        %1746 = vmatpush1.msra.mxu0 %v1660
        %1747 = vmatprep.subr.mxu0 0.0
        %1748 = vmatpush1.msra.mxu0 %v1659
        %1749 = vmatprep.subr.mxu0 0.0
        %1750 = vmatpush1.msra.mxu0 %v1658
        %1751 = vmatprep.subr.mxu0 0.0
        %1752 = vmatpush1.msra.mxu0 %v1657
        %1753 = vmatprep.subr.mxu0 0.0
        %1754 = vmatpush1.msra.mxu0 %v1656
        %1755 = vmatprep.subr.mxu0 0.0
        %1756 = vmatpush1.msra.mxu0 %v1655
        %1757 = vmatprep.subr.mxu0 0.0
        %1758 = vmatpush1.msra.mxu0 %v1654
        %1759 = vmatprep.subr.mxu0 0.0
        %1760 = vmatpush1.msra.mxu0 %v1653
        %1761 = vmatprep.subr.mxu0 0.0
        %1762 = vmatpush1.msra.mxu0 %v1652
        %1763 = vmatprep.subr.mxu0 0.0
        %1764 = vmatpush1.msra.mxu0 %v1651
        %1765 = vmatprep.subr.mxu0 0.0
        %1766 = vmatpush1.msra.mxu0 %v1650
        %1767 = vmatprep.subr.mxu0 0.0
        %1768 = vmatpush1.msra.mxu0 %v1649
        %1769 = vmatprep.subr.mxu0 0.0
        %1770 = vmatpush2.msra.mxu0 %v1680
        %1771 = vmatprep.subr.mxu0 0.0
        %1772 = vmatpush2.msra.mxu0 %v1679
        %1773 = vmatprep.subr.mxu0 0.0
        %1774 = vmatpush2.msra.mxu0 %v1678
        %1775 = vmatprep.subr.mxu0 0.0
        %1776 = vmatpush2.msra.mxu0 %v1677
        %1777 = vmatprep.subr.mxu0 0.0
        %1778 = vmatpush2.msra.mxu0 %v1676
        %1779 = vmatprep.subr.mxu0 0.0
        %1780 = vmatpush2.msra.mxu0 %v1675
        %1781 = vmatprep.subr.mxu0 0.0
        %1782 = vmatpush2.msra.mxu0 %v1674
        %1783 = vmatprep.subr.mxu0 0.0
        %1784 = vmatpush2.msra.mxu0 %v1673
        %1785 = vmatprep.subr.mxu0 0.0
        %1786 = vmatpush2.msra.mxu0 %v1672
        %1787 = vmatprep.subr.mxu0 0.0
        %1788 = vmatpush2.msra.mxu0 %v1671
        %1789 = vmatprep.subr.mxu0 0.0
        %1790 = vmatpush2.msra.mxu0 %v1670
        %1791 = vmatprep.subr.mxu0 0.0
        %1792 = vmatpush2.msra.mxu0 %v1669
        %1793 = vmatprep.subr.mxu0 0.0
        %1794 = vmatpush2.msra.mxu0 %v1668
        %1795 = vmatprep.subr.mxu0 0.0
        %1796 = vmatpush2.msra.mxu0 %v1667
        %1797 = vmatprep.subr.mxu0 0.0
        %1798 = vmatpush2.msra.mxu0 %v1666
        %1799 = vmatprep.subr.mxu0 0.0
        %1800 = vmatpush2.msra.mxu0 %v1665
        %1801 = vmatprep.mubr.f32.mxu0 %v1601
        %1802 = vmatmul.mubr.f32.gmra.mxu0 %v1600
        %v1803 = vpop.f32.mrf.mxu0
        %v1804 = vadd.f32 0.0, %v1803
        %v1805 = vpop.f32.mrf.mxu0
        %1806 = vmatprep.mubr.f32.mxu0 %v1604
        %1807 = vmatmul.mubr.f32.gmra.mxu0 %v1603
        %v1808 = vpop.f32.mrf.mxu0
        %v1809 = vadd.f32 0.0, %v1808
        %v1810 = vpop.f32.mrf.mxu0
        %1811 = vmatprep.mubr.f32.mxu0 %v1607
        %1812 = vmatmul.mubr.f32.gmra.mxu0 %v1606
        %v1813 = vpop.f32.mrf.mxu0
        %v1814 = vadd.f32 0.0, %v1813
        %v1815 = vpop.f32.mrf.mxu0
        %1816 = vmatprep.mubr.f32.mxu0 %v1610
        %1817 = vmatmul.mubr.f32.gmra.mxu0 %v1609
        %v1818 = vpop.f32.mrf.mxu0
        %v1819 = vadd.f32 0.0, %v1818
        %v1820 = vpop.f32.mrf.mxu0
        %1821 = vmatprep.mubr.f32.mxu0 %v1613
        %1822 = vmatmul.mubr.f32.gmra.mxu0 %v1612
        %v1823 = vpop.f32.mrf.mxu0
        %v1824 = vadd.f32 0.0, %v1823
        %v1825 = vpop.f32.mrf.mxu0
        %1826 = vmatprep.mubr.f32.mxu0 %v1616
        %1827 = vmatmul.mubr.f32.gmra.mxu0 %v1615
        %v1828 = vpop.f32.mrf.mxu0
        %v1829 = vadd.f32 0.0, %v1828
        %v1830 = vpop.f32.mrf.mxu0
        %1831 = vmatprep.mubr.f32.mxu0 %v1619
        %1832 = vmatmul.mubr.f32.gmra.mxu0 %v1618
        %v1833 = vpop.f32.mrf.mxu0
        %v1834 = vadd.f32 0.0, %v1833
        %v1835 = vpop.f32.mrf.mxu0
        %1836 = vmatprep.mubr.f32.mxu0 %v1622
        %1837 = vmatmul.mubr.f32.gmra.mxu0 %v1621
        %v1838 = vpop.f32.mrf.mxu0
        %v1839 = vadd.f32 0.0, %v1838
        %v1840 = vpop.f32.mrf.mxu0
        %1841 = vmatprep.mubr.f32.mxu0 %v1625
        %1842 = vmatmul.mubr.f32.gmra.mxu0 %v1624
        %v1843 = vpop.f32.mrf.mxu0
        %v1844 = vadd.f32 0.0, %v1843
        %v1845 = vpop.f32.mrf.mxu0
        %1846 = vmatprep.mubr.f32.mxu0 %v1628
        %1847 = vmatmul.mubr.f32.gmra.mxu0 %v1627
        %v1848 = vpop.f32.mrf.mxu0
        %v1849 = vadd.f32 0.0, %v1848
        %v1850 = vpop.f32.mrf.mxu0
        %1851 = vmatprep.mubr.f32.mxu0 %v1631
        %1852 = vmatmul.mubr.f32.gmra.mxu0 %v1630
        %v1853 = vpop.f32.mrf.mxu0
        %v1854 = vadd.f32 0.0, %v1853
        %v1855 = vpop.f32.mrf.mxu0
        %1856 = vmatprep.mubr.f32.mxu0 %v1634
        %1857 = vmatmul.mubr.f32.gmra.mxu0 %v1633
        %v1858 = vpop.f32.mrf.mxu0
        %v1859 = vadd.f32 0.0, %v1858
        %v1860 = vpop.f32.mrf.mxu0
        %1861 = vmatprep.mubr.f32.mxu0 %v1637
        %1862 = vmatmul.mubr.f32.gmra.mxu0 %v1636
        %v1863 = vpop.f32.mrf.mxu0
        %v1864 = vadd.f32 0.0, %v1863
        %v1865 = vpop.f32.mrf.mxu0
        %1866 = vmatprep.mubr.f32.mxu0 %v1640
        %1867 = vmatmul.mubr.f32.gmra.mxu0 %v1639
        %v1868 = vpop.f32.mrf.mxu0
        %v1869 = vadd.f32 0.0, %v1868
        %v1870 = vpop.f32.mrf.mxu0
        %1871 = vmatprep.mubr.f32.mxu0 %v1643
        %1872 = vmatmul.mubr.f32.gmra.mxu0 %v1642
        %v1873 = vpop.f32.mrf.mxu0
        %v1874 = vadd.f32 0.0, %v1873
        %v1875 = vpop.f32.mrf.mxu0
        %1876 = vmatprep.mubr.f32.mxu0 %v1646
        %1877 = vmatmul.mubr.f32.gmra.mxu0 %v1645
        %v1878 = vpop.f32.mrf.mxu0
        %v1879 = vadd.f32 0.0, %v1878
        %v1880 = vpop.f32.mrf.mxu0
        %1881 = vdwg.mxu0
        %1882 = vmatprep.subr.mxu0 0.0
        %1883 = vmatpush1.msra.mxu0 0.0
        %1884 = vmatprep.subr.mxu0 0.0
        %1885 = vmatpush1.msra.mxu0 0.0
        %1886 = vmatprep.subr.mxu0 0.0
        %1887 = vmatpush1.msra.mxu0 0.0
        %1888 = vmatprep.subr.mxu0 0.0
        %1889 = vmatpush1.msra.mxu0 0.0
        %1890 = vmatprep.subr.mxu0 0.0
        %1891 = vmatpush1.msra.mxu0 0.0
        %1892 = vmatprep.subr.mxu0 0.0
        %1893 = vmatpush1.msra.mxu0 0.0
        %1894 = vmatprep.subr.mxu0 0.0
        %1895 = vmatpush1.msra.mxu0 0.0
        %1896 = vmatprep.subr.mxu0 0.0
        %1897 = vmatpush1.msra.mxu0 0.0
        %1898 = vmatprep.subr.mxu0 0.0
        %1899 = vmatpush1.msra.mxu0 %v1688
        %1900 = vmatprep.subr.mxu0 0.0
        %1901 = vmatpush1.msra.mxu0 %v1687
        %1902 = vmatprep.subr.mxu0 0.0
        %1903 = vmatpush1.msra.mxu0 %v1686
        %1904 = vmatprep.subr.mxu0 0.0
        %1905 = vmatpush1.msra.mxu0 %v1685
        %1906 = vmatprep.subr.mxu0 0.0
        %1907 = vmatpush1.msra.mxu0 %v1684
        %1908 = vmatprep.subr.mxu0 0.0
        %1909 = vmatpush1.msra.mxu0 %v1683
        %1910 = vmatprep.subr.mxu0 0.0
        %1911 = vmatpush1.msra.mxu0 %v1682
        %1912 = vmatprep.subr.mxu0 0.0
        %1913 = vmatpush1.msra.mxu0 %v1681
        %1914 = vmatprep.subr.mxu0 0.0
        %1915 = vmatpush2.msra.mxu0 0.0
        %1916 = vmatprep.subr.mxu0 0.0
        %1917 = vmatpush2.msra.mxu0 0.0
        %1918 = vmatprep.subr.mxu0 0.0
        %1919 = vmatpush2.msra.mxu0 0.0
        %1920 = vmatprep.subr.mxu0 0.0
        %1921 = vmatpush2.msra.mxu0 0.0
        %1922 = vmatprep.subr.mxu0 0.0
        %1923 = vmatpush2.msra.mxu0 0.0
        %1924 = vmatprep.subr.mxu0 0.0
        %1925 = vmatpush2.msra.mxu0 0.0
        %1926 = vmatprep.subr.mxu0 0.0
        %1927 = vmatpush2.msra.mxu0 0.0
        %1928 = vmatprep.subr.mxu0 0.0
        %1929 = vmatpush2.msra.mxu0 0.0
        %1930 = vmatprep.subr.mxu0 0.0
        %1931 = vmatpush2.msra.mxu0 0.0
        %1932 = vmatprep.subr.mxu0 0.0
        %1933 = vmatpush2.msra.mxu0 0.0
        %1934 = vmatprep.subr.mxu0 0.0
        %1935 = vmatpush2.msra.mxu0 0.0
        %1936 = vmatprep.subr.mxu0 0.0
        %1937 = vmatpush2.msra.mxu0 0.0
        %1938 = vmatprep.subr.mxu0 0.0
        %1939 = vmatpush2.msra.mxu0 0.0
        %1940 = vmatprep.subr.mxu0 0.0
        %1941 = vmatpush2.msra.mxu0 0.0
        %1942 = vmatprep.subr.mxu0 0.0
        %1943 = vmatpush2.msra.mxu0 0.0
        %1944 = vmatprep.subr.mxu0 0.0
        %1945 = vmatpush2.msra.mxu0 0.0
        %1946 = vmatprep.mubr.f32.mxu0 0.0
        %1947 = vmatmul.mubr.f32.gmra.mxu0 %v1690
        %v1948 = vpop.f32.mrf.mxu0
        %v1949 = vadd.f32 %v1804, %v1948
        %v1950 = vpop.f32.mrf.mxu0
        %1951 = vmatprep.mubr.f32.mxu0 0.0
        %1952 = vmatmul.mubr.f32.gmra.mxu0 %v1693
        %v1953 = vpop.f32.mrf.mxu0
        %v1954 = vadd.f32 %v1809, %v1953
        %v1955 = vpop.f32.mrf.mxu0
        %1956 = vmatprep.mubr.f32.mxu0 0.0
        %1957 = vmatmul.mubr.f32.gmra.mxu0 %v1696
        %v1958 = vpop.f32.mrf.mxu0
        %v1959 = vadd.f32 %v1814, %v1958
        %v1960 = vpop.f32.mrf.mxu0
        %1961 = vmatprep.mubr.f32.mxu0 0.0
        %1962 = vmatmul.mubr.f32.gmra.mxu0 %v1699
        %v1963 = vpop.f32.mrf.mxu0
        %v1964 = vadd.f32 %v1819, %v1963
        %v1965 = vpop.f32.mrf.mxu0
        %1966 = vmatprep.mubr.f32.mxu0 0.0
        %1967 = vmatmul.mubr.f32.gmra.mxu0 %v1702
        %v1968 = vpop.f32.mrf.mxu0
        %v1969 = vadd.f32 %v1824, %v1968
        %v1970 = vpop.f32.mrf.mxu0
        %1971 = vmatprep.mubr.f32.mxu0 0.0
        %1972 = vmatmul.mubr.f32.gmra.mxu0 %v1705
        %v1973 = vpop.f32.mrf.mxu0
        %v1974 = vadd.f32 %v1829, %v1973
        %v1975 = vpop.f32.mrf.mxu0
        %1976 = vmatprep.mubr.f32.mxu0 0.0
        %1977 = vmatmul.mubr.f32.gmra.mxu0 %v1708
        %v1978 = vpop.f32.mrf.mxu0
        %v1979 = vadd.f32 %v1834, %v1978
        %v1980 = vpop.f32.mrf.mxu0
        %1981 = vmatprep.mubr.f32.mxu0 0.0
        %1982 = vmatmul.mubr.f32.gmra.mxu0 %v1711
        %v1983 = vpop.f32.mrf.mxu0
        %v1984 = vadd.f32 %v1839, %v1983
        %v1985 = vpop.f32.mrf.mxu0
        %1986 = vmatprep.mubr.f32.mxu0 0.0
        %1987 = vmatmul.mubr.f32.gmra.mxu0 %v1714
        %v1988 = vpop.f32.mrf.mxu0
        %v1989 = vadd.f32 %v1844, %v1988
        %v1990 = vpop.f32.mrf.mxu0
        %1991 = vmatprep.mubr.f32.mxu0 0.0
        %1992 = vmatmul.mubr.f32.gmra.mxu0 %v1717
        %v1993 = vpop.f32.mrf.mxu0
        %v1994 = vadd.f32 %v1849, %v1993
        %v1995 = vpop.f32.mrf.mxu0
        %1996 = vmatprep.mubr.f32.mxu0 0.0
        %1997 = vmatmul.mubr.f32.gmra.mxu0 %v1720
        %v1998 = vpop.f32.mrf.mxu0
        %v1999 = vadd.f32 %v1854, %v1998
        %v2000 = vpop.f32.mrf.mxu0
        %2001 = vmatprep.mubr.f32.mxu0 0.0
        %2002 = vmatmul.mubr.f32.gmra.mxu0 %v1723
        %v2003 = vpop.f32.mrf.mxu0
        %v2004 = vadd.f32 %v1859, %v2003
        %v2005 = vpop.f32.mrf.mxu0
        %2006 = vmatprep.mubr.f32.mxu0 0.0
        %2007 = vmatmul.mubr.f32.gmra.mxu0 %v1726
        %v2008 = vpop.f32.mrf.mxu0
        %v2009 = vadd.f32 %v1864, %v2008
        %v2010 = vpop.f32.mrf.mxu0
        %2011 = vmatprep.mubr.f32.mxu0 0.0
        %2012 = vmatmul.mubr.f32.gmra.mxu0 %v1729
        %v2013 = vpop.f32.mrf.mxu0
        %v2014 = vadd.f32 %v1869, %v2013
        %v2015 = vpop.f32.mrf.mxu0
        %2016 = vmatprep.mubr.f32.mxu0 0.0
        %2017 = vmatmul.mubr.f32.gmra.mxu0 %v1732
        %v2018 = vpop.f32.mrf.mxu0
        %v2019 = vadd.f32 %v1874, %v2018
        %v2020 = vpop.f32.mrf.mxu0
        %2021 = vmatprep.mubr.f32.mxu0 0.0
        %2022 = vmatmul.mubr.f32.gmra.mxu0 %v1735
        %v2023 = vpop.f32.mrf.mxu0
        %v2024 = vadd.f32 %v1879, %v2023
        %v2025 = vpop.f32.mrf.mxu0
        %2026 = vdwg.mxu0
        %v2027 = vadd.f32 %v1521, %v1949
        %v2028 = vadd.f32 %v1526, %v1954
        %v2029 = vadd.f32 %v1531, %v1959
        %v2030 = vadd.f32 %v1536, %v1964
        %v2031 = vadd.f32 %v1541, %v1969
        %v2032 = vadd.f32 %v1546, %v1974
        %v2033 = vadd.f32 %v1551, %v1979
        %v2034 = vadd.f32 %v1556, %v1984
        %v2035 = vadd.f32 %v1561, %v1989
        %v2036 = vadd.f32 %v1566, %v1994
        %v2037 = vadd.f32 %v1571, %v1999
        %v2038 = vadd.f32 %v1576, %v2004
        %v2039 = vadd.f32 %v1581, %v2009
        %v2040 = vadd.f32 %v1586, %v2014
        %v2041 = vadd.f32 %v1591, %v2019
        %v2042 = vadd.f32 %v1596, %v2024
        %s2043 = scalar_lea.vmem [#allocation2], 72
        %v2044 = vld [vmem:[%s2043] sm:$0xff]
        %v2045 = vld [vmem:[%s2043 + $0x8] sm:$0xff]
        %v2046 = vld [vmem:[%s2043 + $0x10] sm:$0xff]
        %v2047 = vld [vmem:[%s2043 + $0x18] sm:$0xff]
        %v2048 = vld [vmem:[%s2043 + $0x20] sm:$0xff]
        %v2049 = vld [vmem:[%s2043 + $0x28] sm:$0xff]
        %v2050 = vld [vmem:[%s2043 + $0x30] sm:$0xff]
        %v2051 = vld [vmem:[%s2043 + $0x38] sm:$0xff]
        %v2052 = vld [vmem:[%s2043 + $0x40] sm:$0xff]
        %v2053 = vld [vmem:[%s2043 + $0x48] sm:$0xff]
        %v2054 = vld [vmem:[%s2043 + $0x50] sm:$0xff]
        %v2055 = vld [vmem:[%s2043 + $0x58] sm:$0xff]
        %v2056 = vld [vmem:[%s2043 + $0x60] sm:$0xff]
        %v2057 = vld [vmem:[%s2043 + $0x68] sm:$0xff]
        %v2058 = vld [vmem:[%s2043 + $0x70] sm:$0xff]
        %v2059 = vld [vmem:[%s2043 + $0x78] sm:$0xff]
        %v2060 = vld [vmem:[%s2043 + $0x80] sm:$0xff]
        %v2061 = vld [vmem:[%s2043 + $0x88] sm:$0xff]
        %v2062 = vld [vmem:[%s2043 + $0x90] sm:$0xff]
        %v2063 = vld [vmem:[%s2043 + $0x98] sm:$0xff]
        %v2064 = vld [vmem:[%s2043 + $0xa0] sm:$0xff]
        %v2065 = vld [vmem:[%s2043 + $0xa8] sm:$0xff]
        %v2066 = vld [vmem:[%s2043 + $0xb0] sm:$0xff]
        %v2067 = vld [vmem:[%s2043 + $0xb8] sm:$0xff]
        %v2068 = vld [vmem:[%s2043 + $0x120] sm:$0xff]
        %v2069 = vld [vmem:[%s2043 + $0x128] sm:$0xff]
        %v2070 = vld [vmem:[%s2043 + $0x130] sm:$0xff]
        %v2071 = vld [vmem:[%s2043 + $0x138] sm:$0xff]
        %v2072 = vld [vmem:[%s2043 + $0x140] sm:$0xff]
        %v2073 = vld [vmem:[%s2043 + $0x148] sm:$0xff]
        %v2074 = vld [vmem:[%s2043 + $0x150] sm:$0xff]
        %v2075 = vld [vmem:[%s2043 + $0x158] sm:$0xff]
        %v2076 = vld [vmem:[%s2043 + $0x160] sm:$0xff]
        %v2077 = vld [vmem:[%s2043 + $0x168] sm:$0xff]
        %v2078 = vld [vmem:[%s2043 + $0x170] sm:$0xff]
        %v2079 = vld [vmem:[%s2043 + $0x178] sm:$0xff]
        %v2080 = vld [vmem:[%s2043 + $0x180] sm:$0xff]
        %v2081 = vld [vmem:[%s2043 + $0x188] sm:$0xff]
        %v2082 = vld [vmem:[%s2043 + $0x190] sm:$0xff]
        %v2083 = vld [vmem:[%s2043 + $0x198] sm:$0xff]
        %v2084 = vld [vmem:[%s2043 + $0x1a0] sm:$0xff]
        %v2085 = vld [vmem:[%s2043 + $0x1a8] sm:$0xff]
        %v2086 = vld [vmem:[%s2043 + $0x1b0] sm:$0xff]
        %v2087 = vld [vmem:[%s2043 + $0x1b8] sm:$0xff]
        %v2088 = vld [vmem:[%s2043 + $0x1c0] sm:$0xff]
        %v2089 = vld [vmem:[%s2043 + $0x1c8] sm:$0xff]
        %v2090 = vld [vmem:[%s2043 + $0x1d0] sm:$0xff]
        %v2091 = vld [vmem:[%s2043 + $0x1d8] sm:$0xff]
        %s2092 = scalar_lea.vmem [#allocation4], 960
        %v2093 = vld [vmem:[%s2092] sm:$0xff]
        %v2094 = vld [vmem:[%s2092 + $0x8] sm:$0xff]
        %v2095 = vld [vmem:[%s2092 + $0x10] sm:$0xff]
        %v2096 = vld [vmem:[%s2092 + $0x18] sm:$0xff]
        %v2097 = vld [vmem:[%s2092 + $0x20] sm:$0xff]
        %v2098 = vld [vmem:[%s2092 + $0x28] sm:$0xff]
        %v2099 = vld [vmem:[%s2092 + $0x30] sm:$0xff]
        %v2100 = vld [vmem:[%s2092 + $0x38] sm:$0xff]
        %v2101 = vld [vmem:[%s2092 + $0x40] sm:$0xff]
        %v2102 = vld [vmem:[%s2092 + $0x48] sm:$0xff]
        %v2103 = vld [vmem:[%s2092 + $0x50] sm:$0xff]
        %v2104 = vld [vmem:[%s2092 + $0x58] sm:$0xff]
        %v2105 = vld [vmem:[%s2092 + $0x60] sm:$0xff]
        %v2106 = vld [vmem:[%s2092 + $0x68] sm:$0xff]
        %v2107 = vld [vmem:[%s2092 + $0x70] sm:$0xff]
        %v2108 = vld [vmem:[%s2092 + $0x78] sm:$0xff]
        %v2109 = vld [vmem:[%s2092 + $0x80] sm:$0xff]
        %v2110 = vld [vmem:[%s2092 + $0x88] sm:$0xff]
        %v2111 = vld [vmem:[%s2092 + $0x90] sm:$0xff]
        %v2112 = vld [vmem:[%s2092 + $0x98] sm:$0xff]
        %v2113 = vld [vmem:[%s2092 + $0xa0] sm:$0xff]
        %v2114 = vld [vmem:[%s2092 + $0xa8] sm:$0xff]
        %v2115 = vld [vmem:[%s2092 + $0xb0] sm:$0xff]
        %v2116 = vld [vmem:[%s2092 + $0xb8] sm:$0xff]
        %v2117 = vld [vmem:[%s2092 + $0xc0] sm:$0xff]
        %v2118 = vld [vmem:[%s2092 + $0xc8] sm:$0xff]
        %v2119 = vld [vmem:[%s2092 + $0xd0] sm:$0xff]
        %v2120 = vld [vmem:[%s2092 + $0xd8] sm:$0xff]
        %v2121 = vld [vmem:[%s2092 + $0xe0] sm:$0xff]
        %v2122 = vld [vmem:[%s2092 + $0xe8] sm:$0xff]
        %v2123 = vld [vmem:[%s2092 + $0xf0] sm:$0xff]
        %v2124 = vld [vmem:[%s2092 + $0xf8] sm:$0xff]
        %v2125 = vld [vmem:[%s2092 + $0x100] sm:$0xff]
        %v2126 = vld [vmem:[%s2092 + $0x108] sm:$0xff]
        %v2127 = vld [vmem:[%s2092 + $0x110] sm:$0xff]
        %v2128 = vld [vmem:[%s2092 + $0x118] sm:$0xff]
        %v2129 = vld [vmem:[%s2092 + $0x120] sm:$0xff]
        %v2130 = vld [vmem:[%s2092 + $0x128] sm:$0xff]
        %v2131 = vld [vmem:[%s2092 + $0x130] sm:$0xff]
        %v2132 = vld [vmem:[%s2092 + $0x138] sm:$0xff]
        %v2134 = vsel %vm335, %v2046, 0
        %v2137 = vsel %vm335, %v2049, 0
        %v2140 = vsel %vm335, %v2052, 0
        %v2143 = vsel %vm335, %v2055, 0
        %v2146 = vsel %vm335, %v2058, 0
        %v2149 = vsel %vm335, %v2061, 0
        %v2152 = vsel %vm335, %v2064, 0
        %v2155 = vsel %vm335, %v2067, 0
        %v2158 = vsel %vm335, %v2070, 0
        %v2161 = vsel %vm335, %v2073, 0
        %v2164 = vsel %vm335, %v2076, 0
        %v2167 = vsel %vm335, %v2079, 0
        %v2170 = vsel %vm335, %v2082, 0
        %v2173 = vsel %vm335, %v2085, 0
        %v2176 = vsel %vm335, %v2088, 0
        %v2179 = vsel %vm335, %v2091, 0
        %2181 = vmatprep.subr.mxu0 0.0
        %2182 = vmatpush1.msra.mxu0 %v2108
        %2183 = vmatprep.subr.mxu0 0.0
        %2184 = vmatpush1.msra.mxu0 %v2107
        %2185 = vmatprep.subr.mxu0 0.0
        %2186 = vmatpush1.msra.mxu0 %v2106
        %2187 = vmatprep.subr.mxu0 0.0
        %2188 = vmatpush1.msra.mxu0 %v2105
        %2189 = vmatprep.subr.mxu0 0.0
        %2190 = vmatpush1.msra.mxu0 %v2104
        %2191 = vmatprep.subr.mxu0 0.0
        %2192 = vmatpush1.msra.mxu0 %v2103
        %2193 = vmatprep.subr.mxu0 0.0
        %2194 = vmatpush1.msra.mxu0 %v2102
        %2195 = vmatprep.subr.mxu0 0.0
        %2196 = vmatpush1.msra.mxu0 %v2101
        %2197 = vmatprep.subr.mxu0 0.0
        %2198 = vmatpush1.msra.mxu0 %v2100
        %2199 = vmatprep.subr.mxu0 0.0
        %2200 = vmatpush1.msra.mxu0 %v2099
        %2201 = vmatprep.subr.mxu0 0.0
        %2202 = vmatpush1.msra.mxu0 %v2098
        %2203 = vmatprep.subr.mxu0 0.0
        %2204 = vmatpush1.msra.mxu0 %v2097
        %2205 = vmatprep.subr.mxu0 0.0
        %2206 = vmatpush1.msra.mxu0 %v2096
        %2207 = vmatprep.subr.mxu0 0.0
        %2208 = vmatpush1.msra.mxu0 %v2095
        %2209 = vmatprep.subr.mxu0 0.0
        %2210 = vmatpush1.msra.mxu0 %v2094
        %2211 = vmatprep.subr.mxu0 0.0
        %2212 = vmatpush1.msra.mxu0 %v2093
        %2213 = vmatprep.subr.mxu0 0.0
        %2214 = vmatpush2.msra.mxu0 %v2124
        %2215 = vmatprep.subr.mxu0 0.0
        %2216 = vmatpush2.msra.mxu0 %v2123
        %2217 = vmatprep.subr.mxu0 0.0
        %2218 = vmatpush2.msra.mxu0 %v2122
        %2219 = vmatprep.subr.mxu0 0.0
        %2220 = vmatpush2.msra.mxu0 %v2121
        %2221 = vmatprep.subr.mxu0 0.0
        %2222 = vmatpush2.msra.mxu0 %v2120
        %2223 = vmatprep.subr.mxu0 0.0
        %2224 = vmatpush2.msra.mxu0 %v2119
        %2225 = vmatprep.subr.mxu0 0.0
        %2226 = vmatpush2.msra.mxu0 %v2118
        %2227 = vmatprep.subr.mxu0 0.0
        %2228 = vmatpush2.msra.mxu0 %v2117
        %2229 = vmatprep.subr.mxu0 0.0
        %2230 = vmatpush2.msra.mxu0 %v2116
        %2231 = vmatprep.subr.mxu0 0.0
        %2232 = vmatpush2.msra.mxu0 %v2115
        %2233 = vmatprep.subr.mxu0 0.0
        %2234 = vmatpush2.msra.mxu0 %v2114
        %2235 = vmatprep.subr.mxu0 0.0
        %2236 = vmatpush2.msra.mxu0 %v2113
        %2237 = vmatprep.subr.mxu0 0.0
        %2238 = vmatpush2.msra.mxu0 %v2112
        %2239 = vmatprep.subr.mxu0 0.0
        %2240 = vmatpush2.msra.mxu0 %v2111
        %2241 = vmatprep.subr.mxu0 0.0
        %2242 = vmatpush2.msra.mxu0 %v2110
        %2243 = vmatprep.subr.mxu0 0.0
        %2244 = vmatpush2.msra.mxu0 %v2109
        %2245 = vmatprep.mubr.f32.mxu0 %v2045
        %2246 = vmatmul.mubr.f32.gmra.mxu0 %v2044
        %v2247 = vpop.f32.mrf.mxu0
        %v2248 = vadd.f32 0.0, %v2247
        %v2249 = vpop.f32.mrf.mxu0
        %2250 = vmatprep.mubr.f32.mxu0 %v2048
        %2251 = vmatmul.mubr.f32.gmra.mxu0 %v2047
        %v2252 = vpop.f32.mrf.mxu0
        %v2253 = vadd.f32 0.0, %v2252
        %v2254 = vpop.f32.mrf.mxu0
        %2255 = vmatprep.mubr.f32.mxu0 %v2051
        %2256 = vmatmul.mubr.f32.gmra.mxu0 %v2050
        %v2257 = vpop.f32.mrf.mxu0
        %v2258 = vadd.f32 0.0, %v2257
        %v2259 = vpop.f32.mrf.mxu0
        %2260 = vmatprep.mubr.f32.mxu0 %v2054
        %2261 = vmatmul.mubr.f32.gmra.mxu0 %v2053
        %v2262 = vpop.f32.mrf.mxu0
        %v2263 = vadd.f32 0.0, %v2262
        %v2264 = vpop.f32.mrf.mxu0
        %2265 = vmatprep.mubr.f32.mxu0 %v2057
        %2266 = vmatmul.mubr.f32.gmra.mxu0 %v2056
        %v2267 = vpop.f32.mrf.mxu0
        %v2268 = vadd.f32 0.0, %v2267
        %v2269 = vpop.f32.mrf.mxu0
        %2270 = vmatprep.mubr.f32.mxu0 %v2060
        %2271 = vmatmul.mubr.f32.gmra.mxu0 %v2059
        %v2272 = vpop.f32.mrf.mxu0
        %v2273 = vadd.f32 0.0, %v2272
        %v2274 = vpop.f32.mrf.mxu0
        %2275 = vmatprep.mubr.f32.mxu0 %v2063
        %2276 = vmatmul.mubr.f32.gmra.mxu0 %v2062
        %v2277 = vpop.f32.mrf.mxu0
        %v2278 = vadd.f32 0.0, %v2277
        %v2279 = vpop.f32.mrf.mxu0
        %2280 = vmatprep.mubr.f32.mxu0 %v2066
        %2281 = vmatmul.mubr.f32.gmra.mxu0 %v2065
        %v2282 = vpop.f32.mrf.mxu0
        %v2283 = vadd.f32 0.0, %v2282
        %v2284 = vpop.f32.mrf.mxu0
        %2285 = vmatprep.mubr.f32.mxu0 %v2069
        %2286 = vmatmul.mubr.f32.gmra.mxu0 %v2068
        %v2287 = vpop.f32.mrf.mxu0
        %v2288 = vadd.f32 0.0, %v2287
        %v2289 = vpop.f32.mrf.mxu0
        %2290 = vmatprep.mubr.f32.mxu0 %v2072
        %2291 = vmatmul.mubr.f32.gmra.mxu0 %v2071
        %v2292 = vpop.f32.mrf.mxu0
        %v2293 = vadd.f32 0.0, %v2292
        %v2294 = vpop.f32.mrf.mxu0
        %2295 = vmatprep.mubr.f32.mxu0 %v2075
        %2296 = vmatmul.mubr.f32.gmra.mxu0 %v2074
        %v2297 = vpop.f32.mrf.mxu0
        %v2298 = vadd.f32 0.0, %v2297
        %v2299 = vpop.f32.mrf.mxu0
        %2300 = vmatprep.mubr.f32.mxu0 %v2078
        %2301 = vmatmul.mubr.f32.gmra.mxu0 %v2077
        %v2302 = vpop.f32.mrf.mxu0
        %v2303 = vadd.f32 0.0, %v2302
        %v2304 = vpop.f32.mrf.mxu0
        %2305 = vmatprep.mubr.f32.mxu0 %v2081
        %2306 = vmatmul.mubr.f32.gmra.mxu0 %v2080
        %v2307 = vpop.f32.mrf.mxu0
        %v2308 = vadd.f32 0.0, %v2307
        %v2309 = vpop.f32.mrf.mxu0
        %2310 = vmatprep.mubr.f32.mxu0 %v2084
        %2311 = vmatmul.mubr.f32.gmra.mxu0 %v2083
        %v2312 = vpop.f32.mrf.mxu0
        %v2313 = vadd.f32 0.0, %v2312
        %v2314 = vpop.f32.mrf.mxu0
        %2315 = vmatprep.mubr.f32.mxu0 %v2087
        %2316 = vmatmul.mubr.f32.gmra.mxu0 %v2086
        %v2317 = vpop.f32.mrf.mxu0
        %v2318 = vadd.f32 0.0, %v2317
        %v2319 = vpop.f32.mrf.mxu0
        %2320 = vmatprep.mubr.f32.mxu0 %v2090
        %2321 = vmatmul.mubr.f32.gmra.mxu0 %v2089
        %v2322 = vpop.f32.mrf.mxu0
        %v2323 = vadd.f32 0.0, %v2322
        %v2324 = vpop.f32.mrf.mxu0
        %2325 = vdwg.mxu0
        %2326 = vmatprep.subr.mxu0 0.0
        %2327 = vmatpush1.msra.mxu0 0.0
        %2328 = vmatprep.subr.mxu0 0.0
        %2329 = vmatpush1.msra.mxu0 0.0
        %2330 = vmatprep.subr.mxu0 0.0
        %2331 = vmatpush1.msra.mxu0 0.0
        %2332 = vmatprep.subr.mxu0 0.0
        %2333 = vmatpush1.msra.mxu0 0.0
        %2334 = vmatprep.subr.mxu0 0.0
        %2335 = vmatpush1.msra.mxu0 0.0
        %2336 = vmatprep.subr.mxu0 0.0
        %2337 = vmatpush1.msra.mxu0 0.0
        %2338 = vmatprep.subr.mxu0 0.0
        %2339 = vmatpush1.msra.mxu0 0.0
        %2340 = vmatprep.subr.mxu0 0.0
        %2341 = vmatpush1.msra.mxu0 0.0
        %2342 = vmatprep.subr.mxu0 0.0
        %2343 = vmatpush1.msra.mxu0 %v2132
        %2344 = vmatprep.subr.mxu0 0.0
        %2345 = vmatpush1.msra.mxu0 %v2131
        %2346 = vmatprep.subr.mxu0 0.0
        %2347 = vmatpush1.msra.mxu0 %v2130
        %2348 = vmatprep.subr.mxu0 0.0
        %2349 = vmatpush1.msra.mxu0 %v2129
        %2350 = vmatprep.subr.mxu0 0.0
        %2351 = vmatpush1.msra.mxu0 %v2128
        %2352 = vmatprep.subr.mxu0 0.0
        %2353 = vmatpush1.msra.mxu0 %v2127
        %2354 = vmatprep.subr.mxu0 0.0
        %2355 = vmatpush1.msra.mxu0 %v2126
        %2356 = vmatprep.subr.mxu0 0.0
        %2357 = vmatpush1.msra.mxu0 %v2125
        %2358 = vmatprep.subr.mxu0 0.0
        %2359 = vmatpush2.msra.mxu0 0.0
        %2360 = vmatprep.subr.mxu0 0.0
        %2361 = vmatpush2.msra.mxu0 0.0
        %2362 = vmatprep.subr.mxu0 0.0
        %2363 = vmatpush2.msra.mxu0 0.0
        %2364 = vmatprep.subr.mxu0 0.0
        %2365 = vmatpush2.msra.mxu0 0.0
        %2366 = vmatprep.subr.mxu0 0.0
        %2367 = vmatpush2.msra.mxu0 0.0
        %2368 = vmatprep.subr.mxu0 0.0
        %2369 = vmatpush2.msra.mxu0 0.0
        %2370 = vmatprep.subr.mxu0 0.0
        %2371 = vmatpush2.msra.mxu0 0.0
        %2372 = vmatprep.subr.mxu0 0.0
        %2373 = vmatpush2.msra.mxu0 0.0
        %2374 = vmatprep.subr.mxu0 0.0
        %2375 = vmatpush2.msra.mxu0 0.0
        %2376 = vmatprep.subr.mxu0 0.0
        %2377 = vmatpush2.msra.mxu0 0.0
        %2378 = vmatprep.subr.mxu0 0.0
        %2379 = vmatpush2.msra.mxu0 0.0
        %2380 = vmatprep.subr.mxu0 0.0
        %2381 = vmatpush2.msra.mxu0 0.0
        %2382 = vmatprep.subr.mxu0 0.0
        %2383 = vmatpush2.msra.mxu0 0.0
        %2384 = vmatprep.subr.mxu0 0.0
        %2385 = vmatpush2.msra.mxu0 0.0
        %2386 = vmatprep.subr.mxu0 0.0
        %2387 = vmatpush2.msra.mxu0 0.0
        %2388 = vmatprep.subr.mxu0 0.0
        %2389 = vmatpush2.msra.mxu0 0.0
        %2390 = vmatprep.mubr.f32.mxu0 0.0
        %2391 = vmatmul.mubr.f32.gmra.mxu0 %v2134
        %v2392 = vpop.f32.mrf.mxu0
        %v2393 = vadd.f32 %v2248, %v2392
        %v2394 = vpop.f32.mrf.mxu0
        %2395 = vmatprep.mubr.f32.mxu0 0.0
        %2396 = vmatmul.mubr.f32.gmra.mxu0 %v2137
        %v2397 = vpop.f32.mrf.mxu0
        %v2398 = vadd.f32 %v2253, %v2397
        %v2399 = vpop.f32.mrf.mxu0
        %2400 = vmatprep.mubr.f32.mxu0 0.0
        %2401 = vmatmul.mubr.f32.gmra.mxu0 %v2140
        %v2402 = vpop.f32.mrf.mxu0
        %v2403 = vadd.f32 %v2258, %v2402
        %v2404 = vpop.f32.mrf.mxu0
        %2405 = vmatprep.mubr.f32.mxu0 0.0
        %2406 = vmatmul.mubr.f32.gmra.mxu0 %v2143
        %v2407 = vpop.f32.mrf.mxu0
        %v2408 = vadd.f32 %v2263, %v2407
        %v2409 = vpop.f32.mrf.mxu0
        %2410 = vmatprep.mubr.f32.mxu0 0.0
        %2411 = vmatmul.mubr.f32.gmra.mxu0 %v2146
        %v2412 = vpop.f32.mrf.mxu0
        %v2413 = vadd.f32 %v2268, %v2412
        %v2414 = vpop.f32.mrf.mxu0
        %2415 = vmatprep.mubr.f32.mxu0 0.0
        %2416 = vmatmul.mubr.f32.gmra.mxu0 %v2149
        %v2417 = vpop.f32.mrf.mxu0
        %v2418 = vadd.f32 %v2273, %v2417
        %v2419 = vpop.f32.mrf.mxu0
        %2420 = vmatprep.mubr.f32.mxu0 0.0
        %2421 = vmatmul.mubr.f32.gmra.mxu0 %v2152
        %v2422 = vpop.f32.mrf.mxu0
        %v2423 = vadd.f32 %v2278, %v2422
        %v2424 = vpop.f32.mrf.mxu0
        %2425 = vmatprep.mubr.f32.mxu0 0.0
        %2426 = vmatmul.mubr.f32.gmra.mxu0 %v2155
        %v2427 = vpop.f32.mrf.mxu0
        %v2428 = vadd.f32 %v2283, %v2427
        %v2429 = vpop.f32.mrf.mxu0
        %2430 = vmatprep.mubr.f32.mxu0 0.0
        %2431 = vmatmul.mubr.f32.gmra.mxu0 %v2158
        %v2432 = vpop.f32.mrf.mxu0
        %v2433 = vadd.f32 %v2288, %v2432
        %v2434 = vpop.f32.mrf.mxu0
        %2435 = vmatprep.mubr.f32.mxu0 0.0
        %2436 = vmatmul.mubr.f32.gmra.mxu0 %v2161
        %v2437 = vpop.f32.mrf.mxu0
        %v2438 = vadd.f32 %v2293, %v2437
        %v2439 = vpop.f32.mrf.mxu0
        %2440 = vmatprep.mubr.f32.mxu0 0.0
        %2441 = vmatmul.mubr.f32.gmra.mxu0 %v2164
        %v2442 = vpop.f32.mrf.mxu0
        %v2443 = vadd.f32 %v2298, %v2442
        %v2444 = vpop.f32.mrf.mxu0
        %2445 = vmatprep.mubr.f32.mxu0 0.0
        %2446 = vmatmul.mubr.f32.gmra.mxu0 %v2167
        %v2447 = vpop.f32.mrf.mxu0
        %v2448 = vadd.f32 %v2303, %v2447
        %v2449 = vpop.f32.mrf.mxu0
        %2450 = vmatprep.mubr.f32.mxu0 0.0
        %2451 = vmatmul.mubr.f32.gmra.mxu0 %v2170
        %v2452 = vpop.f32.mrf.mxu0
        %v2453 = vadd.f32 %v2308, %v2452
        %v2454 = vpop.f32.mrf.mxu0
        %2455 = vmatprep.mubr.f32.mxu0 0.0
        %2456 = vmatmul.mubr.f32.gmra.mxu0 %v2173
        %v2457 = vpop.f32.mrf.mxu0
        %v2458 = vadd.f32 %v2313, %v2457
        %v2459 = vpop.f32.mrf.mxu0
        %2460 = vmatprep.mubr.f32.mxu0 0.0
        %2461 = vmatmul.mubr.f32.gmra.mxu0 %v2176
        %v2462 = vpop.f32.mrf.mxu0
        %v2463 = vadd.f32 %v2318, %v2462
        %v2464 = vpop.f32.mrf.mxu0
        %2465 = vmatprep.mubr.f32.mxu0 0.0
        %2466 = vmatmul.mubr.f32.gmra.mxu0 %v2179
        %v2467 = vpop.f32.mrf.mxu0
        %v2468 = vadd.f32 %v2323, %v2467
        %v2469 = vpop.f32.mrf.mxu0
        %2470 = vdwg.mxu0
        %v2471 = vadd.f32 %v2027, %v2393
        %v2472 = vadd.f32 %v2028, %v2398
        %v2473 = vadd.f32 %v2029, %v2403
        %v2474 = vadd.f32 %v2030, %v2408
        %v2475 = vadd.f32 %v2031, %v2413
        %v2476 = vadd.f32 %v2032, %v2418
        %v2477 = vadd.f32 %v2033, %v2423
        %v2478 = vadd.f32 %v2034, %v2428
        %v2479 = vadd.f32 %v2035, %v2433
        %v2480 = vadd.f32 %v2036, %v2438
        %v2481 = vadd.f32 %v2037, %v2443
        %v2482 = vadd.f32 %v2038, %v2448
        %v2483 = vadd.f32 %v2039, %v2453
        %v2484 = vadd.f32 %v2040, %v2458
        %v2485 = vadd.f32 %v2041, %v2463
        %v2486 = vadd.f32 %v2042, %v2468
        %s2487 = scalar_lea.vmem [#allocation2], 96
        %v2488 = vld [vmem:[%s2487] sm:$0xff]
        %v2489 = vld [vmem:[%s2487 + $0x8] sm:$0xff]
        %v2490 = vld [vmem:[%s2487 + $0x10] sm:$0xff]
        %v2491 = vld [vmem:[%s2487 + $0x18] sm:$0xff]
        %v2492 = vld [vmem:[%s2487 + $0x20] sm:$0xff]
        %v2493 = vld [vmem:[%s2487 + $0x28] sm:$0xff]
        %v2494 = vld [vmem:[%s2487 + $0x30] sm:$0xff]
        %v2495 = vld [vmem:[%s2487 + $0x38] sm:$0xff]
        %v2496 = vld [vmem:[%s2487 + $0x40] sm:$0xff]
        %v2497 = vld [vmem:[%s2487 + $0x48] sm:$0xff]
        %v2498 = vld [vmem:[%s2487 + $0x50] sm:$0xff]
        %v2499 = vld [vmem:[%s2487 + $0x58] sm:$0xff]
        %v2500 = vld [vmem:[%s2487 + $0x60] sm:$0xff]
        %v2501 = vld [vmem:[%s2487 + $0x68] sm:$0xff]
        %v2502 = vld [vmem:[%s2487 + $0x70] sm:$0xff]
        %v2503 = vld [vmem:[%s2487 + $0x78] sm:$0xff]
        %v2504 = vld [vmem:[%s2487 + $0x80] sm:$0xff]
        %v2505 = vld [vmem:[%s2487 + $0x88] sm:$0xff]
        %v2506 = vld [vmem:[%s2487 + $0x90] sm:$0xff]
        %v2507 = vld [vmem:[%s2487 + $0x98] sm:$0xff]
        %v2508 = vld [vmem:[%s2487 + $0xa0] sm:$0xff]
        %v2509 = vld [vmem:[%s2487 + $0xa8] sm:$0xff]
        %v2510 = vld [vmem:[%s2487 + $0xb0] sm:$0xff]
        %v2511 = vld [vmem:[%s2487 + $0xb8] sm:$0xff]
        %v2512 = vld [vmem:[%s2487 + $0x120] sm:$0xff]
        %v2513 = vld [vmem:[%s2487 + $0x128] sm:$0xff]
        %v2514 = vld [vmem:[%s2487 + $0x130] sm:$0xff]
        %v2515 = vld [vmem:[%s2487 + $0x138] sm:$0xff]
        %v2516 = vld [vmem:[%s2487 + $0x140] sm:$0xff]
        %v2517 = vld [vmem:[%s2487 + $0x148] sm:$0xff]
        %v2518 = vld [vmem:[%s2487 + $0x150] sm:$0xff]
        %v2519 = vld [vmem:[%s2487 + $0x158] sm:$0xff]
        %v2520 = vld [vmem:[%s2487 + $0x160] sm:$0xff]
        %v2521 = vld [vmem:[%s2487 + $0x168] sm:$0xff]
        %v2522 = vld [vmem:[%s2487 + $0x170] sm:$0xff]
        %v2523 = vld [vmem:[%s2487 + $0x178] sm:$0xff]
        %v2524 = vld [vmem:[%s2487 + $0x180] sm:$0xff]
        %v2525 = vld [vmem:[%s2487 + $0x188] sm:$0xff]
        %v2526 = vld [vmem:[%s2487 + $0x190] sm:$0xff]
        %v2527 = vld [vmem:[%s2487 + $0x198] sm:$0xff]
        %v2528 = vld [vmem:[%s2487 + $0x1a0] sm:$0xff]
        %v2529 = vld [vmem:[%s2487 + $0x1a8] sm:$0xff]
        %v2530 = vld [vmem:[%s2487 + $0x1b0] sm:$0xff]
        %v2531 = vld [vmem:[%s2487 + $0x1b8] sm:$0xff]
        %v2532 = vld [vmem:[%s2487 + $0x1c0] sm:$0xff]
        %v2533 = vld [vmem:[%s2487 + $0x1c8] sm:$0xff]
        %v2534 = vld [vmem:[%s2487 + $0x1d0] sm:$0xff]
        %v2535 = vld [vmem:[%s2487 + $0x1d8] sm:$0xff]
        %s2536 = scalar_lea.vmem [#allocation4], 1280
        %v2537 = vld [vmem:[%s2536] sm:$0xff]
        %v2538 = vld [vmem:[%s2536 + $0x8] sm:$0xff]
        %v2539 = vld [vmem:[%s2536 + $0x10] sm:$0xff]
        %v2540 = vld [vmem:[%s2536 + $0x18] sm:$0xff]
        %v2541 = vld [vmem:[%s2536 + $0x20] sm:$0xff]
        %v2542 = vld [vmem:[%s2536 + $0x28] sm:$0xff]
        %v2543 = vld [vmem:[%s2536 + $0x30] sm:$0xff]
        %v2544 = vld [vmem:[%s2536 + $0x38] sm:$0xff]
        %v2545 = vld [vmem:[%s2536 + $0x40] sm:$0xff]
        %v2546 = vld [vmem:[%s2536 + $0x48] sm:$0xff]
        %v2547 = vld [vmem:[%s2536 + $0x50] sm:$0xff]
        %v2548 = vld [vmem:[%s2536 + $0x58] sm:$0xff]
        %v2549 = vld [vmem:[%s2536 + $0x60] sm:$0xff]
        %v2550 = vld [vmem:[%s2536 + $0x68] sm:$0xff]
        %v2551 = vld [vmem:[%s2536 + $0x70] sm:$0xff]
        %v2552 = vld [vmem:[%s2536 + $0x78] sm:$0xff]
        %v2553 = vld [vmem:[%s2536 + $0x80] sm:$0xff]
        %v2554 = vld [vmem:[%s2536 + $0x88] sm:$0xff]
        %v2555 = vld [vmem:[%s2536 + $0x90] sm:$0xff]
        %v2556 = vld [vmem:[%s2536 + $0x98] sm:$0xff]
        %v2557 = vld [vmem:[%s2536 + $0xa0] sm:$0xff]
        %v2558 = vld [vmem:[%s2536 + $0xa8] sm:$0xff]
        %v2559 = vld [vmem:[%s2536 + $0xb0] sm:$0xff]
        %v2560 = vld [vmem:[%s2536 + $0xb8] sm:$0xff]
        %v2561 = vld [vmem:[%s2536 + $0xc0] sm:$0xff]
        %v2562 = vld [vmem:[%s2536 + $0xc8] sm:$0xff]
        %v2563 = vld [vmem:[%s2536 + $0xd0] sm:$0xff]
        %v2564 = vld [vmem:[%s2536 + $0xd8] sm:$0xff]
        %v2565 = vld [vmem:[%s2536 + $0xe0] sm:$0xff]
        %v2566 = vld [vmem:[%s2536 + $0xe8] sm:$0xff]
        %v2567 = vld [vmem:[%s2536 + $0xf0] sm:$0xff]
        %v2568 = vld [vmem:[%s2536 + $0xf8] sm:$0xff]
        %v2569 = vld [vmem:[%s2536 + $0x100] sm:$0xff]
        %v2570 = vld [vmem:[%s2536 + $0x108] sm:$0xff]
        %v2571 = vld [vmem:[%s2536 + $0x110] sm:$0xff]
        %v2572 = vld [vmem:[%s2536 + $0x118] sm:$0xff]
        %v2573 = vld [vmem:[%s2536 + $0x120] sm:$0xff]
        %v2574 = vld [vmem:[%s2536 + $0x128] sm:$0xff]
        %v2575 = vld [vmem:[%s2536 + $0x130] sm:$0xff]
        %v2576 = vld [vmem:[%s2536 + $0x138] sm:$0xff]
        %v2578 = vsel %vm335, %v2490, 0
        %v2581 = vsel %vm335, %v2493, 0
        %v2584 = vsel %vm335, %v2496, 0
        %v2587 = vsel %vm335, %v2499, 0
        %v2590 = vsel %vm335, %v2502, 0
        %v2593 = vsel %vm335, %v2505, 0
        %v2596 = vsel %vm335, %v2508, 0
        %v2599 = vsel %vm335, %v2511, 0
        %v2602 = vsel %vm335, %v2514, 0
        %v2605 = vsel %vm335, %v2517, 0
        %v2608 = vsel %vm335, %v2520, 0
        %v2611 = vsel %vm335, %v2523, 0
        %v2614 = vsel %vm335, %v2526, 0
        %v2617 = vsel %vm335, %v2529, 0
        %v2620 = vsel %vm335, %v2532, 0
        %v2623 = vsel %vm335, %v2535, 0
        %2625 = vmatprep.subr.mxu0 0.0
        %2626 = vmatpush1.msra.mxu0 %v2552
        %2627 = vmatprep.subr.mxu0 0.0
        %2628 = vmatpush1.msra.mxu0 %v2551
        %2629 = vmatprep.subr.mxu0 0.0
        %2630 = vmatpush1.msra.mxu0 %v2550
        %2631 = vmatprep.subr.mxu0 0.0
        %2632 = vmatpush1.msra.mxu0 %v2549
        %2633 = vmatprep.subr.mxu0 0.0
        %2634 = vmatpush1.msra.mxu0 %v2548
        %2635 = vmatprep.subr.mxu0 0.0
        %2636 = vmatpush1.msra.mxu0 %v2547
        %2637 = vmatprep.subr.mxu0 0.0
        %2638 = vmatpush1.msra.mxu0 %v2546
        %2639 = vmatprep.subr.mxu0 0.0
        %2640 = vmatpush1.msra.mxu0 %v2545
        %2641 = vmatprep.subr.mxu0 0.0
        %2642 = vmatpush1.msra.mxu0 %v2544
        %2643 = vmatprep.subr.mxu0 0.0
        %2644 = vmatpush1.msra.mxu0 %v2543
        %2645 = vmatprep.subr.mxu0 0.0
        %2646 = vmatpush1.msra.mxu0 %v2542
        %2647 = vmatprep.subr.mxu0 0.0
        %2648 = vmatpush1.msra.mxu0 %v2541
        %2649 = vmatprep.subr.mxu0 0.0
        %2650 = vmatpush1.msra.mxu0 %v2540
        %2651 = vmatprep.subr.mxu0 0.0
        %2652 = vmatpush1.msra.mxu0 %v2539
        %2653 = vmatprep.subr.mxu0 0.0
        %2654 = vmatpush1.msra.mxu0 %v2538
        %2655 = vmatprep.subr.mxu0 0.0
        %2656 = vmatpush1.msra.mxu0 %v2537
        %2657 = vmatprep.subr.mxu0 0.0
        %2658 = vmatpush2.msra.mxu0 %v2568
        %2659 = vmatprep.subr.mxu0 0.0
        %2660 = vmatpush2.msra.mxu0 %v2567
        %2661 = vmatprep.subr.mxu0 0.0
        %2662 = vmatpush2.msra.mxu0 %v2566
        %2663 = vmatprep.subr.mxu0 0.0
        %2664 = vmatpush2.msra.mxu0 %v2565
        %2665 = vmatprep.subr.mxu0 0.0
        %2666 = vmatpush2.msra.mxu0 %v2564
        %2667 = vmatprep.subr.mxu0 0.0
        %2668 = vmatpush2.msra.mxu0 %v2563
        %2669 = vmatprep.subr.mxu0 0.0
        %2670 = vmatpush2.msra.mxu0 %v2562
        %2671 = vmatprep.subr.mxu0 0.0
        %2672 = vmatpush2.msra.mxu0 %v2561
        %2673 = vmatprep.subr.mxu0 0.0
        %2674 = vmatpush2.msra.mxu0 %v2560
        %2675 = vmatprep.subr.mxu0 0.0
        %2676 = vmatpush2.msra.mxu0 %v2559
        %2677 = vmatprep.subr.mxu0 0.0
        %2678 = vmatpush2.msra.mxu0 %v2558
        %2679 = vmatprep.subr.mxu0 0.0
        %2680 = vmatpush2.msra.mxu0 %v2557
        %2681 = vmatprep.subr.mxu0 0.0
        %2682 = vmatpush2.msra.mxu0 %v2556
        %2683 = vmatprep.subr.mxu0 0.0
        %2684 = vmatpush2.msra.mxu0 %v2555
        %2685 = vmatprep.subr.mxu0 0.0
        %2686 = vmatpush2.msra.mxu0 %v2554
        %2687 = vmatprep.subr.mxu0 0.0
        %2688 = vmatpush2.msra.mxu0 %v2553
        %2689 = vmatprep.mubr.f32.mxu0 %v2489
        %2690 = vmatmul.mubr.f32.gmra.mxu0 %v2488
        %v2691 = vpop.f32.mrf.mxu0
        %v2692 = vadd.f32 0.0, %v2691
        %v2693 = vpop.f32.mrf.mxu0
        %2694 = vmatprep.mubr.f32.mxu0 %v2492
        %2695 = vmatmul.mubr.f32.gmra.mxu0 %v2491
        %v2696 = vpop.f32.mrf.mxu0
        %v2697 = vadd.f32 0.0, %v2696
        %v2698 = vpop.f32.mrf.mxu0
        %2699 = vmatprep.mubr.f32.mxu0 %v2495
        %2700 = vmatmul.mubr.f32.gmra.mxu0 %v2494
        %v2701 = vpop.f32.mrf.mxu0
        %v2702 = vadd.f32 0.0, %v2701
        %v2703 = vpop.f32.mrf.mxu0
        %2704 = vmatprep.mubr.f32.mxu0 %v2498
        %2705 = vmatmul.mubr.f32.gmra.mxu0 %v2497
        %v2706 = vpop.f32.mrf.mxu0
        %v2707 = vadd.f32 0.0, %v2706
        %v2708 = vpop.f32.mrf.mxu0
        %2709 = vmatprep.mubr.f32.mxu0 %v2501
        %2710 = vmatmul.mubr.f32.gmra.mxu0 %v2500
        %v2711 = vpop.f32.mrf.mxu0
        %v2712 = vadd.f32 0.0, %v2711
        %v2713 = vpop.f32.mrf.mxu0
        %2714 = vmatprep.mubr.f32.mxu0 %v2504
        %2715 = vmatmul.mubr.f32.gmra.mxu0 %v2503
        %v2716 = vpop.f32.mrf.mxu0
        %v2717 = vadd.f32 0.0, %v2716
        %v2718 = vpop.f32.mrf.mxu0
        %2719 = vmatprep.mubr.f32.mxu0 %v2507
        %2720 = vmatmul.mubr.f32.gmra.mxu0 %v2506
        %v2721 = vpop.f32.mrf.mxu0
        %v2722 = vadd.f32 0.0, %v2721
        %v2723 = vpop.f32.mrf.mxu0
        %2724 = vmatprep.mubr.f32.mxu0 %v2510
        %2725 = vmatmul.mubr.f32.gmra.mxu0 %v2509
        %v2726 = vpop.f32.mrf.mxu0
        %v2727 = vadd.f32 0.0, %v2726
        %v2728 = vpop.f32.mrf.mxu0
        %2729 = vmatprep.mubr.f32.mxu0 %v2513
        %2730 = vmatmul.mubr.f32.gmra.mxu0 %v2512
        %v2731 = vpop.f32.mrf.mxu0
        %v2732 = vadd.f32 0.0, %v2731
        %v2733 = vpop.f32.mrf.mxu0
        %2734 = vmatprep.mubr.f32.mxu0 %v2516
        %2735 = vmatmul.mubr.f32.gmra.mxu0 %v2515
        %v2736 = vpop.f32.mrf.mxu0
        %v2737 = vadd.f32 0.0, %v2736
        %v2738 = vpop.f32.mrf.mxu0
        %2739 = vmatprep.mubr.f32.mxu0 %v2519
        %2740 = vmatmul.mubr.f32.gmra.mxu0 %v2518
        %v2741 = vpop.f32.mrf.mxu0
        %v2742 = vadd.f32 0.0, %v2741
        %v2743 = vpop.f32.mrf.mxu0
        %2744 = vmatprep.mubr.f32.mxu0 %v2522
        %2745 = vmatmul.mubr.f32.gmra.mxu0 %v2521
        %v2746 = vpop.f32.mrf.mxu0
        %v2747 = vadd.f32 0.0, %v2746
        %v2748 = vpop.f32.mrf.mxu0
        %2749 = vmatprep.mubr.f32.mxu0 %v2525
        %2750 = vmatmul.mubr.f32.gmra.mxu0 %v2524
        %v2751 = vpop.f32.mrf.mxu0
        %v2752 = vadd.f32 0.0, %v2751
        %v2753 = vpop.f32.mrf.mxu0
        %2754 = vmatprep.mubr.f32.mxu0 %v2528
        %2755 = vmatmul.mubr.f32.gmra.mxu0 %v2527
        %v2756 = vpop.f32.mrf.mxu0
        %v2757 = vadd.f32 0.0, %v2756
        %v2758 = vpop.f32.mrf.mxu0
        %2759 = vmatprep.mubr.f32.mxu0 %v2531
        %2760 = vmatmul.mubr.f32.gmra.mxu0 %v2530
        %v2761 = vpop.f32.mrf.mxu0
        %v2762 = vadd.f32 0.0, %v2761
        %v2763 = vpop.f32.mrf.mxu0
        %2764 = vmatprep.mubr.f32.mxu0 %v2534
        %2765 = vmatmul.mubr.f32.gmra.mxu0 %v2533
        %v2766 = vpop.f32.mrf.mxu0
        %v2767 = vadd.f32 0.0, %v2766
        %v2768 = vpop.f32.mrf.mxu0
        %2769 = vdwg.mxu0
        %2770 = vmatprep.subr.mxu0 0.0
        %2771 = vmatpush1.msra.mxu0 0.0
        %2772 = vmatprep.subr.mxu0 0.0
        %2773 = vmatpush1.msra.mxu0 0.0
        %2774 = vmatprep.subr.mxu0 0.0
        %2775 = vmatpush1.msra.mxu0 0.0
        %2776 = vmatprep.subr.mxu0 0.0
        %2777 = vmatpush1.msra.mxu0 0.0
        %2778 = vmatprep.subr.mxu0 0.0
        %2779 = vmatpush1.msra.mxu0 0.0
        %2780 = vmatprep.subr.mxu0 0.0
        %2781 = vmatpush1.msra.mxu0 0.0
        %2782 = vmatprep.subr.mxu0 0.0
        %2783 = vmatpush1.msra.mxu0 0.0
        %2784 = vmatprep.subr.mxu0 0.0
        %2785 = vmatpush1.msra.mxu0 0.0
        %2786 = vmatprep.subr.mxu0 0.0
        %2787 = vmatpush1.msra.mxu0 %v2576
        %2788 = vmatprep.subr.mxu0 0.0
        %2789 = vmatpush1.msra.mxu0 %v2575
        %2790 = vmatprep.subr.mxu0 0.0
        %2791 = vmatpush1.msra.mxu0 %v2574
        %2792 = vmatprep.subr.mxu0 0.0
        %2793 = vmatpush1.msra.mxu0 %v2573
        %2794 = vmatprep.subr.mxu0 0.0
        %2795 = vmatpush1.msra.mxu0 %v2572
        %2796 = vmatprep.subr.mxu0 0.0
        %2797 = vmatpush1.msra.mxu0 %v2571
        %2798 = vmatprep.subr.mxu0 0.0
        %2799 = vmatpush1.msra.mxu0 %v2570
        %2800 = vmatprep.subr.mxu0 0.0
        %2801 = vmatpush1.msra.mxu0 %v2569
        %2802 = vmatprep.subr.mxu0 0.0
        %2803 = vmatpush2.msra.mxu0 0.0
        %2804 = vmatprep.subr.mxu0 0.0
        %2805 = vmatpush2.msra.mxu0 0.0
        %2806 = vmatprep.subr.mxu0 0.0
        %2807 = vmatpush2.msra.mxu0 0.0
        %2808 = vmatprep.subr.mxu0 0.0
        %2809 = vmatpush2.msra.mxu0 0.0
        %2810 = vmatprep.subr.mxu0 0.0
        %2811 = vmatpush2.msra.mxu0 0.0
        %2812 = vmatprep.subr.mxu0 0.0
        %2813 = vmatpush2.msra.mxu0 0.0
        %2814 = vmatprep.subr.mxu0 0.0
        %2815 = vmatpush2.msra.mxu0 0.0
        %2816 = vmatprep.subr.mxu0 0.0
        %2817 = vmatpush2.msra.mxu0 0.0
        %2818 = vmatprep.subr.mxu0 0.0
        %2819 = vmatpush2.msra.mxu0 0.0
        %2820 = vmatprep.subr.mxu0 0.0
        %2821 = vmatpush2.msra.mxu0 0.0
        %2822 = vmatprep.subr.mxu0 0.0
        %2823 = vmatpush2.msra.mxu0 0.0
        %2824 = vmatprep.subr.mxu0 0.0
        %2825 = vmatpush2.msra.mxu0 0.0
        %2826 = vmatprep.subr.mxu0 0.0
        %2827 = vmatpush2.msra.mxu0 0.0
        %2828 = vmatprep.subr.mxu0 0.0
        %2829 = vmatpush2.msra.mxu0 0.0
        %2830 = vmatprep.subr.mxu0 0.0
        %2831 = vmatpush2.msra.mxu0 0.0
        %2832 = vmatprep.subr.mxu0 0.0
        %2833 = vmatpush2.msra.mxu0 0.0
        %2834 = vmatprep.mubr.f32.mxu0 0.0
        %2835 = vmatmul.mubr.f32.gmra.mxu0 %v2578
        %v2836 = vpop.f32.mrf.mxu0
        %v2837 = vadd.f32 %v2692, %v2836
        %v2838 = vpop.f32.mrf.mxu0
        %2839 = vmatprep.mubr.f32.mxu0 0.0
        %2840 = vmatmul.mubr.f32.gmra.mxu0 %v2581
        %v2841 = vpop.f32.mrf.mxu0
        %v2842 = vadd.f32 %v2697, %v2841
        %v2843 = vpop.f32.mrf.mxu0
        %2844 = vmatprep.mubr.f32.mxu0 0.0
        %2845 = vmatmul.mubr.f32.gmra.mxu0 %v2584
        %v2846 = vpop.f32.mrf.mxu0
        %v2847 = vadd.f32 %v2702, %v2846
        %v2848 = vpop.f32.mrf.mxu0
        %2849 = vmatprep.mubr.f32.mxu0 0.0
        %2850 = vmatmul.mubr.f32.gmra.mxu0 %v2587
        %v2851 = vpop.f32.mrf.mxu0
        %v2852 = vadd.f32 %v2707, %v2851
        %v2853 = vpop.f32.mrf.mxu0
        %2854 = vmatprep.mubr.f32.mxu0 0.0
        %2855 = vmatmul.mubr.f32.gmra.mxu0 %v2590
        %v2856 = vpop.f32.mrf.mxu0
        %v2857 = vadd.f32 %v2712, %v2856
        %v2858 = vpop.f32.mrf.mxu0
        %2859 = vmatprep.mubr.f32.mxu0 0.0
        %2860 = vmatmul.mubr.f32.gmra.mxu0 %v2593
        %v2861 = vpop.f32.mrf.mxu0
        %v2862 = vadd.f32 %v2717, %v2861
        %v2863 = vpop.f32.mrf.mxu0
        %2864 = vmatprep.mubr.f32.mxu0 0.0
        %2865 = vmatmul.mubr.f32.gmra.mxu0 %v2596
        %v2866 = vpop.f32.mrf.mxu0
        %v2867 = vadd.f32 %v2722, %v2866
        %v2868 = vpop.f32.mrf.mxu0
        %2869 = vmatprep.mubr.f32.mxu0 0.0
        %2870 = vmatmul.mubr.f32.gmra.mxu0 %v2599
        %v2871 = vpop.f32.mrf.mxu0
        %v2872 = vadd.f32 %v2727, %v2871
        %v2873 = vpop.f32.mrf.mxu0
        %2874 = vmatprep.mubr.f32.mxu0 0.0
        %2875 = vmatmul.mubr.f32.gmra.mxu0 %v2602
        %v2876 = vpop.f32.mrf.mxu0
        %v2877 = vadd.f32 %v2732, %v2876
        %v2878 = vpop.f32.mrf.mxu0
        %2879 = vmatprep.mubr.f32.mxu0 0.0
        %2880 = vmatmul.mubr.f32.gmra.mxu0 %v2605
        %v2881 = vpop.f32.mrf.mxu0
        %v2882 = vadd.f32 %v2737, %v2881
        %v2883 = vpop.f32.mrf.mxu0
        %2884 = vmatprep.mubr.f32.mxu0 0.0
        %2885 = vmatmul.mubr.f32.gmra.mxu0 %v2608
        %v2886 = vpop.f32.mrf.mxu0
        %v2887 = vadd.f32 %v2742, %v2886
        %v2888 = vpop.f32.mrf.mxu0
        %2889 = vmatprep.mubr.f32.mxu0 0.0
        %2890 = vmatmul.mubr.f32.gmra.mxu0 %v2611
        %v2891 = vpop.f32.mrf.mxu0
        %v2892 = vadd.f32 %v2747, %v2891
        %v2893 = vpop.f32.mrf.mxu0
        %2894 = vmatprep.mubr.f32.mxu0 0.0
        %2895 = vmatmul.mubr.f32.gmra.mxu0 %v2614
        %v2896 = vpop.f32.mrf.mxu0
        %v2897 = vadd.f32 %v2752, %v2896
        %v2898 = vpop.f32.mrf.mxu0
        %2899 = vmatprep.mubr.f32.mxu0 0.0
        %2900 = vmatmul.mubr.f32.gmra.mxu0 %v2617
        %v2901 = vpop.f32.mrf.mxu0
        %v2902 = vadd.f32 %v2757, %v2901
        %v2903 = vpop.f32.mrf.mxu0
        %2904 = vmatprep.mubr.f32.mxu0 0.0
        %2905 = vmatmul.mubr.f32.gmra.mxu0 %v2620
        %v2906 = vpop.f32.mrf.mxu0
        %v2907 = vadd.f32 %v2762, %v2906
        %v2908 = vpop.f32.mrf.mxu0
        %2909 = vmatprep.mubr.f32.mxu0 0.0
        %2910 = vmatmul.mubr.f32.gmra.mxu0 %v2623
        %v2911 = vpop.f32.mrf.mxu0
        %v2912 = vadd.f32 %v2767, %v2911
        %v2913 = vpop.f32.mrf.mxu0
        %2914 = vdwg.mxu0
        %v2915 = vadd.f32 %v2471, %v2837
        %v2916 = vadd.f32 %v2472, %v2842
        %v2917 = vadd.f32 %v2473, %v2847
        %v2918 = vadd.f32 %v2474, %v2852
        %v2919 = vadd.f32 %v2475, %v2857
        %v2920 = vadd.f32 %v2476, %v2862
        %v2921 = vadd.f32 %v2477, %v2867
        %v2922 = vadd.f32 %v2478, %v2872
        %v2923 = vadd.f32 %v2479, %v2877
        %v2924 = vadd.f32 %v2480, %v2882
        %v2925 = vadd.f32 %v2481, %v2887
        %v2926 = vadd.f32 %v2482, %v2892
        %v2927 = vadd.f32 %v2483, %v2897
        %v2928 = vadd.f32 %v2484, %v2902
        %v2929 = vadd.f32 %v2485, %v2907
        %v2930 = vadd.f32 %v2486, %v2912
        %v2931 = vld [vmem:[%s2] sm:$0x1]
        %v2933 = vlaneseq
        %v2934 = vshrl.u32 %v2933, 7
        %v2935 = vsub.s32 0, %v2934
        %v2936 = vrot.slane %v2931, %v2935
        %v2938 = vadd.f32 %v2915, %v2936
        %v2939 = vadd.f32 %v2916, %v2936
        %v2940 = vadd.f32 %v2917, %v2936
        %v2941 = vadd.f32 %v2918, %v2936
        %v2942 = vadd.f32 %v2919, %v2936
        %v2943 = vadd.f32 %v2920, %v2936
        %v2944 = vadd.f32 %v2921, %v2936
        %v2945 = vadd.f32 %v2922, %v2936
        %v2946 = vadd.f32 %v2923, %v2936
        %v2947 = vadd.f32 %v2924, %v2936
        %v2948 = vadd.f32 %v2925, %v2936
        %v2949 = vadd.f32 %v2926, %v2936
        %v2950 = vadd.f32 %v2927, %v2936
        %v2951 = vadd.f32 %v2928, %v2936
        %v2952 = vadd.f32 %v2929, %v2936
        %v2953 = vadd.f32 %v2930, %v2936
        %v2954 = vmax.f32 %v2938, 0.0
        %v2955 = vmax.f32 %v2939, 0.0
        %v2956 = vmax.f32 %v2940, 0.0
        %v2957 = vmax.f32 %v2941, 0.0
        %v2958 = vmax.f32 %v2942, 0.0
        %v2959 = vmax.f32 %v2943, 0.0
        %v2960 = vmax.f32 %v2944, 0.0
        %v2961 = vmax.f32 %v2945, 0.0
        %v2962 = vmax.f32 %v2946, 0.0
        %v2963 = vmax.f32 %v2947, 0.0
        %v2964 = vmax.f32 %v2948, 0.0
        %v2965 = vmax.f32 %v2949, 0.0
        %v2966 = vmax.f32 %v2950, 0.0
        %v2967 = vmax.f32 %v2951, 0.0
        %v2968 = vmax.f32 %v2952, 0.0
        %v2969 = vmax.f32 %v2953, 0.0
        %2970 = vst.msk [vmem:[#allocation3] sm:$0xff] %vm335, 0.0
        %2971 = vst.msk [vmem:[#allocation3 + $0x8] sm:$0xff] %vm335, 0.0
        %2972 = vst.msk [vmem:[#allocation3 + $0x10] sm:$0xff] %vm335, 0.0
        %2973 = vst.msk [vmem:[#allocation3 + $0x18] sm:$0xff] %vm335, 0.0
        %2974 = vst.msk [vmem:[#allocation3 + $0x20] sm:$0xff] %vm335, 0.0
        %2975 = vst.msk [vmem:[#allocation3 + $0x28] sm:$0xff] %vm335, 0.0
        %2976 = vst.msk [vmem:[#allocation3 + $0x120] sm:$0xff] %vm335, 0.0
        %2977 = vst.msk [vmem:[#allocation3 + $0x128] sm:$0xff] %vm335, 0.0
        %2978 = vst.msk [vmem:[#allocation3 + $0x130] sm:$0xff] %vm335, 0.0
        %2979 = vst.msk [vmem:[#allocation3 + $0x138] sm:$0xff] %vm335, 0.0
        %2980 = vst.msk [vmem:[#allocation3 + $0x140] sm:$0xff] %vm335, 0.0
        %2981 = vst.msk [vmem:[#allocation3 + $0x148] sm:$0xff] %vm335, 0.0
        %s2982 = scalar_lea.vmem [#allocation3], 240
        %2983 = vst.msk [vmem:[%s2982] sm:$0xff] %vm335, 0.0
        %2984 = vst.msk [vmem:[%s2982 + $0x8] sm:$0xff] %vm335, 0.0
        %2985 = vst.msk [vmem:[%s2982 + $0x10] sm:$0xff] %vm335, 0.0
        %2986 = vst.msk [vmem:[%s2982 + $0x18] sm:$0xff] %vm335, 0.0
        %2987 = vst.msk [vmem:[%s2982 + $0x20] sm:$0xff] %vm335, 0.0
        %2988 = vst.msk [vmem:[%s2982 + $0x28] sm:$0xff] %vm335, 0.0
        %2989 = vst.msk [vmem:[%s2982 + $0x120] sm:$0xff] %vm335, 0.0
        %2990 = vst.msk [vmem:[%s2982 + $0x128] sm:$0xff] %vm335, 0.0
        %2991 = vst.msk [vmem:[%s2982 + $0x130] sm:$0xff] %vm335, 0.0
        %2992 = vst.msk [vmem:[%s2982 + $0x138] sm:$0xff] %vm335, 0.0
        %2993 = vst.msk [vmem:[%s2982 + $0x140] sm:$0xff] %vm335, 0.0
        %2994 = vst.msk [vmem:[%s2982 + $0x148] sm:$0xff] %vm335, 0.0
        %s2995 = scalar_lea.vmem [#allocation3], 48
        %vm2996 = vcmask 517120
        %2997 = vst.msk [vmem:[%s2995 + $0x6] sm:$0x3] %vm2996, 0.0
        %2998 = vst.msk [vmem:[%s2995 + $0x1e] sm:$0x3] %vm2996, 0.0
        %2999 = vst.msk [vmem:[%s2995 + $0x36] sm:$0x3] %vm2996, 0.0
        %3000 = vst.msk [vmem:[%s2995 + $0x4e] sm:$0x3] %vm2996, 0.0
        %3001 = vst.msk [vmem:[%s2995 + $0x66] sm:$0x3] %vm2996, 0.0
        %3002 = vst.msk [vmem:[%s2995 + $0x7e] sm:$0x3] %vm2996, 0.0
        %3003 = vst.msk [vmem:[%s2995 + $0x96] sm:$0x3] %vm2996, 0.0
        %3004 = vst.msk [vmem:[%s2995 + $0xae] sm:$0x3] %vm2996, 0.0
        %3005 = vst.msk [vmem:[%s2995 + $0x126] sm:$0x3] %vm2996, 0.0
        %3006 = vst.msk [vmem:[%s2995 + $0x13e] sm:$0x3] %vm2996, 0.0
        %3007 = vst.msk [vmem:[%s2995 + $0x156] sm:$0x3] %vm2996, 0.0
        %3008 = vst.msk [vmem:[%s2995 + $0x16e] sm:$0x3] %vm2996, 0.0
        %3009 = vst.msk [vmem:[%s2995 + $0x186] sm:$0x3] %vm2996, 0.0
        %3010 = vst.msk [vmem:[%s2995 + $0x19e] sm:$0x3] %vm2996, 0.0
        %3011 = vst.msk [vmem:[%s2995 + $0x1b6] sm:$0x3] %vm2996, 0.0
        %3012 = vst.msk [vmem:[%s2995 + $0x1ce] sm:$0x3] %vm2996, 0.0
        %3013 = vst.msk [vmem:[%s2995 + $0x10] sm:$0x3] %vm2996, 0.0
        %3014 = vst.msk [vmem:[%s2995 + $0x28] sm:$0x3] %vm2996, 0.0
        %3015 = vst.msk [vmem:[%s2995 + $0x40] sm:$0x3] %vm2996, 0.0
        %3016 = vst.msk [vmem:[%s2995 + $0x58] sm:$0x3] %vm2996, 0.0
        %3017 = vst.msk [vmem:[%s2995 + $0x70] sm:$0x3] %vm2996, 0.0
        %3018 = vst.msk [vmem:[%s2995 + $0x88] sm:$0x3] %vm2996, 0.0
        %3019 = vst.msk [vmem:[%s2995 + $0xa0] sm:$0x3] %vm2996, 0.0
        %3020 = vst.msk [vmem:[%s2995 + $0xb8] sm:$0x3] %vm2996, 0.0
        %3021 = vst.msk [vmem:[%s2995 + $0x130] sm:$0x3] %vm2996, 0.0
        %3022 = vst.msk [vmem:[%s2995 + $0x148] sm:$0x3] %vm2996, 0.0
        %3023 = vst.msk [vmem:[%s2995 + $0x160] sm:$0x3] %vm2996, 0.0
        %3024 = vst.msk [vmem:[%s2995 + $0x178] sm:$0x3] %vm2996, 0.0
        %3025 = vst.msk [vmem:[%s2995 + $0x190] sm:$0x3] %vm2996, 0.0
        %3026 = vst.msk [vmem:[%s2995 + $0x1a8] sm:$0x3] %vm2996, 0.0
        %3027 = vst.msk [vmem:[%s2995 + $0x1c0] sm:$0x3] %vm2996, 0.0
        %3028 = vst.msk [vmem:[%s2995 + $0x1d8] sm:$0x3] %vm2996, 0.0
        %3029 = vst.msk [vmem:[%s2995 + $0x8] sm:$0xff] %vm335, %v2954
        %3030 = vst.msk [vmem:[%s2995 + $0x20] sm:$0xff] %vm335, %v2955
        %3031 = vst.msk [vmem:[%s2995 + $0x38] sm:$0xff] %vm335, %v2956
        %3032 = vst.msk [vmem:[%s2995 + $0x50] sm:$0xff] %vm335, %v2957
        %3033 = vst.msk [vmem:[%s2995 + $0x68] sm:$0xff] %vm335, %v2958
        %3034 = vst.msk [vmem:[%s2995 + $0x80] sm:$0xff] %vm335, %v2959
        %3035 = vst.msk [vmem:[%s2995 + $0x98] sm:$0xff] %vm335, %v2960
        %3036 = vst.msk [vmem:[%s2995 + $0xb0] sm:$0xff] %vm335, %v2961
        %3037 = vst.msk [vmem:[%s2995 + $0x128] sm:$0xff] %vm335, %v2962
        %3038 = vst.msk [vmem:[%s2995 + $0x140] sm:$0xff] %vm335, %v2963
        %3039 = vst.msk [vmem:[%s2995 + $0x158] sm:$0xff] %vm335, %v2964
        %3040 = vst.msk [vmem:[%s2995 + $0x170] sm:$0xff] %vm335, %v2965
        %3041 = vst.msk [vmem:[%s2995 + $0x188] sm:$0xff] %vm335, %v2966
        %3042 = vst.msk [vmem:[%s2995 + $0x1a0] sm:$0xff] %vm335, %v2967
        %3043 = vst.msk [vmem:[%s2995 + $0x1b8] sm:$0xff] %vm335, %v2968
        %3044 = vst.msk [vmem:[%s2995 + $0x1d0] sm:$0xff] %vm335, %v2969
        %v3045 = vld [vmem:[#allocation3 + $0x6] sm:$0xff]
        %v3046 = vld [vmem:[#allocation3 + $0x1e] sm:$0xff]
        %v3047 = vld [vmem:[#allocation3 + $0x36] sm:$0xff]
        %v3048 = vld [vmem:[#allocation3 + $0x4e] sm:$0xff]
        %v3049 = vld [vmem:[#allocation3 + $0x66] sm:$0xff]
        %v3050 = vld [vmem:[#allocation3 + $0x7e] sm:$0xff]
        %v3051 = vld [vmem:[#allocation3 + $0x96] sm:$0xff]
        %v3052 = vld [vmem:[#allocation3 + $0xae] sm:$0xff]
        %v3053 = vld [vmem:[#allocation3 + $0xc6] sm:$0xff]
        %v3054 = vld [vmem:[#allocation3 + $0xde] sm:$0xff]
        %v3055 = vld [vmem:[#allocation3 + $0xf6] sm:$0xff]
        %v3056 = vld [vmem:[#allocation3 + $0x10e] sm:$0xff]
        %v3057 = vld [vmem:[#allocation3 + $0x126] sm:$0xff]
        %v3058 = vld [vmem:[#allocation3 + $0x13e] sm:$0xff]
        %v3059 = vld [vmem:[#allocation3 + $0x156] sm:$0xff]
        %v3060 = vld [vmem:[#allocation3 + $0x16e] sm:$0xff]
        %v3061 = vld [vmem:[#allocation3 + $0x186] sm:$0xff]
        %v3062 = vld [vmem:[#allocation3 + $0x19e] sm:$0xff]
        %v3063 = vld [vmem:[#allocation3 + $0x1b6] sm:$0xff]
        %v3064 = vld [vmem:[#allocation3 + $0x1ce] sm:$0xff]
        %v3065 = vld [vmem:[#allocation3 + $0x1e6] sm:$0xff]
        %v3066 = vld [vmem:[#allocation3 + $0x1fe] sm:$0xff]
        %v3067 = vld [vmem:[#allocation3 + $0x216] sm:$0xff]
        %v3068 = vld [vmem:[#allocation3 + $0x22e] sm:$0xff]
        %3069 = vst.msk [vmem:[#allocation2] sm:$0xff] %vm335, %v3045
        %3070 = vst.msk [vmem:[#allocation2 + $0x18] sm:$0xff] %vm335, %v3046
        %3071 = vst.msk [vmem:[#allocation2 + $0x30] sm:$0xff] %vm335, %v3047
        %3072 = vst.msk [vmem:[#allocation2 + $0x48] sm:$0xff] %vm335, %v3048
        %3073 = vst.msk [vmem:[#allocation2 + $0x60] sm:$0xff] %vm335, %v3049
        %3074 = vst.msk [vmem:[#allocation2 + $0x78] sm:$0xff] %vm335, %v3050
        %3075 = vst.msk [vmem:[#allocation2 + $0x90] sm:$0xff] %vm335, %v3051
        %3076 = vst.msk [vmem:[#allocation2 + $0xa8] sm:$0xff] %vm335, %v3052
        %3077 = vst.msk [vmem:[#allocation2 + $0xc0] sm:$0xff] %vm335, %v3053
        %3078 = vst.msk [vmem:[#allocation2 + $0xd8] sm:$0xff] %vm335, %v3054
        %3079 = vst.msk [vmem:[#allocation2 + $0xf0] sm:$0xff] %vm335, %v3055
        %3080 = vst.msk [vmem:[#allocation2 + $0x108] sm:$0xff] %vm335, %v3056
        %3081 = vst.msk [vmem:[#allocation2 + $0x120] sm:$0xff] %vm335, %v3057
        %3082 = vst.msk [vmem:[#allocation2 + $0x138] sm:$0xff] %vm335, %v3058
        %3083 = vst.msk [vmem:[#allocation2 + $0x150] sm:$0xff] %vm335, %v3059
        %3084 = vst.msk [vmem:[#allocation2 + $0x168] sm:$0xff] %vm335, %v3060
        %3085 = vst.msk [vmem:[#allocation2 + $0x180] sm:$0xff] %vm335, %v3061
        %3086 = vst.msk [vmem:[#allocation2 + $0x198] sm:$0xff] %vm335, %v3062
        %3087 = vst.msk [vmem:[#allocation2 + $0x1b0] sm:$0xff] %vm335, %v3063
        %3088 = vst.msk [vmem:[#allocation2 + $0x1c8] sm:$0xff] %vm335, %v3064
        %3089 = vst.msk [vmem:[#allocation2 + $0x1e0] sm:$0xff] %vm335, %v3065
        %3090 = vst.msk [vmem:[#allocation2 + $0x1f8] sm:$0xff] %vm335, %v3066
        %3091 = vst.msk [vmem:[#allocation2 + $0x210] sm:$0xff] %vm335, %v3067
        %3092 = vst.msk [vmem:[#allocation2 + $0x228] sm:$0xff] %vm335, %v3068
        %v3093 = vld [vmem:[#allocation3 + $0x7] sm:$0xff]
        %v3094 = vld [vmem:[#allocation3 + $0x1f] sm:$0xff]
        %v3095 = vld [vmem:[#allocation3 + $0x37] sm:$0xff]
        %v3096 = vld [vmem:[#allocation3 + $0x4f] sm:$0xff]
        %v3097 = vld [vmem:[#allocation3 + $0x67] sm:$0xff]
        %v3098 = vld [vmem:[#allocation3 + $0x7f] sm:$0xff]
        %v3099 = vld [vmem:[#allocation3 + $0x97] sm:$0xff]
        %v3100 = vld [vmem:[#allocation3 + $0xaf] sm:$0xff]
        %v3101 = vld [vmem:[#allocation3 + $0xc7] sm:$0xff]
        %v3102 = vld [vmem:[#allocation3 + $0xdf] sm:$0xff]
        %v3103 = vld [vmem:[#allocation3 + $0xf7] sm:$0xff]
        %v3104 = vld [vmem:[#allocation3 + $0x10f] sm:$0xff]
        %v3105 = vld [vmem:[#allocation3 + $0x127] sm:$0xff]
        %v3106 = vld [vmem:[#allocation3 + $0x13f] sm:$0xff]
        %v3107 = vld [vmem:[#allocation3 + $0x157] sm:$0xff]
        %v3108 = vld [vmem:[#allocation3 + $0x16f] sm:$0xff]
        %v3109 = vld [vmem:[#allocation3 + $0x187] sm:$0xff]
        %v3110 = vld [vmem:[#allocation3 + $0x19f] sm:$0xff]
        %v3111 = vld [vmem:[#allocation3 + $0x1b7] sm:$0xff]
        %v3112 = vld [vmem:[#allocation3 + $0x1cf] sm:$0xff]
        %v3113 = vld [vmem:[#allocation3 + $0x1e7] sm:$0xff]
        %v3114 = vld [vmem:[#allocation3 + $0x1ff] sm:$0xff]
        %v3115 = vld [vmem:[#allocation3 + $0x217] sm:$0xff]
        %v3116 = vld [vmem:[#allocation3 + $0x22f] sm:$0xff]
        %3141 = vrot.lane.b32.xlu0 %v3093, 64
        %v3142 = vpop.permute.xlu0 %3141
        %3143 = vrot.lane.b32.xlu0 %v3094, 64
        %v3144 = vpop.permute.xlu0 %3143
        %3145 = vrot.lane.b32.xlu0 %v3095, 64
        %v3146 = vpop.permute.xlu0 %3145
        %3147 = vrot.lane.b32.xlu0 %v3096, 64
        %v3148 = vpop.permute.xlu0 %3147
        %3149 = vrot.lane.b32.xlu0 %v3097, 64
        %v3150 = vpop.permute.xlu0 %3149
        %3151 = vrot.lane.b32.xlu0 %v3098, 64
        %v3152 = vpop.permute.xlu0 %3151
        %3153 = vrot.lane.b32.xlu0 %v3099, 64
        %v3154 = vpop.permute.xlu0 %3153
        %3155 = vrot.lane.b32.xlu0 %v3100, 64
        %v3156 = vpop.permute.xlu0 %3155
        %3157 = vrot.lane.b32.xlu0 %v3101, 64
        %v3158 = vpop.permute.xlu0 %3157
        %3159 = vrot.lane.b32.xlu0 %v3102, 64
        %v3160 = vpop.permute.xlu0 %3159
        %3161 = vrot.lane.b32.xlu0 %v3103, 64
        %v3162 = vpop.permute.xlu0 %3161
        %3163 = vrot.lane.b32.xlu0 %v3104, 64
        %v3164 = vpop.permute.xlu0 %3163
        %3165 = vrot.lane.b32.xlu0 %v3105, 64
        %v3166 = vpop.permute.xlu0 %3165
        %3167 = vrot.lane.b32.xlu0 %v3106, 64
        %v3168 = vpop.permute.xlu0 %3167
        %3169 = vrot.lane.b32.xlu0 %v3107, 64
        %v3170 = vpop.permute.xlu0 %3169
        %3171 = vrot.lane.b32.xlu0 %v3108, 64
        %v3172 = vpop.permute.xlu0 %3171
        %3173 = vrot.lane.b32.xlu0 %v3109, 64
        %v3174 = vpop.permute.xlu0 %3173
        %3175 = vrot.lane.b32.xlu0 %v3110, 64
        %v3176 = vpop.permute.xlu0 %3175
        %3177 = vrot.lane.b32.xlu0 %v3111, 64
        %v3178 = vpop.permute.xlu0 %3177
        %3179 = vrot.lane.b32.xlu0 %v3112, 64
        %v3180 = vpop.permute.xlu0 %3179
        %3181 = vrot.lane.b32.xlu0 %v3113, 64
        %v3182 = vpop.permute.xlu0 %3181
        %3183 = vrot.lane.b32.xlu0 %v3114, 64
        %v3184 = vpop.permute.xlu0 %3183
        %3185 = vrot.lane.b32.xlu0 %v3115, 64
        %v3186 = vpop.permute.xlu0 %3185
        %3187 = vrot.lane.b32.xlu0 %v3116, 64
        %v3188 = vpop.permute.xlu0 %3187
        %3213 = vst.msk [vmem:[#allocation2] sm:$0xff] %vm480, %v3142
        %3214 = vst.msk [vmem:[#allocation2 + $0x18] sm:$0xff] %vm480, %v3144
        %3215 = vst.msk [vmem:[#allocation2 + $0x30] sm:$0xff] %vm480, %v3146
        %3216 = vst.msk [vmem:[#allocation2 + $0x48] sm:$0xff] %vm480, %v3148
        %3217 = vst.msk [vmem:[#allocation2 + $0x60] sm:$0xff] %vm480, %v3150
        %3218 = vst.msk [vmem:[#allocation2 + $0x78] sm:$0xff] %vm480, %v3152
        %3219 = vst.msk [vmem:[#allocation2 + $0x90] sm:$0xff] %vm480, %v3154
        %3220 = vst.msk [vmem:[#allocation2 + $0xa8] sm:$0xff] %vm480, %v3156
        %3221 = vst.msk [vmem:[#allocation2 + $0xc0] sm:$0xff] %vm480, %v3158
        %3222 = vst.msk [vmem:[#allocation2 + $0xd8] sm:$0xff] %vm480, %v3160
        %3223 = vst.msk [vmem:[#allocation2 + $0xf0] sm:$0xff] %vm480, %v3162
        %3224 = vst.msk [vmem:[#allocation2 + $0x108] sm:$0xff] %vm480, %v3164
        %3225 = vst.msk [vmem:[#allocation2 + $0x120] sm:$0xff] %vm480, %v3166
        %3226 = vst.msk [vmem:[#allocation2 + $0x138] sm:$0xff] %vm480, %v3168
        %3227 = vst.msk [vmem:[#allocation2 + $0x150] sm:$0xff] %vm480, %v3170
        %3228 = vst.msk [vmem:[#allocation2 + $0x168] sm:$0xff] %vm480, %v3172
        %3229 = vst.msk [vmem:[#allocation2 + $0x180] sm:$0xff] %vm480, %v3174
        %3230 = vst.msk [vmem:[#allocation2 + $0x198] sm:$0xff] %vm480, %v3176
        %3231 = vst.msk [vmem:[#allocation2 + $0x1b0] sm:$0xff] %vm480, %v3178
        %3232 = vst.msk [vmem:[#allocation2 + $0x1c8] sm:$0xff] %vm480, %v3180
        %3233 = vst.msk [vmem:[#allocation2 + $0x1e0] sm:$0xff] %vm480, %v3182
        %3234 = vst.msk [vmem:[#allocation2 + $0x1f8] sm:$0xff] %vm480, %v3184
        %3235 = vst.msk [vmem:[#allocation2 + $0x210] sm:$0xff] %vm480, %v3186
        %3236 = vst.msk [vmem:[#allocation2 + $0x228] sm:$0xff] %vm480, %v3188
        %v3237 = vld [vmem:[#allocation3 + $0x8] sm:$0xff]
        %v3238 = vld [vmem:[#allocation3 + $0x20] sm:$0xff]
        %v3239 = vld [vmem:[#allocation3 + $0x38] sm:$0xff]
        %v3240 = vld [vmem:[#allocation3 + $0x50] sm:$0xff]
        %v3241 = vld [vmem:[#allocation3 + $0x68] sm:$0xff]
        %v3242 = vld [vmem:[#allocation3 + $0x80] sm:$0xff]
        %v3243 = vld [vmem:[#allocation3 + $0x98] sm:$0xff]
        %v3244 = vld [vmem:[#allocation3 + $0xb0] sm:$0xff]
        %v3245 = vld [vmem:[#allocation3 + $0xc8] sm:$0xff]
        %v3246 = vld [vmem:[#allocation3 + $0xe0] sm:$0xff]
        %v3247 = vld [vmem:[#allocation3 + $0xf8] sm:$0xff]
        %v3248 = vld [vmem:[#allocation3 + $0x110] sm:$0xff]
        %v3249 = vld [vmem:[#allocation3 + $0x128] sm:$0xff]
        %v3250 = vld [vmem:[#allocation3 + $0x140] sm:$0xff]
        %v3251 = vld [vmem:[#allocation3 + $0x158] sm:$0xff]
        %v3252 = vld [vmem:[#allocation3 + $0x170] sm:$0xff]
        %v3253 = vld [vmem:[#allocation3 + $0x188] sm:$0xff]
        %v3254 = vld [vmem:[#allocation3 + $0x1a0] sm:$0xff]
        %v3255 = vld [vmem:[#allocation3 + $0x1b8] sm:$0xff]
        %v3256 = vld [vmem:[#allocation3 + $0x1d0] sm:$0xff]
        %v3257 = vld [vmem:[#allocation3 + $0x1e8] sm:$0xff]
        %v3258 = vld [vmem:[#allocation3 + $0x200] sm:$0xff]
        %v3259 = vld [vmem:[#allocation3 + $0x218] sm:$0xff]
        %v3260 = vld [vmem:[#allocation3 + $0x230] sm:$0xff]
        %3261 = vst.msk [vmem:[#allocation2 + $0x8] sm:$0xff] %vm335, %v3237
        %3262 = vst.msk [vmem:[#allocation2 + $0x20] sm:$0xff] %vm335, %v3238
        %3263 = vst.msk [vmem:[#allocation2 + $0x38] sm:$0xff] %vm335, %v3239
        %3264 = vst.msk [vmem:[#allocation2 + $0x50] sm:$0xff] %vm335, %v3240
        %3265 = vst.msk [vmem:[#allocation2 + $0x68] sm:$0xff] %vm335, %v3241
        %3266 = vst.msk [vmem:[#allocation2 + $0x80] sm:$0xff] %vm335, %v3242
        %3267 = vst.msk [vmem:[#allocation2 + $0x98] sm:$0xff] %vm335, %v3243
        %3268 = vst.msk [vmem:[#allocation2 + $0xb0] sm:$0xff] %vm335, %v3244
        %3269 = vst.msk [vmem:[#allocation2 + $0xc8] sm:$0xff] %vm335, %v3245
        %3270 = vst.msk [vmem:[#allocation2 + $0xe0] sm:$0xff] %vm335, %v3246
        %3271 = vst.msk [vmem:[#allocation2 + $0xf8] sm:$0xff] %vm335, %v3247
        %3272 = vst.msk [vmem:[#allocation2 + $0x110] sm:$0xff] %vm335, %v3248
        %3273 = vst.msk [vmem:[#allocation2 + $0x128] sm:$0xff] %vm335, %v3249
        %3274 = vst.msk [vmem:[#allocation2 + $0x140] sm:$0xff] %vm335, %v3250
        %3275 = vst.msk [vmem:[#allocation2 + $0x158] sm:$0xff] %vm335, %v3251
        %3276 = vst.msk [vmem:[#allocation2 + $0x170] sm:$0xff] %vm335, %v3252
        %3277 = vst.msk [vmem:[#allocation2 + $0x188] sm:$0xff] %vm335, %v3253
        %3278 = vst.msk [vmem:[#allocation2 + $0x1a0] sm:$0xff] %vm335, %v3254
        %3279 = vst.msk [vmem:[#allocation2 + $0x1b8] sm:$0xff] %vm335, %v3255
        %3280 = vst.msk [vmem:[#allocation2 + $0x1d0] sm:$0xff] %vm335, %v3256
        %3281 = vst.msk [vmem:[#allocation2 + $0x1e8] sm:$0xff] %vm335, %v3257
        %3282 = vst.msk [vmem:[#allocation2 + $0x200] sm:$0xff] %vm335, %v3258
        %3283 = vst.msk [vmem:[#allocation2 + $0x218] sm:$0xff] %vm335, %v3259
        %3284 = vst.msk [vmem:[#allocation2 + $0x230] sm:$0xff] %vm335, %v3260
        %v3285 = vld [vmem:[#allocation3 + $0x9] sm:$0xff]
        %v3286 = vld [vmem:[#allocation3 + $0x21] sm:$0xff]
        %v3287 = vld [vmem:[#allocation3 + $0x39] sm:$0xff]
        %v3288 = vld [vmem:[#allocation3 + $0x51] sm:$0xff]
        %v3289 = vld [vmem:[#allocation3 + $0x69] sm:$0xff]
        %v3290 = vld [vmem:[#allocation3 + $0x81] sm:$0xff]
        %v3291 = vld [vmem:[#allocation3 + $0x99] sm:$0xff]
        %v3292 = vld [vmem:[#allocation3 + $0xb1] sm:$0xff]
        %v3293 = vld [vmem:[#allocation3 + $0xc9] sm:$0xff]
        %v3294 = vld [vmem:[#allocation3 + $0xe1] sm:$0xff]
        %v3295 = vld [vmem:[#allocation3 + $0xf9] sm:$0xff]
        %v3296 = vld [vmem:[#allocation3 + $0x111] sm:$0xff]
        %v3297 = vld [vmem:[#allocation3 + $0x129] sm:$0xff]
        %v3298 = vld [vmem:[#allocation3 + $0x141] sm:$0xff]
        %v3299 = vld [vmem:[#allocation3 + $0x159] sm:$0xff]
        %v3300 = vld [vmem:[#allocation3 + $0x171] sm:$0xff]
        %v3301 = vld [vmem:[#allocation3 + $0x189] sm:$0xff]
        %v3302 = vld [vmem:[#allocation3 + $0x1a1] sm:$0xff]
        %v3303 = vld [vmem:[#allocation3 + $0x1b9] sm:$0xff]
        %v3304 = vld [vmem:[#allocation3 + $0x1d1] sm:$0xff]
        %v3305 = vld [vmem:[#allocation3 + $0x1e9] sm:$0xff]
        %v3306 = vld [vmem:[#allocation3 + $0x201] sm:$0xff]
        %v3307 = vld [vmem:[#allocation3 + $0x219] sm:$0xff]
        %v3308 = vld [vmem:[#allocation3 + $0x231] sm:$0xff]
        %3333 = vrot.lane.b32.xlu0 %v3285, 64
        %v3334 = vpop.permute.xlu0 %3333
        %3335 = vrot.lane.b32.xlu0 %v3286, 64
        %v3336 = vpop.permute.xlu0 %3335
        %3337 = vrot.lane.b32.xlu0 %v3287, 64
        %v3338 = vpop.permute.xlu0 %3337
        %3339 = vrot.lane.b32.xlu0 %v3288, 64
        %v3340 = vpop.permute.xlu0 %3339
        %3341 = vrot.lane.b32.xlu0 %v3289, 64
        %v3342 = vpop.permute.xlu0 %3341
        %3343 = vrot.lane.b32.xlu0 %v3290, 64
        %v3344 = vpop.permute.xlu0 %3343
        %3345 = vrot.lane.b32.xlu0 %v3291, 64
        %v3346 = vpop.permute.xlu0 %3345
        %3347 = vrot.lane.b32.xlu0 %v3292, 64
        %v3348 = vpop.permute.xlu0 %3347
        %3349 = vrot.lane.b32.xlu0 %v3293, 64
        %v3350 = vpop.permute.xlu0 %3349
        %3351 = vrot.lane.b32.xlu0 %v3294, 64
        %v3352 = vpop.permute.xlu0 %3351
        %3353 = vrot.lane.b32.xlu0 %v3295, 64
        %v3354 = vpop.permute.xlu0 %3353
        %3355 = vrot.lane.b32.xlu0 %v3296, 64
        %v3356 = vpop.permute.xlu0 %3355
        %3357 = vrot.lane.b32.xlu0 %v3297, 64
        %v3358 = vpop.permute.xlu0 %3357
        %3359 = vrot.lane.b32.xlu0 %v3298, 64
        %v3360 = vpop.permute.xlu0 %3359
        %3361 = vrot.lane.b32.xlu0 %v3299, 64
        %v3362 = vpop.permute.xlu0 %3361
        %3363 = vrot.lane.b32.xlu0 %v3300, 64
        %v3364 = vpop.permute.xlu0 %3363
        %3365 = vrot.lane.b32.xlu0 %v3301, 64
        %v3366 = vpop.permute.xlu0 %3365
        %3367 = vrot.lane.b32.xlu0 %v3302, 64
        %v3368 = vpop.permute.xlu0 %3367
        %3369 = vrot.lane.b32.xlu0 %v3303, 64
        %v3370 = vpop.permute.xlu0 %3369
        %3371 = vrot.lane.b32.xlu0 %v3304, 64
        %v3372 = vpop.permute.xlu0 %3371
        %3373 = vrot.lane.b32.xlu0 %v3305, 64
        %v3374 = vpop.permute.xlu0 %3373
        %3375 = vrot.lane.b32.xlu0 %v3306, 64
        %v3376 = vpop.permute.xlu0 %3375
        %3377 = vrot.lane.b32.xlu0 %v3307, 64
        %v3378 = vpop.permute.xlu0 %3377
        %3379 = vrot.lane.b32.xlu0 %v3308, 64
        %v3380 = vpop.permute.xlu0 %3379
        %3405 = vst.msk [vmem:[#allocation2 + $0x8] sm:$0xff] %vm480, %v3334
        %3406 = vst.msk [vmem:[#allocation2 + $0x20] sm:$0xff] %vm480, %v3336
        %3407 = vst.msk [vmem:[#allocation2 + $0x38] sm:$0xff] %vm480, %v3338
        %3408 = vst.msk [vmem:[#allocation2 + $0x50] sm:$0xff] %vm480, %v3340
        %3409 = vst.msk [vmem:[#allocation2 + $0x68] sm:$0xff] %vm480, %v3342
        %3410 = vst.msk [vmem:[#allocation2 + $0x80] sm:$0xff] %vm480, %v3344
        %3411 = vst.msk [vmem:[#allocation2 + $0x98] sm:$0xff] %vm480, %v3346
        %3412 = vst.msk [vmem:[#allocation2 + $0xb0] sm:$0xff] %vm480, %v3348
        %3413 = vst.msk [vmem:[#allocation2 + $0xc8] sm:$0xff] %vm480, %v3350
        %3414 = vst.msk [vmem:[#allocation2 + $0xe0] sm:$0xff] %vm480, %v3352
        %3415 = vst.msk [vmem:[#allocation2 + $0xf8] sm:$0xff] %vm480, %v3354
        %3416 = vst.msk [vmem:[#allocation2 + $0x110] sm:$0xff] %vm480, %v3356
        %3417 = vst.msk [vmem:[#allocation2 + $0x128] sm:$0xff] %vm480, %v3358
        %3418 = vst.msk [vmem:[#allocation2 + $0x140] sm:$0xff] %vm480, %v3360
        %3419 = vst.msk [vmem:[#allocation2 + $0x158] sm:$0xff] %vm480, %v3362
        %3420 = vst.msk [vmem:[#allocation2 + $0x170] sm:$0xff] %vm480, %v3364
        %3421 = vst.msk [vmem:[#allocation2 + $0x188] sm:$0xff] %vm480, %v3366
        %3422 = vst.msk [vmem:[#allocation2 + $0x1a0] sm:$0xff] %vm480, %v3368
        %3423 = vst.msk [vmem:[#allocation2 + $0x1b8] sm:$0xff] %vm480, %v3370
        %3424 = vst.msk [vmem:[#allocation2 + $0x1d0] sm:$0xff] %vm480, %v3372
        %3425 = vst.msk [vmem:[#allocation2 + $0x1e8] sm:$0xff] %vm480, %v3374
        %3426 = vst.msk [vmem:[#allocation2 + $0x200] sm:$0xff] %vm480, %v3376
        %3427 = vst.msk [vmem:[#allocation2 + $0x218] sm:$0xff] %vm480, %v3378
        %3428 = vst.msk [vmem:[#allocation2 + $0x230] sm:$0xff] %vm480, %v3380
        %v3429 = vld [vmem:[#allocation3 + $0xa] sm:$0xff]
        %v3430 = vld [vmem:[#allocation3 + $0x22] sm:$0xff]
        %v3431 = vld [vmem:[#allocation3 + $0x3a] sm:$0xff]
        %v3432 = vld [vmem:[#allocation3 + $0x52] sm:$0xff]
        %v3433 = vld [vmem:[#allocation3 + $0x6a] sm:$0xff]
        %v3434 = vld [vmem:[#allocation3 + $0x82] sm:$0xff]
        %v3435 = vld [vmem:[#allocation3 + $0x9a] sm:$0xff]
        %v3436 = vld [vmem:[#allocation3 + $0xb2] sm:$0xff]
        %v3437 = vld [vmem:[#allocation3 + $0xca] sm:$0xff]
        %v3438 = vld [vmem:[#allocation3 + $0xe2] sm:$0xff]
        %v3439 = vld [vmem:[#allocation3 + $0xfa] sm:$0xff]
        %v3440 = vld [vmem:[#allocation3 + $0x112] sm:$0xff]
        %v3441 = vld [vmem:[#allocation3 + $0x12a] sm:$0xff]
        %v3442 = vld [vmem:[#allocation3 + $0x142] sm:$0xff]
        %v3443 = vld [vmem:[#allocation3 + $0x15a] sm:$0xff]
        %v3444 = vld [vmem:[#allocation3 + $0x172] sm:$0xff]
        %v3445 = vld [vmem:[#allocation3 + $0x18a] sm:$0xff]
        %v3446 = vld [vmem:[#allocation3 + $0x1a2] sm:$0xff]
        %v3447 = vld [vmem:[#allocation3 + $0x1ba] sm:$0xff]
        %v3448 = vld [vmem:[#allocation3 + $0x1d2] sm:$0xff]
        %v3449 = vld [vmem:[#allocation3 + $0x1ea] sm:$0xff]
        %v3450 = vld [vmem:[#allocation3 + $0x202] sm:$0xff]
        %v3451 = vld [vmem:[#allocation3 + $0x21a] sm:$0xff]
        %v3452 = vld [vmem:[#allocation3 + $0x232] sm:$0xff]
        %3453 = vst.msk [vmem:[#allocation2 + $0x10] sm:$0xff] %vm335, %v3429
        %3454 = vst.msk [vmem:[#allocation2 + $0x28] sm:$0xff] %vm335, %v3430
        %3455 = vst.msk [vmem:[#allocation2 + $0x40] sm:$0xff] %vm335, %v3431
        %3456 = vst.msk [vmem:[#allocation2 + $0x58] sm:$0xff] %vm335, %v3432
        %3457 = vst.msk [vmem:[#allocation2 + $0x70] sm:$0xff] %vm335, %v3433
        %3458 = vst.msk [vmem:[#allocation2 + $0x88] sm:$0xff] %vm335, %v3434
        %3459 = vst.msk [vmem:[#allocation2 + $0xa0] sm:$0xff] %vm335, %v3435
        %3460 = vst.msk [vmem:[#allocation2 + $0xb8] sm:$0xff] %vm335, %v3436
        %3461 = vst.msk [vmem:[#allocation2 + $0xd0] sm:$0xff] %vm335, %v3437
        %3462 = vst.msk [vmem:[#allocation2 + $0xe8] sm:$0xff] %vm335, %v3438
        %3463 = vst.msk [vmem:[#allocation2 + $0x100] sm:$0xff] %vm335, %v3439
        %3464 = vst.msk [vmem:[#allocation2 + $0x118] sm:$0xff] %vm335, %v3440
        %3465 = vst.msk [vmem:[#allocation2 + $0x130] sm:$0xff] %vm335, %v3441
        %3466 = vst.msk [vmem:[#allocation2 + $0x148] sm:$0xff] %vm335, %v3442
        %3467 = vst.msk [vmem:[#allocation2 + $0x160] sm:$0xff] %vm335, %v3443
        %3468 = vst.msk [vmem:[#allocation2 + $0x178] sm:$0xff] %vm335, %v3444
        %3469 = vst.msk [vmem:[#allocation2 + $0x190] sm:$0xff] %vm335, %v3445
        %3470 = vst.msk [vmem:[#allocation2 + $0x1a8] sm:$0xff] %vm335, %v3446
        %3471 = vst.msk [vmem:[#allocation2 + $0x1c0] sm:$0xff] %vm335, %v3447
        %3472 = vst.msk [vmem:[#allocation2 + $0x1d8] sm:$0xff] %vm335, %v3448
        %3473 = vst.msk [vmem:[#allocation2 + $0x1f0] sm:$0xff] %vm335, %v3449
        %3474 = vst.msk [vmem:[#allocation2 + $0x208] sm:$0xff] %vm335, %v3450
        %3475 = vst.msk [vmem:[#allocation2 + $0x220] sm:$0xff] %vm335, %v3451
        %3476 = vst.msk [vmem:[#allocation2 + $0x238] sm:$0xff] %vm335, %v3452
        %v3477 = vld [vmem:[#allocation2] sm:$0xff]
        %v3478 = vld [vmem:[#allocation2 + $0x8] sm:$0xff]
        %v3479 = vld [vmem:[#allocation2 + $0x10] sm:$0xff]
        %v3480 = vld [vmem:[#allocation2 + $0x18] sm:$0xff]
        %v3481 = vld [vmem:[#allocation2 + $0x20] sm:$0xff]
        %v3482 = vld [vmem:[#allocation2 + $0x28] sm:$0xff]
        %v3483 = vld [vmem:[#allocation2 + $0x30] sm:$0xff]
        %v3484 = vld [vmem:[#allocation2 + $0x38] sm:$0xff]
        %v3485 = vld [vmem:[#allocation2 + $0x40] sm:$0xff]
        %v3486 = vld [vmem:[#allocation2 + $0x48] sm:$0xff]
        %v3487 = vld [vmem:[#allocation2 + $0x50] sm:$0xff]
        %v3488 = vld [vmem:[#allocation2 + $0x58] sm:$0xff]
        %v3489 = vld [vmem:[#allocation2 + $0x60] sm:$0xff]
        %v3490 = vld [vmem:[#allocation2 + $0x68] sm:$0xff]
        %v3491 = vld [vmem:[#allocation2 + $0x70] sm:$0xff]
        %v3492 = vld [vmem:[#allocation2 + $0x78] sm:$0xff]
        %v3493 = vld [vmem:[#allocation2 + $0x80] sm:$0xff]
        %v3494 = vld [vmem:[#allocation2 + $0x88] sm:$0xff]
        %v3495 = vld [vmem:[#allocation2 + $0x90] sm:$0xff]
        %v3496 = vld [vmem:[#allocation2 + $0x98] sm:$0xff]
        %v3497 = vld [vmem:[#allocation2 + $0xa0] sm:$0xff]
        %v3498 = vld [vmem:[#allocation2 + $0xa8] sm:$0xff]
        %v3499 = vld [vmem:[#allocation2 + $0xb0] sm:$0xff]
        %v3500 = vld [vmem:[#allocation2 + $0xb8] sm:$0xff]
        %v3501 = vld [vmem:[#allocation2 + $0x120] sm:$0xff]
        %v3502 = vld [vmem:[#allocation2 + $0x128] sm:$0xff]
        %v3503 = vld [vmem:[#allocation2 + $0x130] sm:$0xff]
        %v3504 = vld [vmem:[#allocation2 + $0x138] sm:$0xff]
        %v3505 = vld [vmem:[#allocation2 + $0x140] sm:$0xff]
        %v3506 = vld [vmem:[#allocation2 + $0x148] sm:$0xff]
        %v3507 = vld [vmem:[#allocation2 + $0x150] sm:$0xff]
        %v3508 = vld [vmem:[#allocation2 + $0x158] sm:$0xff]
        %v3509 = vld [vmem:[#allocation2 + $0x160] sm:$0xff]
        %v3510 = vld [vmem:[#allocation2 + $0x168] sm:$0xff]
        %v3511 = vld [vmem:[#allocation2 + $0x170] sm:$0xff]
        %v3512 = vld [vmem:[#allocation2 + $0x178] sm:$0xff]
        %v3513 = vld [vmem:[#allocation2 + $0x180] sm:$0xff]
        %v3514 = vld [vmem:[#allocation2 + $0x188] sm:$0xff]
        %v3515 = vld [vmem:[#allocation2 + $0x190] sm:$0xff]
        %v3516 = vld [vmem:[#allocation2 + $0x198] sm:$0xff]
        %v3517 = vld [vmem:[#allocation2 + $0x1a0] sm:$0xff]
        %v3518 = vld [vmem:[#allocation2 + $0x1a8] sm:$0xff]
        %v3519 = vld [vmem:[#allocation2 + $0x1b0] sm:$0xff]
        %v3520 = vld [vmem:[#allocation2 + $0x1b8] sm:$0xff]
        %v3521 = vld [vmem:[#allocation2 + $0x1c0] sm:$0xff]
        %v3522 = vld [vmem:[#allocation2 + $0x1c8] sm:$0xff]
        %v3523 = vld [vmem:[#allocation2 + $0x1d0] sm:$0xff]
        %v3524 = vld [vmem:[#allocation2 + $0x1d8] sm:$0xff]
        %v3525 = vld [vmem:[#allocation7] sm:$0xff]
        %v3526 = vld [vmem:[#allocation7 + $0x8] sm:$0xff]
        %v3527 = vld [vmem:[#allocation7 + $0x10] sm:$0xff]
        %v3528 = vld [vmem:[#allocation7 + $0x18] sm:$0xff]
        %v3529 = vld [vmem:[#allocation7 + $0x20] sm:$0xff]
        %v3530 = vld [vmem:[#allocation7 + $0x28] sm:$0xff]
        %v3531 = vld [vmem:[#allocation7 + $0x30] sm:$0xff]
        %v3532 = vld [vmem:[#allocation7 + $0x38] sm:$0xff]
        %v3533 = vld [vmem:[#allocation7 + $0x40] sm:$0xff]
        %v3534 = vld [vmem:[#allocation7 + $0x48] sm:$0xff]
        %v3535 = vld [vmem:[#allocation7 + $0x50] sm:$0xff]
        %v3536 = vld [vmem:[#allocation7 + $0x58] sm:$0xff]
        %v3537 = vld [vmem:[#allocation7 + $0x60] sm:$0xff]
        %v3538 = vld [vmem:[#allocation7 + $0x68] sm:$0xff]
        %v3539 = vld [vmem:[#allocation7 + $0x70] sm:$0xff]
        %v3540 = vld [vmem:[#allocation7 + $0x78] sm:$0xff]
        %v3541 = vld [vmem:[#allocation7 + $0x80] sm:$0xff]
        %v3542 = vld [vmem:[#allocation7 + $0x88] sm:$0xff]
        %v3543 = vld [vmem:[#allocation7 + $0x90] sm:$0xff]
        %v3544 = vld [vmem:[#allocation7 + $0x98] sm:$0xff]
        %v3545 = vld [vmem:[#allocation7 + $0xa0] sm:$0xff]
        %v3546 = vld [vmem:[#allocation7 + $0xa8] sm:$0xff]
        %v3547 = vld [vmem:[#allocation7 + $0xb0] sm:$0xff]
        %v3548 = vld [vmem:[#allocation7 + $0xb8] sm:$0xff]
        %v3549 = vld [vmem:[#allocation7 + $0xc0] sm:$0xff]
        %v3550 = vld [vmem:[#allocation7 + $0xc8] sm:$0xff]
        %v3551 = vld [vmem:[#allocation7 + $0xd0] sm:$0xff]
        %v3552 = vld [vmem:[#allocation7 + $0xd8] sm:$0xff]
        %v3553 = vld [vmem:[#allocation7 + $0xe0] sm:$0xff]
        %v3554 = vld [vmem:[#allocation7 + $0xe8] sm:$0xff]
        %v3555 = vld [vmem:[#allocation7 + $0xf0] sm:$0xff]
        %v3556 = vld [vmem:[#allocation7 + $0xf8] sm:$0xff]
        %v3557 = vld [vmem:[#allocation7 + $0x100] sm:$0xff]
        %v3558 = vld [vmem:[#allocation7 + $0x108] sm:$0xff]
        %v3559 = vld [vmem:[#allocation7 + $0x110] sm:$0xff]
        %v3560 = vld [vmem:[#allocation7 + $0x118] sm:$0xff]
        %v3561 = vld [vmem:[#allocation7 + $0x120] sm:$0xff]
        %v3562 = vld [vmem:[#allocation7 + $0x128] sm:$0xff]
        %v3563 = vld [vmem:[#allocation7 + $0x130] sm:$0xff]
        %v3564 = vld [vmem:[#allocation7 + $0x138] sm:$0xff]
        %v3565 = vld [vmem:[%s833] sm:$0xff]
        %v3566 = vld [vmem:[%s833 + $0x8] sm:$0xff]
        %v3567 = vld [vmem:[%s833 + $0x10] sm:$0xff]
        %v3568 = vld [vmem:[%s833 + $0x18] sm:$0xff]
        %v3569 = vld [vmem:[%s833 + $0x20] sm:$0xff]
        %v3570 = vld [vmem:[%s833 + $0x28] sm:$0xff]
        %v3571 = vld [vmem:[%s833 + $0x30] sm:$0xff]
        %v3572 = vld [vmem:[%s833 + $0x38] sm:$0xff]
        %v3573 = vld [vmem:[%s833 + $0x40] sm:$0xff]
        %v3574 = vld [vmem:[%s833 + $0x48] sm:$0xff]
        %v3575 = vld [vmem:[%s833 + $0x50] sm:$0xff]
        %v3576 = vld [vmem:[%s833 + $0x58] sm:$0xff]
        %v3577 = vld [vmem:[%s833 + $0x60] sm:$0xff]
        %v3578 = vld [vmem:[%s833 + $0x68] sm:$0xff]
        %v3579 = vld [vmem:[%s833 + $0x70] sm:$0xff]
        %v3580 = vld [vmem:[%s833 + $0x78] sm:$0xff]
        %v3581 = vld [vmem:[%s833 + $0x80] sm:$0xff]
        %v3582 = vld [vmem:[%s833 + $0x88] sm:$0xff]
        %v3583 = vld [vmem:[%s833 + $0x90] sm:$0xff]
        %v3584 = vld [vmem:[%s833 + $0x98] sm:$0xff]
        %v3585 = vld [vmem:[%s833 + $0xa0] sm:$0xff]
        %v3586 = vld [vmem:[%s833 + $0xa8] sm:$0xff]
        %v3587 = vld [vmem:[%s833 + $0xb0] sm:$0xff]
        %v3588 = vld [vmem:[%s833 + $0xb8] sm:$0xff]
        %v3589 = vld [vmem:[%s833 + $0x120] sm:$0xff]
        %v3590 = vld [vmem:[%s833 + $0x128] sm:$0xff]
        %v3591 = vld [vmem:[%s833 + $0x130] sm:$0xff]
        %v3592 = vld [vmem:[%s833 + $0x138] sm:$0xff]
        %v3593 = vld [vmem:[%s833 + $0x140] sm:$0xff]
        %v3594 = vld [vmem:[%s833 + $0x148] sm:$0xff]
        %v3595 = vld [vmem:[%s833 + $0x150] sm:$0xff]
        %v3596 = vld [vmem:[%s833 + $0x158] sm:$0xff]
        %v3597 = vld [vmem:[%s833 + $0x160] sm:$0xff]
        %v3598 = vld [vmem:[%s833 + $0x168] sm:$0xff]
        %v3599 = vld [vmem:[%s833 + $0x170] sm:$0xff]
        %v3600 = vld [vmem:[%s833 + $0x178] sm:$0xff]
        %v3601 = vld [vmem:[%s833 + $0x180] sm:$0xff]
        %v3602 = vld [vmem:[%s833 + $0x188] sm:$0xff]
        %v3603 = vld [vmem:[%s833 + $0x190] sm:$0xff]
        %v3604 = vld [vmem:[%s833 + $0x198] sm:$0xff]
        %v3605 = vld [vmem:[%s833 + $0x1a0] sm:$0xff]
        %v3606 = vld [vmem:[%s833 + $0x1a8] sm:$0xff]
        %v3607 = vld [vmem:[%s833 + $0x1b0] sm:$0xff]
        %v3608 = vld [vmem:[%s833 + $0x1b8] sm:$0xff]
        %v3609 = vld [vmem:[%s833 + $0x1c0] sm:$0xff]
        %v3610 = vld [vmem:[%s833 + $0x1c8] sm:$0xff]
        %v3611 = vld [vmem:[%s833 + $0x1d0] sm:$0xff]
        %v3612 = vld [vmem:[%s833 + $0x1d8] sm:$0xff]
        %s3613 = scalar_lea.vmem [#allocation7], 320
        %v3614 = vld [vmem:[%s3613] sm:$0xff]
        %v3615 = vld [vmem:[%s3613 + $0x8] sm:$0xff]
        %v3616 = vld [vmem:[%s3613 + $0x10] sm:$0xff]
        %v3617 = vld [vmem:[%s3613 + $0x18] sm:$0xff]
        %v3618 = vld [vmem:[%s3613 + $0x20] sm:$0xff]
        %v3619 = vld [vmem:[%s3613 + $0x28] sm:$0xff]
        %v3620 = vld [vmem:[%s3613 + $0x30] sm:$0xff]
        %v3621 = vld [vmem:[%s3613 + $0x38] sm:$0xff]
        %v3622 = vld [vmem:[%s3613 + $0x40] sm:$0xff]
        %v3623 = vld [vmem:[%s3613 + $0x48] sm:$0xff]
        %v3624 = vld [vmem:[%s3613 + $0x50] sm:$0xff]
        %v3625 = vld [vmem:[%s3613 + $0x58] sm:$0xff]
        %v3626 = vld [vmem:[%s3613 + $0x60] sm:$0xff]
        %v3627 = vld [vmem:[%s3613 + $0x68] sm:$0xff]
        %v3628 = vld [vmem:[%s3613 + $0x70] sm:$0xff]
        %v3629 = vld [vmem:[%s3613 + $0x78] sm:$0xff]
        %v3630 = vld [vmem:[%s3613 + $0x80] sm:$0xff]
        %v3631 = vld [vmem:[%s3613 + $0x88] sm:$0xff]
        %v3632 = vld [vmem:[%s3613 + $0x90] sm:$0xff]
        %v3633 = vld [vmem:[%s3613 + $0x98] sm:$0xff]
        %v3634 = vld [vmem:[%s3613 + $0xa0] sm:$0xff]
        %v3635 = vld [vmem:[%s3613 + $0xa8] sm:$0xff]
        %v3636 = vld [vmem:[%s3613 + $0xb0] sm:$0xff]
        %v3637 = vld [vmem:[%s3613 + $0xb8] sm:$0xff]
        %v3638 = vld [vmem:[%s3613 + $0xc0] sm:$0xff]
        %v3639 = vld [vmem:[%s3613 + $0xc8] sm:$0xff]
        %v3640 = vld [vmem:[%s3613 + $0xd0] sm:$0xff]
        %v3641 = vld [vmem:[%s3613 + $0xd8] sm:$0xff]
        %v3642 = vld [vmem:[%s3613 + $0xe0] sm:$0xff]
        %v3643 = vld [vmem:[%s3613 + $0xe8] sm:$0xff]
        %v3644 = vld [vmem:[%s3613 + $0xf0] sm:$0xff]
        %v3645 = vld [vmem:[%s3613 + $0xf8] sm:$0xff]
        %v3646 = vld [vmem:[%s3613 + $0x100] sm:$0xff]
        %v3647 = vld [vmem:[%s3613 + $0x108] sm:$0xff]
        %v3648 = vld [vmem:[%s3613 + $0x110] sm:$0xff]
        %v3649 = vld [vmem:[%s3613 + $0x118] sm:$0xff]
        %v3650 = vld [vmem:[%s3613 + $0x120] sm:$0xff]
        %v3651 = vld [vmem:[%s3613 + $0x128] sm:$0xff]
        %v3652 = vld [vmem:[%s3613 + $0x130] sm:$0xff]
        %v3653 = vld [vmem:[%s3613 + $0x138] sm:$0xff]
        %v3655 = vsel %vm335, %v3567, 0
        %v3658 = vsel %vm335, %v3570, 0
        %v3661 = vsel %vm335, %v3573, 0
        %v3664 = vsel %vm335, %v3576, 0
        %v3667 = vsel %vm335, %v3579, 0
        %v3670 = vsel %vm335, %v3582, 0
        %v3673 = vsel %vm335, %v3585, 0
        %v3676 = vsel %vm335, %v3588, 0
        %v3679 = vsel %vm335, %v3591, 0
        %v3682 = vsel %vm335, %v3594, 0
        %v3685 = vsel %vm335, %v3597, 0
        %v3688 = vsel %vm335, %v3600, 0
        %v3691 = vsel %vm335, %v3603, 0
        %v3694 = vsel %vm335, %v3606, 0
        %v3697 = vsel %vm335, %v3609, 0
        %v3700 = vsel %vm335, %v3612, 0
        %3702 = vmatprep.subr.mxu0 0.0
        %3703 = vmatpush1.msra.mxu0 %v3629
        %3704 = vmatprep.subr.mxu0 0.0
        %3705 = vmatpush1.msra.mxu0 %v3628
        %3706 = vmatprep.subr.mxu0 0.0
        %3707 = vmatpush1.msra.mxu0 %v3627
        %3708 = vmatprep.subr.mxu0 0.0
        %3709 = vmatpush1.msra.mxu0 %v3626
        %3710 = vmatprep.subr.mxu0 0.0
        %3711 = vmatpush1.msra.mxu0 %v3625
        %3712 = vmatprep.subr.mxu0 0.0
        %3713 = vmatpush1.msra.mxu0 %v3624
        %3714 = vmatprep.subr.mxu0 0.0
        %3715 = vmatpush1.msra.mxu0 %v3623
        %3716 = vmatprep.subr.mxu0 0.0
        %3717 = vmatpush1.msra.mxu0 %v3622
        %3718 = vmatprep.subr.mxu0 0.0
        %3719 = vmatpush1.msra.mxu0 %v3621
        %3720 = vmatprep.subr.mxu0 0.0
        %3721 = vmatpush1.msra.mxu0 %v3620
        %3722 = vmatprep.subr.mxu0 0.0
        %3723 = vmatpush1.msra.mxu0 %v3619
        %3724 = vmatprep.subr.mxu0 0.0
        %3725 = vmatpush1.msra.mxu0 %v3618
        %3726 = vmatprep.subr.mxu0 0.0
        %3727 = vmatpush1.msra.mxu0 %v3617
        %3728 = vmatprep.subr.mxu0 0.0
        %3729 = vmatpush1.msra.mxu0 %v3616
        %3730 = vmatprep.subr.mxu0 0.0
        %3731 = vmatpush1.msra.mxu0 %v3615
        %3732 = vmatprep.subr.mxu0 0.0
        %3733 = vmatpush1.msra.mxu0 %v3614
        %3734 = vmatprep.subr.mxu0 0.0
        %3735 = vmatpush2.msra.mxu0 %v3645
        %3736 = vmatprep.subr.mxu0 0.0
        %3737 = vmatpush2.msra.mxu0 %v3644
        %3738 = vmatprep.subr.mxu0 0.0
        %3739 = vmatpush2.msra.mxu0 %v3643
        %3740 = vmatprep.subr.mxu0 0.0
        %3741 = vmatpush2.msra.mxu0 %v3642
        %3742 = vmatprep.subr.mxu0 0.0
        %3743 = vmatpush2.msra.mxu0 %v3641
        %3744 = vmatprep.subr.mxu0 0.0
        %3745 = vmatpush2.msra.mxu0 %v3640
        %3746 = vmatprep.subr.mxu0 0.0
        %3747 = vmatpush2.msra.mxu0 %v3639
        %3748 = vmatprep.subr.mxu0 0.0
        %3749 = vmatpush2.msra.mxu0 %v3638
        %3750 = vmatprep.subr.mxu0 0.0
        %3751 = vmatpush2.msra.mxu0 %v3637
        %3752 = vmatprep.subr.mxu0 0.0
        %3753 = vmatpush2.msra.mxu0 %v3636
        %3754 = vmatprep.subr.mxu0 0.0
        %3755 = vmatpush2.msra.mxu0 %v3635
        %3756 = vmatprep.subr.mxu0 0.0
        %3757 = vmatpush2.msra.mxu0 %v3634
        %3758 = vmatprep.subr.mxu0 0.0
        %3759 = vmatpush2.msra.mxu0 %v3633
        %3760 = vmatprep.subr.mxu0 0.0
        %3761 = vmatpush2.msra.mxu0 %v3632
        %3762 = vmatprep.subr.mxu0 0.0
        %3763 = vmatpush2.msra.mxu0 %v3631
        %3764 = vmatprep.subr.mxu0 0.0
        %3765 = vmatpush2.msra.mxu0 %v3630
        %3766 = vmatprep.mubr.f32.mxu0 %v3566
        %3767 = vmatmul.mubr.f32.gmra.mxu0 %v3565
        %v3768 = vpop.f32.mrf.mxu0
        %v3769 = vadd.f32 0.0, %v3768
        %v3770 = vpop.f32.mrf.mxu0
        %3771 = vmatprep.mubr.f32.mxu0 %v3569
        %3772 = vmatmul.mubr.f32.gmra.mxu0 %v3568
        %v3773 = vpop.f32.mrf.mxu0
        %v3774 = vadd.f32 0.0, %v3773
        %v3775 = vpop.f32.mrf.mxu0
        %3776 = vmatprep.mubr.f32.mxu0 %v3572
        %3777 = vmatmul.mubr.f32.gmra.mxu0 %v3571
        %v3778 = vpop.f32.mrf.mxu0
        %v3779 = vadd.f32 0.0, %v3778
        %v3780 = vpop.f32.mrf.mxu0
        %3781 = vmatprep.mubr.f32.mxu0 %v3575
        %3782 = vmatmul.mubr.f32.gmra.mxu0 %v3574
        %v3783 = vpop.f32.mrf.mxu0
        %v3784 = vadd.f32 0.0, %v3783
        %v3785 = vpop.f32.mrf.mxu0
        %3786 = vmatprep.mubr.f32.mxu0 %v3578
        %3787 = vmatmul.mubr.f32.gmra.mxu0 %v3577
        %v3788 = vpop.f32.mrf.mxu0
        %v3789 = vadd.f32 0.0, %v3788
        %v3790 = vpop.f32.mrf.mxu0
        %3791 = vmatprep.mubr.f32.mxu0 %v3581
        %3792 = vmatmul.mubr.f32.gmra.mxu0 %v3580
        %v3793 = vpop.f32.mrf.mxu0
        %v3794 = vadd.f32 0.0, %v3793
        %v3795 = vpop.f32.mrf.mxu0
        %3796 = vmatprep.mubr.f32.mxu0 %v3584
        %3797 = vmatmul.mubr.f32.gmra.mxu0 %v3583
        %v3798 = vpop.f32.mrf.mxu0
        %v3799 = vadd.f32 0.0, %v3798
        %v3800 = vpop.f32.mrf.mxu0
        %3801 = vmatprep.mubr.f32.mxu0 %v3587
        %3802 = vmatmul.mubr.f32.gmra.mxu0 %v3586
        %v3803 = vpop.f32.mrf.mxu0
        %v3804 = vadd.f32 0.0, %v3803
        %v3805 = vpop.f32.mrf.mxu0
        %3806 = vmatprep.mubr.f32.mxu0 %v3590
        %3807 = vmatmul.mubr.f32.gmra.mxu0 %v3589
        %v3808 = vpop.f32.mrf.mxu0
        %v3809 = vadd.f32 0.0, %v3808
        %v3810 = vpop.f32.mrf.mxu0
        %3811 = vmatprep.mubr.f32.mxu0 %v3593
        %3812 = vmatmul.mubr.f32.gmra.mxu0 %v3592
        %v3813 = vpop.f32.mrf.mxu0
        %v3814 = vadd.f32 0.0, %v3813
        %v3815 = vpop.f32.mrf.mxu0
        %3816 = vmatprep.mubr.f32.mxu0 %v3596
        %3817 = vmatmul.mubr.f32.gmra.mxu0 %v3595
        %v3818 = vpop.f32.mrf.mxu0
        %v3819 = vadd.f32 0.0, %v3818
        %v3820 = vpop.f32.mrf.mxu0
        %3821 = vmatprep.mubr.f32.mxu0 %v3599
        %3822 = vmatmul.mubr.f32.gmra.mxu0 %v3598
        %v3823 = vpop.f32.mrf.mxu0
        %v3824 = vadd.f32 0.0, %v3823
        %v3825 = vpop.f32.mrf.mxu0
        %3826 = vmatprep.mubr.f32.mxu0 %v3602
        %3827 = vmatmul.mubr.f32.gmra.mxu0 %v3601
        %v3828 = vpop.f32.mrf.mxu0
        %v3829 = vadd.f32 0.0, %v3828
        %v3830 = vpop.f32.mrf.mxu0
        %3831 = vmatprep.mubr.f32.mxu0 %v3605
        %3832 = vmatmul.mubr.f32.gmra.mxu0 %v3604
        %v3833 = vpop.f32.mrf.mxu0
        %v3834 = vadd.f32 0.0, %v3833
        %v3835 = vpop.f32.mrf.mxu0
        %3836 = vmatprep.mubr.f32.mxu0 %v3608
        %3837 = vmatmul.mubr.f32.gmra.mxu0 %v3607
        %v3838 = vpop.f32.mrf.mxu0
        %v3839 = vadd.f32 0.0, %v3838
        %v3840 = vpop.f32.mrf.mxu0
        %3841 = vmatprep.mubr.f32.mxu0 %v3611
        %3842 = vmatmul.mubr.f32.gmra.mxu0 %v3610
        %v3843 = vpop.f32.mrf.mxu0
        %v3844 = vadd.f32 0.0, %v3843
        %v3845 = vpop.f32.mrf.mxu0
        %3846 = vdwg.mxu0
        %3847 = vmatprep.subr.mxu0 0.0
        %3848 = vmatpush1.msra.mxu0 0.0
        %3849 = vmatprep.subr.mxu0 0.0
        %3850 = vmatpush1.msra.mxu0 0.0
        %3851 = vmatprep.subr.mxu0 0.0
        %3852 = vmatpush1.msra.mxu0 0.0
        %3853 = vmatprep.subr.mxu0 0.0
        %3854 = vmatpush1.msra.mxu0 0.0
        %3855 = vmatprep.subr.mxu0 0.0
        %3856 = vmatpush1.msra.mxu0 0.0
        %3857 = vmatprep.subr.mxu0 0.0
        %3858 = vmatpush1.msra.mxu0 0.0
        %3859 = vmatprep.subr.mxu0 0.0
        %3860 = vmatpush1.msra.mxu0 0.0
        %3861 = vmatprep.subr.mxu0 0.0
        %3862 = vmatpush1.msra.mxu0 0.0
        %3863 = vmatprep.subr.mxu0 0.0
        %3864 = vmatpush1.msra.mxu0 %v3653
        %3865 = vmatprep.subr.mxu0 0.0
        %3866 = vmatpush1.msra.mxu0 %v3652
        %3867 = vmatprep.subr.mxu0 0.0
        %3868 = vmatpush1.msra.mxu0 %v3651
        %3869 = vmatprep.subr.mxu0 0.0
        %3870 = vmatpush1.msra.mxu0 %v3650
        %3871 = vmatprep.subr.mxu0 0.0
        %3872 = vmatpush1.msra.mxu0 %v3649
        %3873 = vmatprep.subr.mxu0 0.0
        %3874 = vmatpush1.msra.mxu0 %v3648
        %3875 = vmatprep.subr.mxu0 0.0
        %3876 = vmatpush1.msra.mxu0 %v3647
        %3877 = vmatprep.subr.mxu0 0.0
        %3878 = vmatpush1.msra.mxu0 %v3646
        %3879 = vmatprep.subr.mxu0 0.0
        %3880 = vmatpush2.msra.mxu0 0.0
        %3881 = vmatprep.subr.mxu0 0.0
        %3882 = vmatpush2.msra.mxu0 0.0
        %3883 = vmatprep.subr.mxu0 0.0
        %3884 = vmatpush2.msra.mxu0 0.0
        %3885 = vmatprep.subr.mxu0 0.0
        %3886 = vmatpush2.msra.mxu0 0.0
        %3887 = vmatprep.subr.mxu0 0.0
        %3888 = vmatpush2.msra.mxu0 0.0
        %3889 = vmatprep.subr.mxu0 0.0
        %3890 = vmatpush2.msra.mxu0 0.0
        %3891 = vmatprep.subr.mxu0 0.0
        %3892 = vmatpush2.msra.mxu0 0.0
        %3893 = vmatprep.subr.mxu0 0.0
        %3894 = vmatpush2.msra.mxu0 0.0
        %3895 = vmatprep.subr.mxu0 0.0
        %3896 = vmatpush2.msra.mxu0 0.0
        %3897 = vmatprep.subr.mxu0 0.0
        %3898 = vmatpush2.msra.mxu0 0.0
        %3899 = vmatprep.subr.mxu0 0.0
        %3900 = vmatpush2.msra.mxu0 0.0
        %3901 = vmatprep.subr.mxu0 0.0
        %3902 = vmatpush2.msra.mxu0 0.0
        %3903 = vmatprep.subr.mxu0 0.0
        %3904 = vmatpush2.msra.mxu0 0.0
        %3905 = vmatprep.subr.mxu0 0.0
        %3906 = vmatpush2.msra.mxu0 0.0
        %3907 = vmatprep.subr.mxu0 0.0
        %3908 = vmatpush2.msra.mxu0 0.0
        %3909 = vmatprep.subr.mxu0 0.0
        %3910 = vmatpush2.msra.mxu0 0.0
        %3911 = vmatprep.mubr.f32.mxu0 0.0
        %3912 = vmatmul.mubr.f32.gmra.mxu0 %v3655
        %v3913 = vpop.f32.mrf.mxu0
        %v3914 = vadd.f32 %v3769, %v3913
        %v3915 = vpop.f32.mrf.mxu0
        %3916 = vmatprep.mubr.f32.mxu0 0.0
        %3917 = vmatmul.mubr.f32.gmra.mxu0 %v3658
        %v3918 = vpop.f32.mrf.mxu0
        %v3919 = vadd.f32 %v3774, %v3918
        %v3920 = vpop.f32.mrf.mxu0
        %3921 = vmatprep.mubr.f32.mxu0 0.0
        %3922 = vmatmul.mubr.f32.gmra.mxu0 %v3661
        %v3923 = vpop.f32.mrf.mxu0
        %v3924 = vadd.f32 %v3779, %v3923
        %v3925 = vpop.f32.mrf.mxu0
        %3926 = vmatprep.mubr.f32.mxu0 0.0
        %3927 = vmatmul.mubr.f32.gmra.mxu0 %v3664
        %v3928 = vpop.f32.mrf.mxu0
        %v3929 = vadd.f32 %v3784, %v3928
        %v3930 = vpop.f32.mrf.mxu0
        %3931 = vmatprep.mubr.f32.mxu0 0.0
        %3932 = vmatmul.mubr.f32.gmra.mxu0 %v3667
        %v3933 = vpop.f32.mrf.mxu0
        %v3934 = vadd.f32 %v3789, %v3933
        %v3935 = vpop.f32.mrf.mxu0
        %3936 = vmatprep.mubr.f32.mxu0 0.0
        %3937 = vmatmul.mubr.f32.gmra.mxu0 %v3670
        %v3938 = vpop.f32.mrf.mxu0
        %v3939 = vadd.f32 %v3794, %v3938
        %v3940 = vpop.f32.mrf.mxu0
        %3941 = vmatprep.mubr.f32.mxu0 0.0
        %3942 = vmatmul.mubr.f32.gmra.mxu0 %v3673
        %v3943 = vpop.f32.mrf.mxu0
        %v3944 = vadd.f32 %v3799, %v3943
        %v3945 = vpop.f32.mrf.mxu0
        %3946 = vmatprep.mubr.f32.mxu0 0.0
        %3947 = vmatmul.mubr.f32.gmra.mxu0 %v3676
        %v3948 = vpop.f32.mrf.mxu0
        %v3949 = vadd.f32 %v3804, %v3948
        %v3950 = vpop.f32.mrf.mxu0
        %3951 = vmatprep.mubr.f32.mxu0 0.0
        %3952 = vmatmul.mubr.f32.gmra.mxu0 %v3679
        %v3953 = vpop.f32.mrf.mxu0
        %v3954 = vadd.f32 %v3809, %v3953
        %v3955 = vpop.f32.mrf.mxu0
        %3956 = vmatprep.mubr.f32.mxu0 0.0
        %3957 = vmatmul.mubr.f32.gmra.mxu0 %v3682
        %v3958 = vpop.f32.mrf.mxu0
        %v3959 = vadd.f32 %v3814, %v3958
        %v3960 = vpop.f32.mrf.mxu0
        %3961 = vmatprep.mubr.f32.mxu0 0.0
        %3962 = vmatmul.mubr.f32.gmra.mxu0 %v3685
        %v3963 = vpop.f32.mrf.mxu0
        %v3964 = vadd.f32 %v3819, %v3963
        %v3965 = vpop.f32.mrf.mxu0
        %3966 = vmatprep.mubr.f32.mxu0 0.0
        %3967 = vmatmul.mubr.f32.gmra.mxu0 %v3688
        %v3968 = vpop.f32.mrf.mxu0
        %v3969 = vadd.f32 %v3824, %v3968
        %v3970 = vpop.f32.mrf.mxu0
        %3971 = vmatprep.mubr.f32.mxu0 0.0
        %3972 = vmatmul.mubr.f32.gmra.mxu0 %v3691
        %v3973 = vpop.f32.mrf.mxu0
        %v3974 = vadd.f32 %v3829, %v3973
        %v3975 = vpop.f32.mrf.mxu0
        %3976 = vmatprep.mubr.f32.mxu0 0.0
        %3977 = vmatmul.mubr.f32.gmra.mxu0 %v3694
        %v3978 = vpop.f32.mrf.mxu0
        %v3979 = vadd.f32 %v3834, %v3978
        %v3980 = vpop.f32.mrf.mxu0
        %3981 = vmatprep.mubr.f32.mxu0 0.0
        %3982 = vmatmul.mubr.f32.gmra.mxu0 %v3697
        %v3983 = vpop.f32.mrf.mxu0
        %v3984 = vadd.f32 %v3839, %v3983
        %v3985 = vpop.f32.mrf.mxu0
        %3986 = vmatprep.mubr.f32.mxu0 0.0
        %3987 = vmatmul.mubr.f32.gmra.mxu0 %v3700
        %v3988 = vpop.f32.mrf.mxu0
        %v3989 = vadd.f32 %v3844, %v3988
        %v3990 = vpop.f32.mrf.mxu0
        %3991 = vdwg.mxu0
        %v3993 = vsel %vm335, %v3479, 0
        %v3996 = vsel %vm335, %v3482, 0
        %v3999 = vsel %vm335, %v3485, 0
        %v4002 = vsel %vm335, %v3488, 0
        %v4005 = vsel %vm335, %v3491, 0
        %v4008 = vsel %vm335, %v3494, 0
        %v4011 = vsel %vm335, %v3497, 0
        %v4014 = vsel %vm335, %v3500, 0
        %v4017 = vsel %vm335, %v3503, 0
        %v4020 = vsel %vm335, %v3506, 0
        %v4023 = vsel %vm335, %v3509, 0
        %v4026 = vsel %vm335, %v3512, 0
        %v4029 = vsel %vm335, %v3515, 0
        %v4032 = vsel %vm335, %v3518, 0
        %v4035 = vsel %vm335, %v3521, 0
        %v4038 = vsel %vm335, %v3524, 0
        %4040 = vmatprep.subr.mxu0 0.0
        %4041 = vmatpush1.msra.mxu0 %v3540
        %4042 = vmatprep.subr.mxu0 0.0
        %4043 = vmatpush1.msra.mxu0 %v3539
        %4044 = vmatprep.subr.mxu0 0.0
        %4045 = vmatpush1.msra.mxu0 %v3538
        %4046 = vmatprep.subr.mxu0 0.0
        %4047 = vmatpush1.msra.mxu0 %v3537
        %4048 = vmatprep.subr.mxu0 0.0
        %4049 = vmatpush1.msra.mxu0 %v3536
        %4050 = vmatprep.subr.mxu0 0.0
        %4051 = vmatpush1.msra.mxu0 %v3535
        %4052 = vmatprep.subr.mxu0 0.0
        %4053 = vmatpush1.msra.mxu0 %v3534
        %4054 = vmatprep.subr.mxu0 0.0
        %4055 = vmatpush1.msra.mxu0 %v3533
        %4056 = vmatprep.subr.mxu0 0.0
        %4057 = vmatpush1.msra.mxu0 %v3532
        %4058 = vmatprep.subr.mxu0 0.0
        %4059 = vmatpush1.msra.mxu0 %v3531
        %4060 = vmatprep.subr.mxu0 0.0
        %4061 = vmatpush1.msra.mxu0 %v3530
        %4062 = vmatprep.subr.mxu0 0.0
        %4063 = vmatpush1.msra.mxu0 %v3529
        %4064 = vmatprep.subr.mxu0 0.0
        %4065 = vmatpush1.msra.mxu0 %v3528
        %4066 = vmatprep.subr.mxu0 0.0
        %4067 = vmatpush1.msra.mxu0 %v3527
        %4068 = vmatprep.subr.mxu0 0.0
        %4069 = vmatpush1.msra.mxu0 %v3526
        %4070 = vmatprep.subr.mxu0 0.0
        %4071 = vmatpush1.msra.mxu0 %v3525
        %4072 = vmatprep.subr.mxu0 0.0
        %4073 = vmatpush2.msra.mxu0 %v3556
        %4074 = vmatprep.subr.mxu0 0.0
        %4075 = vmatpush2.msra.mxu0 %v3555
        %4076 = vmatprep.subr.mxu0 0.0
        %4077 = vmatpush2.msra.mxu0 %v3554
        %4078 = vmatprep.subr.mxu0 0.0
        %4079 = vmatpush2.msra.mxu0 %v3553
        %4080 = vmatprep.subr.mxu0 0.0
        %4081 = vmatpush2.msra.mxu0 %v3552
        %4082 = vmatprep.subr.mxu0 0.0
        %4083 = vmatpush2.msra.mxu0 %v3551
        %4084 = vmatprep.subr.mxu0 0.0
        %4085 = vmatpush2.msra.mxu0 %v3550
        %4086 = vmatprep.subr.mxu0 0.0
        %4087 = vmatpush2.msra.mxu0 %v3549
        %4088 = vmatprep.subr.mxu0 0.0
        %4089 = vmatpush2.msra.mxu0 %v3548
        %4090 = vmatprep.subr.mxu0 0.0
        %4091 = vmatpush2.msra.mxu0 %v3547
        %4092 = vmatprep.subr.mxu0 0.0
        %4093 = vmatpush2.msra.mxu0 %v3546
        %4094 = vmatprep.subr.mxu0 0.0
        %4095 = vmatpush2.msra.mxu0 %v3545
        %4096 = vmatprep.subr.mxu0 0.0
        %4097 = vmatpush2.msra.mxu0 %v3544
        %4098 = vmatprep.subr.mxu0 0.0
        %4099 = vmatpush2.msra.mxu0 %v3543
        %4100 = vmatprep.subr.mxu0 0.0
        %4101 = vmatpush2.msra.mxu0 %v3542
        %4102 = vmatprep.subr.mxu0 0.0
        %4103 = vmatpush2.msra.mxu0 %v3541
        %4104 = vmatprep.mubr.f32.mxu0 %v3478
        %4105 = vmatmul.mubr.f32.gmra.mxu0 %v3477
        %v4106 = vpop.f32.mrf.mxu0
        %v4107 = vadd.f32 %v3914, %v4106
        %v4108 = vpop.f32.mrf.mxu0
        %4109 = vmatprep.mubr.f32.mxu0 %v3481
        %4110 = vmatmul.mubr.f32.gmra.mxu0 %v3480
        %v4111 = vpop.f32.mrf.mxu0
        %v4112 = vadd.f32 %v3919, %v4111
        %v4113 = vpop.f32.mrf.mxu0
        %4114 = vmatprep.mubr.f32.mxu0 %v3484
        %4115 = vmatmul.mubr.f32.gmra.mxu0 %v3483
        %v4116 = vpop.f32.mrf.mxu0
        %v4117 = vadd.f32 %v3924, %v4116
        %v4118 = vpop.f32.mrf.mxu0
        %4119 = vmatprep.mubr.f32.mxu0 %v3487
        %4120 = vmatmul.mubr.f32.gmra.mxu0 %v3486
        %v4121 = vpop.f32.mrf.mxu0
        %v4122 = vadd.f32 %v3929, %v4121
        %v4123 = vpop.f32.mrf.mxu0
        %4124 = vmatprep.mubr.f32.mxu0 %v3490
        %4125 = vmatmul.mubr.f32.gmra.mxu0 %v3489
        %v4126 = vpop.f32.mrf.mxu0
        %v4127 = vadd.f32 %v3934, %v4126
        %v4128 = vpop.f32.mrf.mxu0
        %4129 = vmatprep.mubr.f32.mxu0 %v3493
        %4130 = vmatmul.mubr.f32.gmra.mxu0 %v3492
        %v4131 = vpop.f32.mrf.mxu0
        %v4132 = vadd.f32 %v3939, %v4131
        %v4133 = vpop.f32.mrf.mxu0
        %4134 = vmatprep.mubr.f32.mxu0 %v3496
        %4135 = vmatmul.mubr.f32.gmra.mxu0 %v3495
        %v4136 = vpop.f32.mrf.mxu0
        %v4137 = vadd.f32 %v3944, %v4136
        %v4138 = vpop.f32.mrf.mxu0
        %4139 = vmatprep.mubr.f32.mxu0 %v3499
        %4140 = vmatmul.mubr.f32.gmra.mxu0 %v3498
        %v4141 = vpop.f32.mrf.mxu0
        %v4142 = vadd.f32 %v3949, %v4141
        %v4143 = vpop.f32.mrf.mxu0
        %4144 = vmatprep.mubr.f32.mxu0 %v3502
        %4145 = vmatmul.mubr.f32.gmra.mxu0 %v3501
        %v4146 = vpop.f32.mrf.mxu0
        %v4147 = vadd.f32 %v3954, %v4146
        %v4148 = vpop.f32.mrf.mxu0
        %4149 = vmatprep.mubr.f32.mxu0 %v3505
        %4150 = vmatmul.mubr.f32.gmra.mxu0 %v3504
        %v4151 = vpop.f32.mrf.mxu0
        %v4152 = vadd.f32 %v3959, %v4151
        %v4153 = vpop.f32.mrf.mxu0
        %4154 = vmatprep.mubr.f32.mxu0 %v3508
        %4155 = vmatmul.mubr.f32.gmra.mxu0 %v3507
        %v4156 = vpop.f32.mrf.mxu0
        %v4157 = vadd.f32 %v3964, %v4156
        %v4158 = vpop.f32.mrf.mxu0
        %4159 = vmatprep.mubr.f32.mxu0 %v3511
        %4160 = vmatmul.mubr.f32.gmra.mxu0 %v3510
        %v4161 = vpop.f32.mrf.mxu0
        %v4162 = vadd.f32 %v3969, %v4161
        %v4163 = vpop.f32.mrf.mxu0
        %4164 = vmatprep.mubr.f32.mxu0 %v3514
        %4165 = vmatmul.mubr.f32.gmra.mxu0 %v3513
        %v4166 = vpop.f32.mrf.mxu0
        %v4167 = vadd.f32 %v3974, %v4166
        %v4168 = vpop.f32.mrf.mxu0
        %4169 = vmatprep.mubr.f32.mxu0 %v3517
        %4170 = vmatmul.mubr.f32.gmra.mxu0 %v3516
        %v4171 = vpop.f32.mrf.mxu0
        %v4172 = vadd.f32 %v3979, %v4171
        %v4173 = vpop.f32.mrf.mxu0
        %4174 = vmatprep.mubr.f32.mxu0 %v3520
        %4175 = vmatmul.mubr.f32.gmra.mxu0 %v3519
        %v4176 = vpop.f32.mrf.mxu0
        %v4177 = vadd.f32 %v3984, %v4176
        %v4178 = vpop.f32.mrf.mxu0
        %4179 = vmatprep.mubr.f32.mxu0 %v3523
        %4180 = vmatmul.mubr.f32.gmra.mxu0 %v3522
        %v4181 = vpop.f32.mrf.mxu0
        %v4182 = vadd.f32 %v3989, %v4181
        %v4183 = vpop.f32.mrf.mxu0
        %4184 = vdwg.mxu0
        %4185 = vmatprep.subr.mxu0 0.0
        %4186 = vmatpush1.msra.mxu0 0.0
        %4187 = vmatprep.subr.mxu0 0.0
        %4188 = vmatpush1.msra.mxu0 0.0
        %4189 = vmatprep.subr.mxu0 0.0
        %4190 = vmatpush1.msra.mxu0 0.0
        %4191 = vmatprep.subr.mxu0 0.0
        %4192 = vmatpush1.msra.mxu0 0.0
        %4193 = vmatprep.subr.mxu0 0.0
        %4194 = vmatpush1.msra.mxu0 0.0
        %4195 = vmatprep.subr.mxu0 0.0
        %4196 = vmatpush1.msra.mxu0 0.0
        %4197 = vmatprep.subr.mxu0 0.0
        %4198 = vmatpush1.msra.mxu0 0.0
        %4199 = vmatprep.subr.mxu0 0.0
        %4200 = vmatpush1.msra.mxu0 0.0
        %4201 = vmatprep.subr.mxu0 0.0
        %4202 = vmatpush1.msra.mxu0 %v3564
        %4203 = vmatprep.subr.mxu0 0.0
        %4204 = vmatpush1.msra.mxu0 %v3563
        %4205 = vmatprep.subr.mxu0 0.0
        %4206 = vmatpush1.msra.mxu0 %v3562
        %4207 = vmatprep.subr.mxu0 0.0
        %4208 = vmatpush1.msra.mxu0 %v3561
        %4209 = vmatprep.subr.mxu0 0.0
        %4210 = vmatpush1.msra.mxu0 %v3560
        %4211 = vmatprep.subr.mxu0 0.0
        %4212 = vmatpush1.msra.mxu0 %v3559
        %4213 = vmatprep.subr.mxu0 0.0
        %4214 = vmatpush1.msra.mxu0 %v3558
        %4215 = vmatprep.subr.mxu0 0.0
        %4216 = vmatpush1.msra.mxu0 %v3557
        %4217 = vmatprep.subr.mxu0 0.0
        %4218 = vmatpush2.msra.mxu0 0.0
        %4219 = vmatprep.subr.mxu0 0.0
        %4220 = vmatpush2.msra.mxu0 0.0
        %4221 = vmatprep.subr.mxu0 0.0
        %4222 = vmatpush2.msra.mxu0 0.0
        %4223 = vmatprep.subr.mxu0 0.0
        %4224 = vmatpush2.msra.mxu0 0.0
        %4225 = vmatprep.subr.mxu0 0.0
        %4226 = vmatpush2.msra.mxu0 0.0
        %4227 = vmatprep.subr.mxu0 0.0
        %4228 = vmatpush2.msra.mxu0 0.0
        %4229 = vmatprep.subr.mxu0 0.0
        %4230 = vmatpush2.msra.mxu0 0.0
        %4231 = vmatprep.subr.mxu0 0.0
        %4232 = vmatpush2.msra.mxu0 0.0
        %4233 = vmatprep.subr.mxu0 0.0
        %4234 = vmatpush2.msra.mxu0 0.0
        %4235 = vmatprep.subr.mxu0 0.0
        %4236 = vmatpush2.msra.mxu0 0.0
        %4237 = vmatprep.subr.mxu0 0.0
        %4238 = vmatpush2.msra.mxu0 0.0
        %4239 = vmatprep.subr.mxu0 0.0
        %4240 = vmatpush2.msra.mxu0 0.0
        %4241 = vmatprep.subr.mxu0 0.0
        %4242 = vmatpush2.msra.mxu0 0.0
        %4243 = vmatprep.subr.mxu0 0.0
        %4244 = vmatpush2.msra.mxu0 0.0
        %4245 = vmatprep.subr.mxu0 0.0
        %4246 = vmatpush2.msra.mxu0 0.0
        %4247 = vmatprep.subr.mxu0 0.0
        %4248 = vmatpush2.msra.mxu0 0.0
        %4249 = vmatprep.mubr.f32.mxu0 0.0
        %4250 = vmatmul.mubr.f32.gmra.mxu0 %v3993
        %v4251 = vpop.f32.mrf.mxu0
        %v4252 = vadd.f32 %v4107, %v4251
        %v4253 = vpop.f32.mrf.mxu0
        %4254 = vmatprep.mubr.f32.mxu0 0.0
        %4255 = vmatmul.mubr.f32.gmra.mxu0 %v3996
        %v4256 = vpop.f32.mrf.mxu0
        %v4257 = vadd.f32 %v4112, %v4256
        %v4258 = vpop.f32.mrf.mxu0
        %4259 = vmatprep.mubr.f32.mxu0 0.0
        %4260 = vmatmul.mubr.f32.gmra.mxu0 %v3999
        %v4261 = vpop.f32.mrf.mxu0
        %v4262 = vadd.f32 %v4117, %v4261
        %v4263 = vpop.f32.mrf.mxu0
        %4264 = vmatprep.mubr.f32.mxu0 0.0
        %4265 = vmatmul.mubr.f32.gmra.mxu0 %v4002
        %v4266 = vpop.f32.mrf.mxu0
        %v4267 = vadd.f32 %v4122, %v4266
        %v4268 = vpop.f32.mrf.mxu0
        %4269 = vmatprep.mubr.f32.mxu0 0.0
        %4270 = vmatmul.mubr.f32.gmra.mxu0 %v4005
        %v4271 = vpop.f32.mrf.mxu0
        %v4272 = vadd.f32 %v4127, %v4271
        %v4273 = vpop.f32.mrf.mxu0
        %4274 = vmatprep.mubr.f32.mxu0 0.0
        %4275 = vmatmul.mubr.f32.gmra.mxu0 %v4008
        %v4276 = vpop.f32.mrf.mxu0
        %v4277 = vadd.f32 %v4132, %v4276
        %v4278 = vpop.f32.mrf.mxu0
        %4279 = vmatprep.mubr.f32.mxu0 0.0
        %4280 = vmatmul.mubr.f32.gmra.mxu0 %v4011
        %v4281 = vpop.f32.mrf.mxu0
        %v4282 = vadd.f32 %v4137, %v4281
        %v4283 = vpop.f32.mrf.mxu0
        %4284 = vmatprep.mubr.f32.mxu0 0.0
        %4285 = vmatmul.mubr.f32.gmra.mxu0 %v4014
        %v4286 = vpop.f32.mrf.mxu0
        %v4287 = vadd.f32 %v4142, %v4286
        %v4288 = vpop.f32.mrf.mxu0
        %4289 = vmatprep.mubr.f32.mxu0 0.0
        %4290 = vmatmul.mubr.f32.gmra.mxu0 %v4017
        %v4291 = vpop.f32.mrf.mxu0
        %v4292 = vadd.f32 %v4147, %v4291
        %v4293 = vpop.f32.mrf.mxu0
        %4294 = vmatprep.mubr.f32.mxu0 0.0
        %4295 = vmatmul.mubr.f32.gmra.mxu0 %v4020
        %v4296 = vpop.f32.mrf.mxu0
        %v4297 = vadd.f32 %v4152, %v4296
        %v4298 = vpop.f32.mrf.mxu0
        %4299 = vmatprep.mubr.f32.mxu0 0.0
        %4300 = vmatmul.mubr.f32.gmra.mxu0 %v4023
        %v4301 = vpop.f32.mrf.mxu0
        %v4302 = vadd.f32 %v4157, %v4301
        %v4303 = vpop.f32.mrf.mxu0
        %4304 = vmatprep.mubr.f32.mxu0 0.0
        %4305 = vmatmul.mubr.f32.gmra.mxu0 %v4026
        %v4306 = vpop.f32.mrf.mxu0
        %v4307 = vadd.f32 %v4162, %v4306
        %v4308 = vpop.f32.mrf.mxu0
        %4309 = vmatprep.mubr.f32.mxu0 0.0
        %4310 = vmatmul.mubr.f32.gmra.mxu0 %v4029
        %v4311 = vpop.f32.mrf.mxu0
        %v4312 = vadd.f32 %v4167, %v4311
        %v4313 = vpop.f32.mrf.mxu0
        %4314 = vmatprep.mubr.f32.mxu0 0.0
        %4315 = vmatmul.mubr.f32.gmra.mxu0 %v4032
        %v4316 = vpop.f32.mrf.mxu0
        %v4317 = vadd.f32 %v4172, %v4316
        %v4318 = vpop.f32.mrf.mxu0
        %4319 = vmatprep.mubr.f32.mxu0 0.0
        %4320 = vmatmul.mubr.f32.gmra.mxu0 %v4035
        %v4321 = vpop.f32.mrf.mxu0
        %v4322 = vadd.f32 %v4177, %v4321
        %v4323 = vpop.f32.mrf.mxu0
        %4324 = vmatprep.mubr.f32.mxu0 0.0
        %4325 = vmatmul.mubr.f32.gmra.mxu0 %v4038
        %v4326 = vpop.f32.mrf.mxu0
        %v4327 = vadd.f32 %v4182, %v4326
        %v4328 = vpop.f32.mrf.mxu0
        %4329 = vdwg.mxu0
        %v4330 = vld [vmem:[%s1599] sm:$0xff]
        %v4331 = vld [vmem:[%s1599 + $0x8] sm:$0xff]
        %v4332 = vld [vmem:[%s1599 + $0x10] sm:$0xff]
        %v4333 = vld [vmem:[%s1599 + $0x18] sm:$0xff]
        %v4334 = vld [vmem:[%s1599 + $0x20] sm:$0xff]
        %v4335 = vld [vmem:[%s1599 + $0x28] sm:$0xff]
        %v4336 = vld [vmem:[%s1599 + $0x30] sm:$0xff]
        %v4337 = vld [vmem:[%s1599 + $0x38] sm:$0xff]
        %v4338 = vld [vmem:[%s1599 + $0x40] sm:$0xff]
        %v4339 = vld [vmem:[%s1599 + $0x48] sm:$0xff]
        %v4340 = vld [vmem:[%s1599 + $0x50] sm:$0xff]
        %v4341 = vld [vmem:[%s1599 + $0x58] sm:$0xff]
        %v4342 = vld [vmem:[%s1599 + $0x60] sm:$0xff]
        %v4343 = vld [vmem:[%s1599 + $0x68] sm:$0xff]
        %v4344 = vld [vmem:[%s1599 + $0x70] sm:$0xff]
        %v4345 = vld [vmem:[%s1599 + $0x78] sm:$0xff]
        %v4346 = vld [vmem:[%s1599 + $0x80] sm:$0xff]
        %v4347 = vld [vmem:[%s1599 + $0x88] sm:$0xff]
        %v4348 = vld [vmem:[%s1599 + $0x90] sm:$0xff]
        %v4349 = vld [vmem:[%s1599 + $0x98] sm:$0xff]
        %v4350 = vld [vmem:[%s1599 + $0xa0] sm:$0xff]
        %v4351 = vld [vmem:[%s1599 + $0xa8] sm:$0xff]
        %v4352 = vld [vmem:[%s1599 + $0xb0] sm:$0xff]
        %v4353 = vld [vmem:[%s1599 + $0xb8] sm:$0xff]
        %v4354 = vld [vmem:[%s1599 + $0x120] sm:$0xff]
        %v4355 = vld [vmem:[%s1599 + $0x128] sm:$0xff]
        %v4356 = vld [vmem:[%s1599 + $0x130] sm:$0xff]
        %v4357 = vld [vmem:[%s1599 + $0x138] sm:$0xff]
        %v4358 = vld [vmem:[%s1599 + $0x140] sm:$0xff]
        %v4359 = vld [vmem:[%s1599 + $0x148] sm:$0xff]
        %v4360 = vld [vmem:[%s1599 + $0x150] sm:$0xff]
        %v4361 = vld [vmem:[%s1599 + $0x158] sm:$0xff]
        %v4362 = vld [vmem:[%s1599 + $0x160] sm:$0xff]
        %v4363 = vld [vmem:[%s1599 + $0x168] sm:$0xff]
        %v4364 = vld [vmem:[%s1599 + $0x170] sm:$0xff]
        %v4365 = vld [vmem:[%s1599 + $0x178] sm:$0xff]
        %v4366 = vld [vmem:[%s1599 + $0x180] sm:$0xff]
        %v4367 = vld [vmem:[%s1599 + $0x188] sm:$0xff]
        %v4368 = vld [vmem:[%s1599 + $0x190] sm:$0xff]
        %v4369 = vld [vmem:[%s1599 + $0x198] sm:$0xff]
        %v4370 = vld [vmem:[%s1599 + $0x1a0] sm:$0xff]
        %v4371 = vld [vmem:[%s1599 + $0x1a8] sm:$0xff]
        %v4372 = vld [vmem:[%s1599 + $0x1b0] sm:$0xff]
        %v4373 = vld [vmem:[%s1599 + $0x1b8] sm:$0xff]
        %v4374 = vld [vmem:[%s1599 + $0x1c0] sm:$0xff]
        %v4375 = vld [vmem:[%s1599 + $0x1c8] sm:$0xff]
        %v4376 = vld [vmem:[%s1599 + $0x1d0] sm:$0xff]
        %v4377 = vld [vmem:[%s1599 + $0x1d8] sm:$0xff]
        %s4378 = scalar_lea.vmem [#allocation7], 640
        %v4379 = vld [vmem:[%s4378] sm:$0xff]
        %v4380 = vld [vmem:[%s4378 + $0x8] sm:$0xff]
        %v4381 = vld [vmem:[%s4378 + $0x10] sm:$0xff]
        %v4382 = vld [vmem:[%s4378 + $0x18] sm:$0xff]
        %v4383 = vld [vmem:[%s4378 + $0x20] sm:$0xff]
        %v4384 = vld [vmem:[%s4378 + $0x28] sm:$0xff]
        %v4385 = vld [vmem:[%s4378 + $0x30] sm:$0xff]
        %v4386 = vld [vmem:[%s4378 + $0x38] sm:$0xff]
        %v4387 = vld [vmem:[%s4378 + $0x40] sm:$0xff]
        %v4388 = vld [vmem:[%s4378 + $0x48] sm:$0xff]
        %v4389 = vld [vmem:[%s4378 + $0x50] sm:$0xff]
        %v4390 = vld [vmem:[%s4378 + $0x58] sm:$0xff]
        %v4391 = vld [vmem:[%s4378 + $0x60] sm:$0xff]
        %v4392 = vld [vmem:[%s4378 + $0x68] sm:$0xff]
        %v4393 = vld [vmem:[%s4378 + $0x70] sm:$0xff]
        %v4394 = vld [vmem:[%s4378 + $0x78] sm:$0xff]
        %v4395 = vld [vmem:[%s4378 + $0x80] sm:$0xff]
        %v4396 = vld [vmem:[%s4378 + $0x88] sm:$0xff]
        %v4397 = vld [vmem:[%s4378 + $0x90] sm:$0xff]
        %v4398 = vld [vmem:[%s4378 + $0x98] sm:$0xff]
        %v4399 = vld [vmem:[%s4378 + $0xa0] sm:$0xff]
        %v4400 = vld [vmem:[%s4378 + $0xa8] sm:$0xff]
        %v4401 = vld [vmem:[%s4378 + $0xb0] sm:$0xff]
        %v4402 = vld [vmem:[%s4378 + $0xb8] sm:$0xff]
        %v4403 = vld [vmem:[%s4378 + $0xc0] sm:$0xff]
        %v4404 = vld [vmem:[%s4378 + $0xc8] sm:$0xff]
        %v4405 = vld [vmem:[%s4378 + $0xd0] sm:$0xff]
        %v4406 = vld [vmem:[%s4378 + $0xd8] sm:$0xff]
        %v4407 = vld [vmem:[%s4378 + $0xe0] sm:$0xff]
        %v4408 = vld [vmem:[%s4378 + $0xe8] sm:$0xff]
        %v4409 = vld [vmem:[%s4378 + $0xf0] sm:$0xff]
        %v4410 = vld [vmem:[%s4378 + $0xf8] sm:$0xff]
        %v4411 = vld [vmem:[%s4378 + $0x100] sm:$0xff]
        %v4412 = vld [vmem:[%s4378 + $0x108] sm:$0xff]
        %v4413 = vld [vmem:[%s4378 + $0x110] sm:$0xff]
        %v4414 = vld [vmem:[%s4378 + $0x118] sm:$0xff]
        %v4415 = vld [vmem:[%s4378 + $0x120] sm:$0xff]
        %v4416 = vld [vmem:[%s4378 + $0x128] sm:$0xff]
        %v4417 = vld [vmem:[%s4378 + $0x130] sm:$0xff]
        %v4418 = vld [vmem:[%s4378 + $0x138] sm:$0xff]
        %v4420 = vsel %vm335, %v4332, 0
        %v4423 = vsel %vm335, %v4335, 0
        %v4426 = vsel %vm335, %v4338, 0
        %v4429 = vsel %vm335, %v4341, 0
        %v4432 = vsel %vm335, %v4344, 0
        %v4435 = vsel %vm335, %v4347, 0
        %v4438 = vsel %vm335, %v4350, 0
        %v4441 = vsel %vm335, %v4353, 0
        %v4444 = vsel %vm335, %v4356, 0
        %v4447 = vsel %vm335, %v4359, 0
        %v4450 = vsel %vm335, %v4362, 0
        %v4453 = vsel %vm335, %v4365, 0
        %v4456 = vsel %vm335, %v4368, 0
        %v4459 = vsel %vm335, %v4371, 0
        %v4462 = vsel %vm335, %v4374, 0
        %v4465 = vsel %vm335, %v4377, 0
        %4467 = vmatprep.subr.mxu0 0.0
        %4468 = vmatpush1.msra.mxu0 %v4394
        %4469 = vmatprep.subr.mxu0 0.0
        %4470 = vmatpush1.msra.mxu0 %v4393
        %4471 = vmatprep.subr.mxu0 0.0
        %4472 = vmatpush1.msra.mxu0 %v4392
        %4473 = vmatprep.subr.mxu0 0.0
        %4474 = vmatpush1.msra.mxu0 %v4391
        %4475 = vmatprep.subr.mxu0 0.0
        %4476 = vmatpush1.msra.mxu0 %v4390
        %4477 = vmatprep.subr.mxu0 0.0
        %4478 = vmatpush1.msra.mxu0 %v4389
        %4479 = vmatprep.subr.mxu0 0.0
        %4480 = vmatpush1.msra.mxu0 %v4388
        %4481 = vmatprep.subr.mxu0 0.0
        %4482 = vmatpush1.msra.mxu0 %v4387
        %4483 = vmatprep.subr.mxu0 0.0
        %4484 = vmatpush1.msra.mxu0 %v4386
        %4485 = vmatprep.subr.mxu0 0.0
        %4486 = vmatpush1.msra.mxu0 %v4385
        %4487 = vmatprep.subr.mxu0 0.0
        %4488 = vmatpush1.msra.mxu0 %v4384
        %4489 = vmatprep.subr.mxu0 0.0
        %4490 = vmatpush1.msra.mxu0 %v4383
        %4491 = vmatprep.subr.mxu0 0.0
        %4492 = vmatpush1.msra.mxu0 %v4382
        %4493 = vmatprep.subr.mxu0 0.0
        %4494 = vmatpush1.msra.mxu0 %v4381
        %4495 = vmatprep.subr.mxu0 0.0
        %4496 = vmatpush1.msra.mxu0 %v4380
        %4497 = vmatprep.subr.mxu0 0.0
        %4498 = vmatpush1.msra.mxu0 %v4379
        %4499 = vmatprep.subr.mxu0 0.0
        %4500 = vmatpush2.msra.mxu0 %v4410
        %4501 = vmatprep.subr.mxu0 0.0
        %4502 = vmatpush2.msra.mxu0 %v4409
        %4503 = vmatprep.subr.mxu0 0.0
        %4504 = vmatpush2.msra.mxu0 %v4408
        %4505 = vmatprep.subr.mxu0 0.0
        %4506 = vmatpush2.msra.mxu0 %v4407
        %4507 = vmatprep.subr.mxu0 0.0
        %4508 = vmatpush2.msra.mxu0 %v4406
        %4509 = vmatprep.subr.mxu0 0.0
        %4510 = vmatpush2.msra.mxu0 %v4405
        %4511 = vmatprep.subr.mxu0 0.0
        %4512 = vmatpush2.msra.mxu0 %v4404
        %4513 = vmatprep.subr.mxu0 0.0
        %4514 = vmatpush2.msra.mxu0 %v4403
        %4515 = vmatprep.subr.mxu0 0.0
        %4516 = vmatpush2.msra.mxu0 %v4402
        %4517 = vmatprep.subr.mxu0 0.0
        %4518 = vmatpush2.msra.mxu0 %v4401
        %4519 = vmatprep.subr.mxu0 0.0
        %4520 = vmatpush2.msra.mxu0 %v4400
        %4521 = vmatprep.subr.mxu0 0.0
        %4522 = vmatpush2.msra.mxu0 %v4399
        %4523 = vmatprep.subr.mxu0 0.0
        %4524 = vmatpush2.msra.mxu0 %v4398
        %4525 = vmatprep.subr.mxu0 0.0
        %4526 = vmatpush2.msra.mxu0 %v4397
        %4527 = vmatprep.subr.mxu0 0.0
        %4528 = vmatpush2.msra.mxu0 %v4396
        %4529 = vmatprep.subr.mxu0 0.0
        %4530 = vmatpush2.msra.mxu0 %v4395
        %4531 = vmatprep.mubr.f32.mxu0 %v4331
        %4532 = vmatmul.mubr.f32.gmra.mxu0 %v4330
        %v4533 = vpop.f32.mrf.mxu0
        %v4534 = vadd.f32 0.0, %v4533
        %v4535 = vpop.f32.mrf.mxu0
        %4536 = vmatprep.mubr.f32.mxu0 %v4334
        %4537 = vmatmul.mubr.f32.gmra.mxu0 %v4333
        %v4538 = vpop.f32.mrf.mxu0
        %v4539 = vadd.f32 0.0, %v4538
        %v4540 = vpop.f32.mrf.mxu0
        %4541 = vmatprep.mubr.f32.mxu0 %v4337
        %4542 = vmatmul.mubr.f32.gmra.mxu0 %v4336
        %v4543 = vpop.f32.mrf.mxu0
        %v4544 = vadd.f32 0.0, %v4543
        %v4545 = vpop.f32.mrf.mxu0
        %4546 = vmatprep.mubr.f32.mxu0 %v4340
        %4547 = vmatmul.mubr.f32.gmra.mxu0 %v4339
        %v4548 = vpop.f32.mrf.mxu0
        %v4549 = vadd.f32 0.0, %v4548
        %v4550 = vpop.f32.mrf.mxu0
        %4551 = vmatprep.mubr.f32.mxu0 %v4343
        %4552 = vmatmul.mubr.f32.gmra.mxu0 %v4342
        %v4553 = vpop.f32.mrf.mxu0
        %v4554 = vadd.f32 0.0, %v4553
        %v4555 = vpop.f32.mrf.mxu0
        %4556 = vmatprep.mubr.f32.mxu0 %v4346
        %4557 = vmatmul.mubr.f32.gmra.mxu0 %v4345
        %v4558 = vpop.f32.mrf.mxu0
        %v4559 = vadd.f32 0.0, %v4558
        %v4560 = vpop.f32.mrf.mxu0
        %4561 = vmatprep.mubr.f32.mxu0 %v4349
        %4562 = vmatmul.mubr.f32.gmra.mxu0 %v4348
        %v4563 = vpop.f32.mrf.mxu0
        %v4564 = vadd.f32 0.0, %v4563
        %v4565 = vpop.f32.mrf.mxu0
        %4566 = vmatprep.mubr.f32.mxu0 %v4352
        %4567 = vmatmul.mubr.f32.gmra.mxu0 %v4351
        %v4568 = vpop.f32.mrf.mxu0
        %v4569 = vadd.f32 0.0, %v4568
        %v4570 = vpop.f32.mrf.mxu0
        %4571 = vmatprep.mubr.f32.mxu0 %v4355
        %4572 = vmatmul.mubr.f32.gmra.mxu0 %v4354
        %v4573 = vpop.f32.mrf.mxu0
        %v4574 = vadd.f32 0.0, %v4573
        %v4575 = vpop.f32.mrf.mxu0
        %4576 = vmatprep.mubr.f32.mxu0 %v4358
        %4577 = vmatmul.mubr.f32.gmra.mxu0 %v4357
        %v4578 = vpop.f32.mrf.mxu0
        %v4579 = vadd.f32 0.0, %v4578
        %v4580 = vpop.f32.mrf.mxu0
        %4581 = vmatprep.mubr.f32.mxu0 %v4361
        %4582 = vmatmul.mubr.f32.gmra.mxu0 %v4360
        %v4583 = vpop.f32.mrf.mxu0
        %v4584 = vadd.f32 0.0, %v4583
        %v4585 = vpop.f32.mrf.mxu0
        %4586 = vmatprep.mubr.f32.mxu0 %v4364
        %4587 = vmatmul.mubr.f32.gmra.mxu0 %v4363
        %v4588 = vpop.f32.mrf.mxu0
        %v4589 = vadd.f32 0.0, %v4588
        %v4590 = vpop.f32.mrf.mxu0
        %4591 = vmatprep.mubr.f32.mxu0 %v4367
        %4592 = vmatmul.mubr.f32.gmra.mxu0 %v4366
        %v4593 = vpop.f32.mrf.mxu0
        %v4594 = vadd.f32 0.0, %v4593
        %v4595 = vpop.f32.mrf.mxu0
        %4596 = vmatprep.mubr.f32.mxu0 %v4370
        %4597 = vmatmul.mubr.f32.gmra.mxu0 %v4369
        %v4598 = vpop.f32.mrf.mxu0
        %v4599 = vadd.f32 0.0, %v4598
        %v4600 = vpop.f32.mrf.mxu0
        %4601 = vmatprep.mubr.f32.mxu0 %v4373
        %4602 = vmatmul.mubr.f32.gmra.mxu0 %v4372
        %v4603 = vpop.f32.mrf.mxu0
        %v4604 = vadd.f32 0.0, %v4603
        %v4605 = vpop.f32.mrf.mxu0
        %4606 = vmatprep.mubr.f32.mxu0 %v4376
        %4607 = vmatmul.mubr.f32.gmra.mxu0 %v4375
        %v4608 = vpop.f32.mrf.mxu0
        %v4609 = vadd.f32 0.0, %v4608
        %v4610 = vpop.f32.mrf.mxu0
        %4611 = vdwg.mxu0
        %4612 = vmatprep.subr.mxu0 0.0
        %4613 = vmatpush1.msra.mxu0 0.0
        %4614 = vmatprep.subr.mxu0 0.0
        %4615 = vmatpush1.msra.mxu0 0.0
        %4616 = vmatprep.subr.mxu0 0.0
        %4617 = vmatpush1.msra.mxu0 0.0
        %4618 = vmatprep.subr.mxu0 0.0
        %4619 = vmatpush1.msra.mxu0 0.0
        %4620 = vmatprep.subr.mxu0 0.0
        %4621 = vmatpush1.msra.mxu0 0.0
        %4622 = vmatprep.subr.mxu0 0.0
        %4623 = vmatpush1.msra.mxu0 0.0
        %4624 = vmatprep.subr.mxu0 0.0
        %4625 = vmatpush1.msra.mxu0 0.0
        %4626 = vmatprep.subr.mxu0 0.0
        %4627 = vmatpush1.msra.mxu0 0.0
        %4628 = vmatprep.subr.mxu0 0.0
        %4629 = vmatpush1.msra.mxu0 %v4418
        %4630 = vmatprep.subr.mxu0 0.0
        %4631 = vmatpush1.msra.mxu0 %v4417
        %4632 = vmatprep.subr.mxu0 0.0
        %4633 = vmatpush1.msra.mxu0 %v4416
        %4634 = vmatprep.subr.mxu0 0.0
        %4635 = vmatpush1.msra.mxu0 %v4415
        %4636 = vmatprep.subr.mxu0 0.0
        %4637 = vmatpush1.msra.mxu0 %v4414
        %4638 = vmatprep.subr.mxu0 0.0
        %4639 = vmatpush1.msra.mxu0 %v4413
        %4640 = vmatprep.subr.mxu0 0.0
        %4641 = vmatpush1.msra.mxu0 %v4412
        %4642 = vmatprep.subr.mxu0 0.0
        %4643 = vmatpush1.msra.mxu0 %v4411
        %4644 = vmatprep.subr.mxu0 0.0
        %4645 = vmatpush2.msra.mxu0 0.0
        %4646 = vmatprep.subr.mxu0 0.0
        %4647 = vmatpush2.msra.mxu0 0.0
        %4648 = vmatprep.subr.mxu0 0.0
        %4649 = vmatpush2.msra.mxu0 0.0
        %4650 = vmatprep.subr.mxu0 0.0
        %4651 = vmatpush2.msra.mxu0 0.0
        %4652 = vmatprep.subr.mxu0 0.0
        %4653 = vmatpush2.msra.mxu0 0.0
        %4654 = vmatprep.subr.mxu0 0.0
        %4655 = vmatpush2.msra.mxu0 0.0
        %4656 = vmatprep.subr.mxu0 0.0
        %4657 = vmatpush2.msra.mxu0 0.0
        %4658 = vmatprep.subr.mxu0 0.0
        %4659 = vmatpush2.msra.mxu0 0.0
        %4660 = vmatprep.subr.mxu0 0.0
        %4661 = vmatpush2.msra.mxu0 0.0
        %4662 = vmatprep.subr.mxu0 0.0
        %4663 = vmatpush2.msra.mxu0 0.0
        %4664 = vmatprep.subr.mxu0 0.0
        %4665 = vmatpush2.msra.mxu0 0.0
        %4666 = vmatprep.subr.mxu0 0.0
        %4667 = vmatpush2.msra.mxu0 0.0
        %4668 = vmatprep.subr.mxu0 0.0
        %4669 = vmatpush2.msra.mxu0 0.0
        %4670 = vmatprep.subr.mxu0 0.0
        %4671 = vmatpush2.msra.mxu0 0.0
        %4672 = vmatprep.subr.mxu0 0.0
        %4673 = vmatpush2.msra.mxu0 0.0
        %4674 = vmatprep.subr.mxu0 0.0
        %4675 = vmatpush2.msra.mxu0 0.0
        %4676 = vmatprep.mubr.f32.mxu0 0.0
        %4677 = vmatmul.mubr.f32.gmra.mxu0 %v4420
        %v4678 = vpop.f32.mrf.mxu0
        %v4679 = vadd.f32 %v4534, %v4678
        %v4680 = vpop.f32.mrf.mxu0
        %4681 = vmatprep.mubr.f32.mxu0 0.0
        %4682 = vmatmul.mubr.f32.gmra.mxu0 %v4423
        %v4683 = vpop.f32.mrf.mxu0
        %v4684 = vadd.f32 %v4539, %v4683
        %v4685 = vpop.f32.mrf.mxu0
        %4686 = vmatprep.mubr.f32.mxu0 0.0
        %4687 = vmatmul.mubr.f32.gmra.mxu0 %v4426
        %v4688 = vpop.f32.mrf.mxu0
        %v4689 = vadd.f32 %v4544, %v4688
        %v4690 = vpop.f32.mrf.mxu0
        %4691 = vmatprep.mubr.f32.mxu0 0.0
        %4692 = vmatmul.mubr.f32.gmra.mxu0 %v4429
        %v4693 = vpop.f32.mrf.mxu0
        %v4694 = vadd.f32 %v4549, %v4693
        %v4695 = vpop.f32.mrf.mxu0
        %4696 = vmatprep.mubr.f32.mxu0 0.0
        %4697 = vmatmul.mubr.f32.gmra.mxu0 %v4432
        %v4698 = vpop.f32.mrf.mxu0
        %v4699 = vadd.f32 %v4554, %v4698
        %v4700 = vpop.f32.mrf.mxu0
        %4701 = vmatprep.mubr.f32.mxu0 0.0
        %4702 = vmatmul.mubr.f32.gmra.mxu0 %v4435
        %v4703 = vpop.f32.mrf.mxu0
        %v4704 = vadd.f32 %v4559, %v4703
        %v4705 = vpop.f32.mrf.mxu0
        %4706 = vmatprep.mubr.f32.mxu0 0.0
        %4707 = vmatmul.mubr.f32.gmra.mxu0 %v4438
        %v4708 = vpop.f32.mrf.mxu0
        %v4709 = vadd.f32 %v4564, %v4708
        %v4710 = vpop.f32.mrf.mxu0
        %4711 = vmatprep.mubr.f32.mxu0 0.0
        %4712 = vmatmul.mubr.f32.gmra.mxu0 %v4441
        %v4713 = vpop.f32.mrf.mxu0
        %v4714 = vadd.f32 %v4569, %v4713
        %v4715 = vpop.f32.mrf.mxu0
        %4716 = vmatprep.mubr.f32.mxu0 0.0
        %4717 = vmatmul.mubr.f32.gmra.mxu0 %v4444
        %v4718 = vpop.f32.mrf.mxu0
        %v4719 = vadd.f32 %v4574, %v4718
        %v4720 = vpop.f32.mrf.mxu0
        %4721 = vmatprep.mubr.f32.mxu0 0.0
        %4722 = vmatmul.mubr.f32.gmra.mxu0 %v4447
        %v4723 = vpop.f32.mrf.mxu0
        %v4724 = vadd.f32 %v4579, %v4723
        %v4725 = vpop.f32.mrf.mxu0
        %4726 = vmatprep.mubr.f32.mxu0 0.0
        %4727 = vmatmul.mubr.f32.gmra.mxu0 %v4450
        %v4728 = vpop.f32.mrf.mxu0
        %v4729 = vadd.f32 %v4584, %v4728
        %v4730 = vpop.f32.mrf.mxu0
        %4731 = vmatprep.mubr.f32.mxu0 0.0
        %4732 = vmatmul.mubr.f32.gmra.mxu0 %v4453
        %v4733 = vpop.f32.mrf.mxu0
        %v4734 = vadd.f32 %v4589, %v4733
        %v4735 = vpop.f32.mrf.mxu0
        %4736 = vmatprep.mubr.f32.mxu0 0.0
        %4737 = vmatmul.mubr.f32.gmra.mxu0 %v4456
        %v4738 = vpop.f32.mrf.mxu0
        %v4739 = vadd.f32 %v4594, %v4738
        %v4740 = vpop.f32.mrf.mxu0
        %4741 = vmatprep.mubr.f32.mxu0 0.0
        %4742 = vmatmul.mubr.f32.gmra.mxu0 %v4459
        %v4743 = vpop.f32.mrf.mxu0
        %v4744 = vadd.f32 %v4599, %v4743
        %v4745 = vpop.f32.mrf.mxu0
        %4746 = vmatprep.mubr.f32.mxu0 0.0
        %4747 = vmatmul.mubr.f32.gmra.mxu0 %v4462
        %v4748 = vpop.f32.mrf.mxu0
        %v4749 = vadd.f32 %v4604, %v4748
        %v4750 = vpop.f32.mrf.mxu0
        %4751 = vmatprep.mubr.f32.mxu0 0.0
        %4752 = vmatmul.mubr.f32.gmra.mxu0 %v4465
        %v4753 = vpop.f32.mrf.mxu0
        %v4754 = vadd.f32 %v4609, %v4753
        %v4755 = vpop.f32.mrf.mxu0
        %4756 = vdwg.mxu0
        %v4757 = vadd.f32 %v4252, %v4679
        %v4758 = vadd.f32 %v4257, %v4684
        %v4759 = vadd.f32 %v4262, %v4689
        %v4760 = vadd.f32 %v4267, %v4694
        %v4761 = vadd.f32 %v4272, %v4699
        %v4762 = vadd.f32 %v4277, %v4704
        %v4763 = vadd.f32 %v4282, %v4709
        %v4764 = vadd.f32 %v4287, %v4714
        %v4765 = vadd.f32 %v4292, %v4719
        %v4766 = vadd.f32 %v4297, %v4724
        %v4767 = vadd.f32 %v4302, %v4729
        %v4768 = vadd.f32 %v4307, %v4734
        %v4769 = vadd.f32 %v4312, %v4739
        %v4770 = vadd.f32 %v4317, %v4744
        %v4771 = vadd.f32 %v4322, %v4749
        %v4772 = vadd.f32 %v4327, %v4754
        %v4773 = vld [vmem:[%s2043] sm:$0xff]
        %v4774 = vld [vmem:[%s2043 + $0x8] sm:$0xff]
        %v4775 = vld [vmem:[%s2043 + $0x10] sm:$0xff]
        %v4776 = vld [vmem:[%s2043 + $0x18] sm:$0xff]
        %v4777 = vld [vmem:[%s2043 + $0x20] sm:$0xff]
        %v4778 = vld [vmem:[%s2043 + $0x28] sm:$0xff]
        %v4779 = vld [vmem:[%s2043 + $0x30] sm:$0xff]
        %v4780 = vld [vmem:[%s2043 + $0x38] sm:$0xff]
        %v4781 = vld [vmem:[%s2043 + $0x40] sm:$0xff]
        %v4782 = vld [vmem:[%s2043 + $0x48] sm:$0xff]
        %v4783 = vld [vmem:[%s2043 + $0x50] sm:$0xff]
        %v4784 = vld [vmem:[%s2043 + $0x58] sm:$0xff]
        %v4785 = vld [vmem:[%s2043 + $0x60] sm:$0xff]
        %v4786 = vld [vmem:[%s2043 + $0x68] sm:$0xff]
        %v4787 = vld [vmem:[%s2043 + $0x70] sm:$0xff]
        %v4788 = vld [vmem:[%s2043 + $0x78] sm:$0xff]
        %v4789 = vld [vmem:[%s2043 + $0x80] sm:$0xff]
        %v4790 = vld [vmem:[%s2043 + $0x88] sm:$0xff]
        %v4791 = vld [vmem:[%s2043 + $0x90] sm:$0xff]
        %v4792 = vld [vmem:[%s2043 + $0x98] sm:$0xff]
        %v4793 = vld [vmem:[%s2043 + $0xa0] sm:$0xff]
        %v4794 = vld [vmem:[%s2043 + $0xa8] sm:$0xff]
        %v4795 = vld [vmem:[%s2043 + $0xb0] sm:$0xff]
        %v4796 = vld [vmem:[%s2043 + $0xb8] sm:$0xff]
        %v4797 = vld [vmem:[%s2043 + $0x120] sm:$0xff]
        %v4798 = vld [vmem:[%s2043 + $0x128] sm:$0xff]
        %v4799 = vld [vmem:[%s2043 + $0x130] sm:$0xff]
        %v4800 = vld [vmem:[%s2043 + $0x138] sm:$0xff]
        %v4801 = vld [vmem:[%s2043 + $0x140] sm:$0xff]
        %v4802 = vld [vmem:[%s2043 + $0x148] sm:$0xff]
        %v4803 = vld [vmem:[%s2043 + $0x150] sm:$0xff]
        %v4804 = vld [vmem:[%s2043 + $0x158] sm:$0xff]
        %v4805 = vld [vmem:[%s2043 + $0x160] sm:$0xff]
        %v4806 = vld [vmem:[%s2043 + $0x168] sm:$0xff]
        %v4807 = vld [vmem:[%s2043 + $0x170] sm:$0xff]
        %v4808 = vld [vmem:[%s2043 + $0x178] sm:$0xff]
        %v4809 = vld [vmem:[%s2043 + $0x180] sm:$0xff]
        %v4810 = vld [vmem:[%s2043 + $0x188] sm:$0xff]
        %v4811 = vld [vmem:[%s2043 + $0x190] sm:$0xff]
        %v4812 = vld [vmem:[%s2043 + $0x198] sm:$0xff]
        %v4813 = vld [vmem:[%s2043 + $0x1a0] sm:$0xff]
        %v4814 = vld [vmem:[%s2043 + $0x1a8] sm:$0xff]
        %v4815 = vld [vmem:[%s2043 + $0x1b0] sm:$0xff]
        %v4816 = vld [vmem:[%s2043 + $0x1b8] sm:$0xff]
        %v4817 = vld [vmem:[%s2043 + $0x1c0] sm:$0xff]
        %v4818 = vld [vmem:[%s2043 + $0x1c8] sm:$0xff]
        %v4819 = vld [vmem:[%s2043 + $0x1d0] sm:$0xff]
        %v4820 = vld [vmem:[%s2043 + $0x1d8] sm:$0xff]
        %s4821 = scalar_lea.vmem [#allocation7], 960
        %v4822 = vld [vmem:[%s4821] sm:$0xff]
        %v4823 = vld [vmem:[%s4821 + $0x8] sm:$0xff]
        %v4824 = vld [vmem:[%s4821 + $0x10] sm:$0xff]
        %v4825 = vld [vmem:[%s4821 + $0x18] sm:$0xff]
        %v4826 = vld [vmem:[%s4821 + $0x20] sm:$0xff]
        %v4827 = vld [vmem:[%s4821 + $0x28] sm:$0xff]
        %v4828 = vld [vmem:[%s4821 + $0x30] sm:$0xff]
        %v4829 = vld [vmem:[%s4821 + $0x38] sm:$0xff]
        %v4830 = vld [vmem:[%s4821 + $0x40] sm:$0xff]
        %v4831 = vld [vmem:[%s4821 + $0x48] sm:$0xff]
        %v4832 = vld [vmem:[%s4821 + $0x50] sm:$0xff]
        %v4833 = vld [vmem:[%s4821 + $0x58] sm:$0xff]
        %v4834 = vld [vmem:[%s4821 + $0x60] sm:$0xff]
        %v4835 = vld [vmem:[%s4821 + $0x68] sm:$0xff]
        %v4836 = vld [vmem:[%s4821 + $0x70] sm:$0xff]
        %v4837 = vld [vmem:[%s4821 + $0x78] sm:$0xff]
        %v4838 = vld [vmem:[%s4821 + $0x80] sm:$0xff]
        %v4839 = vld [vmem:[%s4821 + $0x88] sm:$0xff]
        %v4840 = vld [vmem:[%s4821 + $0x90] sm:$0xff]
        %v4841 = vld [vmem:[%s4821 + $0x98] sm:$0xff]
        %v4842 = vld [vmem:[%s4821 + $0xa0] sm:$0xff]
        %v4843 = vld [vmem:[%s4821 + $0xa8] sm:$0xff]
        %v4844 = vld [vmem:[%s4821 + $0xb0] sm:$0xff]
        %v4845 = vld [vmem:[%s4821 + $0xb8] sm:$0xff]
        %v4846 = vld [vmem:[%s4821 + $0xc0] sm:$0xff]
        %v4847 = vld [vmem:[%s4821 + $0xc8] sm:$0xff]
        %v4848 = vld [vmem:[%s4821 + $0xd0] sm:$0xff]
        %v4849 = vld [vmem:[%s4821 + $0xd8] sm:$0xff]
        %v4850 = vld [vmem:[%s4821 + $0xe0] sm:$0xff]
        %v4851 = vld [vmem:[%s4821 + $0xe8] sm:$0xff]
        %v4852 = vld [vmem:[%s4821 + $0xf0] sm:$0xff]
        %v4853 = vld [vmem:[%s4821 + $0xf8] sm:$0xff]
        %v4854 = vld [vmem:[%s4821 + $0x100] sm:$0xff]
        %v4855 = vld [vmem:[%s4821 + $0x108] sm:$0xff]
        %v4856 = vld [vmem:[%s4821 + $0x110] sm:$0xff]
        %v4857 = vld [vmem:[%s4821 + $0x118] sm:$0xff]
        %v4858 = vld [vmem:[%s4821 + $0x120] sm:$0xff]
        %v4859 = vld [vmem:[%s4821 + $0x128] sm:$0xff]
        %v4860 = vld [vmem:[%s4821 + $0x130] sm:$0xff]
        %v4861 = vld [vmem:[%s4821 + $0x138] sm:$0xff]
        %v4863 = vsel %vm335, %v4775, 0
        %v4866 = vsel %vm335, %v4778, 0
        %v4869 = vsel %vm335, %v4781, 0
        %v4872 = vsel %vm335, %v4784, 0
        %v4875 = vsel %vm335, %v4787, 0
        %v4878 = vsel %vm335, %v4790, 0
        %v4881 = vsel %vm335, %v4793, 0
        %v4884 = vsel %vm335, %v4796, 0
        %v4887 = vsel %vm335, %v4799, 0
        %v4890 = vsel %vm335, %v4802, 0
        %v4893 = vsel %vm335, %v4805, 0
        %v4896 = vsel %vm335, %v4808, 0
        %v4899 = vsel %vm335, %v4811, 0
        %v4902 = vsel %vm335, %v4814, 0
        %v4905 = vsel %vm335, %v4817, 0
        %v4908 = vsel %vm335, %v4820, 0
        %4910 = vmatprep.subr.mxu0 0.0
        %4911 = vmatpush1.msra.mxu0 %v4837
        %4912 = vmatprep.subr.mxu0 0.0
        %4913 = vmatpush1.msra.mxu0 %v4836
        %4914 = vmatprep.subr.mxu0 0.0
        %4915 = vmatpush1.msra.mxu0 %v4835
        %4916 = vmatprep.subr.mxu0 0.0
        %4917 = vmatpush1.msra.mxu0 %v4834
        %4918 = vmatprep.subr.mxu0 0.0
        %4919 = vmatpush1.msra.mxu0 %v4833
        %4920 = vmatprep.subr.mxu0 0.0
        %4921 = vmatpush1.msra.mxu0 %v4832
        %4922 = vmatprep.subr.mxu0 0.0
        %4923 = vmatpush1.msra.mxu0 %v4831
        %4924 = vmatprep.subr.mxu0 0.0
        %4925 = vmatpush1.msra.mxu0 %v4830
        %4926 = vmatprep.subr.mxu0 0.0
        %4927 = vmatpush1.msra.mxu0 %v4829
        %4928 = vmatprep.subr.mxu0 0.0
        %4929 = vmatpush1.msra.mxu0 %v4828
        %4930 = vmatprep.subr.mxu0 0.0
        %4931 = vmatpush1.msra.mxu0 %v4827
        %4932 = vmatprep.subr.mxu0 0.0
        %4933 = vmatpush1.msra.mxu0 %v4826
        %4934 = vmatprep.subr.mxu0 0.0
        %4935 = vmatpush1.msra.mxu0 %v4825
        %4936 = vmatprep.subr.mxu0 0.0
        %4937 = vmatpush1.msra.mxu0 %v4824
        %4938 = vmatprep.subr.mxu0 0.0
        %4939 = vmatpush1.msra.mxu0 %v4823
        %4940 = vmatprep.subr.mxu0 0.0
        %4941 = vmatpush1.msra.mxu0 %v4822
        %4942 = vmatprep.subr.mxu0 0.0
        %4943 = vmatpush2.msra.mxu0 %v4853
        %4944 = vmatprep.subr.mxu0 0.0
        %4945 = vmatpush2.msra.mxu0 %v4852
        %4946 = vmatprep.subr.mxu0 0.0
        %4947 = vmatpush2.msra.mxu0 %v4851
        %4948 = vmatprep.subr.mxu0 0.0
        %4949 = vmatpush2.msra.mxu0 %v4850
        %4950 = vmatprep.subr.mxu0 0.0
        %4951 = vmatpush2.msra.mxu0 %v4849
        %4952 = vmatprep.subr.mxu0 0.0
        %4953 = vmatpush2.msra.mxu0 %v4848
        %4954 = vmatprep.subr.mxu0 0.0
        %4955 = vmatpush2.msra.mxu0 %v4847
        %4956 = vmatprep.subr.mxu0 0.0
        %4957 = vmatpush2.msra.mxu0 %v4846
        %4958 = vmatprep.subr.mxu0 0.0
        %4959 = vmatpush2.msra.mxu0 %v4845
        %4960 = vmatprep.subr.mxu0 0.0
        %4961 = vmatpush2.msra.mxu0 %v4844
        %4962 = vmatprep.subr.mxu0 0.0
        %4963 = vmatpush2.msra.mxu0 %v4843
        %4964 = vmatprep.subr.mxu0 0.0
        %4965 = vmatpush2.msra.mxu0 %v4842
        %4966 = vmatprep.subr.mxu0 0.0
        %4967 = vmatpush2.msra.mxu0 %v4841
        %4968 = vmatprep.subr.mxu0 0.0
        %4969 = vmatpush2.msra.mxu0 %v4840
        %4970 = vmatprep.subr.mxu0 0.0
        %4971 = vmatpush2.msra.mxu0 %v4839
        %4972 = vmatprep.subr.mxu0 0.0
        %4973 = vmatpush2.msra.mxu0 %v4838
        %4974 = vmatprep.mubr.f32.mxu0 %v4774
        %4975 = vmatmul.mubr.f32.gmra.mxu0 %v4773
        %v4976 = vpop.f32.mrf.mxu0
        %v4977 = vadd.f32 0.0, %v4976
        %v4978 = vpop.f32.mrf.mxu0
        %4979 = vmatprep.mubr.f32.mxu0 %v4777
        %4980 = vmatmul.mubr.f32.gmra.mxu0 %v4776
        %v4981 = vpop.f32.mrf.mxu0
        %v4982 = vadd.f32 0.0, %v4981
        %v4983 = vpop.f32.mrf.mxu0
        %4984 = vmatprep.mubr.f32.mxu0 %v4780
        %4985 = vmatmul.mubr.f32.gmra.mxu0 %v4779
        %v4986 = vpop.f32.mrf.mxu0
        %v4987 = vadd.f32 0.0, %v4986
        %v4988 = vpop.f32.mrf.mxu0
        %4989 = vmatprep.mubr.f32.mxu0 %v4783
        %4990 = vmatmul.mubr.f32.gmra.mxu0 %v4782
        %v4991 = vpop.f32.mrf.mxu0
        %v4992 = vadd.f32 0.0, %v4991
        %v4993 = vpop.f32.mrf.mxu0
        %4994 = vmatprep.mubr.f32.mxu0 %v4786
        %4995 = vmatmul.mubr.f32.gmra.mxu0 %v4785
        %v4996 = vpop.f32.mrf.mxu0
        %v4997 = vadd.f32 0.0, %v4996
        %v4998 = vpop.f32.mrf.mxu0
        %4999 = vmatprep.mubr.f32.mxu0 %v4789
        %5000 = vmatmul.mubr.f32.gmra.mxu0 %v4788
        %v5001 = vpop.f32.mrf.mxu0
        %v5002 = vadd.f32 0.0, %v5001
        %v5003 = vpop.f32.mrf.mxu0
        %5004 = vmatprep.mubr.f32.mxu0 %v4792
        %5005 = vmatmul.mubr.f32.gmra.mxu0 %v4791
        %v5006 = vpop.f32.mrf.mxu0
        %v5007 = vadd.f32 0.0, %v5006
        %v5008 = vpop.f32.mrf.mxu0
        %5009 = vmatprep.mubr.f32.mxu0 %v4795
        %5010 = vmatmul.mubr.f32.gmra.mxu0 %v4794
        %v5011 = vpop.f32.mrf.mxu0
        %v5012 = vadd.f32 0.0, %v5011
        %v5013 = vpop.f32.mrf.mxu0
        %5014 = vmatprep.mubr.f32.mxu0 %v4798
        %5015 = vmatmul.mubr.f32.gmra.mxu0 %v4797
        %v5016 = vpop.f32.mrf.mxu0
        %v5017 = vadd.f32 0.0, %v5016
        %v5018 = vpop.f32.mrf.mxu0
        %5019 = vmatprep.mubr.f32.mxu0 %v4801
        %5020 = vmatmul.mubr.f32.gmra.mxu0 %v4800
        %v5021 = vpop.f32.mrf.mxu0
        %v5022 = vadd.f32 0.0, %v5021
        %v5023 = vpop.f32.mrf.mxu0
        %5024 = vmatprep.mubr.f32.mxu0 %v4804
        %5025 = vmatmul.mubr.f32.gmra.mxu0 %v4803
        %v5026 = vpop.f32.mrf.mxu0
        %v5027 = vadd.f32 0.0, %v5026
        %v5028 = vpop.f32.mrf.mxu0
        %5029 = vmatprep.mubr.f32.mxu0 %v4807
        %5030 = vmatmul.mubr.f32.gmra.mxu0 %v4806
        %v5031 = vpop.f32.mrf.mxu0
        %v5032 = vadd.f32 0.0, %v5031
        %v5033 = vpop.f32.mrf.mxu0
        %5034 = vmatprep.mubr.f32.mxu0 %v4810
        %5035 = vmatmul.mubr.f32.gmra.mxu0 %v4809
        %v5036 = vpop.f32.mrf.mxu0
        %v5037 = vadd.f32 0.0, %v5036
        %v5038 = vpop.f32.mrf.mxu0
        %5039 = vmatprep.mubr.f32.mxu0 %v4813
        %5040 = vmatmul.mubr.f32.gmra.mxu0 %v4812
        %v5041 = vpop.f32.mrf.mxu0
        %v5042 = vadd.f32 0.0, %v5041
        %v5043 = vpop.f32.mrf.mxu0
        %5044 = vmatprep.mubr.f32.mxu0 %v4816
        %5045 = vmatmul.mubr.f32.gmra.mxu0 %v4815
        %v5046 = vpop.f32.mrf.mxu0
        %v5047 = vadd.f32 0.0, %v5046
        %v5048 = vpop.f32.mrf.mxu0
        %5049 = vmatprep.mubr.f32.mxu0 %v4819
        %5050 = vmatmul.mubr.f32.gmra.mxu0 %v4818
        %v5051 = vpop.f32.mrf.mxu0
        %v5052 = vadd.f32 0.0, %v5051
        %v5053 = vpop.f32.mrf.mxu0
        %5054 = vdwg.mxu0
        %5055 = vmatprep.subr.mxu0 0.0
        %5056 = vmatpush1.msra.mxu0 0.0
        %5057 = vmatprep.subr.mxu0 0.0
        %5058 = vmatpush1.msra.mxu0 0.0
        %5059 = vmatprep.subr.mxu0 0.0
        %5060 = vmatpush1.msra.mxu0 0.0
        %5061 = vmatprep.subr.mxu0 0.0
        %5062 = vmatpush1.msra.mxu0 0.0
        %5063 = vmatprep.subr.mxu0 0.0
        %5064 = vmatpush1.msra.mxu0 0.0
        %5065 = vmatprep.subr.mxu0 0.0
        %5066 = vmatpush1.msra.mxu0 0.0
        %5067 = vmatprep.subr.mxu0 0.0
        %5068 = vmatpush1.msra.mxu0 0.0
        %5069 = vmatprep.subr.mxu0 0.0
        %5070 = vmatpush1.msra.mxu0 0.0
        %5071 = vmatprep.subr.mxu0 0.0
        %5072 = vmatpush1.msra.mxu0 %v4861
        %5073 = vmatprep.subr.mxu0 0.0
        %5074 = vmatpush1.msra.mxu0 %v4860
        %5075 = vmatprep.subr.mxu0 0.0
        %5076 = vmatpush1.msra.mxu0 %v4859
        %5077 = vmatprep.subr.mxu0 0.0
        %5078 = vmatpush1.msra.mxu0 %v4858
        %5079 = vmatprep.subr.mxu0 0.0
        %5080 = vmatpush1.msra.mxu0 %v4857
        %5081 = vmatprep.subr.mxu0 0.0
        %5082 = vmatpush1.msra.mxu0 %v4856
        %5083 = vmatprep.subr.mxu0 0.0
        %5084 = vmatpush1.msra.mxu0 %v4855
        %5085 = vmatprep.subr.mxu0 0.0
        %5086 = vmatpush1.msra.mxu0 %v4854
        %5087 = vmatprep.subr.mxu0 0.0
        %5088 = vmatpush2.msra.mxu0 0.0
        %5089 = vmatprep.subr.mxu0 0.0
        %5090 = vmatpush2.msra.mxu0 0.0
        %5091 = vmatprep.subr.mxu0 0.0
        %5092 = vmatpush2.msra.mxu0 0.0
        %5093 = vmatprep.subr.mxu0 0.0
        %5094 = vmatpush2.msra.mxu0 0.0
        %5095 = vmatprep.subr.mxu0 0.0
        %5096 = vmatpush2.msra.mxu0 0.0
        %5097 = vmatprep.subr.mxu0 0.0
        %5098 = vmatpush2.msra.mxu0 0.0
        %5099 = vmatprep.subr.mxu0 0.0
        %5100 = vmatpush2.msra.mxu0 0.0
        %5101 = vmatprep.subr.mxu0 0.0
        %5102 = vmatpush2.msra.mxu0 0.0
        %5103 = vmatprep.subr.mxu0 0.0
        %5104 = vmatpush2.msra.mxu0 0.0
        %5105 = vmatprep.subr.mxu0 0.0
        %5106 = vmatpush2.msra.mxu0 0.0
        %5107 = vmatprep.subr.mxu0 0.0
        %5108 = vmatpush2.msra.mxu0 0.0
        %5109 = vmatprep.subr.mxu0 0.0
        %5110 = vmatpush2.msra.mxu0 0.0
        %5111 = vmatprep.subr.mxu0 0.0
        %5112 = vmatpush2.msra.mxu0 0.0
        %5113 = vmatprep.subr.mxu0 0.0
        %5114 = vmatpush2.msra.mxu0 0.0
        %5115 = vmatprep.subr.mxu0 0.0
        %5116 = vmatpush2.msra.mxu0 0.0
        %5117 = vmatprep.subr.mxu0 0.0
        %5118 = vmatpush2.msra.mxu0 0.0
        %5119 = vmatprep.mubr.f32.mxu0 0.0
        %5120 = vmatmul.mubr.f32.gmra.mxu0 %v4863
        %v5121 = vpop.f32.mrf.mxu0
        %v5122 = vadd.f32 %v4977, %v5121
        %v5123 = vpop.f32.mrf.mxu0
        %5124 = vmatprep.mubr.f32.mxu0 0.0
        %5125 = vmatmul.mubr.f32.gmra.mxu0 %v4866
        %v5126 = vpop.f32.mrf.mxu0
        %v5127 = vadd.f32 %v4982, %v5126
        %v5128 = vpop.f32.mrf.mxu0
        %5129 = vmatprep.mubr.f32.mxu0 0.0
        %5130 = vmatmul.mubr.f32.gmra.mxu0 %v4869
        %v5131 = vpop.f32.mrf.mxu0
        %v5132 = vadd.f32 %v4987, %v5131
        %v5133 = vpop.f32.mrf.mxu0
        %5134 = vmatprep.mubr.f32.mxu0 0.0
        %5135 = vmatmul.mubr.f32.gmra.mxu0 %v4872
        %v5136 = vpop.f32.mrf.mxu0
        %v5137 = vadd.f32 %v4992, %v5136
        %v5138 = vpop.f32.mrf.mxu0
        %5139 = vmatprep.mubr.f32.mxu0 0.0
        %5140 = vmatmul.mubr.f32.gmra.mxu0 %v4875
        %v5141 = vpop.f32.mrf.mxu0
        %v5142 = vadd.f32 %v4997, %v5141
        %v5143 = vpop.f32.mrf.mxu0
        %5144 = vmatprep.mubr.f32.mxu0 0.0
        %5145 = vmatmul.mubr.f32.gmra.mxu0 %v4878
        %v5146 = vpop.f32.mrf.mxu0
        %v5147 = vadd.f32 %v5002, %v5146
        %v5148 = vpop.f32.mrf.mxu0
        %5149 = vmatprep.mubr.f32.mxu0 0.0
        %5150 = vmatmul.mubr.f32.gmra.mxu0 %v4881
        %v5151 = vpop.f32.mrf.mxu0
        %v5152 = vadd.f32 %v5007, %v5151
        %v5153 = vpop.f32.mrf.mxu0
        %5154 = vmatprep.mubr.f32.mxu0 0.0
        %5155 = vmatmul.mubr.f32.gmra.mxu0 %v4884
        %v5156 = vpop.f32.mrf.mxu0
        %v5157 = vadd.f32 %v5012, %v5156
        %v5158 = vpop.f32.mrf.mxu0
        %5159 = vmatprep.mubr.f32.mxu0 0.0
        %5160 = vmatmul.mubr.f32.gmra.mxu0 %v4887
        %v5161 = vpop.f32.mrf.mxu0
        %v5162 = vadd.f32 %v5017, %v5161
        %v5163 = vpop.f32.mrf.mxu0
        %5164 = vmatprep.mubr.f32.mxu0 0.0
        %5165 = vmatmul.mubr.f32.gmra.mxu0 %v4890
        %v5166 = vpop.f32.mrf.mxu0
        %v5167 = vadd.f32 %v5022, %v5166
        %v5168 = vpop.f32.mrf.mxu0
        %5169 = vmatprep.mubr.f32.mxu0 0.0
        %5170 = vmatmul.mubr.f32.gmra.mxu0 %v4893
        %v5171 = vpop.f32.mrf.mxu0
        %v5172 = vadd.f32 %v5027, %v5171
        %v5173 = vpop.f32.mrf.mxu0
        %5174 = vmatprep.mubr.f32.mxu0 0.0
        %5175 = vmatmul.mubr.f32.gmra.mxu0 %v4896
        %v5176 = vpop.f32.mrf.mxu0
        %v5177 = vadd.f32 %v5032, %v5176
        %v5178 = vpop.f32.mrf.mxu0
        %5179 = vmatprep.mubr.f32.mxu0 0.0
        %5180 = vmatmul.mubr.f32.gmra.mxu0 %v4899
        %v5181 = vpop.f32.mrf.mxu0
        %v5182 = vadd.f32 %v5037, %v5181
        %v5183 = vpop.f32.mrf.mxu0
        %5184 = vmatprep.mubr.f32.mxu0 0.0
        %5185 = vmatmul.mubr.f32.gmra.mxu0 %v4902
        %v5186 = vpop.f32.mrf.mxu0
        %v5187 = vadd.f32 %v5042, %v5186
        %v5188 = vpop.f32.mrf.mxu0
        %5189 = vmatprep.mubr.f32.mxu0 0.0
        %5190 = vmatmul.mubr.f32.gmra.mxu0 %v4905
        %v5191 = vpop.f32.mrf.mxu0
        %v5192 = vadd.f32 %v5047, %v5191
        %v5193 = vpop.f32.mrf.mxu0
        %5194 = vmatprep.mubr.f32.mxu0 0.0
        %5195 = vmatmul.mubr.f32.gmra.mxu0 %v4908
        %v5196 = vpop.f32.mrf.mxu0
        %v5197 = vadd.f32 %v5052, %v5196
        %v5198 = vpop.f32.mrf.mxu0
        %5199 = vdwg.mxu0
        %v5200 = vadd.f32 %v4757, %v5122
        %v5201 = vadd.f32 %v4758, %v5127
        %v5202 = vadd.f32 %v4759, %v5132
        %v5203 = vadd.f32 %v4760, %v5137
        %v5204 = vadd.f32 %v4761, %v5142
        %v5205 = vadd.f32 %v4762, %v5147
        %v5206 = vadd.f32 %v4763, %v5152
        %v5207 = vadd.f32 %v4764, %v5157
        %v5208 = vadd.f32 %v4765, %v5162
        %v5209 = vadd.f32 %v4766, %v5167
        %v5210 = vadd.f32 %v4767, %v5172
        %v5211 = vadd.f32 %v4768, %v5177
        %v5212 = vadd.f32 %v4769, %v5182
        %v5213 = vadd.f32 %v4770, %v5187
        %v5214 = vadd.f32 %v4771, %v5192
        %v5215 = vadd.f32 %v4772, %v5197
        %v5216 = vld [vmem:[%s2487] sm:$0xff]
        %v5217 = vld [vmem:[%s2487 + $0x8] sm:$0xff]
        %v5218 = vld [vmem:[%s2487 + $0x10] sm:$0xff]
        %v5219 = vld [vmem:[%s2487 + $0x18] sm:$0xff]
        %v5220 = vld [vmem:[%s2487 + $0x20] sm:$0xff]
        %v5221 = vld [vmem:[%s2487 + $0x28] sm:$0xff]
        %v5222 = vld [vmem:[%s2487 + $0x30] sm:$0xff]
        %v5223 = vld [vmem:[%s2487 + $0x38] sm:$0xff]
        %v5224 = vld [vmem:[%s2487 + $0x40] sm:$0xff]
        %v5225 = vld [vmem:[%s2487 + $0x48] sm:$0xff]
        %v5226 = vld [vmem:[%s2487 + $0x50] sm:$0xff]
        %v5227 = vld [vmem:[%s2487 + $0x58] sm:$0xff]
        %v5228 = vld [vmem:[%s2487 + $0x60] sm:$0xff]
        %v5229 = vld [vmem:[%s2487 + $0x68] sm:$0xff]
        %v5230 = vld [vmem:[%s2487 + $0x70] sm:$0xff]
        %v5231 = vld [vmem:[%s2487 + $0x78] sm:$0xff]
        %v5232 = vld [vmem:[%s2487 + $0x80] sm:$0xff]
        %v5233 = vld [vmem:[%s2487 + $0x88] sm:$0xff]
        %v5234 = vld [vmem:[%s2487 + $0x90] sm:$0xff]
        %v5235 = vld [vmem:[%s2487 + $0x98] sm:$0xff]
        %v5236 = vld [vmem:[%s2487 + $0xa0] sm:$0xff]
        %v5237 = vld [vmem:[%s2487 + $0xa8] sm:$0xff]
        %v5238 = vld [vmem:[%s2487 + $0xb0] sm:$0xff]
        %v5239 = vld [vmem:[%s2487 + $0xb8] sm:$0xff]
        %v5240 = vld [vmem:[%s2487 + $0x120] sm:$0xff]
        %v5241 = vld [vmem:[%s2487 + $0x128] sm:$0xff]
        %v5242 = vld [vmem:[%s2487 + $0x130] sm:$0xff]
        %v5243 = vld [vmem:[%s2487 + $0x138] sm:$0xff]
        %v5244 = vld [vmem:[%s2487 + $0x140] sm:$0xff]
        %v5245 = vld [vmem:[%s2487 + $0x148] sm:$0xff]
        %v5246 = vld [vmem:[%s2487 + $0x150] sm:$0xff]
        %v5247 = vld [vmem:[%s2487 + $0x158] sm:$0xff]
        %v5248 = vld [vmem:[%s2487 + $0x160] sm:$0xff]
        %v5249 = vld [vmem:[%s2487 + $0x168] sm:$0xff]
        %v5250 = vld [vmem:[%s2487 + $0x170] sm:$0xff]
        %v5251 = vld [vmem:[%s2487 + $0x178] sm:$0xff]
        %v5252 = vld [vmem:[%s2487 + $0x180] sm:$0xff]
        %v5253 = vld [vmem:[%s2487 + $0x188] sm:$0xff]
        %v5254 = vld [vmem:[%s2487 + $0x190] sm:$0xff]
        %v5255 = vld [vmem:[%s2487 + $0x198] sm:$0xff]
        %v5256 = vld [vmem:[%s2487 + $0x1a0] sm:$0xff]
        %v5257 = vld [vmem:[%s2487 + $0x1a8] sm:$0xff]
        %v5258 = vld [vmem:[%s2487 + $0x1b0] sm:$0xff]
        %v5259 = vld [vmem:[%s2487 + $0x1b8] sm:$0xff]
        %v5260 = vld [vmem:[%s2487 + $0x1c0] sm:$0xff]
        %v5261 = vld [vmem:[%s2487 + $0x1c8] sm:$0xff]
        %v5262 = vld [vmem:[%s2487 + $0x1d0] sm:$0xff]
        %v5263 = vld [vmem:[%s2487 + $0x1d8] sm:$0xff]
        %s5264 = scalar_lea.vmem [#allocation7], 1280
        %v5265 = vld [vmem:[%s5264] sm:$0xff]
        %v5266 = vld [vmem:[%s5264 + $0x8] sm:$0xff]
        %v5267 = vld [vmem:[%s5264 + $0x10] sm:$0xff]
        %v5268 = vld [vmem:[%s5264 + $0x18] sm:$0xff]
        %v5269 = vld [vmem:[%s5264 + $0x20] sm:$0xff]
        %v5270 = vld [vmem:[%s5264 + $0x28] sm:$0xff]
        %v5271 = vld [vmem:[%s5264 + $0x30] sm:$0xff]
        %v5272 = vld [vmem:[%s5264 + $0x38] sm:$0xff]
        %v5273 = vld [vmem:[%s5264 + $0x40] sm:$0xff]
        %v5274 = vld [vmem:[%s5264 + $0x48] sm:$0xff]
        %v5275 = vld [vmem:[%s5264 + $0x50] sm:$0xff]
        %v5276 = vld [vmem:[%s5264 + $0x58] sm:$0xff]
        %v5277 = vld [vmem:[%s5264 + $0x60] sm:$0xff]
        %v5278 = vld [vmem:[%s5264 + $0x68] sm:$0xff]
        %v5279 = vld [vmem:[%s5264 + $0x70] sm:$0xff]
        %v5280 = vld [vmem:[%s5264 + $0x78] sm:$0xff]
        %v5281 = vld [vmem:[%s5264 + $0x80] sm:$0xff]
        %v5282 = vld [vmem:[%s5264 + $0x88] sm:$0xff]
        %v5283 = vld [vmem:[%s5264 + $0x90] sm:$0xff]
        %v5284 = vld [vmem:[%s5264 + $0x98] sm:$0xff]
        %v5285 = vld [vmem:[%s5264 + $0xa0] sm:$0xff]
        %v5286 = vld [vmem:[%s5264 + $0xa8] sm:$0xff]
        %v5287 = vld [vmem:[%s5264 + $0xb0] sm:$0xff]
        %v5288 = vld [vmem:[%s5264 + $0xb8] sm:$0xff]
        %v5289 = vld [vmem:[%s5264 + $0xc0] sm:$0xff]
        %v5290 = vld [vmem:[%s5264 + $0xc8] sm:$0xff]
        %v5291 = vld [vmem:[%s5264 + $0xd0] sm:$0xff]
        %v5292 = vld [vmem:[%s5264 + $0xd8] sm:$0xff]
        %v5293 = vld [vmem:[%s5264 + $0xe0] sm:$0xff]
        %v5294 = vld [vmem:[%s5264 + $0xe8] sm:$0xff]
        %v5295 = vld [vmem:[%s5264 + $0xf0] sm:$0xff]
        %v5296 = vld [vmem:[%s5264 + $0xf8] sm:$0xff]
        %v5297 = vld [vmem:[%s5264 + $0x100] sm:$0xff]
        %v5298 = vld [vmem:[%s5264 + $0x108] sm:$0xff]
        %v5299 = vld [vmem:[%s5264 + $0x110] sm:$0xff]
        %v5300 = vld [vmem:[%s5264 + $0x118] sm:$0xff]
        %v5301 = vld [vmem:[%s5264 + $0x120] sm:$0xff]
        %v5302 = vld [vmem:[%s5264 + $0x128] sm:$0xff]
        %v5303 = vld [vmem:[%s5264 + $0x130] sm:$0xff]
        %v5304 = vld [vmem:[%s5264 + $0x138] sm:$0xff]
        %v5306 = vsel %vm335, %v5218, 0
        %v5309 = vsel %vm335, %v5221, 0
        %v5312 = vsel %vm335, %v5224, 0
        %v5315 = vsel %vm335, %v5227, 0
        %v5318 = vsel %vm335, %v5230, 0
        %v5321 = vsel %vm335, %v5233, 0
        %v5324 = vsel %vm335, %v5236, 0
        %v5327 = vsel %vm335, %v5239, 0
        %v5330 = vsel %vm335, %v5242, 0
        %v5333 = vsel %vm335, %v5245, 0
        %v5336 = vsel %vm335, %v5248, 0
        %v5339 = vsel %vm335, %v5251, 0
        %v5342 = vsel %vm335, %v5254, 0
        %v5345 = vsel %vm335, %v5257, 0
        %v5348 = vsel %vm335, %v5260, 0
        %v5351 = vsel %vm335, %v5263, 0
        %5353 = vmatprep.subr.mxu0 0.0
        %5354 = vmatpush1.msra.mxu0 %v5280
        %5355 = vmatprep.subr.mxu0 0.0
        %5356 = vmatpush1.msra.mxu0 %v5279
        %5357 = vmatprep.subr.mxu0 0.0
        %5358 = vmatpush1.msra.mxu0 %v5278
        %5359 = vmatprep.subr.mxu0 0.0
        %5360 = vmatpush1.msra.mxu0 %v5277
        %5361 = vmatprep.subr.mxu0 0.0
        %5362 = vmatpush1.msra.mxu0 %v5276
        %5363 = vmatprep.subr.mxu0 0.0
        %5364 = vmatpush1.msra.mxu0 %v5275
        %5365 = vmatprep.subr.mxu0 0.0
        %5366 = vmatpush1.msra.mxu0 %v5274
        %5367 = vmatprep.subr.mxu0 0.0
        %5368 = vmatpush1.msra.mxu0 %v5273
        %5369 = vmatprep.subr.mxu0 0.0
        %5370 = vmatpush1.msra.mxu0 %v5272
        %5371 = vmatprep.subr.mxu0 0.0
        %5372 = vmatpush1.msra.mxu0 %v5271
        %5373 = vmatprep.subr.mxu0 0.0
        %5374 = vmatpush1.msra.mxu0 %v5270
        %5375 = vmatprep.subr.mxu0 0.0
        %5376 = vmatpush1.msra.mxu0 %v5269
        %5377 = vmatprep.subr.mxu0 0.0
        %5378 = vmatpush1.msra.mxu0 %v5268
        %5379 = vmatprep.subr.mxu0 0.0
        %5380 = vmatpush1.msra.mxu0 %v5267
        %5381 = vmatprep.subr.mxu0 0.0
        %5382 = vmatpush1.msra.mxu0 %v5266
        %5383 = vmatprep.subr.mxu0 0.0
        %5384 = vmatpush1.msra.mxu0 %v5265
        %5385 = vmatprep.subr.mxu0 0.0
        %5386 = vmatpush2.msra.mxu0 %v5296
        %5387 = vmatprep.subr.mxu0 0.0
        %5388 = vmatpush2.msra.mxu0 %v5295
        %5389 = vmatprep.subr.mxu0 0.0
        %5390 = vmatpush2.msra.mxu0 %v5294
        %5391 = vmatprep.subr.mxu0 0.0
        %5392 = vmatpush2.msra.mxu0 %v5293
        %5393 = vmatprep.subr.mxu0 0.0
        %5394 = vmatpush2.msra.mxu0 %v5292
        %5395 = vmatprep.subr.mxu0 0.0
        %5396 = vmatpush2.msra.mxu0 %v5291
        %5397 = vmatprep.subr.mxu0 0.0
        %5398 = vmatpush2.msra.mxu0 %v5290
        %5399 = vmatprep.subr.mxu0 0.0
        %5400 = vmatpush2.msra.mxu0 %v5289
        %5401 = vmatprep.subr.mxu0 0.0
        %5402 = vmatpush2.msra.mxu0 %v5288
        %5403 = vmatprep.subr.mxu0 0.0
        %5404 = vmatpush2.msra.mxu0 %v5287
        %5405 = vmatprep.subr.mxu0 0.0
        %5406 = vmatpush2.msra.mxu0 %v5286
        %5407 = vmatprep.subr.mxu0 0.0
        %5408 = vmatpush2.msra.mxu0 %v5285
        %5409 = vmatprep.subr.mxu0 0.0
        %5410 = vmatpush2.msra.mxu0 %v5284
        %5411 = vmatprep.subr.mxu0 0.0
        %5412 = vmatpush2.msra.mxu0 %v5283
        %5413 = vmatprep.subr.mxu0 0.0
        %5414 = vmatpush2.msra.mxu0 %v5282
        %5415 = vmatprep.subr.mxu0 0.0
        %5416 = vmatpush2.msra.mxu0 %v5281
        %5417 = vmatprep.mubr.f32.mxu0 %v5217
        %5418 = vmatmul.mubr.f32.gmra.mxu0 %v5216
        %v5419 = vpop.f32.mrf.mxu0
        %v5420 = vadd.f32 0.0, %v5419
        %v5421 = vpop.f32.mrf.mxu0
        %5422 = vmatprep.mubr.f32.mxu0 %v5220
        %5423 = vmatmul.mubr.f32.gmra.mxu0 %v5219
        %v5424 = vpop.f32.mrf.mxu0
        %v5425 = vadd.f32 0.0, %v5424
        %v5426 = vpop.f32.mrf.mxu0
        %5427 = vmatprep.mubr.f32.mxu0 %v5223
        %5428 = vmatmul.mubr.f32.gmra.mxu0 %v5222
        %v5429 = vpop.f32.mrf.mxu0
        %v5430 = vadd.f32 0.0, %v5429
        %v5431 = vpop.f32.mrf.mxu0
        %5432 = vmatprep.mubr.f32.mxu0 %v5226
        %5433 = vmatmul.mubr.f32.gmra.mxu0 %v5225
        %v5434 = vpop.f32.mrf.mxu0
        %v5435 = vadd.f32 0.0, %v5434
        %v5436 = vpop.f32.mrf.mxu0
        %5437 = vmatprep.mubr.f32.mxu0 %v5229
        %5438 = vmatmul.mubr.f32.gmra.mxu0 %v5228
        %v5439 = vpop.f32.mrf.mxu0
        %v5440 = vadd.f32 0.0, %v5439
        %v5441 = vpop.f32.mrf.mxu0
        %5442 = vmatprep.mubr.f32.mxu0 %v5232
        %5443 = vmatmul.mubr.f32.gmra.mxu0 %v5231
        %v5444 = vpop.f32.mrf.mxu0
        %v5445 = vadd.f32 0.0, %v5444
        %v5446 = vpop.f32.mrf.mxu0
        %5447 = vmatprep.mubr.f32.mxu0 %v5235
        %5448 = vmatmul.mubr.f32.gmra.mxu0 %v5234
        %v5449 = vpop.f32.mrf.mxu0
        %v5450 = vadd.f32 0.0, %v5449
        %v5451 = vpop.f32.mrf.mxu0
        %5452 = vmatprep.mubr.f32.mxu0 %v5238
        %5453 = vmatmul.mubr.f32.gmra.mxu0 %v5237
        %v5454 = vpop.f32.mrf.mxu0
        %v5455 = vadd.f32 0.0, %v5454
        %v5456 = vpop.f32.mrf.mxu0
        %5457 = vmatprep.mubr.f32.mxu0 %v5241
        %5458 = vmatmul.mubr.f32.gmra.mxu0 %v5240
        %v5459 = vpop.f32.mrf.mxu0
        %v5460 = vadd.f32 0.0, %v5459
        %v5461 = vpop.f32.mrf.mxu0
        %5462 = vmatprep.mubr.f32.mxu0 %v5244
        %5463 = vmatmul.mubr.f32.gmra.mxu0 %v5243
        %v5464 = vpop.f32.mrf.mxu0
        %v5465 = vadd.f32 0.0, %v5464
        %v5466 = vpop.f32.mrf.mxu0
        %5467 = vmatprep.mubr.f32.mxu0 %v5247
        %5468 = vmatmul.mubr.f32.gmra.mxu0 %v5246
        %v5469 = vpop.f32.mrf.mxu0
        %v5470 = vadd.f32 0.0, %v5469
        %v5471 = vpop.f32.mrf.mxu0
        %5472 = vmatprep.mubr.f32.mxu0 %v5250
        %5473 = vmatmul.mubr.f32.gmra.mxu0 %v5249
        %v5474 = vpop.f32.mrf.mxu0
        %v5475 = vadd.f32 0.0, %v5474
        %v5476 = vpop.f32.mrf.mxu0
        %5477 = vmatprep.mubr.f32.mxu0 %v5253
        %5478 = vmatmul.mubr.f32.gmra.mxu0 %v5252
        %v5479 = vpop.f32.mrf.mxu0
        %v5480 = vadd.f32 0.0, %v5479
        %v5481 = vpop.f32.mrf.mxu0
        %5482 = vmatprep.mubr.f32.mxu0 %v5256
        %5483 = vmatmul.mubr.f32.gmra.mxu0 %v5255
        %v5484 = vpop.f32.mrf.mxu0
        %v5485 = vadd.f32 0.0, %v5484
        %v5486 = vpop.f32.mrf.mxu0
        %5487 = vmatprep.mubr.f32.mxu0 %v5259
        %5488 = vmatmul.mubr.f32.gmra.mxu0 %v5258
        %v5489 = vpop.f32.mrf.mxu0
        %v5490 = vadd.f32 0.0, %v5489
        %v5491 = vpop.f32.mrf.mxu0
        %5492 = vmatprep.mubr.f32.mxu0 %v5262
        %5493 = vmatmul.mubr.f32.gmra.mxu0 %v5261
        %v5494 = vpop.f32.mrf.mxu0
        %v5495 = vadd.f32 0.0, %v5494
        %v5496 = vpop.f32.mrf.mxu0
        %5497 = vdwg.mxu0
        %5498 = vmatprep.subr.mxu0 0.0
        %5499 = vmatpush1.msra.mxu0 0.0
        %5500 = vmatprep.subr.mxu0 0.0
        %5501 = vmatpush1.msra.mxu0 0.0
        %5502 = vmatprep.subr.mxu0 0.0
        %5503 = vmatpush1.msra.mxu0 0.0
        %5504 = vmatprep.subr.mxu0 0.0
        %5505 = vmatpush1.msra.mxu0 0.0
        %5506 = vmatprep.subr.mxu0 0.0
        %5507 = vmatpush1.msra.mxu0 0.0
        %5508 = vmatprep.subr.mxu0 0.0
        %5509 = vmatpush1.msra.mxu0 0.0
        %5510 = vmatprep.subr.mxu0 0.0
        %5511 = vmatpush1.msra.mxu0 0.0
        %5512 = vmatprep.subr.mxu0 0.0
        %5513 = vmatpush1.msra.mxu0 0.0
        %5514 = vmatprep.subr.mxu0 0.0
        %5515 = vmatpush1.msra.mxu0 %v5304
        %5516 = vmatprep.subr.mxu0 0.0
        %5517 = vmatpush1.msra.mxu0 %v5303
        %5518 = vmatprep.subr.mxu0 0.0
        %5519 = vmatpush1.msra.mxu0 %v5302
        %5520 = vmatprep.subr.mxu0 0.0
        %5521 = vmatpush1.msra.mxu0 %v5301
        %5522 = vmatprep.subr.mxu0 0.0
        %5523 = vmatpush1.msra.mxu0 %v5300
        %5524 = vmatprep.subr.mxu0 0.0
        %5525 = vmatpush1.msra.mxu0 %v5299
        %5526 = vmatprep.subr.mxu0 0.0
        %5527 = vmatpush1.msra.mxu0 %v5298
        %5528 = vmatprep.subr.mxu0 0.0
        %5529 = vmatpush1.msra.mxu0 %v5297
        %5530 = vmatprep.subr.mxu0 0.0
        %5531 = vmatpush2.msra.mxu0 0.0
        %5532 = vmatprep.subr.mxu0 0.0
        %5533 = vmatpush2.msra.mxu0 0.0
        %5534 = vmatprep.subr.mxu0 0.0
        %5535 = vmatpush2.msra.mxu0 0.0
        %5536 = vmatprep.subr.mxu0 0.0
        %5537 = vmatpush2.msra.mxu0 0.0
        %5538 = vmatprep.subr.mxu0 0.0
        %5539 = vmatpush2.msra.mxu0 0.0
        %5540 = vmatprep.subr.mxu0 0.0
        %5541 = vmatpush2.msra.mxu0 0.0
        %5542 = vmatprep.subr.mxu0 0.0
        %5543 = vmatpush2.msra.mxu0 0.0
        %5544 = vmatprep.subr.mxu0 0.0
        %5545 = vmatpush2.msra.mxu0 0.0
        %5546 = vmatprep.subr.mxu0 0.0
        %5547 = vmatpush2.msra.mxu0 0.0
        %5548 = vmatprep.subr.mxu0 0.0
        %5549 = vmatpush2.msra.mxu0 0.0
        %5550 = vmatprep.subr.mxu0 0.0
        %5551 = vmatpush2.msra.mxu0 0.0
        %5552 = vmatprep.subr.mxu0 0.0
        %5553 = vmatpush2.msra.mxu0 0.0
        %5554 = vmatprep.subr.mxu0 0.0
        %5555 = vmatpush2.msra.mxu0 0.0
        %5556 = vmatprep.subr.mxu0 0.0
        %5557 = vmatpush2.msra.mxu0 0.0
        %5558 = vmatprep.subr.mxu0 0.0
        %5559 = vmatpush2.msra.mxu0 0.0
        %5560 = vmatprep.subr.mxu0 0.0
        %5561 = vmatpush2.msra.mxu0 0.0
        %5562 = vmatprep.mubr.f32.mxu0 0.0
        %5563 = vmatmul.mubr.f32.gmra.mxu0 %v5306
        %v5564 = vpop.f32.mrf.mxu0
        %v5565 = vadd.f32 %v5420, %v5564
        %v5566 = vpop.f32.mrf.mxu0
        %5567 = vmatprep.mubr.f32.mxu0 0.0
        %5568 = vmatmul.mubr.f32.gmra.mxu0 %v5309
        %v5569 = vpop.f32.mrf.mxu0
        %v5570 = vadd.f32 %v5425, %v5569
        %v5571 = vpop.f32.mrf.mxu0
        %5572 = vmatprep.mubr.f32.mxu0 0.0
        %5573 = vmatmul.mubr.f32.gmra.mxu0 %v5312
        %v5574 = vpop.f32.mrf.mxu0
        %v5575 = vadd.f32 %v5430, %v5574
        %v5576 = vpop.f32.mrf.mxu0
        %5577 = vmatprep.mubr.f32.mxu0 0.0
        %5578 = vmatmul.mubr.f32.gmra.mxu0 %v5315
        %v5579 = vpop.f32.mrf.mxu0
        %v5580 = vadd.f32 %v5435, %v5579
        %v5581 = vpop.f32.mrf.mxu0
        %5582 = vmatprep.mubr.f32.mxu0 0.0
        %5583 = vmatmul.mubr.f32.gmra.mxu0 %v5318
        %v5584 = vpop.f32.mrf.mxu0
        %v5585 = vadd.f32 %v5440, %v5584
        %v5586 = vpop.f32.mrf.mxu0
        %5587 = vmatprep.mubr.f32.mxu0 0.0
        %5588 = vmatmul.mubr.f32.gmra.mxu0 %v5321
        %v5589 = vpop.f32.mrf.mxu0
        %v5590 = vadd.f32 %v5445, %v5589
        %v5591 = vpop.f32.mrf.mxu0
        %5592 = vmatprep.mubr.f32.mxu0 0.0
        %5593 = vmatmul.mubr.f32.gmra.mxu0 %v5324
        %v5594 = vpop.f32.mrf.mxu0
        %v5595 = vadd.f32 %v5450, %v5594
        %v5596 = vpop.f32.mrf.mxu0
        %5597 = vmatprep.mubr.f32.mxu0 0.0
        %5598 = vmatmul.mubr.f32.gmra.mxu0 %v5327
        %v5599 = vpop.f32.mrf.mxu0
        %v5600 = vadd.f32 %v5455, %v5599
        %v5601 = vpop.f32.mrf.mxu0
        %5602 = vmatprep.mubr.f32.mxu0 0.0
        %5603 = vmatmul.mubr.f32.gmra.mxu0 %v5330
        %v5604 = vpop.f32.mrf.mxu0
        %v5605 = vadd.f32 %v5460, %v5604
        %v5606 = vpop.f32.mrf.mxu0
        %5607 = vmatprep.mubr.f32.mxu0 0.0
        %5608 = vmatmul.mubr.f32.gmra.mxu0 %v5333
        %v5609 = vpop.f32.mrf.mxu0
        %v5610 = vadd.f32 %v5465, %v5609
        %v5611 = vpop.f32.mrf.mxu0
        %5612 = vmatprep.mubr.f32.mxu0 0.0
        %5613 = vmatmul.mubr.f32.gmra.mxu0 %v5336
        %v5614 = vpop.f32.mrf.mxu0
        %v5615 = vadd.f32 %v5470, %v5614
        %v5616 = vpop.f32.mrf.mxu0
        %5617 = vmatprep.mubr.f32.mxu0 0.0
        %5618 = vmatmul.mubr.f32.gmra.mxu0 %v5339
        %v5619 = vpop.f32.mrf.mxu0
        %v5620 = vadd.f32 %v5475, %v5619
        %v5621 = vpop.f32.mrf.mxu0
        %5622 = vmatprep.mubr.f32.mxu0 0.0
        %5623 = vmatmul.mubr.f32.gmra.mxu0 %v5342
        %v5624 = vpop.f32.mrf.mxu0
        %v5625 = vadd.f32 %v5480, %v5624
        %v5626 = vpop.f32.mrf.mxu0
        %5627 = vmatprep.mubr.f32.mxu0 0.0
        %5628 = vmatmul.mubr.f32.gmra.mxu0 %v5345
        %v5629 = vpop.f32.mrf.mxu0
        %v5630 = vadd.f32 %v5485, %v5629
        %v5631 = vpop.f32.mrf.mxu0
        %5632 = vmatprep.mubr.f32.mxu0 0.0
        %5633 = vmatmul.mubr.f32.gmra.mxu0 %v5348
        %v5634 = vpop.f32.mrf.mxu0
        %v5635 = vadd.f32 %v5490, %v5634
        %v5636 = vpop.f32.mrf.mxu0
        %5637 = vmatprep.mubr.f32.mxu0 0.0
        %5638 = vmatmul.mubr.f32.gmra.mxu0 %v5351
        %v5639 = vpop.f32.mrf.mxu0
        %v5640 = vadd.f32 %v5495, %v5639
        %v5641 = vpop.f32.mrf.mxu0
        %5642 = vdwg.mxu0
        %v5643 = vadd.f32 %v5200, %v5565
        %v5644 = vadd.f32 %v5201, %v5570
        %v5645 = vadd.f32 %v5202, %v5575
        %v5646 = vadd.f32 %v5203, %v5580
        %v5647 = vadd.f32 %v5204, %v5585
        %v5648 = vadd.f32 %v5205, %v5590
        %v5649 = vadd.f32 %v5206, %v5595
        %v5650 = vadd.f32 %v5207, %v5600
        %v5651 = vadd.f32 %v5208, %v5605
        %v5652 = vadd.f32 %v5209, %v5610
        %v5653 = vadd.f32 %v5210, %v5615
        %v5654 = vadd.f32 %v5211, %v5620
        %v5655 = vadd.f32 %v5212, %v5625
        %v5656 = vadd.f32 %v5213, %v5630
        %v5657 = vadd.f32 %v5214, %v5635
        %v5658 = vadd.f32 %v5215, %v5640
        %v5659 = vld [vmem:[%s4] sm:$0x1]
        %v5661 = vlaneseq
        %v5662 = vshrl.u32 %v5661, 7
        %v5663 = vsub.s32 0, %v5662
        %v5664 = vrot.slane %v5659, %v5663
        %v5666 = vadd.f32 %v5643, %v5664
        %v5667 = vadd.f32 %v5644, %v5664
        %v5668 = vadd.f32 %v5645, %v5664
        %v5669 = vadd.f32 %v5646, %v5664
        %v5670 = vadd.f32 %v5647, %v5664
        %v5671 = vadd.f32 %v5648, %v5664
        %v5672 = vadd.f32 %v5649, %v5664
        %v5673 = vadd.f32 %v5650, %v5664
        %v5674 = vadd.f32 %v5651, %v5664
        %v5675 = vadd.f32 %v5652, %v5664
        %v5676 = vadd.f32 %v5653, %v5664
        %v5677 = vadd.f32 %v5654, %v5664
        %v5678 = vadd.f32 %v5655, %v5664
        %v5679 = vadd.f32 %v5656, %v5664
        %v5680 = vadd.f32 %v5657, %v5664
        %v5681 = vadd.f32 %v5658, %v5664
        %v5682 = vld [vmem:[%s308] sm:$0xff]
        %v5683 = vld [vmem:[%s308 + $0x8] sm:$0xff]
        %v5684 = vld [vmem:[%s308 + $0x10] sm:$0xff]
        %v5685 = vld [vmem:[%s308 + $0x18] sm:$0xff]
        %v5686 = vld [vmem:[%s308 + $0x20] sm:$0xff]
        %v5687 = vld [vmem:[%s308 + $0x28] sm:$0xff]
        %v5688 = vld [vmem:[%s308 + $0x30] sm:$0xff]
        %v5689 = vld [vmem:[%s308 + $0x38] sm:$0xff]
        %v5690 = vld [vmem:[%s308 + $0x40] sm:$0xff]
        %v5691 = vld [vmem:[%s308 + $0x48] sm:$0xff]
        %v5692 = vld [vmem:[%s308 + $0x50] sm:$0xff]
        %v5693 = vld [vmem:[%s308 + $0x58] sm:$0xff]
        %v5694 = vld [vmem:[%s308 + $0x60] sm:$0xff]
        %v5695 = vld [vmem:[%s308 + $0x68] sm:$0xff]
        %v5696 = vld [vmem:[%s308 + $0x70] sm:$0xff]
        %v5697 = vld [vmem:[%s308 + $0x78] sm:$0xff]
        %v5698 = vadd.f32 %v5666, %v5682
        %v5699 = vadd.f32 %v5667, %v5683
        %v5700 = vadd.f32 %v5668, %v5684
        %v5701 = vadd.f32 %v5669, %v5685
        %v5702 = vadd.f32 %v5670, %v5686
        %v5703 = vadd.f32 %v5671, %v5687
        %v5704 = vadd.f32 %v5672, %v5688
        %v5705 = vadd.f32 %v5673, %v5689
        %v5706 = vadd.f32 %v5674, %v5690
        %v5707 = vadd.f32 %v5675, %v5691
        %v5708 = vadd.f32 %v5676, %v5692
        %v5709 = vadd.f32 %v5677, %v5693
        %v5710 = vadd.f32 %v5678, %v5694
        %v5711 = vadd.f32 %v5679, %v5695
        %v5712 = vadd.f32 %v5680, %v5696
        %v5713 = vadd.f32 %v5681, %v5697
        %5714 = vst.msk [vmem:[%s295] sm:$0xff] %vm335, %v5698
        %5715 = vst.msk [vmem:[%s295 + $0x8] sm:$0xff] %vm335, %v5699
        %5716 = vst.msk [vmem:[%s295 + $0x10] sm:$0xff] %vm335, %v5700
        %5717 = vst.msk [vmem:[%s295 + $0x18] sm:$0xff] %vm335, %v5701
        %5718 = vst.msk [vmem:[%s295 + $0x20] sm:$0xff] %vm335, %v5702
        %5719 = vst.msk [vmem:[%s295 + $0x28] sm:$0xff] %vm335, %v5703
        %5720 = vst.msk [vmem:[%s295 + $0x30] sm:$0xff] %vm335, %v5704
        %5721 = vst.msk [vmem:[%s295 + $0x38] sm:$0xff] %vm335, %v5705
        %5722 = vst.msk [vmem:[%s295 + $0x40] sm:$0xff] %vm335, %v5706
        %5723 = vst.msk [vmem:[%s295 + $0x48] sm:$0xff] %vm335, %v5707
        %5724 = vst.msk [vmem:[%s295 + $0x50] sm:$0xff] %vm335, %v5708
        %5725 = vst.msk [vmem:[%s295 + $0x58] sm:$0xff] %vm335, %v5709
        %5726 = vst.msk [vmem:[%s295 + $0x60] sm:$0xff] %vm335, %v5710
        %5727 = vst.msk [vmem:[%s295 + $0x68] sm:$0xff] %vm335, %v5711
        %5728 = vst.msk [vmem:[%s295 + $0x70] sm:$0xff] %vm335, %v5712
        %5729 = vst.msk [vmem:[%s295 + $0x78] sm:$0xff] %vm335, %v5713
        %s5730 = sand.u32 %s166, 1
        %s5731 = scalar_lea.sflag [#allocation6], %s5730
        %s5732 = sand.u32 %s166, 1
        %s5733 = smul.addr %s5732, 128
        %s5734 = scalar_lea.vmem [#allocation9], %s5733
        // Predicated region
        $region53: #{resblock_pallas.1} parent=43 // pred_check
          %p5735 = pneg %p176
        $region54: #{resblock_pallas.1} parent=43 // pred_check_branch
          %5737 = sbr.rel (%p5735) target = $region56
        $region55: #{resblock_pallas.1} parent=43 // pred_region
          %s5738 = smul.u32 2, %s22
          %s5740 = ssub.s32 2048, 2048
          %5741 = vsyncadd %s5731, %s5740
          %s5742 = smul.addr %s5738, 8
          %s5743 = smul.addr %s5742, 128
          %s5744 = scalar_lea.hbm %s6, %s5743
          %s5745 = sshll.u32 %s5734, 4
          %s5746 = int_to_ptr.vmem [resolvable:$true] %s5745
          %5751 = dma.vmem_to_hbm [thread:$0]  %s5746, 2048, %s5744, %s5731, 128, 128, 8
        $region56: #{resblock_pallas.1} parent=43 // pred_fallthru
          _
      $region44: #{resblock_pallas.1} parent=5 // pred_fallthru
        _
      %p5752 = scmp.le.s32.totalorder 2, %s17
      // Predicated region
      $region57: #{resblock_pallas.1} parent=5 // pred_check
        %p5753 = pneg %p5752
      $region58: #{resblock_pallas.1} parent=5 // pred_check_branch
        %5755 = sbr.rel (%p5753) target = $region60
      $region59: #{resblock_pallas.1} parent=5 // pred_region
        %s5756 = ssub.s32 %s17, 2
        // Predicated region
        $region61: #{resblock_pallas.1} parent=59 // pred_check
          %p5757 = pneg %p182
        $region62: #{resblock_pallas.1} parent=59 // pred_check_branch
          %5759 = sbr.rel (%p5757) target = $region64
        $region63: #{resblock_pallas.1} parent=59 // pred_region
          %s5760 = sand.u32 %s167, 1
          %s5761 = scalar_lea.sflag [#allocation6], %s5760
          %s5762 = sand.u32 %s167, 1
          %s5763 = smul.addr %s5762, 128
          %s5764 = scalar_lea.vmem [#allocation9], %s5763
          %5765 = dma.done %s5761, 2048
        $region64: #{resblock_pallas.1} parent=59 // pred_fallthru
          _
      $region60: #{resblock_pallas.1} parent=5 // pred_fallthru
        _
    $region6: #{resblock_pallas.1} parent=1 // loop_footer
      %s21 = sadd.s32 1, %s17
    $region7: #{resblock_pallas.1} parent=1 // loop_footer_branch
      %16 = sbr.rel target = $region3
    $region8: #{resblock_pallas.1} parent=1 // loop_exit
      _
    %5766 = vsyncpa [#allocation5], 1
    %s5767 = scalar_lea.sflag [#allocation5], 1
    %5768 = vsyncpa %s5767, 1
    %5769 = vsyncpa [#allocation8], 1
    %5770 = vsyncpa [#allocation6], 1
    %s5771 = scalar_lea.sflag [#allocation6], 1
    %5772 = vsyncpa %s5771, 1

</llo_original>
